<compile_context>
chip_gen: v5e
topology: v5e:2x2
jax: 0.10.0
libtpu: 0.0.40
codegen_flags: <defaults>
</compile_context>

<pallas_src>
import jax
import jax.numpy as jnp
from jax.experimental import pallas as pl
from jax.experimental.pallas import tpu as pltpu

EPS = 1e-5


def fused_kernel(gate_ref, x_ref, res_ref,
                 w1_ref, g1_ref, b1_ref,
                 w2_ref, g2_ref, b2_ref,
                 out_ref):
    # Shapes (all VMEM-resident, single grid point), channel-major with P = H*W:
    #   gate_ref: (1, C1) f32      x_ref:  (C1, P) f32     res_ref: (C2, P) f32
    #   w1_ref:   (C2, C1) bf16    g1/b1:  (C2, 1) f32
    #   w2_ref:   (C3, C2) bf16    g2/b2:  (C3, 1) f32
    #   out_ref:  (C3, P) f32
    f32 = jnp.float32
    bf16 = jnp.bfloat16
    inv_p = 1.0 / float(x_ref.shape[1])          # true row count (no padding bias)

    # Fold the SE gate into the first conv weight:  W1 @ (x * g) == (W1 * g) @ x
    gate = jax.nn.sigmoid(gate_ref[...])                          # (1, C1) f32
    w1 = (w1_ref[...].astype(f32) * gate).astype(bf16)            # (C2, C1) bf16

    # conv2d108: 1x1 conv == channel matmul on the MXU (bf16 in, f32 accumulate)
    y1 = jnp.dot(w1, x_ref[...].astype(bf16),
                 preferred_element_type=f32)                      # (C2, P) f32

    # batchnorm2d64 (training mode: batch mean / biased variance over P = N*H*W)
    m1 = jnp.sum(y1, axis=1, keepdims=True) * inv_p               # (C2, 1)
    d1 = y1 - m1
    v1 = jnp.sum(d1 * d1, axis=1, keepdims=True) * inv_p
    s1 = jax.lax.rsqrt(v1 + EPS) * g1_ref[...]                    # fused scale
    y1n = d1 * s1 + b1_ref[...]

    # residual add
    z = res_ref[...] + y1n                                        # (C2, P) f32

    # conv2d114: 1x1 conv
    y2 = jnp.dot(w2_ref[...], z.astype(bf16),
                 preferred_element_type=f32)                      # (C3, P) f32

    # batchnorm2d68
    m2 = jnp.sum(y2, axis=1, keepdims=True) * inv_p
    d2 = y2 - m2
    v2 = jnp.sum(d2 * d2, axis=1, keepdims=True) * inv_p
    s2 = jax.lax.rsqrt(v2 + EPS) * g2_ref[...]
    out_ref[...] = d2 * s2 + b2_ref[...]


def module_forward(x318, x314, x336, params):
    """x318: (1,C1,1,1), x314: (1,C1,H,W), x336: (1,C2,H,W) -> (1,C3,H,W)."""
    N, C1, H, W = x314.shape
    assert N == 1, "free NCHW <-> (C, P) reshape relies on N == 1 (as in the module)"
    C2 = params["w1"].shape[0]
    C3 = params["w2"].shape[0]
    P = H * W

    # All layout changes are free reshapes (no transposes, no extra XLA ops).
    x_t = x314.reshape(C1, P)            # channel-major activations
    res_t = x336.reshape(C2, P)
    gate = x318.reshape(1, C1)           # lane-dense row, folded into w1 in-kernel

    vmem = pl.BlockSpec(memory_space=pltpu.MemorySpace.VMEM)
    out_t = pl.pallas_call(
        fused_kernel,
        out_shape=jax.ShapeDtypeStruct((C3, P), jnp.float32),
        in_specs=[vmem] * 9,
        out_specs=vmem,
        compiler_params=pltpu.CompilerParams(
            vmem_limit_bytes=32 * 1024 * 1024),   # ~6 MB resident; generous headroom
    )(gate, x_t, res_t,
      params["w1"], params["g1"], params["b1"],
      params["w2"], params["g2"], params["b2"])

    return out_t.reshape(N, C3, H, W)    # free reshape back to NCHW


def reference_forward(x318, x314, x336, params):
    """Plain-JAX f32 reference (same math; weights upcast from bf16)."""
    N, C1, H, W = x314.shape
    P = H * W
    C2 = params["w1"].shape[0]
    C3 = params["w2"].shape[0]

    def bn(y, gamma, beta):                       # y: (C, P), gamma/beta: (C, 1)
        m = jnp.mean(y, axis=1, keepdims=True)
        v = jnp.mean((y - m) ** 2, axis=1, keepdims=True)
        return (y - m) * jax.lax.rsqrt(v + EPS) * gamma + beta

    x = x314.reshape(C1, P)
    res = x336.reshape(C2, P)
    g = jax.nn.sigmoid(x318.reshape(C1, 1))
    w1 = params["w1"].astype(jnp.float32)         # (C2, C1)
    w2 = params["w2"].astype(jnp.float32)         # (C3, C2)

    y1 = bn(w1 @ (x * g), params["g1"], params["b1"])
    y2 = bn(w2 @ (res + y1), params["g2"], params["b2"])
    return y2.reshape(N, C3, H, W)


if __name__ == "__main__":
    # Shapes implied by the module's forward.
    N, H, W = 1, 7, 7
    C1, C2, C3 = 1248, 352, 1408

    key = jax.random.PRNGKey(0)
    k = jax.random.split(key, 8)

    # Inputs (deterministic)
    x314 = jax.random.normal(k[0], (N, C1, H, W), dtype=jnp.float32)
    x318 = jax.random.normal(k[1], (N, C1, 1, 1), dtype=jnp.float32)
    x336 = jax.random.normal(k[2], (N, C2, H, W), dtype=jnp.float32)

    # Parameters. 1x1 conv weights kept in PyTorch-native (Cout, Cin) layout and
    # stored as bf16 (the kernel is weight-DMA bound); BN affine params as
    # per-channel f32 columns.
    params = {
        "w1": (0.02 * jax.random.normal(k[3], (C2, C1), dtype=jnp.float32)
               ).astype(jnp.bfloat16),
        "g1": 1.0 + 0.1 * jax.random.normal(k[4], (C2, 1), dtype=jnp.float32),
        "b1": 0.1 * jax.random.normal(k[5], (C2, 1), dtype=jnp.float32),
        "w2": (0.02 * jax.random.normal(k[6], (C3, C2), dtype=jnp.float32)
               ).astype(jnp.bfloat16),
        "g2": jnp.ones((C3, 1), dtype=jnp.float32),
        "b2": jnp.zeros((C3, 1), dtype=jnp.float32),
    }

    fwd = jax.jit(module_forward)
    out = jax.block_until_ready(fwd(x318, x314, x336, params))
    ref = jax.block_until_ready(reference_forward(x318, x314, x336, params))

    assert out.shape == (N, C3, H, W), out.shape
    max_err = float(jnp.max(jnp.abs(out - ref)))
    # bf16 matmul inputs (f32 accumulation, f32 BN) vs an all-f32 reference.
    assert jnp.allclose(out, ref, atol=4e-2, rtol=4e-2), max_err

    print("KERNEL_OK")
</pallas_src>

<mosaic_0001>
module attributes {stable_mosaic.version = 11 : i64} {
  func.func @fused_kernel(%arg0: memref<1x1248xf32, #tpu.memory_space<vmem>>, %arg1: memref<1248x49xf32, #tpu.memory_space<vmem>>, %arg2: memref<352x49xf32, #tpu.memory_space<vmem>>, %arg3: memref<352x1248xbf16, #tpu.memory_space<vmem>>, %arg4: memref<352x1xf32, #tpu.memory_space<vmem>>, %arg5: memref<352x1xf32, #tpu.memory_space<vmem>>, %arg6: memref<1408x352xbf16, #tpu.memory_space<vmem>>, %arg7: memref<1408x1xf32, #tpu.memory_space<vmem>>, %arg8: memref<1408x1xf32, #tpu.memory_space<vmem>>, %arg9: memref<1408x49xf32, #tpu.memory_space<vmem>>) attributes {dimension_semantics = [], scalar_prefetch = 0 : i64, scratch_operands = 0 : i64, tpu.core_type = #tpu.core_type<tc>} {
    %c0 = arith.constant 0 : index
    %c0_0 = arith.constant 0 : index
    %0 = vector.load %arg0[%c0, %c0_0] : memref<1x1248xf32, #tpu.memory_space<vmem>>, vector<1x1248xf32>
    %1 = arith.negf %0 : vector<1x1248xf32>
    %2 = math.exp %1 : vector<1x1248xf32>
    %cst = arith.constant 1.000000e+00 : f32
    %3 = vector.broadcast %cst : f32 to vector<1x1248xf32>
    %4 = arith.addf %3, %2 : vector<1x1248xf32>
    %5 = arith.divf %3, %4 : vector<1x1248xf32>
    %c0_1 = arith.constant 0 : index
    %c0_2 = arith.constant 0 : index
    %6 = vector.load %arg3[%c0_1, %c0_2] : memref<352x1248xbf16, #tpu.memory_space<vmem>>, vector<352x1248xbf16>
    %7 = arith.extf %6 : vector<352x1248xbf16> to vector<352x1248xf32>
    %8 = vector.broadcast %5 : vector<1x1248xf32> to vector<352x1248xf32>
    %9 = arith.mulf %7, %8 : vector<352x1248xf32>
    %10 = arith.truncf %9 : vector<352x1248xf32> to vector<352x1248xbf16>
    %c0_3 = arith.constant 0 : index
    %c0_4 = arith.constant 0 : index
    %11 = vector.load %arg1[%c0_3, %c0_4] : memref<1248x49xf32, #tpu.memory_space<vmem>>, vector<1248x49xf32>
    %12 = arith.truncf %11 : vector<1248x49xf32> to vector<1248x49xbf16>
    %cst_5 = arith.constant dense<0.000000e+00> : vector<352x49xf32>
    %13 = tpu.matmul %10, %12, %cst_5 {dimension_numbers = #tpu.dot_dimension_numbers<[1], [0], [0], [1], [0, 0, 1, 1], [], []>} : vector<352x1248xbf16>, vector<1248x49xbf16>, vector<352x49xf32> -> vector<352x49xf32>
    %cst_6 = arith.constant dense<0.000000e+00> : vector<352xf32>
    %14 = vector.multi_reduction <add>, %13, %cst_6 [1] : vector<352x49xf32> to vector<352xf32>
    %15 = vector.shape_cast %14 : vector<352xf32> to vector<352x1xf32>
    %cst_7 = arith.constant 0.0204081628 : f32
    %16 = vector.broadcast %cst_7 : f32 to vector<352x1xf32>
    %17 = arith.mulf %15, %16 : vector<352x1xf32>
    %18 = vector.broadcast %17 : vector<352x1xf32> to vector<352x49xf32>
    %19 = arith.subf %13, %18 : vector<352x49xf32>
    %20 = arith.mulf %19, %19 : vector<352x49xf32>
    %cst_8 = arith.constant dense<0.000000e+00> : vector<352xf32>
    %21 = vector.multi_reduction <add>, %20, %cst_8 [1] : vector<352x49xf32> to vector<352xf32>
    %22 = vector.shape_cast %21 : vector<352xf32> to vector<352x1xf32>
    %cst_9 = arith.constant 0.0204081628 : f32
    %23 = vector.broadcast %cst_9 : f32 to vector<352x1xf32>
    %24 = arith.mulf %22, %23 : vector<352x1xf32>
    %cst_10 = arith.constant 9.99999974E-6 : f32
    %25 = vector.broadcast %cst_10 : f32 to vector<352x1xf32>
    %26 = arith.addf %24, %25 : vector<352x1xf32>
    %27 = math.rsqrt %26 : vector<352x1xf32>
    %c0_11 = arith.constant 0 : index
    %c0_12 = arith.constant 0 : index
    %28 = vector.load %arg4[%c0_11, %c0_12] : memref<352x1xf32, #tpu.memory_space<vmem>>, vector<352x1xf32>
    %29 = arith.mulf %27, %28 : vector<352x1xf32>
    %30 = vector.broadcast %29 : vector<352x1xf32> to vector<352x49xf32>
    %31 = arith.mulf %19, %30 : vector<352x49xf32>
    %c0_13 = arith.constant 0 : index
    %c0_14 = arith.constant 0 : index
    %32 = vector.load %arg5[%c0_13, %c0_14] : memref<352x1xf32, #tpu.memory_space<vmem>>, vector<352x1xf32>
    %33 = vector.broadcast %32 : vector<352x1xf32> to vector<352x49xf32>
    %34 = arith.addf %31, %33 : vector<352x49xf32>
    %c0_15 = arith.constant 0 : index
    %c0_16 = arith.constant 0 : index
    %35 = vector.load %arg2[%c0_15, %c0_16] : memref<352x49xf32, #tpu.memory_space<vmem>>, vector<352x49xf32>
    %36 = arith.addf %35, %34 : vector<352x49xf32>
    %c0_17 = arith.constant 0 : index
    %c0_18 = arith.constant 0 : index
    %37 = vector.load %arg6[%c0_17, %c0_18] : memref<1408x352xbf16, #tpu.memory_space<vmem>>, vector<1408x352xbf16>
    %38 = arith.truncf %36 : vector<352x49xf32> to vector<352x49xbf16>
    %cst_19 = arith.constant dense<0.000000e+00> : vector<1408x49xf32>
    %39 = tpu.matmul %37, %38, %cst_19 {dimension_numbers = #tpu.dot_dimension_numbers<[1], [0], [0], [1], [0, 0, 1, 1], [], []>} : vector<1408x352xbf16>, vector<352x49xbf16>, vector<1408x49xf32> -> vector<1408x49xf32>
    %cst_20 = arith.constant dense<0.000000e+00> : vector<1408xf32>
    %40 = vector.multi_reduction <add>, %39, %cst_20 [1] : vector<1408x49xf32> to vector<1408xf32>
    %41 = vector.shape_cast %40 : vector<1408xf32> to vector<1408x1xf32>
    %cst_21 = arith.constant 0.0204081628 : f32
    %42 = vector.broadcast %cst_21 : f32 to vector<1408x1xf32>
    %43 = arith.mulf %41, %42 : vector<1408x1xf32>
    %44 = vector.broadcast %43 : vector<1408x1xf32> to vector<1408x49xf32>
    %45 = arith.subf %39, %44 : vector<1408x49xf32>
    %46 = arith.mulf %45, %45 : vector<1408x49xf32>
    %cst_22 = arith.constant dense<0.000000e+00> : vector<1408xf32>
    %47 = vector.multi_reduction <add>, %46, %cst_22 [1] : vector<1408x49xf32> to vector<1408xf32>
    %48 = vector.shape_cast %47 : vector<1408xf32> to vector<1408x1xf32>
    %cst_23 = arith.constant 0.0204081628 : f32
    %49 = vector.broadcast %cst_23 : f32 to vector<1408x1xf32>
    %50 = arith.mulf %48, %49 : vector<1408x1xf32>
    %cst_24 = arith.constant 9.99999974E-6 : f32
    %51 = vector.broadcast %cst_24 : f32 to vector<1408x1xf32>
    %52 = arith.addf %50, %51 : vector<1408x1xf32>
    %53 = math.rsqrt %52 : vector<1408x1xf32>
    %c0_25 = arith.constant 0 : index
    %c0_26 = arith.constant 0 : index
    %54 = vector.load %arg7[%c0_25, %c0_26] : memref<1408x1xf32, #tpu.memory_space<vmem>>, vector<1408x1xf32>
    %55 = arith.mulf %53, %54 : vector<1408x1xf32>
    %56 = vector.broadcast %55 : vector<1408x1xf32> to vector<1408x49xf32>
    %57 = arith.mulf %45, %56 : vector<1408x49xf32>
    %c0_27 = arith.constant 0 : index
    %c0_28 = arith.constant 0 : index
    %58 = vector.load %arg8[%c0_27, %c0_28] : memref<1408x1xf32, #tpu.memory_space<vmem>>, vector<1408x1xf32>
    %59 = vector.broadcast %58 : vector<1408x1xf32> to vector<1408x49xf32>
    %60 = arith.addf %57, %59 : vector<1408x49xf32>
    %c0_29 = arith.constant 0 : index
    %c0_30 = arith.constant 0 : index
    %61 = vector.load %arg9[%c0_29, %c0_30] : memref<1408x49xf32, #tpu.memory_space<vmem>>, vector<1408x49xf32>
    tpu.vector_store %arg9[%c0_29, %c0_30], %60 {strides = array<i32>} : memref<1408x49xf32, #tpu.memory_space<vmem>>, vector<1408x49xf32>,
    return
  }
}

</mosaic_0001>

<llo_original>
// kernel: module_forward.1
$region0: #{module_forward.1}
  #allocation0 [shape = 'u32[]', space=smem, size = 0x4, offset = 0x4, fixed_abs, tag = 'smem constant byte address 0x4 - core index']
  #allocation1 [shape = 'u32[72,128]{1,0:T(1,128)}', space=vmem, size = 0x9000, scoped, tag = 'internal scratch']
  %s0 = inlined_call_operand.vmem [shape: f32[1,1248], index: 0, kind: input, shape index: {}]
  %s1 = inlined_call_operand.vmem [shape: f32[1248,49], index: 1, kind: input, shape index: {}]
  %s2 = inlined_call_operand.vmem [shape: f32[352,49], index: 2, kind: input, shape index: {}]
  %s3 = inlined_call_operand.vmem [shape: bf16[352,1248], index: 3, kind: input, shape index: {}]
  %s4 = inlined_call_operand.vmem [shape: f32[352,1], index: 4, kind: input, shape index: {}]
  %s5 = inlined_call_operand.vmem [shape: f32[352,1], index: 5, kind: input, shape index: {}]
  %s6 = inlined_call_operand.vmem [shape: bf16[1408,352], index: 6, kind: input, shape index: {}]
  %s7 = inlined_call_operand.vmem [shape: f32[1408,1], index: 7, kind: input, shape index: {}]
  %s8 = inlined_call_operand.vmem [shape: f32[1408,1], index: 8, kind: input, shape index: {}]
  %s9 = inlined_call_operand.vmem [shape: f32[1408,49], index: 9, kind: output, shape index: {}]
  %s10 = sld [smem:[#allocation0]]
  $region46: #{module_forward.1} parent=0
    _
  %s12 = ssub.s32 1, %s10
  %s13 = scalar_select 0, %s12, %s10
  // Predicated region
  $region2: #{module_forward.1} parent=0 // pred_check
    _
  $region3: #{module_forward.1} parent=0 // pred_check_branch
    %15 = sbr.rel (0) target = $region5
  $region4: #{module_forward.1} parent=0 // pred_region
    _
  $region5: #{module_forward.1} parent=0 // pred_fallthru
    _
  // Predicated region
  $region6: #{module_forward.1} parent=0 // pred_check
    _
  $region7: #{module_forward.1} parent=0 // pred_check_branch
    %17 = sbr.rel (0) target = $region9
  $region8: #{module_forward.1} parent=0 // pred_region
    _
  $region9: #{module_forward.1} parent=0 // pred_fallthru
    _
  // Predicated region
  $region10: #{module_forward.1} parent=0 // pred_check
    _
  $region11: #{module_forward.1} parent=0 // pred_check_branch
    %19 = sbr.rel (0) target = $region13
  $region12: #{module_forward.1} parent=0 // pred_region
    _
  $region13: #{module_forward.1} parent=0 // pred_fallthru
    _
  // Predicated region
  $region14: #{module_forward.1} parent=0 // pred_check
    _
  $region15: #{module_forward.1} parent=0 // pred_check_branch
    %21 = sbr.rel (0) target = $region17
  $region16: #{module_forward.1} parent=0 // pred_region
    _
  $region17: #{module_forward.1} parent=0 // pred_fallthru
    _
  // Predicated region
  $region18: #{module_forward.1} parent=0 // pred_check
    _
  $region19: #{module_forward.1} parent=0 // pred_check_branch
    %23 = sbr.rel (0) target = $region21
  $region20: #{module_forward.1} parent=0 // pred_region
    _
  $region21: #{module_forward.1} parent=0 // pred_fallthru
    _
  // Predicated region
  $region22: #{module_forward.1} parent=0 // pred_check
    _
  $region23: #{module_forward.1} parent=0 // pred_check_branch
    %25 = sbr.rel (0) target = $region25
  $region24: #{module_forward.1} parent=0 // pred_region
    _
  $region25: #{module_forward.1} parent=0 // pred_fallthru
    _
  // Predicated region
  $region26: #{module_forward.1} parent=0 // pred_check
    _
  $region27: #{module_forward.1} parent=0 // pred_check_branch
    %27 = sbr.rel (0) target = $region29
  $region28: #{module_forward.1} parent=0 // pred_region
    _
  $region29: #{module_forward.1} parent=0 // pred_fallthru
    _
  // Predicated region
  $region30: #{module_forward.1} parent=0 // pred_check
    _
  $region31: #{module_forward.1} parent=0 // pred_check_branch
    %29 = sbr.rel (0) target = $region33
  $region32: #{module_forward.1} parent=0 // pred_region
    _
  $region33: #{module_forward.1} parent=0 // pred_fallthru
    _
  // Predicated region
  $region34: #{module_forward.1} parent=0 // pred_check
    _
  $region35: #{module_forward.1} parent=0 // pred_check_branch
    %31 = sbr.rel (0) target = $region37
  $region36: #{module_forward.1} parent=0 // pred_region
    _
  $region37: #{module_forward.1} parent=0 // pred_fallthru
    _
  %v33 = vld [vmem:[%s0] sm:$0xff]
  %v34 = vld [vmem:[%s0 + $0x8] sm:$0x3]
  %v35 = vxor.u32 %v33, 2147483648
  %v36 = vxor.u32 %v34, 2147483648
  %v37 = vmul.f32 %v35, 1.442695
  %v38 = vpow.pop %v37
  %v39 = vmul.f32 %v36, 1.442695
  %v40 = vpow.pop %v39
  %v41 = vadd.f32 %v38, 1.0
  %v42 = vadd.f32 %v40, 1.0
  %v43 = vrcp.pop %v41
  %v44 = vmul.f32 %v41, %v43
  %v45 = vsub.f32 1.0, %v44
  %v46 = vmul.f32 %v43, %v45
  %v47 = vadd.f32 %v43, %v46
  %vm48 = vweird.f32 %v41
  %vm49 = vweird.f32 %v43
  %vm50 = vmor %vm48, %vm49
  %v51 = vsel %vm50, %v43, %v47
  %v52 = vand.u32 2147483647, %v41
  %vm53 = vcmp.eq.f32.partialorder %v52, 8.507059e+37
  %v54 = vand.u32 %v41, 2147483648
  %v55 = vor.u32 1.1754944e-38, %v54
  %v56 = vsel %vm53, %v55, %v51
  %v57 = vmul.f32 1.0, %v56
  %v58 = vrcp.pop %v42
  %v59 = vmul.f32 %v42, %v58
  %v60 = vsub.f32 1.0, %v59
  %v61 = vmul.f32 %v58, %v60
  %v62 = vadd.f32 %v58, %v61
  %vm63 = vweird.f32 %v42
  %vm64 = vweird.f32 %v58
  %vm65 = vmor %vm63, %vm64
  %v66 = vsel %vm65, %v58, %v62
  %v67 = vand.u32 2147483647, %v42
  %vm68 = vcmp.eq.f32.partialorder %v67, 8.507059e+37
  %v69 = vand.u32 %v42, 2147483648
  %v70 = vor.u32 1.1754944e-38, %v69
  %v71 = vsel %vm68, %v70, %v66
  %v72 = vmul.f32 1.0, %v71
  %v73 = vld [vmem:[%s3] sm:$0xff]
  %v74 = vld [vmem:[%s3 + $0x8] sm:$0xff]
  %v75 = vld [vmem:[%s3 + $0x10] sm:$0xff]
  %v76 = vld [vmem:[%s3 + $0x18] sm:$0xff]
  %v77 = vld [vmem:[%s3 + $0x20] sm:$0xff]
  %v78 = vld [vmem:[%s3 + $0x28] sm:$0xff]
  %v79 = vld [vmem:[%s3 + $0x30] sm:$0xff]
  %v80 = vld [vmem:[%s3 + $0x38] sm:$0xff]
  %v81 = vld [vmem:[%s3 + $0x40] sm:$0xff]
  %v82 = vld [vmem:[%s3 + $0x48] sm:$0xff]
  %v83 = vld [vmem:[%s3 + $0x50] sm:$0xff]
  %v84 = vld [vmem:[%s3 + $0x58] sm:$0xff]
  %v85 = vld [vmem:[%s3 + $0x60] sm:$0xff]
  %v86 = vld [vmem:[%s3 + $0x68] sm:$0xff]
  %v87 = vld [vmem:[%s3 + $0x70] sm:$0xff]
  %v88 = vld [vmem:[%s3 + $0x78] sm:$0xff]
  %v89 = vld [vmem:[%s3 + $0x80] sm:$0xff]
  %v90 = vld [vmem:[%s3 + $0x88] sm:$0xff]
  %v91 = vld [vmem:[%s3 + $0x90] sm:$0xff]
  %v92 = vld [vmem:[%s3 + $0x98] sm:$0xff]
  %v93 = vld [vmem:[%s3 + $0xa0] sm:$0xff]
  %v94 = vld [vmem:[%s3 + $0xa8] sm:$0xff]
  %v95 = vld [vmem:[%s3 + $0xb0] sm:$0xff]
  %v96 = vld [vmem:[%s3 + $0xb8] sm:$0xff]
  %v97 = vld [vmem:[%s3 + $0xc0] sm:$0xff]
  %v98 = vld [vmem:[%s3 + $0xc8] sm:$0xff]
  %v99 = vld [vmem:[%s3 + $0xd0] sm:$0xff]
  %v100 = vld [vmem:[%s3 + $0xd8] sm:$0xff]
  %v101 = vld [vmem:[%s3 + $0xe0] sm:$0xff]
  %v102 = vld [vmem:[%s3 + $0xe8] sm:$0xff]
  %v103 = vld [vmem:[%s3 + $0xf0] sm:$0xff]
  %v104 = vld [vmem:[%s3 + $0xf8] sm:$0xff]
  %v105 = vld [vmem:[%s3 + $0x100] sm:$0xff]
  %v106 = vld [vmem:[%s3 + $0x108] sm:$0xff]
  %v107 = vld [vmem:[%s3 + $0x110] sm:$0xff]
  %v108 = vld [vmem:[%s3 + $0x118] sm:$0xff]
  %v109 = vld [vmem:[%s3 + $0x120] sm:$0xff]
  %v110 = vld [vmem:[%s3 + $0x128] sm:$0xff]
  %v111 = vld [vmem:[%s3 + $0x130] sm:$0xff]
  %v112 = vld [vmem:[%s3 + $0x138] sm:$0xff]
  %v113 = vld [vmem:[%s3 + $0x140] sm:$0xff]
  %v114 = vld [vmem:[%s3 + $0x148] sm:$0xff]
  %v115 = vld [vmem:[%s3 + $0x150] sm:$0xff]
  %v116 = vld [vmem:[%s3 + $0x158] sm:$0xff]
  %v117 = vld [vmem:[%s3 + $0x160] sm:$0xff]
  %v118 = vld [vmem:[%s3 + $0x168] sm:$0xff]
  %v119 = vld [vmem:[%s3 + $0x170] sm:$0xff]
  %v120 = vld [vmem:[%s3 + $0x178] sm:$0xff]
  %v121 = vld [vmem:[%s3 + $0x180] sm:$0xff]
  %v122 = vld [vmem:[%s3 + $0x188] sm:$0xff]
  %v123 = vld [vmem:[%s3 + $0x190] sm:$0xff]
  %v124 = vld [vmem:[%s3 + $0x198] sm:$0xff]
  %v125 = vld [vmem:[%s3 + $0x1a0] sm:$0xff]
  %v126 = vld [vmem:[%s3 + $0x1a8] sm:$0xff]
  %v127 = vld [vmem:[%s3 + $0x1b0] sm:$0xff]
  %v128 = vld [vmem:[%s3 + $0x1b8] sm:$0xff]
  %v129 = vld [vmem:[%s3 + $0x1c0] sm:$0xff]
  %v130 = vld [vmem:[%s3 + $0x1c8] sm:$0xff]
  %v131 = vld [vmem:[%s3 + $0x1d0] sm:$0xff]
  %v132 = vld [vmem:[%s3 + $0x1d8] sm:$0xff]
  %v133 = vld [vmem:[%s3 + $0x1e0] sm:$0xff]
  %v134 = vld [vmem:[%s3 + $0x1e8] sm:$0xff]
  %v135 = vld [vmem:[%s3 + $0x1f0] sm:$0xff]
  %v136 = vld [vmem:[%s3 + $0x1f8] sm:$0xff]
  %v137 = vld [vmem:[%s3 + $0x200] sm:$0xff]
  %v138 = vld [vmem:[%s3 + $0x208] sm:$0xff]
  %v139 = vld [vmem:[%s3 + $0x210] sm:$0xff]
  %v140 = vld [vmem:[%s3 + $0x218] sm:$0xff]
  %v141 = vld [vmem:[%s3 + $0x220] sm:$0xff]
  %v142 = vld [vmem:[%s3 + $0x228] sm:$0xff]
  %v143 = vld [vmem:[%s3 + $0x230] sm:$0xff]
  %v144 = vld [vmem:[%s3 + $0x238] sm:$0xff]
  %v145 = vld [vmem:[%s3 + $0x240] sm:$0xff]
  %v146 = vld [vmem:[%s3 + $0x248] sm:$0xff]
  %v147 = vld [vmem:[%s3 + $0x250] sm:$0xff]
  %v148 = vld [vmem:[%s3 + $0x258] sm:$0xff]
  %v149 = vld [vmem:[%s3 + $0x260] sm:$0xff]
  %v150 = vld [vmem:[%s3 + $0x268] sm:$0xff]
  %v151 = vld [vmem:[%s3 + $0x270] sm:$0xff]
  %v152 = vld [vmem:[%s3 + $0x278] sm:$0xff]
  %v153 = vld [vmem:[%s3 + $0x280] sm:$0xff]
  %v154 = vld [vmem:[%s3 + $0x288] sm:$0xff]
  %v155 = vld [vmem:[%s3 + $0x290] sm:$0xff]
  %v156 = vld [vmem:[%s3 + $0x298] sm:$0xff]
  %v157 = vld [vmem:[%s3 + $0x2a0] sm:$0xff]
  %v158 = vld [vmem:[%s3 + $0x2a8] sm:$0xff]
  %v159 = vld [vmem:[%s3 + $0x2b0] sm:$0xff]
  %v160 = vld [vmem:[%s3 + $0x2b8] sm:$0xff]
  %v161 = vld [vmem:[%s3 + $0x2c0] sm:$0xff]
  %v162 = vld [vmem:[%s3 + $0x2c8] sm:$0xff]
  %v163 = vld [vmem:[%s3 + $0x2d0] sm:$0xff]
  %v164 = vld [vmem:[%s3 + $0x2d8] sm:$0xff]
  %v165 = vld [vmem:[%s3 + $0x2e0] sm:$0xff]
  %v166 = vld [vmem:[%s3 + $0x2e8] sm:$0xff]
  %v167 = vld [vmem:[%s3 + $0x2f0] sm:$0xff]
  %v168 = vld [vmem:[%s3 + $0x2f8] sm:$0xff]
  %v169 = vld [vmem:[%s3 + $0x300] sm:$0xff]
  %v170 = vld [vmem:[%s3 + $0x308] sm:$0xff]
  %v171 = vld [vmem:[%s3 + $0x310] sm:$0xff]
  %v172 = vld [vmem:[%s3 + $0x318] sm:$0xff]
  %v173 = vld [vmem:[%s3 + $0x320] sm:$0xff]
  %v174 = vld [vmem:[%s3 + $0x328] sm:$0xff]
  %v175 = vld [vmem:[%s3 + $0x330] sm:$0xff]
  %v176 = vld [vmem:[%s3 + $0x338] sm:$0xff]
  %v177 = vld [vmem:[%s3 + $0x340] sm:$0xff]
  %v178 = vld [vmem:[%s3 + $0x348] sm:$0xff]
  %v179 = vld [vmem:[%s3 + $0x350] sm:$0xff]
  %v180 = vld [vmem:[%s3 + $0x358] sm:$0xff]
  %v181 = vld [vmem:[%s3 + $0x360] sm:$0xff]
  %v182 = vld [vmem:[%s3 + $0x368] sm:$0xff]
  %v183 = vld [vmem:[%s3 + $0x370] sm:$0xff]
  %v184 = vld [vmem:[%s3 + $0x378] sm:$0xff]
  %v185 = vld [vmem:[%s3 + $0x380] sm:$0xff]
  %v186 = vld [vmem:[%s3 + $0x388] sm:$0xff]
  %v187 = vld [vmem:[%s3 + $0x390] sm:$0xff]
  %v188 = vld [vmem:[%s3 + $0x398] sm:$0xff]
  %v189 = vld [vmem:[%s3 + $0x3a0] sm:$0xff]
  %v190 = vld [vmem:[%s3 + $0x3a8] sm:$0xff]
  %v191 = vld [vmem:[%s3 + $0x3b0] sm:$0xff]
  %v192 = vld [vmem:[%s3 + $0x3b8] sm:$0xff]
  %v193 = vld [vmem:[%s3 + $0x3c0] sm:$0xff]
  %v194 = vld [vmem:[%s3 + $0x3c8] sm:$0xff]
  %v195 = vld [vmem:[%s3 + $0x3d0] sm:$0xff]
  %v196 = vld [vmem:[%s3 + $0x3d8] sm:$0xff]
  %v197 = vld [vmem:[%s3 + $0x3e0] sm:$0xff]
  %v198 = vld [vmem:[%s3 + $0x3e8] sm:$0xff]
  %v199 = vld [vmem:[%s3 + $0x3f0] sm:$0xff]
  %v200 = vld [vmem:[%s3 + $0x3f8] sm:$0xff]
  %v201 = vld [vmem:[%s3 + $0x400] sm:$0xff]
  %v202 = vld [vmem:[%s3 + $0x408] sm:$0xff]
  %v203 = vld [vmem:[%s3 + $0x410] sm:$0xff]
  %v204 = vld [vmem:[%s3 + $0x418] sm:$0xff]
  %v205 = vld [vmem:[%s3 + $0x420] sm:$0xff]
  %v206 = vld [vmem:[%s3 + $0x428] sm:$0xff]
  %v207 = vld [vmem:[%s3 + $0x430] sm:$0xff]
  %v208 = vld [vmem:[%s3 + $0x438] sm:$0xff]
  %v209 = vld [vmem:[%s3 + $0x440] sm:$0xff]
  %v210 = vld [vmem:[%s3 + $0x448] sm:$0xff]
  %v211 = vld [vmem:[%s3 + $0x450] sm:$0xff]
  %v212 = vld [vmem:[%s3 + $0x458] sm:$0xff]
  %v213 = vld [vmem:[%s3 + $0x460] sm:$0xff]
  %v214 = vld [vmem:[%s3 + $0x468] sm:$0xff]
  %v215 = vld [vmem:[%s3 + $0x470] sm:$0xff]
  %v216 = vld [vmem:[%s3 + $0x478] sm:$0xff]
  %v217 = vld [vmem:[%s3 + $0x480] sm:$0xff]
  %v218 = vld [vmem:[%s3 + $0x488] sm:$0xff]
  %v219 = vld [vmem:[%s3 + $0x490] sm:$0xff]
  %v220 = vld [vmem:[%s3 + $0x498] sm:$0xff]
  %v221 = vld [vmem:[%s3 + $0x4a0] sm:$0xff]
  %v222 = vld [vmem:[%s3 + $0x4a8] sm:$0xff]
  %v223 = vld [vmem:[%s3 + $0x4b0] sm:$0xff]
  %v224 = vld [vmem:[%s3 + $0x4b8] sm:$0xff]
  %v225 = vld [vmem:[%s3 + $0x4c0] sm:$0xff]
  %v226 = vld [vmem:[%s3 + $0x4c8] sm:$0xff]
  %v227 = vld [vmem:[%s3 + $0x4d0] sm:$0xff]
  %v228 = vld [vmem:[%s3 + $0x4d8] sm:$0xff]
  %v229 = vld [vmem:[%s3 + $0x4e0] sm:$0xff]
  %v230 = vld [vmem:[%s3 + $0x4e8] sm:$0xff]
  %v231 = vld [vmem:[%s3 + $0x4f0] sm:$0xff]
  %v232 = vld [vmem:[%s3 + $0x4f8] sm:$0xff]
  %v233 = vld [vmem:[%s3 + $0x500] sm:$0xff]
  %v234 = vld [vmem:[%s3 + $0x508] sm:$0xff]
  %v235 = vld [vmem:[%s3 + $0x510] sm:$0xff]
  %v236 = vld [vmem:[%s3 + $0x518] sm:$0xff]
  %v237 = vld [vmem:[%s3 + $0x520] sm:$0xff]
  %v238 = vld [vmem:[%s3 + $0x528] sm:$0xff]
  %v239 = vld [vmem:[%s3 + $0x530] sm:$0xff]
  %v240 = vld [vmem:[%s3 + $0x538] sm:$0xff]
  %v241 = vld [vmem:[%s3 + $0x540] sm:$0xff]
  %v242 = vld [vmem:[%s3 + $0x548] sm:$0xff]
  %v243 = vld [vmem:[%s3 + $0x550] sm:$0xff]
  %v244 = vld [vmem:[%s3 + $0x558] sm:$0xff]
  %v245 = vld [vmem:[%s3 + $0x560] sm:$0xff]
  %v246 = vld [vmem:[%s3 + $0x568] sm:$0xff]
  %v247 = vld [vmem:[%s3 + $0x570] sm:$0xff]
  %v248 = vld [vmem:[%s3 + $0x578] sm:$0xff]
  %v249 = vld [vmem:[%s3 + $0x580] sm:$0xff]
  %v250 = vld [vmem:[%s3 + $0x588] sm:$0xff]
  %v251 = vld [vmem:[%s3 + $0x590] sm:$0xff]
  %v252 = vld [vmem:[%s3 + $0x598] sm:$0xff]
  %v253 = vld [vmem:[%s3 + $0x5a0] sm:$0xff]
  %v254 = vld [vmem:[%s3 + $0x5a8] sm:$0xff]
  %v255 = vld [vmem:[%s3 + $0x5b0] sm:$0xff]
  %v256 = vld [vmem:[%s3 + $0x5b8] sm:$0xff]
  %v257 = vld [vmem:[%s3 + $0x5c0] sm:$0xff]
  %v258 = vld [vmem:[%s3 + $0x5c8] sm:$0xff]
  %v259 = vld [vmem:[%s3 + $0x5d0] sm:$0xff]
  %v260 = vld [vmem:[%s3 + $0x5d8] sm:$0xff]
  %v261 = vld [vmem:[%s3 + $0x5e0] sm:$0xff]
  %v262 = vld [vmem:[%s3 + $0x5e8] sm:$0xff]
  %v263 = vld [vmem:[%s3 + $0x5f0] sm:$0xff]
  %v264 = vld [vmem:[%s3 + $0x5f8] sm:$0xff]
  %v265 = vld [vmem:[%s3 + $0x600] sm:$0xff]
  %v266 = vld [vmem:[%s3 + $0x608] sm:$0xff]
  %v267 = vld [vmem:[%s3 + $0x610] sm:$0xff]
  %v268 = vld [vmem:[%s3 + $0x618] sm:$0xff]
  %v269 = vld [vmem:[%s3 + $0x620] sm:$0xff]
  %v270 = vld [vmem:[%s3 + $0x628] sm:$0xff]
  %v271 = vld [vmem:[%s3 + $0x630] sm:$0xff]
  %v272 = vld [vmem:[%s3 + $0x638] sm:$0xff]
  %v273 = vld [vmem:[%s3 + $0x640] sm:$0xff]
  %v274 = vld [vmem:[%s3 + $0x648] sm:$0xff]
  %v275 = vld [vmem:[%s3 + $0x650] sm:$0xff]
  %v276 = vld [vmem:[%s3 + $0x658] sm:$0xff]
  %v277 = vld [vmem:[%s3 + $0x660] sm:$0xff]
  %v278 = vld [vmem:[%s3 + $0x668] sm:$0xff]
  %v279 = vld [vmem:[%s3 + $0x670] sm:$0xff]
  %v280 = vld [vmem:[%s3 + $0x678] sm:$0xff]
  %v281 = vld [vmem:[%s3 + $0x680] sm:$0xff]
  %v282 = vld [vmem:[%s3 + $0x688] sm:$0xff]
  %v283 = vld [vmem:[%s3 + $0x690] sm:$0xff]
  %v284 = vld [vmem:[%s3 + $0x698] sm:$0xff]
  %v285 = vld [vmem:[%s3 + $0x6a0] sm:$0xff]
  %v286 = vld [vmem:[%s3 + $0x6a8] sm:$0xff]
  %v287 = vld [vmem:[%s3 + $0x6b0] sm:$0xff]
  %v288 = vld [vmem:[%s3 + $0x6b8] sm:$0xff]
  %v289 = vld [vmem:[%s3 + $0x6c0] sm:$0xff]
  %v290 = vld [vmem:[%s3 + $0x6c8] sm:$0xff]
  %v291 = vld [vmem:[%s3 + $0x6d0] sm:$0xff]
  %v292 = vld [vmem:[%s3 + $0x6d8] sm:$0xff]
  %v293 = vunpack.c.l.bf16 %v73
  %v294 = vunpack.c.h.bf16 %v73
  %v295 = vunpack.c.l.bf16 %v74
  %v296 = vunpack.c.h.bf16 %v74
  %v297 = vunpack.c.l.bf16 %v75
  %v298 = vunpack.c.h.bf16 %v75
  %v299 = vunpack.c.l.bf16 %v76
  %v300 = vunpack.c.h.bf16 %v76
  %v301 = vunpack.c.l.bf16 %v77
  %v302 = vunpack.c.h.bf16 %v77
  %v303 = vunpack.c.l.bf16 %v78
  %v304 = vunpack.c.h.bf16 %v78
  %v305 = vunpack.c.l.bf16 %v79
  %v306 = vunpack.c.h.bf16 %v79
  %v307 = vunpack.c.l.bf16 %v80
  %v308 = vunpack.c.h.bf16 %v80
  %v309 = vunpack.c.l.bf16 %v81
  %v310 = vunpack.c.h.bf16 %v81
  %v311 = vunpack.c.l.bf16 %v82
  %v312 = vunpack.c.h.bf16 %v82
  %v313 = vunpack.c.l.bf16 %v83
  %v314 = vunpack.c.h.bf16 %v83
  %v315 = vunpack.c.l.bf16 %v84
  %v316 = vunpack.c.h.bf16 %v84
  %v317 = vunpack.c.l.bf16 %v85
  %v318 = vunpack.c.h.bf16 %v85
  %v319 = vunpack.c.l.bf16 %v86
  %v320 = vunpack.c.h.bf16 %v86
  %v321 = vunpack.c.l.bf16 %v87
  %v322 = vunpack.c.h.bf16 %v87
  %v323 = vunpack.c.l.bf16 %v88
  %v324 = vunpack.c.h.bf16 %v88
  %v325 = vunpack.c.l.bf16 %v89
  %v326 = vunpack.c.h.bf16 %v89
  %v327 = vunpack.c.l.bf16 %v90
  %v328 = vunpack.c.h.bf16 %v90
  %v329 = vunpack.c.l.bf16 %v91
  %v330 = vunpack.c.h.bf16 %v91
  %v331 = vunpack.c.l.bf16 %v92
  %v332 = vunpack.c.h.bf16 %v92
  %v333 = vunpack.c.l.bf16 %v93
  %v334 = vunpack.c.h.bf16 %v93
  %v335 = vunpack.c.l.bf16 %v94
  %v336 = vunpack.c.h.bf16 %v94
  %v337 = vunpack.c.l.bf16 %v95
  %v338 = vunpack.c.h.bf16 %v95
  %v339 = vunpack.c.l.bf16 %v96
  %v340 = vunpack.c.h.bf16 %v96
  %v341 = vunpack.c.l.bf16 %v97
  %v342 = vunpack.c.h.bf16 %v97
  %v343 = vunpack.c.l.bf16 %v98
  %v344 = vunpack.c.h.bf16 %v98
  %v345 = vunpack.c.l.bf16 %v99
  %v346 = vunpack.c.h.bf16 %v99
  %v347 = vunpack.c.l.bf16 %v100
  %v348 = vunpack.c.h.bf16 %v100
  %v349 = vunpack.c.l.bf16 %v101
  %v350 = vunpack.c.h.bf16 %v101
  %v351 = vunpack.c.l.bf16 %v102
  %v352 = vunpack.c.h.bf16 %v102
  %v353 = vunpack.c.l.bf16 %v103
  %v354 = vunpack.c.h.bf16 %v103
  %v355 = vunpack.c.l.bf16 %v104
  %v356 = vunpack.c.h.bf16 %v104
  %v357 = vunpack.c.l.bf16 %v105
  %v358 = vunpack.c.h.bf16 %v105
  %v359 = vunpack.c.l.bf16 %v106
  %v360 = vunpack.c.h.bf16 %v106
  %v361 = vunpack.c.l.bf16 %v107
  %v362 = vunpack.c.h.bf16 %v107
  %v363 = vunpack.c.l.bf16 %v108
  %v364 = vunpack.c.h.bf16 %v108
  %v365 = vunpack.c.l.bf16 %v109
  %v366 = vunpack.c.h.bf16 %v109
  %v367 = vunpack.c.l.bf16 %v110
  %v368 = vunpack.c.h.bf16 %v110
  %v369 = vunpack.c.l.bf16 %v111
  %v370 = vunpack.c.h.bf16 %v111
  %v371 = vunpack.c.l.bf16 %v112
  %v372 = vunpack.c.h.bf16 %v112
  %v373 = vunpack.c.l.bf16 %v113
  %v374 = vunpack.c.h.bf16 %v113
  %v375 = vunpack.c.l.bf16 %v114
  %v376 = vunpack.c.h.bf16 %v114
  %v377 = vunpack.c.l.bf16 %v115
  %v378 = vunpack.c.h.bf16 %v115
  %v379 = vunpack.c.l.bf16 %v116
  %v380 = vunpack.c.h.bf16 %v116
  %v381 = vunpack.c.l.bf16 %v117
  %v382 = vunpack.c.h.bf16 %v117
  %v383 = vunpack.c.l.bf16 %v118
  %v384 = vunpack.c.h.bf16 %v118
  %v385 = vunpack.c.l.bf16 %v119
  %v386 = vunpack.c.h.bf16 %v119
  %v387 = vunpack.c.l.bf16 %v120
  %v388 = vunpack.c.h.bf16 %v120
  %v389 = vunpack.c.l.bf16 %v121
  %v390 = vunpack.c.h.bf16 %v121
  %v391 = vunpack.c.l.bf16 %v122
  %v392 = vunpack.c.h.bf16 %v122
  %v393 = vunpack.c.l.bf16 %v123
  %v394 = vunpack.c.h.bf16 %v123
  %v395 = vunpack.c.l.bf16 %v124
  %v396 = vunpack.c.h.bf16 %v124
  %v397 = vunpack.c.l.bf16 %v125
  %v398 = vunpack.c.h.bf16 %v125
  %v399 = vunpack.c.l.bf16 %v126
  %v400 = vunpack.c.h.bf16 %v126
  %v401 = vunpack.c.l.bf16 %v127
  %v402 = vunpack.c.h.bf16 %v127
  %v403 = vunpack.c.l.bf16 %v128
  %v404 = vunpack.c.h.bf16 %v128
  %v405 = vunpack.c.l.bf16 %v129
  %v406 = vunpack.c.h.bf16 %v129
  %v407 = vunpack.c.l.bf16 %v130
  %v408 = vunpack.c.h.bf16 %v130
  %v409 = vunpack.c.l.bf16 %v131
  %v410 = vunpack.c.h.bf16 %v131
  %v411 = vunpack.c.l.bf16 %v132
  %v412 = vunpack.c.h.bf16 %v132
  %v413 = vunpack.c.l.bf16 %v133
  %v414 = vunpack.c.h.bf16 %v133
  %v415 = vunpack.c.l.bf16 %v134
  %v416 = vunpack.c.h.bf16 %v134
  %v417 = vunpack.c.l.bf16 %v135
  %v418 = vunpack.c.h.bf16 %v135
  %v419 = vunpack.c.l.bf16 %v136
  %v420 = vunpack.c.h.bf16 %v136
  %v421 = vunpack.c.l.bf16 %v137
  %v422 = vunpack.c.h.bf16 %v137
  %v423 = vunpack.c.l.bf16 %v138
  %v424 = vunpack.c.h.bf16 %v138
  %v425 = vunpack.c.l.bf16 %v139
  %v426 = vunpack.c.h.bf16 %v139
  %v427 = vunpack.c.l.bf16 %v140
  %v428 = vunpack.c.h.bf16 %v140
  %v429 = vunpack.c.l.bf16 %v141
  %v430 = vunpack.c.h.bf16 %v141
  %v431 = vunpack.c.l.bf16 %v142
  %v432 = vunpack.c.h.bf16 %v142
  %v433 = vunpack.c.l.bf16 %v143
  %v434 = vunpack.c.h.bf16 %v143
  %v435 = vunpack.c.l.bf16 %v144
  %v436 = vunpack.c.h.bf16 %v144
  %v437 = vunpack.c.l.bf16 %v145
  %v438 = vunpack.c.h.bf16 %v145
  %v439 = vunpack.c.l.bf16 %v146
  %v440 = vunpack.c.h.bf16 %v146
  %v441 = vunpack.c.l.bf16 %v147
  %v442 = vunpack.c.h.bf16 %v147
  %v443 = vunpack.c.l.bf16 %v148
  %v444 = vunpack.c.h.bf16 %v148
  %v445 = vunpack.c.l.bf16 %v149
  %v446 = vunpack.c.h.bf16 %v149
  %v447 = vunpack.c.l.bf16 %v150
  %v448 = vunpack.c.h.bf16 %v150
  %v449 = vunpack.c.l.bf16 %v151
  %v450 = vunpack.c.h.bf16 %v151
  %v451 = vunpack.c.l.bf16 %v152
  %v452 = vunpack.c.h.bf16 %v152
  %v453 = vunpack.c.l.bf16 %v153
  %v454 = vunpack.c.h.bf16 %v153
  %v455 = vunpack.c.l.bf16 %v154
  %v456 = vunpack.c.h.bf16 %v154
  %v457 = vunpack.c.l.bf16 %v155
  %v458 = vunpack.c.h.bf16 %v155
  %v459 = vunpack.c.l.bf16 %v156
  %v460 = vunpack.c.h.bf16 %v156
  %v461 = vunpack.c.l.bf16 %v157
  %v462 = vunpack.c.h.bf16 %v157
  %v463 = vunpack.c.l.bf16 %v158
  %v464 = vunpack.c.h.bf16 %v158
  %v465 = vunpack.c.l.bf16 %v159
  %v466 = vunpack.c.h.bf16 %v159
  %v467 = vunpack.c.l.bf16 %v160
  %v468 = vunpack.c.h.bf16 %v160
  %v469 = vunpack.c.l.bf16 %v161
  %v470 = vunpack.c.h.bf16 %v161
  %v471 = vunpack.c.l.bf16 %v162
  %v472 = vunpack.c.h.bf16 %v162
  %v473 = vunpack.c.l.bf16 %v163
  %v474 = vunpack.c.h.bf16 %v163
  %v475 = vunpack.c.l.bf16 %v164
  %v476 = vunpack.c.h.bf16 %v164
  %v477 = vunpack.c.l.bf16 %v165
  %v478 = vunpack.c.h.bf16 %v165
  %v479 = vunpack.c.l.bf16 %v166
  %v480 = vunpack.c.h.bf16 %v166
  %v481 = vunpack.c.l.bf16 %v167
  %v482 = vunpack.c.h.bf16 %v167
  %v483 = vunpack.c.l.bf16 %v168
  %v484 = vunpack.c.h.bf16 %v168
  %v485 = vunpack.c.l.bf16 %v169
  %v486 = vunpack.c.h.bf16 %v169
  %v487 = vunpack.c.l.bf16 %v170
  %v488 = vunpack.c.h.bf16 %v170
  %v489 = vunpack.c.l.bf16 %v171
  %v490 = vunpack.c.h.bf16 %v171
  %v491 = vunpack.c.l.bf16 %v172
  %v492 = vunpack.c.h.bf16 %v172
  %v493 = vunpack.c.l.bf16 %v173
  %v494 = vunpack.c.h.bf16 %v173
  %v495 = vunpack.c.l.bf16 %v174
  %v496 = vunpack.c.h.bf16 %v174
  %v497 = vunpack.c.l.bf16 %v175
  %v498 = vunpack.c.h.bf16 %v175
  %v499 = vunpack.c.l.bf16 %v176
  %v500 = vunpack.c.h.bf16 %v176
  %v501 = vunpack.c.l.bf16 %v177
  %v502 = vunpack.c.h.bf16 %v177
  %v503 = vunpack.c.l.bf16 %v178
  %v504 = vunpack.c.h.bf16 %v178
  %v505 = vunpack.c.l.bf16 %v179
  %v506 = vunpack.c.h.bf16 %v179
  %v507 = vunpack.c.l.bf16 %v180
  %v508 = vunpack.c.h.bf16 %v180
  %v509 = vunpack.c.l.bf16 %v181
  %v510 = vunpack.c.h.bf16 %v181
  %v511 = vunpack.c.l.bf16 %v182
  %v512 = vunpack.c.h.bf16 %v182
  %v513 = vunpack.c.l.bf16 %v183
  %v514 = vunpack.c.h.bf16 %v183
  %v515 = vunpack.c.l.bf16 %v184
  %v516 = vunpack.c.h.bf16 %v184
  %v517 = vunpack.c.l.bf16 %v185
  %v518 = vunpack.c.h.bf16 %v185
  %v519 = vunpack.c.l.bf16 %v186
  %v520 = vunpack.c.h.bf16 %v186
  %v521 = vunpack.c.l.bf16 %v187
  %v522 = vunpack.c.h.bf16 %v187
  %v523 = vunpack.c.l.bf16 %v188
  %v524 = vunpack.c.h.bf16 %v188
  %v525 = vunpack.c.l.bf16 %v189
  %v526 = vunpack.c.h.bf16 %v189
  %v527 = vunpack.c.l.bf16 %v190
  %v528 = vunpack.c.h.bf16 %v190
  %v529 = vunpack.c.l.bf16 %v191
  %v530 = vunpack.c.h.bf16 %v191
  %v531 = vunpack.c.l.bf16 %v192
  %v532 = vunpack.c.h.bf16 %v192
  %v533 = vunpack.c.l.bf16 %v193
  %v534 = vunpack.c.h.bf16 %v193
  %v535 = vunpack.c.l.bf16 %v194
  %v536 = vunpack.c.h.bf16 %v194
  %v537 = vunpack.c.l.bf16 %v195
  %v538 = vunpack.c.h.bf16 %v195
  %v539 = vunpack.c.l.bf16 %v196
  %v540 = vunpack.c.h.bf16 %v196
  %v541 = vunpack.c.l.bf16 %v197
  %v542 = vunpack.c.h.bf16 %v197
  %v543 = vunpack.c.l.bf16 %v198
  %v544 = vunpack.c.h.bf16 %v198
  %v545 = vunpack.c.l.bf16 %v199
  %v546 = vunpack.c.h.bf16 %v199
  %v547 = vunpack.c.l.bf16 %v200
  %v548 = vunpack.c.h.bf16 %v200
  %v549 = vunpack.c.l.bf16 %v201
  %v550 = vunpack.c.h.bf16 %v201
  %v551 = vunpack.c.l.bf16 %v202
  %v552 = vunpack.c.h.bf16 %v202
  %v553 = vunpack.c.l.bf16 %v203
  %v554 = vunpack.c.h.bf16 %v203
  %v555 = vunpack.c.l.bf16 %v204
  %v556 = vunpack.c.h.bf16 %v204
  %v557 = vunpack.c.l.bf16 %v205
  %v558 = vunpack.c.h.bf16 %v205
  %v559 = vunpack.c.l.bf16 %v206
  %v560 = vunpack.c.h.bf16 %v206
  %v561 = vunpack.c.l.bf16 %v207
  %v562 = vunpack.c.h.bf16 %v207
  %v563 = vunpack.c.l.bf16 %v208
  %v564 = vunpack.c.h.bf16 %v208
  %v565 = vunpack.c.l.bf16 %v209
  %v566 = vunpack.c.h.bf16 %v209
  %v567 = vunpack.c.l.bf16 %v210
  %v568 = vunpack.c.h.bf16 %v210
  %v569 = vunpack.c.l.bf16 %v211
  %v570 = vunpack.c.h.bf16 %v211
  %v571 = vunpack.c.l.bf16 %v212
  %v572 = vunpack.c.h.bf16 %v212
  %v573 = vunpack.c.l.bf16 %v213
  %v574 = vunpack.c.h.bf16 %v213
  %v575 = vunpack.c.l.bf16 %v214
  %v576 = vunpack.c.h.bf16 %v214
  %v577 = vunpack.c.l.bf16 %v215
  %v578 = vunpack.c.h.bf16 %v215
  %v579 = vunpack.c.l.bf16 %v216
  %v580 = vunpack.c.h.bf16 %v216
  %v581 = vunpack.c.l.bf16 %v217
  %v582 = vunpack.c.h.bf16 %v217
  %v583 = vunpack.c.l.bf16 %v218
  %v584 = vunpack.c.h.bf16 %v218
  %v585 = vunpack.c.l.bf16 %v219
  %v586 = vunpack.c.h.bf16 %v219
  %v587 = vunpack.c.l.bf16 %v220
  %v588 = vunpack.c.h.bf16 %v220
  %v589 = vunpack.c.l.bf16 %v221
  %v590 = vunpack.c.h.bf16 %v221
  %v591 = vunpack.c.l.bf16 %v222
  %v592 = vunpack.c.h.bf16 %v222
  %v593 = vunpack.c.l.bf16 %v223
  %v594 = vunpack.c.h.bf16 %v223
  %v595 = vunpack.c.l.bf16 %v224
  %v596 = vunpack.c.h.bf16 %v224
  %v597 = vunpack.c.l.bf16 %v225
  %v598 = vunpack.c.h.bf16 %v225
  %v599 = vunpack.c.l.bf16 %v226
  %v600 = vunpack.c.h.bf16 %v226
  %v601 = vunpack.c.l.bf16 %v227
  %v602 = vunpack.c.h.bf16 %v227
  %v603 = vunpack.c.l.bf16 %v228
  %v604 = vunpack.c.h.bf16 %v228
  %v605 = vunpack.c.l.bf16 %v229
  %v606 = vunpack.c.h.bf16 %v229
  %v607 = vunpack.c.l.bf16 %v230
  %v608 = vunpack.c.h.bf16 %v230
  %v609 = vunpack.c.l.bf16 %v231
  %v610 = vunpack.c.h.bf16 %v231
  %v611 = vunpack.c.l.bf16 %v232
  %v612 = vunpack.c.h.bf16 %v232
  %v613 = vunpack.c.l.bf16 %v233
  %v614 = vunpack.c.h.bf16 %v233
  %v615 = vunpack.c.l.bf16 %v234
  %v616 = vunpack.c.h.bf16 %v234
  %v617 = vunpack.c.l.bf16 %v235
  %v618 = vunpack.c.h.bf16 %v235
  %v619 = vunpack.c.l.bf16 %v236
  %v620 = vunpack.c.h.bf16 %v236
  %v621 = vunpack.c.l.bf16 %v237
  %v622 = vunpack.c.h.bf16 %v237
  %v623 = vunpack.c.l.bf16 %v238
  %v624 = vunpack.c.h.bf16 %v238
  %v625 = vunpack.c.l.bf16 %v239
  %v626 = vunpack.c.h.bf16 %v239
  %v627 = vunpack.c.l.bf16 %v240
  %v628 = vunpack.c.h.bf16 %v240
  %v629 = vunpack.c.l.bf16 %v241
  %v630 = vunpack.c.h.bf16 %v241
  %v631 = vunpack.c.l.bf16 %v242
  %v632 = vunpack.c.h.bf16 %v242
  %v633 = vunpack.c.l.bf16 %v243
  %v634 = vunpack.c.h.bf16 %v243
  %v635 = vunpack.c.l.bf16 %v244
  %v636 = vunpack.c.h.bf16 %v244
  %v637 = vunpack.c.l.bf16 %v245
  %v638 = vunpack.c.h.bf16 %v245
  %v639 = vunpack.c.l.bf16 %v246
  %v640 = vunpack.c.h.bf16 %v246
  %v641 = vunpack.c.l.bf16 %v247
  %v642 = vunpack.c.h.bf16 %v247
  %v643 = vunpack.c.l.bf16 %v248
  %v644 = vunpack.c.h.bf16 %v248
  %v645 = vunpack.c.l.bf16 %v249
  %v646 = vunpack.c.h.bf16 %v249
  %v647 = vunpack.c.l.bf16 %v250
  %v648 = vunpack.c.h.bf16 %v250
  %v649 = vunpack.c.l.bf16 %v251
  %v650 = vunpack.c.h.bf16 %v251
  %v651 = vunpack.c.l.bf16 %v252
  %v652 = vunpack.c.h.bf16 %v252
  %v653 = vunpack.c.l.bf16 %v253
  %v654 = vunpack.c.h.bf16 %v253
  %v655 = vunpack.c.l.bf16 %v254
  %v656 = vunpack.c.h.bf16 %v254
  %v657 = vunpack.c.l.bf16 %v255
  %v658 = vunpack.c.h.bf16 %v255
  %v659 = vunpack.c.l.bf16 %v256
  %v660 = vunpack.c.h.bf16 %v256
  %v661 = vunpack.c.l.bf16 %v257
  %v662 = vunpack.c.h.bf16 %v257
  %v663 = vunpack.c.l.bf16 %v258
  %v664 = vunpack.c.h.bf16 %v258
  %v665 = vunpack.c.l.bf16 %v259
  %v666 = vunpack.c.h.bf16 %v259
  %v667 = vunpack.c.l.bf16 %v260
  %v668 = vunpack.c.h.bf16 %v260
  %v669 = vunpack.c.l.bf16 %v261
  %v670 = vunpack.c.h.bf16 %v261
  %v671 = vunpack.c.l.bf16 %v262
  %v672 = vunpack.c.h.bf16 %v262
  %v673 = vunpack.c.l.bf16 %v263
  %v674 = vunpack.c.h.bf16 %v263
  %v675 = vunpack.c.l.bf16 %v264
  %v676 = vunpack.c.h.bf16 %v264
  %v677 = vunpack.c.l.bf16 %v265
  %v678 = vunpack.c.h.bf16 %v265
  %v679 = vunpack.c.l.bf16 %v266
  %v680 = vunpack.c.h.bf16 %v266
  %v681 = vunpack.c.l.bf16 %v267
  %v682 = vunpack.c.h.bf16 %v267
  %v683 = vunpack.c.l.bf16 %v268
  %v684 = vunpack.c.h.bf16 %v268
  %v685 = vunpack.c.l.bf16 %v269
  %v686 = vunpack.c.h.bf16 %v269
  %v687 = vunpack.c.l.bf16 %v270
  %v688 = vunpack.c.h.bf16 %v270
  %v689 = vunpack.c.l.bf16 %v271
  %v690 = vunpack.c.h.bf16 %v271
  %v691 = vunpack.c.l.bf16 %v272
  %v692 = vunpack.c.h.bf16 %v272
  %v693 = vunpack.c.l.bf16 %v273
  %v694 = vunpack.c.h.bf16 %v273
  %v695 = vunpack.c.l.bf16 %v274
  %v696 = vunpack.c.h.bf16 %v274
  %v697 = vunpack.c.l.bf16 %v275
  %v698 = vunpack.c.h.bf16 %v275
  %v699 = vunpack.c.l.bf16 %v276
  %v700 = vunpack.c.h.bf16 %v276
  %v701 = vunpack.c.l.bf16 %v277
  %v702 = vunpack.c.h.bf16 %v277
  %v703 = vunpack.c.l.bf16 %v278
  %v704 = vunpack.c.h.bf16 %v278
  %v705 = vunpack.c.l.bf16 %v279
  %v706 = vunpack.c.h.bf16 %v279
  %v707 = vunpack.c.l.bf16 %v280
  %v708 = vunpack.c.h.bf16 %v280
  %v709 = vunpack.c.l.bf16 %v281
  %v710 = vunpack.c.h.bf16 %v281
  %v711 = vunpack.c.l.bf16 %v282
  %v712 = vunpack.c.h.bf16 %v282
  %v713 = vunpack.c.l.bf16 %v283
  %v714 = vunpack.c.h.bf16 %v283
  %v715 = vunpack.c.l.bf16 %v284
  %v716 = vunpack.c.h.bf16 %v284
  %v717 = vunpack.c.l.bf16 %v285
  %v718 = vunpack.c.h.bf16 %v285
  %v719 = vunpack.c.l.bf16 %v286
  %v720 = vunpack.c.h.bf16 %v286
  %v721 = vunpack.c.l.bf16 %v287
  %v722 = vunpack.c.h.bf16 %v287
  %v723 = vunpack.c.l.bf16 %v288
  %v724 = vunpack.c.h.bf16 %v288
  %v725 = vunpack.c.l.bf16 %v289
  %v726 = vunpack.c.h.bf16 %v289
  %v727 = vunpack.c.l.bf16 %v290
  %v728 = vunpack.c.h.bf16 %v290
  %v729 = vunpack.c.l.bf16 %v291
  %v730 = vunpack.c.h.bf16 %v291
  %v731 = vunpack.c.l.bf16 %v292
  %v732 = vunpack.c.h.bf16 %v292
  %v735 = vperm.slane %v57, 0
  %v736 = vperm.slane %v57, 1
  %v737 = vperm.slane %v57, 2
  %v738 = vperm.slane %v57, 3
  %v739 = vperm.slane %v57, 4
  %v740 = vperm.slane %v57, 5
  %v741 = vperm.slane %v57, 6
  %v742 = vperm.slane %v57, 7
  %v743 = vperm.slane %v72, 0
  %v744 = vperm.slane %v72, 1
  %v755 = vmul.f32 %v293, %v735
  %v756 = vmul.f32 %v294, %v736
  %v757 = vmul.f32 %v295, %v737
  %v758 = vmul.f32 %v296, %v738
  %v759 = vmul.f32 %v297, %v739
  %v760 = vmul.f32 %v298, %v740
  %v761 = vmul.f32 %v299, %v741
  %v762 = vmul.f32 %v300, %v742
  %v763 = vmul.f32 %v301, %v743
  %v764 = vmul.f32 %v302, %v744
  %v765 = vmul.f32 %v303, %v735
  %v766 = vmul.f32 %v304, %v736
  %v767 = vmul.f32 %v305, %v737
  %v768 = vmul.f32 %v306, %v738
  %v769 = vmul.f32 %v307, %v739
  %v770 = vmul.f32 %v308, %v740
  %v771 = vmul.f32 %v309, %v741
  %v772 = vmul.f32 %v310, %v742
  %v773 = vmul.f32 %v311, %v743
  %v774 = vmul.f32 %v312, %v744
  %v775 = vmul.f32 %v313, %v735
  %v776 = vmul.f32 %v314, %v736
  %v777 = vmul.f32 %v315, %v737
  %v778 = vmul.f32 %v316, %v738
  %v779 = vmul.f32 %v317, %v739
  %v780 = vmul.f32 %v318, %v740
  %v781 = vmul.f32 %v319, %v741
  %v782 = vmul.f32 %v320, %v742
  %v783 = vmul.f32 %v321, %v743
  %v784 = vmul.f32 %v322, %v744
  %v785 = vmul.f32 %v323, %v735
  %v786 = vmul.f32 %v324, %v736
  %v787 = vmul.f32 %v325, %v737
  %v788 = vmul.f32 %v326, %v738
  %v789 = vmul.f32 %v327, %v739
  %v790 = vmul.f32 %v328, %v740
  %v791 = vmul.f32 %v329, %v741
  %v792 = vmul.f32 %v330, %v742
  %v793 = vmul.f32 %v331, %v743
  %v794 = vmul.f32 %v332, %v744
  %v795 = vmul.f32 %v333, %v735
  %v796 = vmul.f32 %v334, %v736
  %v797 = vmul.f32 %v335, %v737
  %v798 = vmul.f32 %v336, %v738
  %v799 = vmul.f32 %v337, %v739
  %v800 = vmul.f32 %v338, %v740
  %v801 = vmul.f32 %v339, %v741
  %v802 = vmul.f32 %v340, %v742
  %v803 = vmul.f32 %v341, %v743
  %v804 = vmul.f32 %v342, %v744
  %v805 = vmul.f32 %v343, %v735
  %v806 = vmul.f32 %v344, %v736
  %v807 = vmul.f32 %v345, %v737
  %v808 = vmul.f32 %v346, %v738
  %v809 = vmul.f32 %v347, %v739
  %v810 = vmul.f32 %v348, %v740
  %v811 = vmul.f32 %v349, %v741
  %v812 = vmul.f32 %v350, %v742
  %v813 = vmul.f32 %v351, %v743
  %v814 = vmul.f32 %v352, %v744
  %v815 = vmul.f32 %v353, %v735
  %v816 = vmul.f32 %v354, %v736
  %v817 = vmul.f32 %v355, %v737
  %v818 = vmul.f32 %v356, %v738
  %v819 = vmul.f32 %v357, %v739
  %v820 = vmul.f32 %v358, %v740
  %v821 = vmul.f32 %v359, %v741
  %v822 = vmul.f32 %v360, %v742
  %v823 = vmul.f32 %v361, %v743
  %v824 = vmul.f32 %v362, %v744
  %v825 = vmul.f32 %v363, %v735
  %v826 = vmul.f32 %v364, %v736
  %v827 = vmul.f32 %v365, %v737
  %v828 = vmul.f32 %v366, %v738
  %v829 = vmul.f32 %v367, %v739
  %v830 = vmul.f32 %v368, %v740
  %v831 = vmul.f32 %v369, %v741
  %v832 = vmul.f32 %v370, %v742
  %v833 = vmul.f32 %v371, %v743
  %v834 = vmul.f32 %v372, %v744
  %v835 = vmul.f32 %v373, %v735
  %v836 = vmul.f32 %v374, %v736
  %v837 = vmul.f32 %v375, %v737
  %v838 = vmul.f32 %v376, %v738
  %v839 = vmul.f32 %v377, %v739
  %v840 = vmul.f32 %v378, %v740
  %v841 = vmul.f32 %v379, %v741
  %v842 = vmul.f32 %v380, %v742
  %v843 = vmul.f32 %v381, %v743
  %v844 = vmul.f32 %v382, %v744
  %v845 = vmul.f32 %v383, %v735
  %v846 = vmul.f32 %v384, %v736
  %v847 = vmul.f32 %v385, %v737
  %v848 = vmul.f32 %v386, %v738
  %v849 = vmul.f32 %v387, %v739
  %v850 = vmul.f32 %v388, %v740
  %v851 = vmul.f32 %v389, %v741
  %v852 = vmul.f32 %v390, %v742
  %v853 = vmul.f32 %v391, %v743
  %v854 = vmul.f32 %v392, %v744
  %v855 = vmul.f32 %v393, %v735
  %v856 = vmul.f32 %v394, %v736
  %v857 = vmul.f32 %v395, %v737
  %v858 = vmul.f32 %v396, %v738
  %v859 = vmul.f32 %v397, %v739
  %v860 = vmul.f32 %v398, %v740
  %v861 = vmul.f32 %v399, %v741
  %v862 = vmul.f32 %v400, %v742
  %v863 = vmul.f32 %v401, %v743
  %v864 = vmul.f32 %v402, %v744
  %v865 = vmul.f32 %v403, %v735
  %v866 = vmul.f32 %v404, %v736
  %v867 = vmul.f32 %v405, %v737
  %v868 = vmul.f32 %v406, %v738
  %v869 = vmul.f32 %v407, %v739
  %v870 = vmul.f32 %v408, %v740
  %v871 = vmul.f32 %v409, %v741
  %v872 = vmul.f32 %v410, %v742
  %v873 = vmul.f32 %v411, %v743
  %v874 = vmul.f32 %v412, %v744
  %v875 = vmul.f32 %v413, %v735
  %v876 = vmul.f32 %v414, %v736
  %v877 = vmul.f32 %v415, %v737
  %v878 = vmul.f32 %v416, %v738
  %v879 = vmul.f32 %v417, %v739
  %v880 = vmul.f32 %v418, %v740
  %v881 = vmul.f32 %v419, %v741
  %v882 = vmul.f32 %v420, %v742
  %v883 = vmul.f32 %v421, %v743
  %v884 = vmul.f32 %v422, %v744
  %v885 = vmul.f32 %v423, %v735
  %v886 = vmul.f32 %v424, %v736
  %v887 = vmul.f32 %v425, %v737
  %v888 = vmul.f32 %v426, %v738
  %v889 = vmul.f32 %v427, %v739
  %v890 = vmul.f32 %v428, %v740
  %v891 = vmul.f32 %v429, %v741
  %v892 = vmul.f32 %v430, %v742
  %v893 = vmul.f32 %v431, %v743
  %v894 = vmul.f32 %v432, %v744
  %v895 = vmul.f32 %v433, %v735
  %v896 = vmul.f32 %v434, %v736
  %v897 = vmul.f32 %v435, %v737
  %v898 = vmul.f32 %v436, %v738
  %v899 = vmul.f32 %v437, %v739
  %v900 = vmul.f32 %v438, %v740
  %v901 = vmul.f32 %v439, %v741
  %v902 = vmul.f32 %v440, %v742
  %v903 = vmul.f32 %v441, %v743
  %v904 = vmul.f32 %v442, %v744
  %v905 = vmul.f32 %v443, %v735
  %v906 = vmul.f32 %v444, %v736
  %v907 = vmul.f32 %v445, %v737
  %v908 = vmul.f32 %v446, %v738
  %v909 = vmul.f32 %v447, %v739
  %v910 = vmul.f32 %v448, %v740
  %v911 = vmul.f32 %v449, %v741
  %v912 = vmul.f32 %v450, %v742
  %v913 = vmul.f32 %v451, %v743
  %v914 = vmul.f32 %v452, %v744
  %v915 = vmul.f32 %v453, %v735
  %v916 = vmul.f32 %v454, %v736
  %v917 = vmul.f32 %v455, %v737
  %v918 = vmul.f32 %v456, %v738
  %v919 = vmul.f32 %v457, %v739
  %v920 = vmul.f32 %v458, %v740
  %v921 = vmul.f32 %v459, %v741
  %v922 = vmul.f32 %v460, %v742
  %v923 = vmul.f32 %v461, %v743
  %v924 = vmul.f32 %v462, %v744
  %v925 = vmul.f32 %v463, %v735
  %v926 = vmul.f32 %v464, %v736
  %v927 = vmul.f32 %v465, %v737
  %v928 = vmul.f32 %v466, %v738
  %v929 = vmul.f32 %v467, %v739
  %v930 = vmul.f32 %v468, %v740
  %v931 = vmul.f32 %v469, %v741
  %v932 = vmul.f32 %v470, %v742
  %v933 = vmul.f32 %v471, %v743
  %v934 = vmul.f32 %v472, %v744
  %v935 = vmul.f32 %v473, %v735
  %v936 = vmul.f32 %v474, %v736
  %v937 = vmul.f32 %v475, %v737
  %v938 = vmul.f32 %v476, %v738
  %v939 = vmul.f32 %v477, %v739
  %v940 = vmul.f32 %v478, %v740
  %v941 = vmul.f32 %v479, %v741
  %v942 = vmul.f32 %v480, %v742
  %v943 = vmul.f32 %v481, %v743
  %v944 = vmul.f32 %v482, %v744
  %v945 = vmul.f32 %v483, %v735
  %v946 = vmul.f32 %v484, %v736
  %v947 = vmul.f32 %v485, %v737
  %v948 = vmul.f32 %v486, %v738
  %v949 = vmul.f32 %v487, %v739
  %v950 = vmul.f32 %v488, %v740
  %v951 = vmul.f32 %v489, %v741
  %v952 = vmul.f32 %v490, %v742
  %v953 = vmul.f32 %v491, %v743
  %v954 = vmul.f32 %v492, %v744
  %v955 = vmul.f32 %v493, %v735
  %v956 = vmul.f32 %v494, %v736
  %v957 = vmul.f32 %v495, %v737
  %v958 = vmul.f32 %v496, %v738
  %v959 = vmul.f32 %v497, %v739
  %v960 = vmul.f32 %v498, %v740
  %v961 = vmul.f32 %v499, %v741
  %v962 = vmul.f32 %v500, %v742
  %v963 = vmul.f32 %v501, %v743
  %v964 = vmul.f32 %v502, %v744
  %v965 = vmul.f32 %v503, %v735
  %v966 = vmul.f32 %v504, %v736
  %v967 = vmul.f32 %v505, %v737
  %v968 = vmul.f32 %v506, %v738
  %v969 = vmul.f32 %v507, %v739
  %v970 = vmul.f32 %v508, %v740
  %v971 = vmul.f32 %v509, %v741
  %v972 = vmul.f32 %v510, %v742
  %v973 = vmul.f32 %v511, %v743
  %v974 = vmul.f32 %v512, %v744
  %v975 = vmul.f32 %v513, %v735
  %v976 = vmul.f32 %v514, %v736
  %v977 = vmul.f32 %v515, %v737
  %v978 = vmul.f32 %v516, %v738
  %v979 = vmul.f32 %v517, %v739
  %v980 = vmul.f32 %v518, %v740
  %v981 = vmul.f32 %v519, %v741
  %v982 = vmul.f32 %v520, %v742
  %v983 = vmul.f32 %v521, %v743
  %v984 = vmul.f32 %v522, %v744
  %v985 = vmul.f32 %v523, %v735
  %v986 = vmul.f32 %v524, %v736
  %v987 = vmul.f32 %v525, %v737
  %v988 = vmul.f32 %v526, %v738
  %v989 = vmul.f32 %v527, %v739
  %v990 = vmul.f32 %v528, %v740
  %v991 = vmul.f32 %v529, %v741
  %v992 = vmul.f32 %v530, %v742
  %v993 = vmul.f32 %v531, %v743
  %v994 = vmul.f32 %v532, %v744
  %v995 = vmul.f32 %v533, %v735
  %v996 = vmul.f32 %v534, %v736
  %v997 = vmul.f32 %v535, %v737
  %v998 = vmul.f32 %v536, %v738
  %v999 = vmul.f32 %v537, %v739
  %v1000 = vmul.f32 %v538, %v740
  %v1001 = vmul.f32 %v539, %v741
  %v1002 = vmul.f32 %v540, %v742
  %v1003 = vmul.f32 %v541, %v743
  %v1004 = vmul.f32 %v542, %v744
  %v1005 = vmul.f32 %v543, %v735
  %v1006 = vmul.f32 %v544, %v736
  %v1007 = vmul.f32 %v545, %v737
  %v1008 = vmul.f32 %v546, %v738
  %v1009 = vmul.f32 %v547, %v739
  %v1010 = vmul.f32 %v548, %v740
  %v1011 = vmul.f32 %v549, %v741
  %v1012 = vmul.f32 %v550, %v742
  %v1013 = vmul.f32 %v551, %v743
  %v1014 = vmul.f32 %v552, %v744
  %v1015 = vmul.f32 %v553, %v735
  %v1016 = vmul.f32 %v554, %v736
  %v1017 = vmul.f32 %v555, %v737
  %v1018 = vmul.f32 %v556, %v738
  %v1019 = vmul.f32 %v557, %v739
  %v1020 = vmul.f32 %v558, %v740
  %v1021 = vmul.f32 %v559, %v741
  %v1022 = vmul.f32 %v560, %v742
  %v1023 = vmul.f32 %v561, %v743
  %v1024 = vmul.f32 %v562, %v744
  %v1025 = vmul.f32 %v563, %v735
  %v1026 = vmul.f32 %v564, %v736
  %v1027 = vmul.f32 %v565, %v737
  %v1028 = vmul.f32 %v566, %v738
  %v1029 = vmul.f32 %v567, %v739
  %v1030 = vmul.f32 %v568, %v740
  %v1031 = vmul.f32 %v569, %v741
  %v1032 = vmul.f32 %v570, %v742
  %v1033 = vmul.f32 %v571, %v743
  %v1034 = vmul.f32 %v572, %v744
  %v1035 = vmul.f32 %v573, %v735
  %v1036 = vmul.f32 %v574, %v736
  %v1037 = vmul.f32 %v575, %v737
  %v1038 = vmul.f32 %v576, %v738
  %v1039 = vmul.f32 %v577, %v739
  %v1040 = vmul.f32 %v578, %v740
  %v1041 = vmul.f32 %v579, %v741
  %v1042 = vmul.f32 %v580, %v742
  %v1043 = vmul.f32 %v581, %v743
  %v1044 = vmul.f32 %v582, %v744
  %v1045 = vmul.f32 %v583, %v735
  %v1046 = vmul.f32 %v584, %v736
  %v1047 = vmul.f32 %v585, %v737
  %v1048 = vmul.f32 %v586, %v738
  %v1049 = vmul.f32 %v587, %v739
  %v1050 = vmul.f32 %v588, %v740
  %v1051 = vmul.f32 %v589, %v741
  %v1052 = vmul.f32 %v590, %v742
  %v1053 = vmul.f32 %v591, %v743
  %v1054 = vmul.f32 %v592, %v744
  %v1055 = vmul.f32 %v593, %v735
  %v1056 = vmul.f32 %v594, %v736
  %v1057 = vmul.f32 %v595, %v737
  %v1058 = vmul.f32 %v596, %v738
  %v1059 = vmul.f32 %v597, %v739
  %v1060 = vmul.f32 %v598, %v740
  %v1061 = vmul.f32 %v599, %v741
  %v1062 = vmul.f32 %v600, %v742
  %v1063 = vmul.f32 %v601, %v743
  %v1064 = vmul.f32 %v602, %v744
  %v1065 = vmul.f32 %v603, %v735
  %v1066 = vmul.f32 %v604, %v736
  %v1067 = vmul.f32 %v605, %v737
  %v1068 = vmul.f32 %v606, %v738
  %v1069 = vmul.f32 %v607, %v739
  %v1070 = vmul.f32 %v608, %v740
  %v1071 = vmul.f32 %v609, %v741
  %v1072 = vmul.f32 %v610, %v742
  %v1073 = vmul.f32 %v611, %v743
  %v1074 = vmul.f32 %v612, %v744
  %v1075 = vmul.f32 %v613, %v735
  %v1076 = vmul.f32 %v614, %v736
  %v1077 = vmul.f32 %v615, %v737
  %v1078 = vmul.f32 %v616, %v738
  %v1079 = vmul.f32 %v617, %v739
  %v1080 = vmul.f32 %v618, %v740
  %v1081 = vmul.f32 %v619, %v741
  %v1082 = vmul.f32 %v620, %v742
  %v1083 = vmul.f32 %v621, %v743
  %v1084 = vmul.f32 %v622, %v744
  %v1085 = vmul.f32 %v623, %v735
  %v1086 = vmul.f32 %v624, %v736
  %v1087 = vmul.f32 %v625, %v737
  %v1088 = vmul.f32 %v626, %v738
  %v1089 = vmul.f32 %v627, %v739
  %v1090 = vmul.f32 %v628, %v740
  %v1091 = vmul.f32 %v629, %v741
  %v1092 = vmul.f32 %v630, %v742
  %v1093 = vmul.f32 %v631, %v743
  %v1094 = vmul.f32 %v632, %v744
  %v1095 = vmul.f32 %v633, %v735
  %v1096 = vmul.f32 %v634, %v736
  %v1097 = vmul.f32 %v635, %v737
  %v1098 = vmul.f32 %v636, %v738
  %v1099 = vmul.f32 %v637, %v739
  %v1100 = vmul.f32 %v638, %v740
  %v1101 = vmul.f32 %v639, %v741
  %v1102 = vmul.f32 %v640, %v742
  %v1103 = vmul.f32 %v641, %v743
  %v1104 = vmul.f32 %v642, %v744
  %v1105 = vmul.f32 %v643, %v735
  %v1106 = vmul.f32 %v644, %v736
  %v1107 = vmul.f32 %v645, %v737
  %v1108 = vmul.f32 %v646, %v738
  %v1109 = vmul.f32 %v647, %v739
  %v1110 = vmul.f32 %v648, %v740
  %v1111 = vmul.f32 %v649, %v741
  %v1112 = vmul.f32 %v650, %v742
  %v1113 = vmul.f32 %v651, %v743
  %v1114 = vmul.f32 %v652, %v744
  %v1115 = vmul.f32 %v653, %v735
  %v1116 = vmul.f32 %v654, %v736
  %v1117 = vmul.f32 %v655, %v737
  %v1118 = vmul.f32 %v656, %v738
  %v1119 = vmul.f32 %v657, %v739
  %v1120 = vmul.f32 %v658, %v740
  %v1121 = vmul.f32 %v659, %v741
  %v1122 = vmul.f32 %v660, %v742
  %v1123 = vmul.f32 %v661, %v743
  %v1124 = vmul.f32 %v662, %v744
  %v1125 = vmul.f32 %v663, %v735
  %v1126 = vmul.f32 %v664, %v736
  %v1127 = vmul.f32 %v665, %v737
  %v1128 = vmul.f32 %v666, %v738
  %v1129 = vmul.f32 %v667, %v739
  %v1130 = vmul.f32 %v668, %v740
  %v1131 = vmul.f32 %v669, %v741
  %v1132 = vmul.f32 %v670, %v742
  %v1133 = vmul.f32 %v671, %v743
  %v1134 = vmul.f32 %v672, %v744
  %v1135 = vmul.f32 %v673, %v735
  %v1136 = vmul.f32 %v674, %v736
  %v1137 = vmul.f32 %v675, %v737
  %v1138 = vmul.f32 %v676, %v738
  %v1139 = vmul.f32 %v677, %v739
  %v1140 = vmul.f32 %v678, %v740
  %v1141 = vmul.f32 %v679, %v741
  %v1142 = vmul.f32 %v680, %v742
  %v1143 = vmul.f32 %v681, %v743
  %v1144 = vmul.f32 %v682, %v744
  %v1145 = vmul.f32 %v683, %v735
  %v1146 = vmul.f32 %v684, %v736
  %v1147 = vmul.f32 %v685, %v737
  %v1148 = vmul.f32 %v686, %v738
  %v1149 = vmul.f32 %v687, %v739
  %v1150 = vmul.f32 %v688, %v740
  %v1151 = vmul.f32 %v689, %v741
  %v1152 = vmul.f32 %v690, %v742
  %v1153 = vmul.f32 %v691, %v743
  %v1154 = vmul.f32 %v692, %v744
  %v1155 = vmul.f32 %v693, %v735
  %v1156 = vmul.f32 %v694, %v736
  %v1157 = vmul.f32 %v695, %v737
  %v1158 = vmul.f32 %v696, %v738
  %v1159 = vmul.f32 %v697, %v739
  %v1160 = vmul.f32 %v698, %v740
  %v1161 = vmul.f32 %v699, %v741
  %v1162 = vmul.f32 %v700, %v742
  %v1163 = vmul.f32 %v701, %v743
  %v1164 = vmul.f32 %v702, %v744
  %v1165 = vmul.f32 %v703, %v735
  %v1166 = vmul.f32 %v704, %v736
  %v1167 = vmul.f32 %v705, %v737
  %v1168 = vmul.f32 %v706, %v738
  %v1169 = vmul.f32 %v707, %v739
  %v1170 = vmul.f32 %v708, %v740
  %v1171 = vmul.f32 %v709, %v741
  %v1172 = vmul.f32 %v710, %v742
  %v1173 = vmul.f32 %v711, %v743
  %v1174 = vmul.f32 %v712, %v744
  %v1175 = vmul.f32 %v713, %v735
  %v1176 = vmul.f32 %v714, %v736
  %v1177 = vmul.f32 %v715, %v737
  %v1178 = vmul.f32 %v716, %v738
  %v1179 = vmul.f32 %v717, %v739
  %v1180 = vmul.f32 %v718, %v740
  %v1181 = vmul.f32 %v719, %v741
  %v1182 = vmul.f32 %v720, %v742
  %v1183 = vmul.f32 %v721, %v743
  %v1184 = vmul.f32 %v722, %v744
  %v1185 = vmul.f32 %v723, %v735
  %v1186 = vmul.f32 %v724, %v736
  %v1187 = vmul.f32 %v725, %v737
  %v1188 = vmul.f32 %v726, %v738
  %v1189 = vmul.f32 %v727, %v739
  %v1190 = vmul.f32 %v728, %v740
  %v1191 = vmul.f32 %v729, %v741
  %v1192 = vmul.f32 %v730, %v742
  %v1193 = vmul.f32 %v731, %v743
  %v1194 = vmul.f32 %v732, %v744
  %v1195 = vpack.c.bf16 %v765, %v755
  %v1196 = vpack.c.bf16 %v766, %v756
  %v1197 = vpack.c.bf16 %v767, %v757
  %v1198 = vpack.c.bf16 %v768, %v758
  %v1199 = vpack.c.bf16 %v769, %v759
  %v1200 = vpack.c.bf16 %v770, %v760
  %v1201 = vpack.c.bf16 %v771, %v761
  %v1202 = vpack.c.bf16 %v772, %v762
  %v1203 = vpack.c.bf16 %v773, %v763
  %v1204 = vpack.c.bf16 %v774, %v764
  %v1205 = vpack.c.bf16 %v785, %v775
  %v1206 = vpack.c.bf16 %v786, %v776
  %v1207 = vpack.c.bf16 %v787, %v777
  %v1208 = vpack.c.bf16 %v788, %v778
  %v1209 = vpack.c.bf16 %v789, %v779
  %v1210 = vpack.c.bf16 %v790, %v780
  %v1211 = vpack.c.bf16 %v791, %v781
  %v1212 = vpack.c.bf16 %v792, %v782
  %v1213 = vpack.c.bf16 %v793, %v783
  %v1214 = vpack.c.bf16 %v794, %v784
  %v1215 = vpack.c.bf16 %v805, %v795
  %v1216 = vpack.c.bf16 %v806, %v796
  %v1217 = vpack.c.bf16 %v807, %v797
  %v1218 = vpack.c.bf16 %v808, %v798
  %v1219 = vpack.c.bf16 %v809, %v799
  %v1220 = vpack.c.bf16 %v810, %v800
  %v1221 = vpack.c.bf16 %v811, %v801
  %v1222 = vpack.c.bf16 %v812, %v802
  %v1223 = vpack.c.bf16 %v813, %v803
  %v1224 = vpack.c.bf16 %v814, %v804
  %v1225 = vpack.c.bf16 %v825, %v815
  %v1226 = vpack.c.bf16 %v826, %v816
  %v1227 = vpack.c.bf16 %v827, %v817
  %v1228 = vpack.c.bf16 %v828, %v818
  %v1229 = vpack.c.bf16 %v829, %v819
  %v1230 = vpack.c.bf16 %v830, %v820
  %v1231 = vpack.c.bf16 %v831, %v821
  %v1232 = vpack.c.bf16 %v832, %v822
  %v1233 = vpack.c.bf16 %v833, %v823
  %v1234 = vpack.c.bf16 %v834, %v824
  %v1235 = vpack.c.bf16 %v845, %v835
  %v1236 = vpack.c.bf16 %v846, %v836
  %v1237 = vpack.c.bf16 %v847, %v837
  %v1238 = vpack.c.bf16 %v848, %v838
  %v1239 = vpack.c.bf16 %v849, %v839
  %v1240 = vpack.c.bf16 %v850, %v840
  %v1241 = vpack.c.bf16 %v851, %v841
  %v1242 = vpack.c.bf16 %v852, %v842
  %v1243 = vpack.c.bf16 %v853, %v843
  %v1244 = vpack.c.bf16 %v854, %v844
  %v1245 = vpack.c.bf16 %v865, %v855
  %v1246 = vpack.c.bf16 %v866, %v856
  %v1247 = vpack.c.bf16 %v867, %v857
  %v1248 = vpack.c.bf16 %v868, %v858
  %v1249 = vpack.c.bf16 %v869, %v859
  %v1250 = vpack.c.bf16 %v870, %v860
  %v1251 = vpack.c.bf16 %v871, %v861
  %v1252 = vpack.c.bf16 %v872, %v862
  %v1253 = vpack.c.bf16 %v873, %v863
  %v1254 = vpack.c.bf16 %v874, %v864
  %v1255 = vpack.c.bf16 %v885, %v875
  %v1256 = vpack.c.bf16 %v886, %v876
  %v1257 = vpack.c.bf16 %v887, %v877
  %v1258 = vpack.c.bf16 %v888, %v878
  %v1259 = vpack.c.bf16 %v889, %v879
  %v1260 = vpack.c.bf16 %v890, %v880
  %v1261 = vpack.c.bf16 %v891, %v881
  %v1262 = vpack.c.bf16 %v892, %v882
  %v1263 = vpack.c.bf16 %v893, %v883
  %v1264 = vpack.c.bf16 %v894, %v884
  %v1265 = vpack.c.bf16 %v905, %v895
  %v1266 = vpack.c.bf16 %v906, %v896
  %v1267 = vpack.c.bf16 %v907, %v897
  %v1268 = vpack.c.bf16 %v908, %v898
  %v1269 = vpack.c.bf16 %v909, %v899
  %v1270 = vpack.c.bf16 %v910, %v900
  %v1271 = vpack.c.bf16 %v911, %v901
  %v1272 = vpack.c.bf16 %v912, %v902
  %v1273 = vpack.c.bf16 %v913, %v903
  %v1274 = vpack.c.bf16 %v914, %v904
  %v1275 = vpack.c.bf16 %v925, %v915
  %v1276 = vpack.c.bf16 %v926, %v916
  %v1277 = vpack.c.bf16 %v927, %v917
  %v1278 = vpack.c.bf16 %v928, %v918
  %v1279 = vpack.c.bf16 %v929, %v919
  %v1280 = vpack.c.bf16 %v930, %v920
  %v1281 = vpack.c.bf16 %v931, %v921
  %v1282 = vpack.c.bf16 %v932, %v922
  %v1283 = vpack.c.bf16 %v933, %v923
  %v1284 = vpack.c.bf16 %v934, %v924
  %v1285 = vpack.c.bf16 %v945, %v935
  %v1286 = vpack.c.bf16 %v946, %v936
  %v1287 = vpack.c.bf16 %v947, %v937
  %v1288 = vpack.c.bf16 %v948, %v938
  %v1289 = vpack.c.bf16 %v949, %v939
  %v1290 = vpack.c.bf16 %v950, %v940
  %v1291 = vpack.c.bf16 %v951, %v941
  %v1292 = vpack.c.bf16 %v952, %v942
  %v1293 = vpack.c.bf16 %v953, %v943
  %v1294 = vpack.c.bf16 %v954, %v944
  %v1295 = vpack.c.bf16 %v965, %v955
  %v1296 = vpack.c.bf16 %v966, %v956
  %v1297 = vpack.c.bf16 %v967, %v957
  %v1298 = vpack.c.bf16 %v968, %v958
  %v1299 = vpack.c.bf16 %v969, %v959
  %v1300 = vpack.c.bf16 %v970, %v960
  %v1301 = vpack.c.bf16 %v971, %v961
  %v1302 = vpack.c.bf16 %v972, %v962
  %v1303 = vpack.c.bf16 %v973, %v963
  %v1304 = vpack.c.bf16 %v974, %v964
  %v1305 = vpack.c.bf16 %v985, %v975
  %v1306 = vpack.c.bf16 %v986, %v976
  %v1307 = vpack.c.bf16 %v987, %v977
  %v1308 = vpack.c.bf16 %v988, %v978
  %v1309 = vpack.c.bf16 %v989, %v979
  %v1310 = vpack.c.bf16 %v990, %v980
  %v1311 = vpack.c.bf16 %v991, %v981
  %v1312 = vpack.c.bf16 %v992, %v982
  %v1313 = vpack.c.bf16 %v993, %v983
  %v1314 = vpack.c.bf16 %v994, %v984
  %v1315 = vpack.c.bf16 %v1005, %v995
  %v1316 = vpack.c.bf16 %v1006, %v996
  %v1317 = vpack.c.bf16 %v1007, %v997
  %v1318 = vpack.c.bf16 %v1008, %v998
  %v1319 = vpack.c.bf16 %v1009, %v999
  %v1320 = vpack.c.bf16 %v1010, %v1000
  %v1321 = vpack.c.bf16 %v1011, %v1001
  %v1322 = vpack.c.bf16 %v1012, %v1002
  %v1323 = vpack.c.bf16 %v1013, %v1003
  %v1324 = vpack.c.bf16 %v1014, %v1004
  %v1325 = vpack.c.bf16 %v1025, %v1015
  %v1326 = vpack.c.bf16 %v1026, %v1016
  %v1327 = vpack.c.bf16 %v1027, %v1017
  %v1328 = vpack.c.bf16 %v1028, %v1018
  %v1329 = vpack.c.bf16 %v1029, %v1019
  %v1330 = vpack.c.bf16 %v1030, %v1020
  %v1331 = vpack.c.bf16 %v1031, %v1021
  %v1332 = vpack.c.bf16 %v1032, %v1022
  %v1333 = vpack.c.bf16 %v1033, %v1023
  %v1334 = vpack.c.bf16 %v1034, %v1024
  %v1335 = vpack.c.bf16 %v1045, %v1035
  %v1336 = vpack.c.bf16 %v1046, %v1036
  %v1337 = vpack.c.bf16 %v1047, %v1037
  %v1338 = vpack.c.bf16 %v1048, %v1038
  %v1339 = vpack.c.bf16 %v1049, %v1039
  %v1340 = vpack.c.bf16 %v1050, %v1040
  %v1341 = vpack.c.bf16 %v1051, %v1041
  %v1342 = vpack.c.bf16 %v1052, %v1042
  %v1343 = vpack.c.bf16 %v1053, %v1043
  %v1344 = vpack.c.bf16 %v1054, %v1044
  %v1345 = vpack.c.bf16 %v1065, %v1055
  %v1346 = vpack.c.bf16 %v1066, %v1056
  %v1347 = vpack.c.bf16 %v1067, %v1057
  %v1348 = vpack.c.bf16 %v1068, %v1058
  %v1349 = vpack.c.bf16 %v1069, %v1059
  %v1350 = vpack.c.bf16 %v1070, %v1060
  %v1351 = vpack.c.bf16 %v1071, %v1061
  %v1352 = vpack.c.bf16 %v1072, %v1062
  %v1353 = vpack.c.bf16 %v1073, %v1063
  %v1354 = vpack.c.bf16 %v1074, %v1064
  %v1355 = vpack.c.bf16 %v1085, %v1075
  %v1356 = vpack.c.bf16 %v1086, %v1076
  %v1357 = vpack.c.bf16 %v1087, %v1077
  %v1358 = vpack.c.bf16 %v1088, %v1078
  %v1359 = vpack.c.bf16 %v1089, %v1079
  %v1360 = vpack.c.bf16 %v1090, %v1080
  %v1361 = vpack.c.bf16 %v1091, %v1081
  %v1362 = vpack.c.bf16 %v1092, %v1082
  %v1363 = vpack.c.bf16 %v1093, %v1083
  %v1364 = vpack.c.bf16 %v1094, %v1084
  %v1365 = vpack.c.bf16 %v1105, %v1095
  %v1366 = vpack.c.bf16 %v1106, %v1096
  %v1367 = vpack.c.bf16 %v1107, %v1097
  %v1368 = vpack.c.bf16 %v1108, %v1098
  %v1369 = vpack.c.bf16 %v1109, %v1099
  %v1370 = vpack.c.bf16 %v1110, %v1100
  %v1371 = vpack.c.bf16 %v1111, %v1101
  %v1372 = vpack.c.bf16 %v1112, %v1102
  %v1373 = vpack.c.bf16 %v1113, %v1103
  %v1374 = vpack.c.bf16 %v1114, %v1104
  %v1375 = vpack.c.bf16 %v1125, %v1115
  %v1376 = vpack.c.bf16 %v1126, %v1116
  %v1377 = vpack.c.bf16 %v1127, %v1117
  %v1378 = vpack.c.bf16 %v1128, %v1118
  %v1379 = vpack.c.bf16 %v1129, %v1119
  %v1380 = vpack.c.bf16 %v1130, %v1120
  %v1381 = vpack.c.bf16 %v1131, %v1121
  %v1382 = vpack.c.bf16 %v1132, %v1122
  %v1383 = vpack.c.bf16 %v1133, %v1123
  %v1384 = vpack.c.bf16 %v1134, %v1124
  %v1385 = vpack.c.bf16 %v1145, %v1135
  %v1386 = vpack.c.bf16 %v1146, %v1136
  %v1387 = vpack.c.bf16 %v1147, %v1137
  %v1388 = vpack.c.bf16 %v1148, %v1138
  %v1389 = vpack.c.bf16 %v1149, %v1139
  %v1390 = vpack.c.bf16 %v1150, %v1140
  %v1391 = vpack.c.bf16 %v1151, %v1141
  %v1392 = vpack.c.bf16 %v1152, %v1142
  %v1393 = vpack.c.bf16 %v1153, %v1143
  %v1394 = vpack.c.bf16 %v1154, %v1144
  %v1395 = vpack.c.bf16 %v1165, %v1155
  %v1396 = vpack.c.bf16 %v1166, %v1156
  %v1397 = vpack.c.bf16 %v1167, %v1157
  %v1398 = vpack.c.bf16 %v1168, %v1158
  %v1399 = vpack.c.bf16 %v1169, %v1159
  %v1400 = vpack.c.bf16 %v1170, %v1160
  %v1401 = vpack.c.bf16 %v1171, %v1161
  %v1402 = vpack.c.bf16 %v1172, %v1162
  %v1403 = vpack.c.bf16 %v1173, %v1163
  %v1404 = vpack.c.bf16 %v1174, %v1164
  %v1405 = vpack.c.bf16 %v1185, %v1175
  %v1406 = vpack.c.bf16 %v1186, %v1176
  %v1407 = vpack.c.bf16 %v1187, %v1177
  %v1408 = vpack.c.bf16 %v1188, %v1178
  %v1409 = vpack.c.bf16 %v1189, %v1179
  %v1410 = vpack.c.bf16 %v1190, %v1180
  %v1411 = vpack.c.bf16 %v1191, %v1181
  %v1412 = vpack.c.bf16 %v1192, %v1182
  %v1413 = vpack.c.bf16 %v1193, %v1183
  %v1414 = vpack.c.bf16 %v1194, %v1184
  %v1415 = vld [vmem:[%s1] sm:$0xff]
  %v1416 = vld [vmem:[%s1 + $0x8] sm:$0xff]
  %v1417 = vld [vmem:[%s1 + $0x10] sm:$0xff]
  %v1418 = vld [vmem:[%s1 + $0x18] sm:$0xff]
  %v1419 = vld [vmem:[%s1 + $0x20] sm:$0xff]
  %v1420 = vld [vmem:[%s1 + $0x28] sm:$0xff]
  %v1421 = vld [vmem:[%s1 + $0x30] sm:$0xff]
  %v1422 = vld [vmem:[%s1 + $0x38] sm:$0xff]
  %v1423 = vld [vmem:[%s1 + $0x40] sm:$0xff]
  %v1424 = vld [vmem:[%s1 + $0x48] sm:$0xff]
  %v1425 = vld [vmem:[%s1 + $0x50] sm:$0xff]
  %v1426 = vld [vmem:[%s1 + $0x58] sm:$0xff]
  %v1427 = vld [vmem:[%s1 + $0x60] sm:$0xff]
  %v1428 = vld [vmem:[%s1 + $0x68] sm:$0xff]
  %v1429 = vld [vmem:[%s1 + $0x70] sm:$0xff]
  %v1430 = vld [vmem:[%s1 + $0x78] sm:$0xff]
  %v1431 = vld [vmem:[%s1 + $0x80] sm:$0xff]
  %v1432 = vld [vmem:[%s1 + $0x88] sm:$0xff]
  %v1433 = vld [vmem:[%s1 + $0x90] sm:$0xff]
  %v1434 = vld [vmem:[%s1 + $0x98] sm:$0xff]
  %v1435 = vld [vmem:[%s1 + $0xa0] sm:$0xff]
  %v1436 = vld [vmem:[%s1 + $0xa8] sm:$0xff]
  %v1437 = vld [vmem:[%s1 + $0xb0] sm:$0xff]
  %v1438 = vld [vmem:[%s1 + $0xb8] sm:$0xff]
  %v1439 = vld [vmem:[%s1 + $0xc0] sm:$0xff]
  %v1440 = vld [vmem:[%s1 + $0xc8] sm:$0xff]
  %v1441 = vld [vmem:[%s1 + $0xd0] sm:$0xff]
  %v1442 = vld [vmem:[%s1 + $0xd8] sm:$0xff]
  %v1443 = vld [vmem:[%s1 + $0xe0] sm:$0xff]
  %v1444 = vld [vmem:[%s1 + $0xe8] sm:$0xff]
  %v1445 = vld [vmem:[%s1 + $0xf0] sm:$0xff]
  %v1446 = vld [vmem:[%s1 + $0xf8] sm:$0xff]
  %v1447 = vld [vmem:[%s1 + $0x100] sm:$0xff]
  %v1448 = vld [vmem:[%s1 + $0x108] sm:$0xff]
  %v1449 = vld [vmem:[%s1 + $0x110] sm:$0xff]
  %v1450 = vld [vmem:[%s1 + $0x118] sm:$0xff]
  %v1451 = vld [vmem:[%s1 + $0x120] sm:$0xff]
  %v1452 = vld [vmem:[%s1 + $0x128] sm:$0xff]
  %v1453 = vld [vmem:[%s1 + $0x130] sm:$0xff]
  %v1454 = vld [vmem:[%s1 + $0x138] sm:$0xff]
  %v1455 = vld [vmem:[%s1 + $0x140] sm:$0xff]
  %v1456 = vld [vmem:[%s1 + $0x148] sm:$0xff]
  %v1457 = vld [vmem:[%s1 + $0x150] sm:$0xff]
  %v1458 = vld [vmem:[%s1 + $0x158] sm:$0xff]
  %v1459 = vld [vmem:[%s1 + $0x160] sm:$0xff]
  %v1460 = vld [vmem:[%s1 + $0x168] sm:$0xff]
  %v1461 = vld [vmem:[%s1 + $0x170] sm:$0xff]
  %v1462 = vld [vmem:[%s1 + $0x178] sm:$0xff]
  %v1463 = vld [vmem:[%s1 + $0x180] sm:$0xff]
  %v1464 = vld [vmem:[%s1 + $0x188] sm:$0xff]
  %v1465 = vld [vmem:[%s1 + $0x190] sm:$0xff]
  %v1466 = vld [vmem:[%s1 + $0x198] sm:$0xff]
  %v1467 = vld [vmem:[%s1 + $0x1a0] sm:$0xff]
  %v1468 = vld [vmem:[%s1 + $0x1a8] sm:$0xff]
  %v1469 = vld [vmem:[%s1 + $0x1b0] sm:$0xff]
  %v1470 = vld [vmem:[%s1 + $0x1b8] sm:$0xff]
  %v1471 = vld [vmem:[%s1 + $0x1c0] sm:$0xff]
  %v1472 = vld [vmem:[%s1 + $0x1c8] sm:$0xff]
  %v1473 = vld [vmem:[%s1 + $0x1d0] sm:$0xff]
  %v1474 = vld [vmem:[%s1 + $0x1d8] sm:$0xff]
  %v1475 = vld [vmem:[%s1 + $0x1e0] sm:$0xff]
  %v1476 = vld [vmem:[%s1 + $0x1e8] sm:$0xff]
  %v1477 = vld [vmem:[%s1 + $0x1f0] sm:$0xff]
  %v1478 = vld [vmem:[%s1 + $0x1f8] sm:$0xff]
  %v1479 = vld [vmem:[%s1 + $0x200] sm:$0xff]
  %v1480 = vld [vmem:[%s1 + $0x208] sm:$0xff]
  %v1481 = vld [vmem:[%s1 + $0x210] sm:$0xff]
  %v1482 = vld [vmem:[%s1 + $0x218] sm:$0xff]
  %v1483 = vld [vmem:[%s1 + $0x220] sm:$0xff]
  %v1484 = vld [vmem:[%s1 + $0x228] sm:$0xff]
  %v1485 = vld [vmem:[%s1 + $0x230] sm:$0xff]
  %v1486 = vld [vmem:[%s1 + $0x238] sm:$0xff]
  %v1487 = vld [vmem:[%s1 + $0x240] sm:$0xff]
  %v1488 = vld [vmem:[%s1 + $0x248] sm:$0xff]
  %v1489 = vld [vmem:[%s1 + $0x250] sm:$0xff]
  %v1490 = vld [vmem:[%s1 + $0x258] sm:$0xff]
  %v1491 = vld [vmem:[%s1 + $0x260] sm:$0xff]
  %v1492 = vld [vmem:[%s1 + $0x268] sm:$0xff]
  %v1493 = vld [vmem:[%s1 + $0x270] sm:$0xff]
  %v1494 = vld [vmem:[%s1 + $0x278] sm:$0xff]
  %v1495 = vld [vmem:[%s1 + $0x280] sm:$0xff]
  %v1496 = vld [vmem:[%s1 + $0x288] sm:$0xff]
  %v1497 = vld [vmem:[%s1 + $0x290] sm:$0xff]
  %v1498 = vld [vmem:[%s1 + $0x298] sm:$0xff]
  %v1499 = vld [vmem:[%s1 + $0x2a0] sm:$0xff]
  %v1500 = vld [vmem:[%s1 + $0x2a8] sm:$0xff]
  %v1501 = vld [vmem:[%s1 + $0x2b0] sm:$0xff]
  %v1502 = vld [vmem:[%s1 + $0x2b8] sm:$0xff]
  %v1503 = vld [vmem:[%s1 + $0x2c0] sm:$0xff]
  %v1504 = vld [vmem:[%s1 + $0x2c8] sm:$0xff]
  %v1505 = vld [vmem:[%s1 + $0x2d0] sm:$0xff]
  %v1506 = vld [vmem:[%s1 + $0x2d8] sm:$0xff]
  %v1507 = vld [vmem:[%s1 + $0x2e0] sm:$0xff]
  %v1508 = vld [vmem:[%s1 + $0x2e8] sm:$0xff]
  %v1509 = vld [vmem:[%s1 + $0x2f0] sm:$0xff]
  %v1510 = vld [vmem:[%s1 + $0x2f8] sm:$0xff]
  %v1511 = vld [vmem:[%s1 + $0x300] sm:$0xff]
  %v1512 = vld [vmem:[%s1 + $0x308] sm:$0xff]
  %v1513 = vld [vmem:[%s1 + $0x310] sm:$0xff]
  %v1514 = vld [vmem:[%s1 + $0x318] sm:$0xff]
  %v1515 = vld [vmem:[%s1 + $0x320] sm:$0xff]
  %v1516 = vld [vmem:[%s1 + $0x328] sm:$0xff]
  %v1517 = vld [vmem:[%s1 + $0x330] sm:$0xff]
  %v1518 = vld [vmem:[%s1 + $0x338] sm:$0xff]
  %v1519 = vld [vmem:[%s1 + $0x340] sm:$0xff]
  %v1520 = vld [vmem:[%s1 + $0x348] sm:$0xff]
  %v1521 = vld [vmem:[%s1 + $0x350] sm:$0xff]
  %v1522 = vld [vmem:[%s1 + $0x358] sm:$0xff]
  %v1523 = vld [vmem:[%s1 + $0x360] sm:$0xff]
  %v1524 = vld [vmem:[%s1 + $0x368] sm:$0xff]
  %v1525 = vld [vmem:[%s1 + $0x370] sm:$0xff]
  %v1526 = vld [vmem:[%s1 + $0x378] sm:$0xff]
  %v1527 = vld [vmem:[%s1 + $0x380] sm:$0xff]
  %v1528 = vld [vmem:[%s1 + $0x388] sm:$0xff]
  %v1529 = vld [vmem:[%s1 + $0x390] sm:$0xff]
  %v1530 = vld [vmem:[%s1 + $0x398] sm:$0xff]
  %v1531 = vld [vmem:[%s1 + $0x3a0] sm:$0xff]
  %v1532 = vld [vmem:[%s1 + $0x3a8] sm:$0xff]
  %v1533 = vld [vmem:[%s1 + $0x3b0] sm:$0xff]
  %v1534 = vld [vmem:[%s1 + $0x3b8] sm:$0xff]
  %v1535 = vld [vmem:[%s1 + $0x3c0] sm:$0xff]
  %v1536 = vld [vmem:[%s1 + $0x3c8] sm:$0xff]
  %v1537 = vld [vmem:[%s1 + $0x3d0] sm:$0xff]
  %v1538 = vld [vmem:[%s1 + $0x3d8] sm:$0xff]
  %v1539 = vld [vmem:[%s1 + $0x3e0] sm:$0xff]
  %v1540 = vld [vmem:[%s1 + $0x3e8] sm:$0xff]
  %v1541 = vld [vmem:[%s1 + $0x3f0] sm:$0xff]
  %v1542 = vld [vmem:[%s1 + $0x3f8] sm:$0xff]
  %v1543 = vld [vmem:[%s1 + $0x400] sm:$0xff]
  %v1544 = vld [vmem:[%s1 + $0x408] sm:$0xff]
  %v1545 = vld [vmem:[%s1 + $0x410] sm:$0xff]
  %v1546 = vld [vmem:[%s1 + $0x418] sm:$0xff]
  %v1547 = vld [vmem:[%s1 + $0x420] sm:$0xff]
  %v1548 = vld [vmem:[%s1 + $0x428] sm:$0xff]
  %v1549 = vld [vmem:[%s1 + $0x430] sm:$0xff]
  %v1550 = vld [vmem:[%s1 + $0x438] sm:$0xff]
  %v1551 = vld [vmem:[%s1 + $0x440] sm:$0xff]
  %v1552 = vld [vmem:[%s1 + $0x448] sm:$0xff]
  %v1553 = vld [vmem:[%s1 + $0x450] sm:$0xff]
  %v1554 = vld [vmem:[%s1 + $0x458] sm:$0xff]
  %v1555 = vld [vmem:[%s1 + $0x460] sm:$0xff]
  %v1556 = vld [vmem:[%s1 + $0x468] sm:$0xff]
  %v1557 = vld [vmem:[%s1 + $0x470] sm:$0xff]
  %v1558 = vld [vmem:[%s1 + $0x478] sm:$0xff]
  %v1559 = vld [vmem:[%s1 + $0x480] sm:$0xff]
  %v1560 = vld [vmem:[%s1 + $0x488] sm:$0xff]
  %v1561 = vld [vmem:[%s1 + $0x490] sm:$0xff]
  %v1562 = vld [vmem:[%s1 + $0x498] sm:$0xff]
  %v1563 = vld [vmem:[%s1 + $0x4a0] sm:$0xff]
  %v1564 = vld [vmem:[%s1 + $0x4a8] sm:$0xff]
  %v1565 = vld [vmem:[%s1 + $0x4b0] sm:$0xff]
  %v1566 = vld [vmem:[%s1 + $0x4b8] sm:$0xff]
  %v1567 = vld [vmem:[%s1 + $0x4c0] sm:$0xff]
  %v1568 = vld [vmem:[%s1 + $0x4c8] sm:$0xff]
  %v1569 = vld [vmem:[%s1 + $0x4d0] sm:$0xff]
  %v1570 = vld [vmem:[%s1 + $0x4d8] sm:$0xff]
  %v1571 = vpack.c.bf16 %v1416, %v1415
  %v1572 = vpack.c.bf16 %v1418, %v1417
  %v1573 = vpack.c.bf16 %v1420, %v1419
  %v1574 = vpack.c.bf16 %v1422, %v1421
  %v1575 = vpack.c.bf16 %v1424, %v1423
  %v1576 = vpack.c.bf16 %v1426, %v1425
  %v1577 = vpack.c.bf16 %v1428, %v1427
  %v1578 = vpack.c.bf16 %v1430, %v1429
  %v1579 = vpack.c.bf16 %v1432, %v1431
  %v1580 = vpack.c.bf16 %v1434, %v1433
  %v1581 = vpack.c.bf16 %v1436, %v1435
  %v1582 = vpack.c.bf16 %v1438, %v1437
  %v1583 = vpack.c.bf16 %v1440, %v1439
  %v1584 = vpack.c.bf16 %v1442, %v1441
  %v1585 = vpack.c.bf16 %v1444, %v1443
  %v1586 = vpack.c.bf16 %v1446, %v1445
  %v1587 = vpack.c.bf16 %v1448, %v1447
  %v1588 = vpack.c.bf16 %v1450, %v1449
  %v1589 = vpack.c.bf16 %v1452, %v1451
  %v1590 = vpack.c.bf16 %v1454, %v1453
  %v1591 = vpack.c.bf16 %v1456, %v1455
  %v1592 = vpack.c.bf16 %v1458, %v1457
  %v1593 = vpack.c.bf16 %v1460, %v1459
  %v1594 = vpack.c.bf16 %v1462, %v1461
  %v1595 = vpack.c.bf16 %v1464, %v1463
  %v1596 = vpack.c.bf16 %v1466, %v1465
  %v1597 = vpack.c.bf16 %v1468, %v1467
  %v1598 = vpack.c.bf16 %v1470, %v1469
  %v1599 = vpack.c.bf16 %v1472, %v1471
  %v1600 = vpack.c.bf16 %v1474, %v1473
  %v1601 = vpack.c.bf16 %v1476, %v1475
  %v1602 = vpack.c.bf16 %v1478, %v1477
  %v1603 = vpack.c.bf16 %v1480, %v1479
  %v1604 = vpack.c.bf16 %v1482, %v1481
  %v1605 = vpack.c.bf16 %v1484, %v1483
  %v1606 = vpack.c.bf16 %v1486, %v1485
  %v1607 = vpack.c.bf16 %v1488, %v1487
  %v1608 = vpack.c.bf16 %v1490, %v1489
  %v1609 = vpack.c.bf16 %v1492, %v1491
  %v1610 = vpack.c.bf16 %v1494, %v1493
  %v1611 = vpack.c.bf16 %v1496, %v1495
  %v1612 = vpack.c.bf16 %v1498, %v1497
  %v1613 = vpack.c.bf16 %v1500, %v1499
  %v1614 = vpack.c.bf16 %v1502, %v1501
  %v1615 = vpack.c.bf16 %v1504, %v1503
  %v1616 = vpack.c.bf16 %v1506, %v1505
  %v1617 = vpack.c.bf16 %v1508, %v1507
  %v1618 = vpack.c.bf16 %v1510, %v1509
  %v1619 = vpack.c.bf16 %v1512, %v1511
  %v1620 = vpack.c.bf16 %v1514, %v1513
  %v1621 = vpack.c.bf16 %v1516, %v1515
  %v1622 = vpack.c.bf16 %v1518, %v1517
  %v1623 = vpack.c.bf16 %v1520, %v1519
  %v1624 = vpack.c.bf16 %v1522, %v1521
  %v1625 = vpack.c.bf16 %v1524, %v1523
  %v1626 = vpack.c.bf16 %v1526, %v1525
  %v1627 = vpack.c.bf16 %v1528, %v1527
  %v1628 = vpack.c.bf16 %v1530, %v1529
  %v1629 = vpack.c.bf16 %v1532, %v1531
  %v1630 = vpack.c.bf16 %v1534, %v1533
  %v1631 = vpack.c.bf16 %v1536, %v1535
  %v1632 = vpack.c.bf16 %v1538, %v1537
  %v1633 = vpack.c.bf16 %v1540, %v1539
  %v1634 = vpack.c.bf16 %v1542, %v1541
  %v1635 = vpack.c.bf16 %v1544, %v1543
  %v1636 = vpack.c.bf16 %v1546, %v1545
  %v1637 = vpack.c.bf16 %v1548, %v1547
  %v1638 = vpack.c.bf16 %v1550, %v1549
  %v1639 = vpack.c.bf16 %v1552, %v1551
  %v1640 = vpack.c.bf16 %v1554, %v1553
  %v1641 = vpack.c.bf16 %v1556, %v1555
  %v1642 = vpack.c.bf16 %v1558, %v1557
  %v1643 = vpack.c.bf16 %v1560, %v1559
  %v1644 = vpack.c.bf16 %v1562, %v1561
  %v1645 = vpack.c.bf16 %v1564, %v1563
  %v1646 = vpack.c.bf16 %v1566, %v1565
  %v1647 = vpack.c.bf16 %v1568, %v1567
  %v1648 = vpack.c.bf16 %v1570, %v1569
  %vm1649 = vcmask 785408
  %v1651 = vsel %vm1649, %v1204, 0
  %v1654 = vsel %vm1649, %v1214, 0
  %v1657 = vsel %vm1649, %v1224, 0
  %v1660 = vsel %vm1649, %v1234, 0
  %v1663 = vsel %vm1649, %v1244, 0
  %v1666 = vsel %vm1649, %v1254, 0
  %v1669 = vsel %vm1649, %v1264, 0
  %v1672 = vsel %vm1649, %v1274, 0
  %v1675 = vsel %vm1649, %v1284, 0
  %v1678 = vsel %vm1649, %v1294, 0
  %v1681 = vsel %vm1649, %v1304, 0
  %v1684 = vsel %vm1649, %v1314, 0
  %v1687 = vsel %vm1649, %v1324, 0
  %v1690 = vsel %vm1649, %v1334, 0
  %v1693 = vsel %vm1649, %v1344, 0
  %v1696 = vsel %vm1649, %v1354, 0
  %v1699 = vsel %vm1649, %v1364, 0
  %v1702 = vsel %vm1649, %v1374, 0
  %v1705 = vsel %vm1649, %v1384, 0
  %v1708 = vsel %vm1649, %v1394, 0
  %v1711 = vsel %vm1649, %v1404, 0
  %v1714 = vsel %vm1649, %v1414, 0
  %1716 = vmatpush.bf16.msra.mxu0 %v1578
  %1717 = vmatpush.bf16.msra.mxu0 %v1577
  %1718 = vmatpush.bf16.msra.mxu0 %v1576
  %1719 = vmatpush.bf16.msra.mxu0 %v1575
  %1720 = vmatpush.bf16.msra.mxu0 %v1574
  %1721 = vmatpush.bf16.msra.mxu0 %v1573
  %1722 = vmatpush.bf16.msra.mxu0 %v1572
  %1723 = vmatpush.bf16.msra.mxu0 %v1571
  %1724 = vmatmul.bf16.gmra.mxu0 %v1195
  %v1725 = vpop.f32.mrf.mxu0
  %v1726 = vadd.f32 0.0, %v1725
  %v1727 = vpop.f32.mrf.mxu0
  %v1728 = vadd.f32 0.0, %v1727
  %1729 = vmatmul.bf16.gmra.mxu0 %v1205
  %v1730 = vpop.f32.mrf.mxu0
  %v1731 = vadd.f32 0.0, %v1730
  %v1732 = vpop.f32.mrf.mxu0
  %v1733 = vadd.f32 0.0, %v1732
  %1734 = vmatmul.bf16.gmra.mxu0 %v1215
  %v1735 = vpop.f32.mrf.mxu0
  %v1736 = vadd.f32 0.0, %v1735
  %v1737 = vpop.f32.mrf.mxu0
  %v1738 = vadd.f32 0.0, %v1737
  %1739 = vmatmul.bf16.gmra.mxu0 %v1225
  %v1740 = vpop.f32.mrf.mxu0
  %v1741 = vadd.f32 0.0, %v1740
  %v1742 = vpop.f32.mrf.mxu0
  %v1743 = vadd.f32 0.0, %v1742
  %1744 = vmatmul.bf16.gmra.mxu0 %v1235
  %v1745 = vpop.f32.mrf.mxu0
  %v1746 = vadd.f32 0.0, %v1745
  %v1747 = vpop.f32.mrf.mxu0
  %v1748 = vadd.f32 0.0, %v1747
  %1749 = vmatmul.bf16.gmra.mxu0 %v1245
  %v1750 = vpop.f32.mrf.mxu0
  %v1751 = vadd.f32 0.0, %v1750
  %v1752 = vpop.f32.mrf.mxu0
  %v1753 = vadd.f32 0.0, %v1752
  %1754 = vmatmul.bf16.gmra.mxu0 %v1255
  %v1755 = vpop.f32.mrf.mxu0
  %v1756 = vadd.f32 0.0, %v1755
  %v1757 = vpop.f32.mrf.mxu0
  %v1758 = vadd.f32 0.0, %v1757
  %1759 = vmatmul.bf16.gmra.mxu0 %v1265
  %v1760 = vpop.f32.mrf.mxu0
  %v1761 = vadd.f32 0.0, %v1760
  %v1762 = vpop.f32.mrf.mxu0
  %v1763 = vadd.f32 0.0, %v1762
  %1764 = vmatmul.bf16.gmra.mxu0 %v1275
  %v1765 = vpop.f32.mrf.mxu0
  %v1766 = vadd.f32 0.0, %v1765
  %v1767 = vpop.f32.mrf.mxu0
  %v1768 = vadd.f32 0.0, %v1767
  %1769 = vmatmul.bf16.gmra.mxu0 %v1285
  %v1770 = vpop.f32.mrf.mxu0
  %v1771 = vadd.f32 0.0, %v1770
  %v1772 = vpop.f32.mrf.mxu0
  %v1773 = vadd.f32 0.0, %v1772
  %1774 = vmatmul.bf16.gmra.mxu0 %v1295
  %v1775 = vpop.f32.mrf.mxu0
  %v1776 = vadd.f32 0.0, %v1775
  %v1777 = vpop.f32.mrf.mxu0
  %v1778 = vadd.f32 0.0, %v1777
  %1779 = vmatmul.bf16.gmra.mxu0 %v1305
  %v1780 = vpop.f32.mrf.mxu0
  %v1781 = vadd.f32 0.0, %v1780
  %v1782 = vpop.f32.mrf.mxu0
  %v1783 = vadd.f32 0.0, %v1782
  %1784 = vmatmul.bf16.gmra.mxu0 %v1315
  %v1785 = vpop.f32.mrf.mxu0
  %v1786 = vadd.f32 0.0, %v1785
  %v1787 = vpop.f32.mrf.mxu0
  %v1788 = vadd.f32 0.0, %v1787
  %1789 = vmatmul.bf16.gmra.mxu0 %v1325
  %v1790 = vpop.f32.mrf.mxu0
  %v1791 = vadd.f32 0.0, %v1790
  %v1792 = vpop.f32.mrf.mxu0
  %v1793 = vadd.f32 0.0, %v1792
  %1794 = vmatmul.bf16.gmra.mxu0 %v1335
  %v1795 = vpop.f32.mrf.mxu0
  %v1796 = vadd.f32 0.0, %v1795
  %v1797 = vpop.f32.mrf.mxu0
  %v1798 = vadd.f32 0.0, %v1797
  %1799 = vmatmul.bf16.gmra.mxu0 %v1345
  %v1800 = vpop.f32.mrf.mxu0
  %v1801 = vadd.f32 0.0, %v1800
  %v1802 = vpop.f32.mrf.mxu0
  %v1803 = vadd.f32 0.0, %v1802
  %1804 = vmatmul.bf16.gmra.mxu0 %v1355
  %v1805 = vpop.f32.mrf.mxu0
  %v1806 = vadd.f32 0.0, %v1805
  %v1807 = vpop.f32.mrf.mxu0
  %v1808 = vadd.f32 0.0, %v1807
  %1809 = vmatmul.bf16.gmra.mxu0 %v1365
  %v1810 = vpop.f32.mrf.mxu0
  %v1811 = vadd.f32 0.0, %v1810
  %v1812 = vpop.f32.mrf.mxu0
  %v1813 = vadd.f32 0.0, %v1812
  %1814 = vmatmul.bf16.gmra.mxu0 %v1375
  %v1815 = vpop.f32.mrf.mxu0
  %v1816 = vadd.f32 0.0, %v1815
  %v1817 = vpop.f32.mrf.mxu0
  %v1818 = vadd.f32 0.0, %v1817
  %1819 = vmatmul.bf16.gmra.mxu0 %v1385
  %v1820 = vpop.f32.mrf.mxu0
  %v1821 = vadd.f32 0.0, %v1820
  %v1822 = vpop.f32.mrf.mxu0
  %v1823 = vadd.f32 0.0, %v1822
  %1824 = vmatmul.bf16.gmra.mxu0 %v1395
  %v1825 = vpop.f32.mrf.mxu0
  %v1826 = vadd.f32 0.0, %v1825
  %v1827 = vpop.f32.mrf.mxu0
  %v1828 = vadd.f32 0.0, %v1827
  %1829 = vmatmul.bf16.gmra.mxu0 %v1405
  %v1830 = vpop.f32.mrf.mxu0
  %v1831 = vadd.f32 0.0, %v1830
  %v1832 = vpop.f32.mrf.mxu0
  %v1833 = vadd.f32 0.0, %v1832
  %1834 = vdwg.mxu0
  %1835 = vmatpush.bf16.msra.mxu0 %v1586
  %1836 = vmatpush.bf16.msra.mxu0 %v1585
  %1837 = vmatpush.bf16.msra.mxu0 %v1584
  %1838 = vmatpush.bf16.msra.mxu0 %v1583
  %1839 = vmatpush.bf16.msra.mxu0 %v1582
  %1840 = vmatpush.bf16.msra.mxu0 %v1581
  %1841 = vmatpush.bf16.msra.mxu0 %v1580
  %1842 = vmatpush.bf16.msra.mxu0 %v1579
  %1843 = vmatmul.bf16.gmra.mxu0 %v1196
  %v1844 = vpop.f32.mrf.mxu0
  %v1845 = vadd.f32 %v1726, %v1844
  %v1846 = vpop.f32.mrf.mxu0
  %v1847 = vadd.f32 %v1728, %v1846
  %1848 = vmatmul.bf16.gmra.mxu0 %v1206
  %v1849 = vpop.f32.mrf.mxu0
  %v1850 = vadd.f32 %v1731, %v1849
  %v1851 = vpop.f32.mrf.mxu0
  %v1852 = vadd.f32 %v1733, %v1851
  %1853 = vmatmul.bf16.gmra.mxu0 %v1216
  %v1854 = vpop.f32.mrf.mxu0
  %v1855 = vadd.f32 %v1736, %v1854
  %v1856 = vpop.f32.mrf.mxu0
  %v1857 = vadd.f32 %v1738, %v1856
  %1858 = vmatmul.bf16.gmra.mxu0 %v1226
  %v1859 = vpop.f32.mrf.mxu0
  %v1860 = vadd.f32 %v1741, %v1859
  %v1861 = vpop.f32.mrf.mxu0
  %v1862 = vadd.f32 %v1743, %v1861
  %1863 = vmatmul.bf16.gmra.mxu0 %v1236
  %v1864 = vpop.f32.mrf.mxu0
  %v1865 = vadd.f32 %v1746, %v1864
  %v1866 = vpop.f32.mrf.mxu0
  %v1867 = vadd.f32 %v1748, %v1866
  %1868 = vmatmul.bf16.gmra.mxu0 %v1246
  %v1869 = vpop.f32.mrf.mxu0
  %v1870 = vadd.f32 %v1751, %v1869
  %v1871 = vpop.f32.mrf.mxu0
  %v1872 = vadd.f32 %v1753, %v1871
  %1873 = vmatmul.bf16.gmra.mxu0 %v1256
  %v1874 = vpop.f32.mrf.mxu0
  %v1875 = vadd.f32 %v1756, %v1874
  %v1876 = vpop.f32.mrf.mxu0
  %v1877 = vadd.f32 %v1758, %v1876
  %1878 = vmatmul.bf16.gmra.mxu0 %v1266
  %v1879 = vpop.f32.mrf.mxu0
  %v1880 = vadd.f32 %v1761, %v1879
  %v1881 = vpop.f32.mrf.mxu0
  %v1882 = vadd.f32 %v1763, %v1881
  %1883 = vmatmul.bf16.gmra.mxu0 %v1276
  %v1884 = vpop.f32.mrf.mxu0
  %v1885 = vadd.f32 %v1766, %v1884
  %v1886 = vpop.f32.mrf.mxu0
  %v1887 = vadd.f32 %v1768, %v1886
  %1888 = vmatmul.bf16.gmra.mxu0 %v1286
  %v1889 = vpop.f32.mrf.mxu0
  %v1890 = vadd.f32 %v1771, %v1889
  %v1891 = vpop.f32.mrf.mxu0
  %v1892 = vadd.f32 %v1773, %v1891
  %1893 = vmatmul.bf16.gmra.mxu0 %v1296
  %v1894 = vpop.f32.mrf.mxu0
  %v1895 = vadd.f32 %v1776, %v1894
  %v1896 = vpop.f32.mrf.mxu0
  %v1897 = vadd.f32 %v1778, %v1896
  %1898 = vmatmul.bf16.gmra.mxu0 %v1306
  %v1899 = vpop.f32.mrf.mxu0
  %v1900 = vadd.f32 %v1781, %v1899
  %v1901 = vpop.f32.mrf.mxu0
  %v1902 = vadd.f32 %v1783, %v1901
  %1903 = vmatmul.bf16.gmra.mxu0 %v1316
  %v1904 = vpop.f32.mrf.mxu0
  %v1905 = vadd.f32 %v1786, %v1904
  %v1906 = vpop.f32.mrf.mxu0
  %v1907 = vadd.f32 %v1788, %v1906
  %1908 = vmatmul.bf16.gmra.mxu0 %v1326
  %v1909 = vpop.f32.mrf.mxu0
  %v1910 = vadd.f32 %v1791, %v1909
  %v1911 = vpop.f32.mrf.mxu0
  %v1912 = vadd.f32 %v1793, %v1911
  %1913 = vmatmul.bf16.gmra.mxu0 %v1336
  %v1914 = vpop.f32.mrf.mxu0
  %v1915 = vadd.f32 %v1796, %v1914
  %v1916 = vpop.f32.mrf.mxu0
  %v1917 = vadd.f32 %v1798, %v1916
  %1918 = vmatmul.bf16.gmra.mxu0 %v1346
  %v1919 = vpop.f32.mrf.mxu0
  %v1920 = vadd.f32 %v1801, %v1919
  %v1921 = vpop.f32.mrf.mxu0
  %v1922 = vadd.f32 %v1803, %v1921
  %1923 = vmatmul.bf16.gmra.mxu0 %v1356
  %v1924 = vpop.f32.mrf.mxu0
  %v1925 = vadd.f32 %v1806, %v1924
  %v1926 = vpop.f32.mrf.mxu0
  %v1927 = vadd.f32 %v1808, %v1926
  %1928 = vmatmul.bf16.gmra.mxu0 %v1366
  %v1929 = vpop.f32.mrf.mxu0
  %v1930 = vadd.f32 %v1811, %v1929
  %v1931 = vpop.f32.mrf.mxu0
  %v1932 = vadd.f32 %v1813, %v1931
  %1933 = vmatmul.bf16.gmra.mxu0 %v1376
  %v1934 = vpop.f32.mrf.mxu0
  %v1935 = vadd.f32 %v1816, %v1934
  %v1936 = vpop.f32.mrf.mxu0
  %v1937 = vadd.f32 %v1818, %v1936
  %1938 = vmatmul.bf16.gmra.mxu0 %v1386
  %v1939 = vpop.f32.mrf.mxu0
  %v1940 = vadd.f32 %v1821, %v1939
  %v1941 = vpop.f32.mrf.mxu0
  %v1942 = vadd.f32 %v1823, %v1941
  %1943 = vmatmul.bf16.gmra.mxu0 %v1396
  %v1944 = vpop.f32.mrf.mxu0
  %v1945 = vadd.f32 %v1826, %v1944
  %v1946 = vpop.f32.mrf.mxu0
  %v1947 = vadd.f32 %v1828, %v1946
  %1948 = vmatmul.bf16.gmra.mxu0 %v1406
  %v1949 = vpop.f32.mrf.mxu0
  %v1950 = vadd.f32 %v1831, %v1949
  %v1951 = vpop.f32.mrf.mxu0
  %v1952 = vadd.f32 %v1833, %v1951
  %1953 = vdwg.mxu0
  %1954 = vmatpush.bf16.msra.mxu0 %v1594
  %1955 = vmatpush.bf16.msra.mxu0 %v1593
  %1956 = vmatpush.bf16.msra.mxu0 %v1592
  %1957 = vmatpush.bf16.msra.mxu0 %v1591
  %1958 = vmatpush.bf16.msra.mxu0 %v1590
  %1959 = vmatpush.bf16.msra.mxu0 %v1589
  %1960 = vmatpush.bf16.msra.mxu0 %v1588
  %1961 = vmatpush.bf16.msra.mxu0 %v1587
  %1962 = vmatmul.bf16.gmra.mxu0 %v1197
  %v1963 = vpop.f32.mrf.mxu0
  %v1964 = vadd.f32 %v1845, %v1963
  %v1965 = vpop.f32.mrf.mxu0
  %v1966 = vadd.f32 %v1847, %v1965
  %1967 = vmatmul.bf16.gmra.mxu0 %v1207
  %v1968 = vpop.f32.mrf.mxu0
  %v1969 = vadd.f32 %v1850, %v1968
  %v1970 = vpop.f32.mrf.mxu0
  %v1971 = vadd.f32 %v1852, %v1970
  %1972 = vmatmul.bf16.gmra.mxu0 %v1217
  %v1973 = vpop.f32.mrf.mxu0
  %v1974 = vadd.f32 %v1855, %v1973
  %v1975 = vpop.f32.mrf.mxu0
  %v1976 = vadd.f32 %v1857, %v1975
  %1977 = vmatmul.bf16.gmra.mxu0 %v1227
  %v1978 = vpop.f32.mrf.mxu0
  %v1979 = vadd.f32 %v1860, %v1978
  %v1980 = vpop.f32.mrf.mxu0
  %v1981 = vadd.f32 %v1862, %v1980
  %1982 = vmatmul.bf16.gmra.mxu0 %v1237
  %v1983 = vpop.f32.mrf.mxu0
  %v1984 = vadd.f32 %v1865, %v1983
  %v1985 = vpop.f32.mrf.mxu0
  %v1986 = vadd.f32 %v1867, %v1985
  %1987 = vmatmul.bf16.gmra.mxu0 %v1247
  %v1988 = vpop.f32.mrf.mxu0
  %v1989 = vadd.f32 %v1870, %v1988
  %v1990 = vpop.f32.mrf.mxu0
  %v1991 = vadd.f32 %v1872, %v1990
  %1992 = vmatmul.bf16.gmra.mxu0 %v1257
  %v1993 = vpop.f32.mrf.mxu0
  %v1994 = vadd.f32 %v1875, %v1993
  %v1995 = vpop.f32.mrf.mxu0
  %v1996 = vadd.f32 %v1877, %v1995
  %1997 = vmatmul.bf16.gmra.mxu0 %v1267
  %v1998 = vpop.f32.mrf.mxu0
  %v1999 = vadd.f32 %v1880, %v1998
  %v2000 = vpop.f32.mrf.mxu0
  %v2001 = vadd.f32 %v1882, %v2000
  %2002 = vmatmul.bf16.gmra.mxu0 %v1277
  %v2003 = vpop.f32.mrf.mxu0
  %v2004 = vadd.f32 %v1885, %v2003
  %v2005 = vpop.f32.mrf.mxu0
  %v2006 = vadd.f32 %v1887, %v2005
  %2007 = vmatmul.bf16.gmra.mxu0 %v1287
  %v2008 = vpop.f32.mrf.mxu0
  %v2009 = vadd.f32 %v1890, %v2008
  %v2010 = vpop.f32.mrf.mxu0
  %v2011 = vadd.f32 %v1892, %v2010
  %2012 = vmatmul.bf16.gmra.mxu0 %v1297
  %v2013 = vpop.f32.mrf.mxu0
  %v2014 = vadd.f32 %v1895, %v2013
  %v2015 = vpop.f32.mrf.mxu0
  %v2016 = vadd.f32 %v1897, %v2015
  %2017 = vmatmul.bf16.gmra.mxu0 %v1307
  %v2018 = vpop.f32.mrf.mxu0
  %v2019 = vadd.f32 %v1900, %v2018
  %v2020 = vpop.f32.mrf.mxu0
  %v2021 = vadd.f32 %v1902, %v2020
  %2022 = vmatmul.bf16.gmra.mxu0 %v1317
  %v2023 = vpop.f32.mrf.mxu0
  %v2024 = vadd.f32 %v1905, %v2023
  %v2025 = vpop.f32.mrf.mxu0
  %v2026 = vadd.f32 %v1907, %v2025
  %2027 = vmatmul.bf16.gmra.mxu0 %v1327
  %v2028 = vpop.f32.mrf.mxu0
  %v2029 = vadd.f32 %v1910, %v2028
  %v2030 = vpop.f32.mrf.mxu0
  %v2031 = vadd.f32 %v1912, %v2030
  %2032 = vmatmul.bf16.gmra.mxu0 %v1337
  %v2033 = vpop.f32.mrf.mxu0
  %v2034 = vadd.f32 %v1915, %v2033
  %v2035 = vpop.f32.mrf.mxu0
  %v2036 = vadd.f32 %v1917, %v2035
  %2037 = vmatmul.bf16.gmra.mxu0 %v1347
  %v2038 = vpop.f32.mrf.mxu0
  %v2039 = vadd.f32 %v1920, %v2038
  %v2040 = vpop.f32.mrf.mxu0
  %v2041 = vadd.f32 %v1922, %v2040
  %2042 = vmatmul.bf16.gmra.mxu0 %v1357
  %v2043 = vpop.f32.mrf.mxu0
  %v2044 = vadd.f32 %v1925, %v2043
  %v2045 = vpop.f32.mrf.mxu0
  %v2046 = vadd.f32 %v1927, %v2045
  %2047 = vmatmul.bf16.gmra.mxu0 %v1367
  %v2048 = vpop.f32.mrf.mxu0
  %v2049 = vadd.f32 %v1930, %v2048
  %v2050 = vpop.f32.mrf.mxu0
  %v2051 = vadd.f32 %v1932, %v2050
  %2052 = vmatmul.bf16.gmra.mxu0 %v1377
  %v2053 = vpop.f32.mrf.mxu0
  %v2054 = vadd.f32 %v1935, %v2053
  %v2055 = vpop.f32.mrf.mxu0
  %v2056 = vadd.f32 %v1937, %v2055
  %2057 = vmatmul.bf16.gmra.mxu0 %v1387
  %v2058 = vpop.f32.mrf.mxu0
  %v2059 = vadd.f32 %v1940, %v2058
  %v2060 = vpop.f32.mrf.mxu0
  %v2061 = vadd.f32 %v1942, %v2060
  %2062 = vmatmul.bf16.gmra.mxu0 %v1397
  %v2063 = vpop.f32.mrf.mxu0
  %v2064 = vadd.f32 %v1945, %v2063
  %v2065 = vpop.f32.mrf.mxu0
  %v2066 = vadd.f32 %v1947, %v2065
  %2067 = vmatmul.bf16.gmra.mxu0 %v1407
  %v2068 = vpop.f32.mrf.mxu0
  %v2069 = vadd.f32 %v1950, %v2068
  %v2070 = vpop.f32.mrf.mxu0
  %v2071 = vadd.f32 %v1952, %v2070
  %2072 = vdwg.mxu0
  %2073 = vmatpush.bf16.msra.mxu0 %v1602
  %2074 = vmatpush.bf16.msra.mxu0 %v1601
  %2075 = vmatpush.bf16.msra.mxu0 %v1600
  %2076 = vmatpush.bf16.msra.mxu0 %v1599
  %2077 = vmatpush.bf16.msra.mxu0 %v1598
  %2078 = vmatpush.bf16.msra.mxu0 %v1597
  %2079 = vmatpush.bf16.msra.mxu0 %v1596
  %2080 = vmatpush.bf16.msra.mxu0 %v1595
  %2081 = vmatmul.bf16.gmra.mxu0 %v1198
  %v2082 = vpop.f32.mrf.mxu0
  %v2083 = vadd.f32 %v1964, %v2082
  %v2084 = vpop.f32.mrf.mxu0
  %v2085 = vadd.f32 %v1966, %v2084
  %2086 = vmatmul.bf16.gmra.mxu0 %v1208
  %v2087 = vpop.f32.mrf.mxu0
  %v2088 = vadd.f32 %v1969, %v2087
  %v2089 = vpop.f32.mrf.mxu0
  %v2090 = vadd.f32 %v1971, %v2089
  %2091 = vmatmul.bf16.gmra.mxu0 %v1218
  %v2092 = vpop.f32.mrf.mxu0
  %v2093 = vadd.f32 %v1974, %v2092
  %v2094 = vpop.f32.mrf.mxu0
  %v2095 = vadd.f32 %v1976, %v2094
  %2096 = vmatmul.bf16.gmra.mxu0 %v1228
  %v2097 = vpop.f32.mrf.mxu0
  %v2098 = vadd.f32 %v1979, %v2097
  %v2099 = vpop.f32.mrf.mxu0
  %v2100 = vadd.f32 %v1981, %v2099
  %2101 = vmatmul.bf16.gmra.mxu0 %v1238
  %v2102 = vpop.f32.mrf.mxu0
  %v2103 = vadd.f32 %v1984, %v2102
  %v2104 = vpop.f32.mrf.mxu0
  %v2105 = vadd.f32 %v1986, %v2104
  %2106 = vmatmul.bf16.gmra.mxu0 %v1248
  %v2107 = vpop.f32.mrf.mxu0
  %v2108 = vadd.f32 %v1989, %v2107
  %v2109 = vpop.f32.mrf.mxu0
  %v2110 = vadd.f32 %v1991, %v2109
  %2111 = vmatmul.bf16.gmra.mxu0 %v1258
  %v2112 = vpop.f32.mrf.mxu0
  %v2113 = vadd.f32 %v1994, %v2112
  %v2114 = vpop.f32.mrf.mxu0
  %v2115 = vadd.f32 %v1996, %v2114
  %2116 = vmatmul.bf16.gmra.mxu0 %v1268
  %v2117 = vpop.f32.mrf.mxu0
  %v2118 = vadd.f32 %v1999, %v2117
  %v2119 = vpop.f32.mrf.mxu0
  %v2120 = vadd.f32 %v2001, %v2119
  %2121 = vmatmul.bf16.gmra.mxu0 %v1278
  %v2122 = vpop.f32.mrf.mxu0
  %v2123 = vadd.f32 %v2004, %v2122
  %v2124 = vpop.f32.mrf.mxu0
  %v2125 = vadd.f32 %v2006, %v2124
  %2126 = vmatmul.bf16.gmra.mxu0 %v1288
  %v2127 = vpop.f32.mrf.mxu0
  %v2128 = vadd.f32 %v2009, %v2127
  %v2129 = vpop.f32.mrf.mxu0
  %v2130 = vadd.f32 %v2011, %v2129
  %2131 = vmatmul.bf16.gmra.mxu0 %v1298
  %v2132 = vpop.f32.mrf.mxu0
  %v2133 = vadd.f32 %v2014, %v2132
  %v2134 = vpop.f32.mrf.mxu0
  %v2135 = vadd.f32 %v2016, %v2134
  %2136 = vmatmul.bf16.gmra.mxu0 %v1308
  %v2137 = vpop.f32.mrf.mxu0
  %v2138 = vadd.f32 %v2019, %v2137
  %v2139 = vpop.f32.mrf.mxu0
  %v2140 = vadd.f32 %v2021, %v2139
  %2141 = vmatmul.bf16.gmra.mxu0 %v1318
  %v2142 = vpop.f32.mrf.mxu0
  %v2143 = vadd.f32 %v2024, %v2142
  %v2144 = vpop.f32.mrf.mxu0
  %v2145 = vadd.f32 %v2026, %v2144
  %2146 = vmatmul.bf16.gmra.mxu0 %v1328
  %v2147 = vpop.f32.mrf.mxu0
  %v2148 = vadd.f32 %v2029, %v2147
  %v2149 = vpop.f32.mrf.mxu0
  %v2150 = vadd.f32 %v2031, %v2149
  %2151 = vmatmul.bf16.gmra.mxu0 %v1338
  %v2152 = vpop.f32.mrf.mxu0
  %v2153 = vadd.f32 %v2034, %v2152
  %v2154 = vpop.f32.mrf.mxu0
  %v2155 = vadd.f32 %v2036, %v2154
  %2156 = vmatmul.bf16.gmra.mxu0 %v1348
  %v2157 = vpop.f32.mrf.mxu0
  %v2158 = vadd.f32 %v2039, %v2157
  %v2159 = vpop.f32.mrf.mxu0
  %v2160 = vadd.f32 %v2041, %v2159
  %2161 = vmatmul.bf16.gmra.mxu0 %v1358
  %v2162 = vpop.f32.mrf.mxu0
  %v2163 = vadd.f32 %v2044, %v2162
  %v2164 = vpop.f32.mrf.mxu0
  %v2165 = vadd.f32 %v2046, %v2164
  %2166 = vmatmul.bf16.gmra.mxu0 %v1368
  %v2167 = vpop.f32.mrf.mxu0
  %v2168 = vadd.f32 %v2049, %v2167
  %v2169 = vpop.f32.mrf.mxu0
  %v2170 = vadd.f32 %v2051, %v2169
  %2171 = vmatmul.bf16.gmra.mxu0 %v1378
  %v2172 = vpop.f32.mrf.mxu0
  %v2173 = vadd.f32 %v2054, %v2172
  %v2174 = vpop.f32.mrf.mxu0
  %v2175 = vadd.f32 %v2056, %v2174
  %2176 = vmatmul.bf16.gmra.mxu0 %v1388
  %v2177 = vpop.f32.mrf.mxu0
  %v2178 = vadd.f32 %v2059, %v2177
  %v2179 = vpop.f32.mrf.mxu0
  %v2180 = vadd.f32 %v2061, %v2179
  %2181 = vmatmul.bf16.gmra.mxu0 %v1398
  %v2182 = vpop.f32.mrf.mxu0
  %v2183 = vadd.f32 %v2064, %v2182
  %v2184 = vpop.f32.mrf.mxu0
  %v2185 = vadd.f32 %v2066, %v2184
  %2186 = vmatmul.bf16.gmra.mxu0 %v1408
  %v2187 = vpop.f32.mrf.mxu0
  %v2188 = vadd.f32 %v2069, %v2187
  %v2189 = vpop.f32.mrf.mxu0
  %v2190 = vadd.f32 %v2071, %v2189
  %2191 = vdwg.mxu0
  %2192 = vmatpush.bf16.msra.mxu0 %v1610
  %2193 = vmatpush.bf16.msra.mxu0 %v1609
  %2194 = vmatpush.bf16.msra.mxu0 %v1608
  %2195 = vmatpush.bf16.msra.mxu0 %v1607
  %2196 = vmatpush.bf16.msra.mxu0 %v1606
  %2197 = vmatpush.bf16.msra.mxu0 %v1605
  %2198 = vmatpush.bf16.msra.mxu0 %v1604
  %2199 = vmatpush.bf16.msra.mxu0 %v1603
  %2200 = vmatmul.bf16.gmra.mxu0 %v1199
  %v2201 = vpop.f32.mrf.mxu0
  %v2202 = vadd.f32 %v2083, %v2201
  %v2203 = vpop.f32.mrf.mxu0
  %v2204 = vadd.f32 %v2085, %v2203
  %2205 = vmatmul.bf16.gmra.mxu0 %v1209
  %v2206 = vpop.f32.mrf.mxu0
  %v2207 = vadd.f32 %v2088, %v2206
  %v2208 = vpop.f32.mrf.mxu0
  %v2209 = vadd.f32 %v2090, %v2208
  %2210 = vmatmul.bf16.gmra.mxu0 %v1219
  %v2211 = vpop.f32.mrf.mxu0
  %v2212 = vadd.f32 %v2093, %v2211
  %v2213 = vpop.f32.mrf.mxu0
  %v2214 = vadd.f32 %v2095, %v2213
  %2215 = vmatmul.bf16.gmra.mxu0 %v1229
  %v2216 = vpop.f32.mrf.mxu0
  %v2217 = vadd.f32 %v2098, %v2216
  %v2218 = vpop.f32.mrf.mxu0
  %v2219 = vadd.f32 %v2100, %v2218
  %2220 = vmatmul.bf16.gmra.mxu0 %v1239
  %v2221 = vpop.f32.mrf.mxu0
  %v2222 = vadd.f32 %v2103, %v2221
  %v2223 = vpop.f32.mrf.mxu0
  %v2224 = vadd.f32 %v2105, %v2223
  %2225 = vmatmul.bf16.gmra.mxu0 %v1249
  %v2226 = vpop.f32.mrf.mxu0
  %v2227 = vadd.f32 %v2108, %v2226
  %v2228 = vpop.f32.mrf.mxu0
  %v2229 = vadd.f32 %v2110, %v2228
  %2230 = vmatmul.bf16.gmra.mxu0 %v1259
  %v2231 = vpop.f32.mrf.mxu0
  %v2232 = vadd.f32 %v2113, %v2231
  %v2233 = vpop.f32.mrf.mxu0
  %v2234 = vadd.f32 %v2115, %v2233
  %2235 = vmatmul.bf16.gmra.mxu0 %v1269
  %v2236 = vpop.f32.mrf.mxu0
  %v2237 = vadd.f32 %v2118, %v2236
  %v2238 = vpop.f32.mrf.mxu0
  %v2239 = vadd.f32 %v2120, %v2238
  %2240 = vmatmul.bf16.gmra.mxu0 %v1279
  %v2241 = vpop.f32.mrf.mxu0
  %v2242 = vadd.f32 %v2123, %v2241
  %v2243 = vpop.f32.mrf.mxu0
  %v2244 = vadd.f32 %v2125, %v2243
  %2245 = vmatmul.bf16.gmra.mxu0 %v1289
  %v2246 = vpop.f32.mrf.mxu0
  %v2247 = vadd.f32 %v2128, %v2246
  %v2248 = vpop.f32.mrf.mxu0
  %v2249 = vadd.f32 %v2130, %v2248
  %2250 = vmatmul.bf16.gmra.mxu0 %v1299
  %v2251 = vpop.f32.mrf.mxu0
  %v2252 = vadd.f32 %v2133, %v2251
  %v2253 = vpop.f32.mrf.mxu0
  %v2254 = vadd.f32 %v2135, %v2253
  %2255 = vmatmul.bf16.gmra.mxu0 %v1309
  %v2256 = vpop.f32.mrf.mxu0
  %v2257 = vadd.f32 %v2138, %v2256
  %v2258 = vpop.f32.mrf.mxu0
  %v2259 = vadd.f32 %v2140, %v2258
  %2260 = vmatmul.bf16.gmra.mxu0 %v1319
  %v2261 = vpop.f32.mrf.mxu0
  %v2262 = vadd.f32 %v2143, %v2261
  %v2263 = vpop.f32.mrf.mxu0
  %v2264 = vadd.f32 %v2145, %v2263
  %2265 = vmatmul.bf16.gmra.mxu0 %v1329
  %v2266 = vpop.f32.mrf.mxu0
  %v2267 = vadd.f32 %v2148, %v2266
  %v2268 = vpop.f32.mrf.mxu0
  %v2269 = vadd.f32 %v2150, %v2268
  %2270 = vmatmul.bf16.gmra.mxu0 %v1339
  %v2271 = vpop.f32.mrf.mxu0
  %v2272 = vadd.f32 %v2153, %v2271
  %v2273 = vpop.f32.mrf.mxu0
  %v2274 = vadd.f32 %v2155, %v2273
  %2275 = vmatmul.bf16.gmra.mxu0 %v1349
  %v2276 = vpop.f32.mrf.mxu0
  %v2277 = vadd.f32 %v2158, %v2276
  %v2278 = vpop.f32.mrf.mxu0
  %v2279 = vadd.f32 %v2160, %v2278
  %2280 = vmatmul.bf16.gmra.mxu0 %v1359
  %v2281 = vpop.f32.mrf.mxu0
  %v2282 = vadd.f32 %v2163, %v2281
  %v2283 = vpop.f32.mrf.mxu0
  %v2284 = vadd.f32 %v2165, %v2283
  %2285 = vmatmul.bf16.gmra.mxu0 %v1369
  %v2286 = vpop.f32.mrf.mxu0
  %v2287 = vadd.f32 %v2168, %v2286
  %v2288 = vpop.f32.mrf.mxu0
  %v2289 = vadd.f32 %v2170, %v2288
  %2290 = vmatmul.bf16.gmra.mxu0 %v1379
  %v2291 = vpop.f32.mrf.mxu0
  %v2292 = vadd.f32 %v2173, %v2291
  %v2293 = vpop.f32.mrf.mxu0
  %v2294 = vadd.f32 %v2175, %v2293
  %2295 = vmatmul.bf16.gmra.mxu0 %v1389
  %v2296 = vpop.f32.mrf.mxu0
  %v2297 = vadd.f32 %v2178, %v2296
  %v2298 = vpop.f32.mrf.mxu0
  %v2299 = vadd.f32 %v2180, %v2298
  %2300 = vmatmul.bf16.gmra.mxu0 %v1399
  %v2301 = vpop.f32.mrf.mxu0
  %v2302 = vadd.f32 %v2183, %v2301
  %v2303 = vpop.f32.mrf.mxu0
  %v2304 = vadd.f32 %v2185, %v2303
  %2305 = vmatmul.bf16.gmra.mxu0 %v1409
  %v2306 = vpop.f32.mrf.mxu0
  %v2307 = vadd.f32 %v2188, %v2306
  %v2308 = vpop.f32.mrf.mxu0
  %v2309 = vadd.f32 %v2190, %v2308
  %2310 = vdwg.mxu0
  %2311 = vmatpush.bf16.msra.mxu0 %v1618
  %2312 = vmatpush.bf16.msra.mxu0 %v1617
  %2313 = vmatpush.bf16.msra.mxu0 %v1616
  %2314 = vmatpush.bf16.msra.mxu0 %v1615
  %2315 = vmatpush.bf16.msra.mxu0 %v1614
  %2316 = vmatpush.bf16.msra.mxu0 %v1613
  %2317 = vmatpush.bf16.msra.mxu0 %v1612
  %2318 = vmatpush.bf16.msra.mxu0 %v1611
  %2319 = vmatmul.bf16.gmra.mxu0 %v1200
  %v2320 = vpop.f32.mrf.mxu0
  %v2321 = vadd.f32 %v2202, %v2320
  %v2322 = vpop.f32.mrf.mxu0
  %v2323 = vadd.f32 %v2204, %v2322
  %2324 = vmatmul.bf16.gmra.mxu0 %v1210
  %v2325 = vpop.f32.mrf.mxu0
  %v2326 = vadd.f32 %v2207, %v2325
  %v2327 = vpop.f32.mrf.mxu0
  %v2328 = vadd.f32 %v2209, %v2327
  %2329 = vmatmul.bf16.gmra.mxu0 %v1220
  %v2330 = vpop.f32.mrf.mxu0
  %v2331 = vadd.f32 %v2212, %v2330
  %v2332 = vpop.f32.mrf.mxu0
  %v2333 = vadd.f32 %v2214, %v2332
  %2334 = vmatmul.bf16.gmra.mxu0 %v1230
  %v2335 = vpop.f32.mrf.mxu0
  %v2336 = vadd.f32 %v2217, %v2335
  %v2337 = vpop.f32.mrf.mxu0
  %v2338 = vadd.f32 %v2219, %v2337
  %2339 = vmatmul.bf16.gmra.mxu0 %v1240
  %v2340 = vpop.f32.mrf.mxu0
  %v2341 = vadd.f32 %v2222, %v2340
  %v2342 = vpop.f32.mrf.mxu0
  %v2343 = vadd.f32 %v2224, %v2342
  %2344 = vmatmul.bf16.gmra.mxu0 %v1250
  %v2345 = vpop.f32.mrf.mxu0
  %v2346 = vadd.f32 %v2227, %v2345
  %v2347 = vpop.f32.mrf.mxu0
  %v2348 = vadd.f32 %v2229, %v2347
  %2349 = vmatmul.bf16.gmra.mxu0 %v1260
  %v2350 = vpop.f32.mrf.mxu0
  %v2351 = vadd.f32 %v2232, %v2350
  %v2352 = vpop.f32.mrf.mxu0
  %v2353 = vadd.f32 %v2234, %v2352
  %2354 = vmatmul.bf16.gmra.mxu0 %v1270
  %v2355 = vpop.f32.mrf.mxu0
  %v2356 = vadd.f32 %v2237, %v2355
  %v2357 = vpop.f32.mrf.mxu0
  %v2358 = vadd.f32 %v2239, %v2357
  %2359 = vmatmul.bf16.gmra.mxu0 %v1280
  %v2360 = vpop.f32.mrf.mxu0
  %v2361 = vadd.f32 %v2242, %v2360
  %v2362 = vpop.f32.mrf.mxu0
  %v2363 = vadd.f32 %v2244, %v2362
  %2364 = vmatmul.bf16.gmra.mxu0 %v1290
  %v2365 = vpop.f32.mrf.mxu0
  %v2366 = vadd.f32 %v2247, %v2365
  %v2367 = vpop.f32.mrf.mxu0
  %v2368 = vadd.f32 %v2249, %v2367
  %2369 = vmatmul.bf16.gmra.mxu0 %v1300
  %v2370 = vpop.f32.mrf.mxu0
  %v2371 = vadd.f32 %v2252, %v2370
  %v2372 = vpop.f32.mrf.mxu0
  %v2373 = vadd.f32 %v2254, %v2372
  %2374 = vmatmul.bf16.gmra.mxu0 %v1310
  %v2375 = vpop.f32.mrf.mxu0
  %v2376 = vadd.f32 %v2257, %v2375
  %v2377 = vpop.f32.mrf.mxu0
  %v2378 = vadd.f32 %v2259, %v2377
  %2379 = vmatmul.bf16.gmra.mxu0 %v1320
  %v2380 = vpop.f32.mrf.mxu0
  %v2381 = vadd.f32 %v2262, %v2380
  %v2382 = vpop.f32.mrf.mxu0
  %v2383 = vadd.f32 %v2264, %v2382
  %2384 = vmatmul.bf16.gmra.mxu0 %v1330
  %v2385 = vpop.f32.mrf.mxu0
  %v2386 = vadd.f32 %v2267, %v2385
  %v2387 = vpop.f32.mrf.mxu0
  %v2388 = vadd.f32 %v2269, %v2387
  %2389 = vmatmul.bf16.gmra.mxu0 %v1340
  %v2390 = vpop.f32.mrf.mxu0
  %v2391 = vadd.f32 %v2272, %v2390
  %v2392 = vpop.f32.mrf.mxu0
  %v2393 = vadd.f32 %v2274, %v2392
  %2394 = vmatmul.bf16.gmra.mxu0 %v1350
  %v2395 = vpop.f32.mrf.mxu0
  %v2396 = vadd.f32 %v2277, %v2395
  %v2397 = vpop.f32.mrf.mxu0
  %v2398 = vadd.f32 %v2279, %v2397
  %2399 = vmatmul.bf16.gmra.mxu0 %v1360
  %v2400 = vpop.f32.mrf.mxu0
  %v2401 = vadd.f32 %v2282, %v2400
  %v2402 = vpop.f32.mrf.mxu0
  %v2403 = vadd.f32 %v2284, %v2402
  %2404 = vmatmul.bf16.gmra.mxu0 %v1370
  %v2405 = vpop.f32.mrf.mxu0
  %v2406 = vadd.f32 %v2287, %v2405
  %v2407 = vpop.f32.mrf.mxu0
  %v2408 = vadd.f32 %v2289, %v2407
  %2409 = vmatmul.bf16.gmra.mxu0 %v1380
  %v2410 = vpop.f32.mrf.mxu0
  %v2411 = vadd.f32 %v2292, %v2410
  %v2412 = vpop.f32.mrf.mxu0
  %v2413 = vadd.f32 %v2294, %v2412
  %2414 = vmatmul.bf16.gmra.mxu0 %v1390
  %v2415 = vpop.f32.mrf.mxu0
  %v2416 = vadd.f32 %v2297, %v2415
  %v2417 = vpop.f32.mrf.mxu0
  %v2418 = vadd.f32 %v2299, %v2417
  %2419 = vmatmul.bf16.gmra.mxu0 %v1400
  %v2420 = vpop.f32.mrf.mxu0
  %v2421 = vadd.f32 %v2302, %v2420
  %v2422 = vpop.f32.mrf.mxu0
  %v2423 = vadd.f32 %v2304, %v2422
  %2424 = vmatmul.bf16.gmra.mxu0 %v1410
  %v2425 = vpop.f32.mrf.mxu0
  %v2426 = vadd.f32 %v2307, %v2425
  %v2427 = vpop.f32.mrf.mxu0
  %v2428 = vadd.f32 %v2309, %v2427
  %2429 = vdwg.mxu0
  %2430 = vmatpush.bf16.msra.mxu0 %v1626
  %2431 = vmatpush.bf16.msra.mxu0 %v1625
  %2432 = vmatpush.bf16.msra.mxu0 %v1624
  %2433 = vmatpush.bf16.msra.mxu0 %v1623
  %2434 = vmatpush.bf16.msra.mxu0 %v1622
  %2435 = vmatpush.bf16.msra.mxu0 %v1621
  %2436 = vmatpush.bf16.msra.mxu0 %v1620
  %2437 = vmatpush.bf16.msra.mxu0 %v1619
  %2438 = vmatmul.bf16.gmra.mxu0 %v1201
  %v2439 = vpop.f32.mrf.mxu0
  %v2440 = vadd.f32 %v2321, %v2439
  %v2441 = vpop.f32.mrf.mxu0
  %v2442 = vadd.f32 %v2323, %v2441
  %2443 = vmatmul.bf16.gmra.mxu0 %v1211
  %v2444 = vpop.f32.mrf.mxu0
  %v2445 = vadd.f32 %v2326, %v2444
  %v2446 = vpop.f32.mrf.mxu0
  %v2447 = vadd.f32 %v2328, %v2446
  %2448 = vmatmul.bf16.gmra.mxu0 %v1221
  %v2449 = vpop.f32.mrf.mxu0
  %v2450 = vadd.f32 %v2331, %v2449
  %v2451 = vpop.f32.mrf.mxu0
  %v2452 = vadd.f32 %v2333, %v2451
  %2453 = vmatmul.bf16.gmra.mxu0 %v1231
  %v2454 = vpop.f32.mrf.mxu0
  %v2455 = vadd.f32 %v2336, %v2454
  %v2456 = vpop.f32.mrf.mxu0
  %v2457 = vadd.f32 %v2338, %v2456
  %2458 = vmatmul.bf16.gmra.mxu0 %v1241
  %v2459 = vpop.f32.mrf.mxu0
  %v2460 = vadd.f32 %v2341, %v2459
  %v2461 = vpop.f32.mrf.mxu0
  %v2462 = vadd.f32 %v2343, %v2461
  %2463 = vmatmul.bf16.gmra.mxu0 %v1251
  %v2464 = vpop.f32.mrf.mxu0
  %v2465 = vadd.f32 %v2346, %v2464
  %v2466 = vpop.f32.mrf.mxu0
  %v2467 = vadd.f32 %v2348, %v2466
  %2468 = vmatmul.bf16.gmra.mxu0 %v1261
  %v2469 = vpop.f32.mrf.mxu0
  %v2470 = vadd.f32 %v2351, %v2469
  %v2471 = vpop.f32.mrf.mxu0
  %v2472 = vadd.f32 %v2353, %v2471
  %2473 = vmatmul.bf16.gmra.mxu0 %v1271
  %v2474 = vpop.f32.mrf.mxu0
  %v2475 = vadd.f32 %v2356, %v2474
  %v2476 = vpop.f32.mrf.mxu0
  %v2477 = vadd.f32 %v2358, %v2476
  %2478 = vmatmul.bf16.gmra.mxu0 %v1281
  %v2479 = vpop.f32.mrf.mxu0
  %v2480 = vadd.f32 %v2361, %v2479
  %v2481 = vpop.f32.mrf.mxu0
  %v2482 = vadd.f32 %v2363, %v2481
  %2483 = vmatmul.bf16.gmra.mxu0 %v1291
  %v2484 = vpop.f32.mrf.mxu0
  %v2485 = vadd.f32 %v2366, %v2484
  %v2486 = vpop.f32.mrf.mxu0
  %v2487 = vadd.f32 %v2368, %v2486
  %2488 = vmatmul.bf16.gmra.mxu0 %v1301
  %v2489 = vpop.f32.mrf.mxu0
  %v2490 = vadd.f32 %v2371, %v2489
  %v2491 = vpop.f32.mrf.mxu0
  %v2492 = vadd.f32 %v2373, %v2491
  %2493 = vmatmul.bf16.gmra.mxu0 %v1311
  %v2494 = vpop.f32.mrf.mxu0
  %v2495 = vadd.f32 %v2376, %v2494
  %v2496 = vpop.f32.mrf.mxu0
  %v2497 = vadd.f32 %v2378, %v2496
  %2498 = vmatmul.bf16.gmra.mxu0 %v1321
  %v2499 = vpop.f32.mrf.mxu0
  %v2500 = vadd.f32 %v2381, %v2499
  %v2501 = vpop.f32.mrf.mxu0
  %v2502 = vadd.f32 %v2383, %v2501
  %2503 = vmatmul.bf16.gmra.mxu0 %v1331
  %v2504 = vpop.f32.mrf.mxu0
  %v2505 = vadd.f32 %v2386, %v2504
  %v2506 = vpop.f32.mrf.mxu0
  %v2507 = vadd.f32 %v2388, %v2506
  %2508 = vmatmul.bf16.gmra.mxu0 %v1341
  %v2509 = vpop.f32.mrf.mxu0
  %v2510 = vadd.f32 %v2391, %v2509
  %v2511 = vpop.f32.mrf.mxu0
  %v2512 = vadd.f32 %v2393, %v2511
  %2513 = vmatmul.bf16.gmra.mxu0 %v1351
  %v2514 = vpop.f32.mrf.mxu0
  %v2515 = vadd.f32 %v2396, %v2514
  %v2516 = vpop.f32.mrf.mxu0
  %v2517 = vadd.f32 %v2398, %v2516
  %2518 = vmatmul.bf16.gmra.mxu0 %v1361
  %v2519 = vpop.f32.mrf.mxu0
  %v2520 = vadd.f32 %v2401, %v2519
  %v2521 = vpop.f32.mrf.mxu0
  %v2522 = vadd.f32 %v2403, %v2521
  %2523 = vmatmul.bf16.gmra.mxu0 %v1371
  %v2524 = vpop.f32.mrf.mxu0
  %v2525 = vadd.f32 %v2406, %v2524
  %v2526 = vpop.f32.mrf.mxu0
  %v2527 = vadd.f32 %v2408, %v2526
  %2528 = vmatmul.bf16.gmra.mxu0 %v1381
  %v2529 = vpop.f32.mrf.mxu0
  %v2530 = vadd.f32 %v2411, %v2529
  %v2531 = vpop.f32.mrf.mxu0
  %v2532 = vadd.f32 %v2413, %v2531
  %2533 = vmatmul.bf16.gmra.mxu0 %v1391
  %v2534 = vpop.f32.mrf.mxu0
  %v2535 = vadd.f32 %v2416, %v2534
  %v2536 = vpop.f32.mrf.mxu0
  %v2537 = vadd.f32 %v2418, %v2536
  %2538 = vmatmul.bf16.gmra.mxu0 %v1401
  %v2539 = vpop.f32.mrf.mxu0
  %v2540 = vadd.f32 %v2421, %v2539
  %v2541 = vpop.f32.mrf.mxu0
  %v2542 = vadd.f32 %v2423, %v2541
  %2543 = vmatmul.bf16.gmra.mxu0 %v1411
  %v2544 = vpop.f32.mrf.mxu0
  %v2545 = vadd.f32 %v2426, %v2544
  %v2546 = vpop.f32.mrf.mxu0
  %v2547 = vadd.f32 %v2428, %v2546
  %2548 = vdwg.mxu0
  %2549 = vmatpush.bf16.msra.mxu0 %v1634
  %2550 = vmatpush.bf16.msra.mxu0 %v1633
  %2551 = vmatpush.bf16.msra.mxu0 %v1632
  %2552 = vmatpush.bf16.msra.mxu0 %v1631
  %2553 = vmatpush.bf16.msra.mxu0 %v1630
  %2554 = vmatpush.bf16.msra.mxu0 %v1629
  %2555 = vmatpush.bf16.msra.mxu0 %v1628
  %2556 = vmatpush.bf16.msra.mxu0 %v1627
  %2557 = vmatmul.bf16.gmra.mxu0 %v1202
  %v2558 = vpop.f32.mrf.mxu0
  %v2559 = vadd.f32 %v2440, %v2558
  %v2560 = vpop.f32.mrf.mxu0
  %v2561 = vadd.f32 %v2442, %v2560
  %2562 = vmatmul.bf16.gmra.mxu0 %v1212
  %v2563 = vpop.f32.mrf.mxu0
  %v2564 = vadd.f32 %v2445, %v2563
  %v2565 = vpop.f32.mrf.mxu0
  %v2566 = vadd.f32 %v2447, %v2565
  %2567 = vmatmul.bf16.gmra.mxu0 %v1222
  %v2568 = vpop.f32.mrf.mxu0
  %v2569 = vadd.f32 %v2450, %v2568
  %v2570 = vpop.f32.mrf.mxu0
  %v2571 = vadd.f32 %v2452, %v2570
  %2572 = vmatmul.bf16.gmra.mxu0 %v1232
  %v2573 = vpop.f32.mrf.mxu0
  %v2574 = vadd.f32 %v2455, %v2573
  %v2575 = vpop.f32.mrf.mxu0
  %v2576 = vadd.f32 %v2457, %v2575
  %2577 = vmatmul.bf16.gmra.mxu0 %v1242
  %v2578 = vpop.f32.mrf.mxu0
  %v2579 = vadd.f32 %v2460, %v2578
  %v2580 = vpop.f32.mrf.mxu0
  %v2581 = vadd.f32 %v2462, %v2580
  %2582 = vmatmul.bf16.gmra.mxu0 %v1252
  %v2583 = vpop.f32.mrf.mxu0
  %v2584 = vadd.f32 %v2465, %v2583
  %v2585 = vpop.f32.mrf.mxu0
  %v2586 = vadd.f32 %v2467, %v2585
  %2587 = vmatmul.bf16.gmra.mxu0 %v1262
  %v2588 = vpop.f32.mrf.mxu0
  %v2589 = vadd.f32 %v2470, %v2588
  %v2590 = vpop.f32.mrf.mxu0
  %v2591 = vadd.f32 %v2472, %v2590
  %2592 = vmatmul.bf16.gmra.mxu0 %v1272
  %v2593 = vpop.f32.mrf.mxu0
  %v2594 = vadd.f32 %v2475, %v2593
  %v2595 = vpop.f32.mrf.mxu0
  %v2596 = vadd.f32 %v2477, %v2595
  %2597 = vmatmul.bf16.gmra.mxu0 %v1282
  %v2598 = vpop.f32.mrf.mxu0
  %v2599 = vadd.f32 %v2480, %v2598
  %v2600 = vpop.f32.mrf.mxu0
  %v2601 = vadd.f32 %v2482, %v2600
  %2602 = vmatmul.bf16.gmra.mxu0 %v1292
  %v2603 = vpop.f32.mrf.mxu0
  %v2604 = vadd.f32 %v2485, %v2603
  %v2605 = vpop.f32.mrf.mxu0
  %v2606 = vadd.f32 %v2487, %v2605
  %2607 = vmatmul.bf16.gmra.mxu0 %v1302
  %v2608 = vpop.f32.mrf.mxu0
  %v2609 = vadd.f32 %v2490, %v2608
  %v2610 = vpop.f32.mrf.mxu0
  %v2611 = vadd.f32 %v2492, %v2610
  %2612 = vmatmul.bf16.gmra.mxu0 %v1312
  %v2613 = vpop.f32.mrf.mxu0
  %v2614 = vadd.f32 %v2495, %v2613
  %v2615 = vpop.f32.mrf.mxu0
  %v2616 = vadd.f32 %v2497, %v2615
  %2617 = vmatmul.bf16.gmra.mxu0 %v1322
  %v2618 = vpop.f32.mrf.mxu0
  %v2619 = vadd.f32 %v2500, %v2618
  %v2620 = vpop.f32.mrf.mxu0
  %v2621 = vadd.f32 %v2502, %v2620
  %2622 = vmatmul.bf16.gmra.mxu0 %v1332
  %v2623 = vpop.f32.mrf.mxu0
  %v2624 = vadd.f32 %v2505, %v2623
  %v2625 = vpop.f32.mrf.mxu0
  %v2626 = vadd.f32 %v2507, %v2625
  %2627 = vmatmul.bf16.gmra.mxu0 %v1342
  %v2628 = vpop.f32.mrf.mxu0
  %v2629 = vadd.f32 %v2510, %v2628
  %v2630 = vpop.f32.mrf.mxu0
  %v2631 = vadd.f32 %v2512, %v2630
  %2632 = vmatmul.bf16.gmra.mxu0 %v1352
  %v2633 = vpop.f32.mrf.mxu0
  %v2634 = vadd.f32 %v2515, %v2633
  %v2635 = vpop.f32.mrf.mxu0
  %v2636 = vadd.f32 %v2517, %v2635
  %2637 = vmatmul.bf16.gmra.mxu0 %v1362
  %v2638 = vpop.f32.mrf.mxu0
  %v2639 = vadd.f32 %v2520, %v2638
  %v2640 = vpop.f32.mrf.mxu0
  %v2641 = vadd.f32 %v2522, %v2640
  %2642 = vmatmul.bf16.gmra.mxu0 %v1372
  %v2643 = vpop.f32.mrf.mxu0
  %v2644 = vadd.f32 %v2525, %v2643
  %v2645 = vpop.f32.mrf.mxu0
  %v2646 = vadd.f32 %v2527, %v2645
  %2647 = vmatmul.bf16.gmra.mxu0 %v1382
  %v2648 = vpop.f32.mrf.mxu0
  %v2649 = vadd.f32 %v2530, %v2648
  %v2650 = vpop.f32.mrf.mxu0
  %v2651 = vadd.f32 %v2532, %v2650
  %2652 = vmatmul.bf16.gmra.mxu0 %v1392
  %v2653 = vpop.f32.mrf.mxu0
  %v2654 = vadd.f32 %v2535, %v2653
  %v2655 = vpop.f32.mrf.mxu0
  %v2656 = vadd.f32 %v2537, %v2655
  %2657 = vmatmul.bf16.gmra.mxu0 %v1402
  %v2658 = vpop.f32.mrf.mxu0
  %v2659 = vadd.f32 %v2540, %v2658
  %v2660 = vpop.f32.mrf.mxu0
  %v2661 = vadd.f32 %v2542, %v2660
  %2662 = vmatmul.bf16.gmra.mxu0 %v1412
  %v2663 = vpop.f32.mrf.mxu0
  %v2664 = vadd.f32 %v2545, %v2663
  %v2665 = vpop.f32.mrf.mxu0
  %v2666 = vadd.f32 %v2547, %v2665
  %2667 = vdwg.mxu0
  %2668 = vmatpush.bf16.msra.mxu0 %v1642
  %2669 = vmatpush.bf16.msra.mxu0 %v1641
  %2670 = vmatpush.bf16.msra.mxu0 %v1640
  %2671 = vmatpush.bf16.msra.mxu0 %v1639
  %2672 = vmatpush.bf16.msra.mxu0 %v1638
  %2673 = vmatpush.bf16.msra.mxu0 %v1637
  %2674 = vmatpush.bf16.msra.mxu0 %v1636
  %2675 = vmatpush.bf16.msra.mxu0 %v1635
  %2676 = vmatmul.bf16.gmra.mxu0 %v1203
  %v2677 = vpop.f32.mrf.mxu0
  %v2678 = vadd.f32 %v2559, %v2677
  %v2679 = vpop.f32.mrf.mxu0
  %v2680 = vadd.f32 %v2561, %v2679
  %2681 = vmatmul.bf16.gmra.mxu0 %v1213
  %v2682 = vpop.f32.mrf.mxu0
  %v2683 = vadd.f32 %v2564, %v2682
  %v2684 = vpop.f32.mrf.mxu0
  %v2685 = vadd.f32 %v2566, %v2684
  %2686 = vmatmul.bf16.gmra.mxu0 %v1223
  %v2687 = vpop.f32.mrf.mxu0
  %v2688 = vadd.f32 %v2569, %v2687
  %v2689 = vpop.f32.mrf.mxu0
  %v2690 = vadd.f32 %v2571, %v2689
  %2691 = vmatmul.bf16.gmra.mxu0 %v1233
  %v2692 = vpop.f32.mrf.mxu0
  %v2693 = vadd.f32 %v2574, %v2692
  %v2694 = vpop.f32.mrf.mxu0
  %v2695 = vadd.f32 %v2576, %v2694
  %2696 = vmatmul.bf16.gmra.mxu0 %v1243
  %v2697 = vpop.f32.mrf.mxu0
  %v2698 = vadd.f32 %v2579, %v2697
  %v2699 = vpop.f32.mrf.mxu0
  %v2700 = vadd.f32 %v2581, %v2699
  %2701 = vmatmul.bf16.gmra.mxu0 %v1253
  %v2702 = vpop.f32.mrf.mxu0
  %v2703 = vadd.f32 %v2584, %v2702
  %v2704 = vpop.f32.mrf.mxu0
  %v2705 = vadd.f32 %v2586, %v2704
  %2706 = vmatmul.bf16.gmra.mxu0 %v1263
  %v2707 = vpop.f32.mrf.mxu0
  %v2708 = vadd.f32 %v2589, %v2707
  %v2709 = vpop.f32.mrf.mxu0
  %v2710 = vadd.f32 %v2591, %v2709
  %2711 = vmatmul.bf16.gmra.mxu0 %v1273
  %v2712 = vpop.f32.mrf.mxu0
  %v2713 = vadd.f32 %v2594, %v2712
  %v2714 = vpop.f32.mrf.mxu0
  %v2715 = vadd.f32 %v2596, %v2714
  %2716 = vmatmul.bf16.gmra.mxu0 %v1283
  %v2717 = vpop.f32.mrf.mxu0
  %v2718 = vadd.f32 %v2599, %v2717
  %v2719 = vpop.f32.mrf.mxu0
  %v2720 = vadd.f32 %v2601, %v2719
  %2721 = vmatmul.bf16.gmra.mxu0 %v1293
  %v2722 = vpop.f32.mrf.mxu0
  %v2723 = vadd.f32 %v2604, %v2722
  %v2724 = vpop.f32.mrf.mxu0
  %v2725 = vadd.f32 %v2606, %v2724
  %2726 = vmatmul.bf16.gmra.mxu0 %v1303
  %v2727 = vpop.f32.mrf.mxu0
  %v2728 = vadd.f32 %v2609, %v2727
  %v2729 = vpop.f32.mrf.mxu0
  %v2730 = vadd.f32 %v2611, %v2729
  %2731 = vmatmul.bf16.gmra.mxu0 %v1313
  %v2732 = vpop.f32.mrf.mxu0
  %v2733 = vadd.f32 %v2614, %v2732
  %v2734 = vpop.f32.mrf.mxu0
  %v2735 = vadd.f32 %v2616, %v2734
  %2736 = vmatmul.bf16.gmra.mxu0 %v1323
  %v2737 = vpop.f32.mrf.mxu0
  %v2738 = vadd.f32 %v2619, %v2737
  %v2739 = vpop.f32.mrf.mxu0
  %v2740 = vadd.f32 %v2621, %v2739
  %2741 = vmatmul.bf16.gmra.mxu0 %v1333
  %v2742 = vpop.f32.mrf.mxu0
  %v2743 = vadd.f32 %v2624, %v2742
  %v2744 = vpop.f32.mrf.mxu0
  %v2745 = vadd.f32 %v2626, %v2744
  %2746 = vmatmul.bf16.gmra.mxu0 %v1343
  %v2747 = vpop.f32.mrf.mxu0
  %v2748 = vadd.f32 %v2629, %v2747
  %v2749 = vpop.f32.mrf.mxu0
  %v2750 = vadd.f32 %v2631, %v2749
  %2751 = vmatmul.bf16.gmra.mxu0 %v1353
  %v2752 = vpop.f32.mrf.mxu0
  %v2753 = vadd.f32 %v2634, %v2752
  %v2754 = vpop.f32.mrf.mxu0
  %v2755 = vadd.f32 %v2636, %v2754
  %2756 = vmatmul.bf16.gmra.mxu0 %v1363
  %v2757 = vpop.f32.mrf.mxu0
  %v2758 = vadd.f32 %v2639, %v2757
  %v2759 = vpop.f32.mrf.mxu0
  %v2760 = vadd.f32 %v2641, %v2759
  %2761 = vmatmul.bf16.gmra.mxu0 %v1373
  %v2762 = vpop.f32.mrf.mxu0
  %v2763 = vadd.f32 %v2644, %v2762
  %v2764 = vpop.f32.mrf.mxu0
  %v2765 = vadd.f32 %v2646, %v2764
  %2766 = vmatmul.bf16.gmra.mxu0 %v1383
  %v2767 = vpop.f32.mrf.mxu0
  %v2768 = vadd.f32 %v2649, %v2767
  %v2769 = vpop.f32.mrf.mxu0
  %v2770 = vadd.f32 %v2651, %v2769
  %2771 = vmatmul.bf16.gmra.mxu0 %v1393
  %v2772 = vpop.f32.mrf.mxu0
  %v2773 = vadd.f32 %v2654, %v2772
  %v2774 = vpop.f32.mrf.mxu0
  %v2775 = vadd.f32 %v2656, %v2774
  %2776 = vmatmul.bf16.gmra.mxu0 %v1403
  %v2777 = vpop.f32.mrf.mxu0
  %v2778 = vadd.f32 %v2659, %v2777
  %v2779 = vpop.f32.mrf.mxu0
  %v2780 = vadd.f32 %v2661, %v2779
  %2781 = vmatmul.bf16.gmra.mxu0 %v1413
  %v2782 = vpop.f32.mrf.mxu0
  %v2783 = vadd.f32 %v2664, %v2782
  %v2784 = vpop.f32.mrf.mxu0
  %v2785 = vadd.f32 %v2666, %v2784
  %2786 = vdwg.mxu0
  %2787 = vmatpush.bf16.msra.mxu0 0
  %2788 = vmatpush.bf16.msra.mxu0 0
  %2789 = vmatpush.bf16.msra.mxu0 %v1648
  %2790 = vmatpush.bf16.msra.mxu0 %v1647
  %2791 = vmatpush.bf16.msra.mxu0 %v1646
  %2792 = vmatpush.bf16.msra.mxu0 %v1645
  %2793 = vmatpush.bf16.msra.mxu0 %v1644
  %2794 = vmatpush.bf16.msra.mxu0 %v1643
  %2795 = vmatmul.bf16.gmra.mxu0 %v1651
  %v2796 = vpop.f32.mrf.mxu0
  %v2797 = vadd.f32 %v2678, %v2796
  %v2798 = vpop.f32.mrf.mxu0
  %v2799 = vadd.f32 %v2680, %v2798
  %2800 = vmatmul.bf16.gmra.mxu0 %v1654
  %v2801 = vpop.f32.mrf.mxu0
  %v2802 = vadd.f32 %v2683, %v2801
  %v2803 = vpop.f32.mrf.mxu0
  %v2804 = vadd.f32 %v2685, %v2803
  %2805 = vmatmul.bf16.gmra.mxu0 %v1657
  %v2806 = vpop.f32.mrf.mxu0
  %v2807 = vadd.f32 %v2688, %v2806
  %v2808 = vpop.f32.mrf.mxu0
  %v2809 = vadd.f32 %v2690, %v2808
  %2810 = vmatmul.bf16.gmra.mxu0 %v1660
  %v2811 = vpop.f32.mrf.mxu0
  %v2812 = vadd.f32 %v2693, %v2811
  %v2813 = vpop.f32.mrf.mxu0
  %v2814 = vadd.f32 %v2695, %v2813
  %2815 = vmatmul.bf16.gmra.mxu0 %v1663
  %v2816 = vpop.f32.mrf.mxu0
  %v2817 = vadd.f32 %v2698, %v2816
  %v2818 = vpop.f32.mrf.mxu0
  %v2819 = vadd.f32 %v2700, %v2818
  %2820 = vmatmul.bf16.gmra.mxu0 %v1666
  %v2821 = vpop.f32.mrf.mxu0
  %v2822 = vadd.f32 %v2703, %v2821
  %v2823 = vpop.f32.mrf.mxu0
  %v2824 = vadd.f32 %v2705, %v2823
  %2825 = vmatmul.bf16.gmra.mxu0 %v1669
  %v2826 = vpop.f32.mrf.mxu0
  %v2827 = vadd.f32 %v2708, %v2826
  %v2828 = vpop.f32.mrf.mxu0
  %v2829 = vadd.f32 %v2710, %v2828
  %2830 = vmatmul.bf16.gmra.mxu0 %v1672
  %v2831 = vpop.f32.mrf.mxu0
  %v2832 = vadd.f32 %v2713, %v2831
  %v2833 = vpop.f32.mrf.mxu0
  %v2834 = vadd.f32 %v2715, %v2833
  %2835 = vmatmul.bf16.gmra.mxu0 %v1675
  %v2836 = vpop.f32.mrf.mxu0
  %v2837 = vadd.f32 %v2718, %v2836
  %v2838 = vpop.f32.mrf.mxu0
  %v2839 = vadd.f32 %v2720, %v2838
  %2840 = vmatmul.bf16.gmra.mxu0 %v1678
  %v2841 = vpop.f32.mrf.mxu0
  %v2842 = vadd.f32 %v2723, %v2841
  %v2843 = vpop.f32.mrf.mxu0
  %v2844 = vadd.f32 %v2725, %v2843
  %2845 = vmatmul.bf16.gmra.mxu0 %v1681
  %v2846 = vpop.f32.mrf.mxu0
  %v2847 = vadd.f32 %v2728, %v2846
  %v2848 = vpop.f32.mrf.mxu0
  %v2849 = vadd.f32 %v2730, %v2848
  %2850 = vmatmul.bf16.gmra.mxu0 %v1684
  %v2851 = vpop.f32.mrf.mxu0
  %v2852 = vadd.f32 %v2733, %v2851
  %v2853 = vpop.f32.mrf.mxu0
  %v2854 = vadd.f32 %v2735, %v2853
  %2855 = vmatmul.bf16.gmra.mxu0 %v1687
  %v2856 = vpop.f32.mrf.mxu0
  %v2857 = vadd.f32 %v2738, %v2856
  %v2858 = vpop.f32.mrf.mxu0
  %v2859 = vadd.f32 %v2740, %v2858
  %2860 = vmatmul.bf16.gmra.mxu0 %v1690
  %v2861 = vpop.f32.mrf.mxu0
  %v2862 = vadd.f32 %v2743, %v2861
  %v2863 = vpop.f32.mrf.mxu0
  %v2864 = vadd.f32 %v2745, %v2863
  %2865 = vmatmul.bf16.gmra.mxu0 %v1693
  %v2866 = vpop.f32.mrf.mxu0
  %v2867 = vadd.f32 %v2748, %v2866
  %v2868 = vpop.f32.mrf.mxu0
  %v2869 = vadd.f32 %v2750, %v2868
  %2870 = vmatmul.bf16.gmra.mxu0 %v1696
  %v2871 = vpop.f32.mrf.mxu0
  %v2872 = vadd.f32 %v2753, %v2871
  %v2873 = vpop.f32.mrf.mxu0
  %v2874 = vadd.f32 %v2755, %v2873
  %2875 = vmatmul.bf16.gmra.mxu0 %v1699
  %v2876 = vpop.f32.mrf.mxu0
  %v2877 = vadd.f32 %v2758, %v2876
  %v2878 = vpop.f32.mrf.mxu0
  %v2879 = vadd.f32 %v2760, %v2878
  %2880 = vmatmul.bf16.gmra.mxu0 %v1702
  %v2881 = vpop.f32.mrf.mxu0
  %v2882 = vadd.f32 %v2763, %v2881
  %v2883 = vpop.f32.mrf.mxu0
  %v2884 = vadd.f32 %v2765, %v2883
  %2885 = vmatmul.bf16.gmra.mxu0 %v1705
  %v2886 = vpop.f32.mrf.mxu0
  %v2887 = vadd.f32 %v2768, %v2886
  %v2888 = vpop.f32.mrf.mxu0
  %v2889 = vadd.f32 %v2770, %v2888
  %2890 = vmatmul.bf16.gmra.mxu0 %v1708
  %v2891 = vpop.f32.mrf.mxu0
  %v2892 = vadd.f32 %v2773, %v2891
  %v2893 = vpop.f32.mrf.mxu0
  %v2894 = vadd.f32 %v2775, %v2893
  %2895 = vmatmul.bf16.gmra.mxu0 %v1711
  %v2896 = vpop.f32.mrf.mxu0
  %v2897 = vadd.f32 %v2778, %v2896
  %v2898 = vpop.f32.mrf.mxu0
  %v2899 = vadd.f32 %v2780, %v2898
  %2900 = vmatmul.bf16.gmra.mxu0 %v1714
  %v2901 = vpop.f32.mrf.mxu0
  %v2902 = vadd.f32 %v2783, %v2901
  %v2903 = vpop.f32.mrf.mxu0
  %v2904 = vadd.f32 %v2785, %v2903
  %2905 = vdwg.mxu0
  %vm2906 = vcmask 400384
  %v2907 = vsel %vm2906, %v2797, 0.0
  %2908 = vadd.xlane.f32.xlu0 %v2907
  %v2909 = vpop.xlane.xlu0 %2908
  %v2910 = vsel %vm2906, %v2799, 0.0
  %2911 = vadd.xlane.f32.xlu0 %v2910
  %v2912 = vpop.xlane.xlu0 %2911
  %v2913 = vsel %vm2906, %v2802, 0.0
  %2914 = vadd.xlane.f32.xlu0 %v2913
  %v2915 = vpop.xlane.xlu0 %2914
  %v2916 = vsel %vm2906, %v2804, 0.0
  %2917 = vadd.xlane.f32.xlu0 %v2916
  %v2918 = vpop.xlane.xlu0 %2917
  %v2919 = vsel %vm2906, %v2807, 0.0
  %2920 = vadd.xlane.f32.xlu0 %v2919
  %v2921 = vpop.xlane.xlu0 %2920
  %v2922 = vsel %vm2906, %v2809, 0.0
  %2923 = vadd.xlane.f32.xlu0 %v2922
  %v2924 = vpop.xlane.xlu0 %2923
  %v2925 = vsel %vm2906, %v2812, 0.0
  %2926 = vadd.xlane.f32.xlu0 %v2925
  %v2927 = vpop.xlane.xlu0 %2926
  %v2928 = vsel %vm2906, %v2814, 0.0
  %2929 = vadd.xlane.f32.xlu0 %v2928
  %v2930 = vpop.xlane.xlu0 %2929
  %v2931 = vsel %vm2906, %v2817, 0.0
  %2932 = vadd.xlane.f32.xlu0 %v2931
  %v2933 = vpop.xlane.xlu0 %2932
  %v2934 = vsel %vm2906, %v2819, 0.0
  %2935 = vadd.xlane.f32.xlu0 %v2934
  %v2936 = vpop.xlane.xlu0 %2935
  %v2937 = vsel %vm2906, %v2822, 0.0
  %2938 = vadd.xlane.f32.xlu0 %v2937
  %v2939 = vpop.xlane.xlu0 %2938
  %v2940 = vsel %vm2906, %v2824, 0.0
  %2941 = vadd.xlane.f32.xlu0 %v2940
  %v2942 = vpop.xlane.xlu0 %2941
  %v2943 = vsel %vm2906, %v2827, 0.0
  %2944 = vadd.xlane.f32.xlu0 %v2943
  %v2945 = vpop.xlane.xlu0 %2944
  %v2946 = vsel %vm2906, %v2829, 0.0
  %2947 = vadd.xlane.f32.xlu0 %v2946
  %v2948 = vpop.xlane.xlu0 %2947
  %v2949 = vsel %vm2906, %v2832, 0.0
  %2950 = vadd.xlane.f32.xlu0 %v2949
  %v2951 = vpop.xlane.xlu0 %2950
  %v2952 = vsel %vm2906, %v2834, 0.0
  %2953 = vadd.xlane.f32.xlu0 %v2952
  %v2954 = vpop.xlane.xlu0 %2953
  %v2955 = vsel %vm2906, %v2837, 0.0
  %2956 = vadd.xlane.f32.xlu0 %v2955
  %v2957 = vpop.xlane.xlu0 %2956
  %v2958 = vsel %vm2906, %v2839, 0.0
  %2959 = vadd.xlane.f32.xlu0 %v2958
  %v2960 = vpop.xlane.xlu0 %2959
  %v2961 = vsel %vm2906, %v2842, 0.0
  %2962 = vadd.xlane.f32.xlu0 %v2961
  %v2963 = vpop.xlane.xlu0 %2962
  %v2964 = vsel %vm2906, %v2844, 0.0
  %2965 = vadd.xlane.f32.xlu0 %v2964
  %v2966 = vpop.xlane.xlu0 %2965
  %v2967 = vsel %vm2906, %v2847, 0.0
  %2968 = vadd.xlane.f32.xlu0 %v2967
  %v2969 = vpop.xlane.xlu0 %2968
  %v2970 = vsel %vm2906, %v2849, 0.0
  %2971 = vadd.xlane.f32.xlu0 %v2970
  %v2972 = vpop.xlane.xlu0 %2971
  %v2973 = vsel %vm2906, %v2852, 0.0
  %2974 = vadd.xlane.f32.xlu0 %v2973
  %v2975 = vpop.xlane.xlu0 %2974
  %v2976 = vsel %vm2906, %v2854, 0.0
  %2977 = vadd.xlane.f32.xlu0 %v2976
  %v2978 = vpop.xlane.xlu0 %2977
  %v2979 = vsel %vm2906, %v2857, 0.0
  %2980 = vadd.xlane.f32.xlu0 %v2979
  %v2981 = vpop.xlane.xlu0 %2980
  %v2982 = vsel %vm2906, %v2859, 0.0
  %2983 = vadd.xlane.f32.xlu0 %v2982
  %v2984 = vpop.xlane.xlu0 %2983
  %v2985 = vsel %vm2906, %v2862, 0.0
  %2986 = vadd.xlane.f32.xlu0 %v2985
  %v2987 = vpop.xlane.xlu0 %2986
  %v2988 = vsel %vm2906, %v2864, 0.0
  %2989 = vadd.xlane.f32.xlu0 %v2988
  %v2990 = vpop.xlane.xlu0 %2989
  %v2991 = vsel %vm2906, %v2867, 0.0
  %2992 = vadd.xlane.f32.xlu0 %v2991
  %v2993 = vpop.xlane.xlu0 %2992
  %v2994 = vsel %vm2906, %v2869, 0.0
  %2995 = vadd.xlane.f32.xlu0 %v2994
  %v2996 = vpop.xlane.xlu0 %2995
  %v2997 = vsel %vm2906, %v2872, 0.0
  %2998 = vadd.xlane.f32.xlu0 %v2997
  %v2999 = vpop.xlane.xlu0 %2998
  %v3000 = vsel %vm2906, %v2874, 0.0
  %3001 = vadd.xlane.f32.xlu0 %v3000
  %v3002 = vpop.xlane.xlu0 %3001
  %v3003 = vsel %vm2906, %v2877, 0.0
  %3004 = vadd.xlane.f32.xlu0 %v3003
  %v3005 = vpop.xlane.xlu0 %3004
  %v3006 = vsel %vm2906, %v2879, 0.0
  %3007 = vadd.xlane.f32.xlu0 %v3006
  %v3008 = vpop.xlane.xlu0 %3007
  %v3009 = vsel %vm2906, %v2882, 0.0
  %3010 = vadd.xlane.f32.xlu0 %v3009
  %v3011 = vpop.xlane.xlu0 %3010
  %v3012 = vsel %vm2906, %v2884, 0.0
  %3013 = vadd.xlane.f32.xlu0 %v3012
  %v3014 = vpop.xlane.xlu0 %3013
  %v3015 = vsel %vm2906, %v2887, 0.0
  %3016 = vadd.xlane.f32.xlu0 %v3015
  %v3017 = vpop.xlane.xlu0 %3016
  %v3018 = vsel %vm2906, %v2889, 0.0
  %3019 = vadd.xlane.f32.xlu0 %v3018
  %v3020 = vpop.xlane.xlu0 %3019
  %v3021 = vsel %vm2906, %v2892, 0.0
  %3022 = vadd.xlane.f32.xlu0 %v3021
  %v3023 = vpop.xlane.xlu0 %3022
  %v3024 = vsel %vm2906, %v2894, 0.0
  %3025 = vadd.xlane.f32.xlu0 %v3024
  %v3026 = vpop.xlane.xlu0 %3025
  %v3027 = vsel %vm2906, %v2897, 0.0
  %3028 = vadd.xlane.f32.xlu0 %v3027
  %v3029 = vpop.xlane.xlu0 %3028
  %v3030 = vsel %vm2906, %v2899, 0.0
  %3031 = vadd.xlane.f32.xlu0 %v3030
  %v3032 = vpop.xlane.xlu0 %3031
  %v3033 = vsel %vm2906, %v2902, 0.0
  %3034 = vadd.xlane.f32.xlu0 %v3033
  %v3035 = vpop.xlane.xlu0 %3034
  %v3036 = vsel %vm2906, %v2904, 0.0
  %3037 = vadd.xlane.f32.xlu0 %v3036
  %v3038 = vpop.xlane.xlu0 %3037
  %v3039 = vmul.f32 %v2909, 0.020408163
  %v3040 = vmul.f32 %v2912, 0.020408163
  %v3041 = vmul.f32 %v2915, 0.020408163
  %v3042 = vmul.f32 %v2918, 0.020408163
  %v3043 = vmul.f32 %v2921, 0.020408163
  %v3044 = vmul.f32 %v2924, 0.020408163
  %v3045 = vmul.f32 %v2927, 0.020408163
  %v3046 = vmul.f32 %v2930, 0.020408163
  %v3047 = vmul.f32 %v2933, 0.020408163
  %v3048 = vmul.f32 %v2936, 0.020408163
  %v3049 = vmul.f32 %v2939, 0.020408163
  %v3050 = vmul.f32 %v2942, 0.020408163
  %v3051 = vmul.f32 %v2945, 0.020408163
  %v3052 = vmul.f32 %v2948, 0.020408163
  %v3053 = vmul.f32 %v2951, 0.020408163
  %v3054 = vmul.f32 %v2954, 0.020408163
  %v3055 = vmul.f32 %v2957, 0.020408163
  %v3056 = vmul.f32 %v2960, 0.020408163
  %v3057 = vmul.f32 %v2963, 0.020408163
  %v3058 = vmul.f32 %v2966, 0.020408163
  %v3059 = vmul.f32 %v2969, 0.020408163
  %v3060 = vmul.f32 %v2972, 0.020408163
  %v3061 = vmul.f32 %v2975, 0.020408163
  %v3062 = vmul.f32 %v2978, 0.020408163
  %v3063 = vmul.f32 %v2981, 0.020408163
  %v3064 = vmul.f32 %v2984, 0.020408163
  %v3065 = vmul.f32 %v2987, 0.020408163
  %v3066 = vmul.f32 %v2990, 0.020408163
  %v3067 = vmul.f32 %v2993, 0.020408163
  %v3068 = vmul.f32 %v2996, 0.020408163
  %v3069 = vmul.f32 %v2999, 0.020408163
  %v3070 = vmul.f32 %v3002, 0.020408163
  %v3071 = vmul.f32 %v3005, 0.020408163
  %v3072 = vmul.f32 %v3008, 0.020408163
  %v3073 = vmul.f32 %v3011, 0.020408163
  %v3074 = vmul.f32 %v3014, 0.020408163
  %v3075 = vmul.f32 %v3017, 0.020408163
  %v3076 = vmul.f32 %v3020, 0.020408163
  %v3077 = vmul.f32 %v3023, 0.020408163
  %v3078 = vmul.f32 %v3026, 0.020408163
  %v3079 = vmul.f32 %v3029, 0.020408163
  %v3080 = vmul.f32 %v3032, 0.020408163
  %v3081 = vmul.f32 %v3035, 0.020408163
  %v3082 = vmul.f32 %v3038, 0.020408163
  %v3083 = vsub.f32 %v2797, %v3039
  %v3084 = vsub.f32 %v2799, %v3040
  %v3085 = vsub.f32 %v2802, %v3041
  %v3086 = vsub.f32 %v2804, %v3042
  %v3087 = vsub.f32 %v2807, %v3043
  %v3088 = vsub.f32 %v2809, %v3044
  %v3089 = vsub.f32 %v2812, %v3045
  %v3090 = vsub.f32 %v2814, %v3046
  %v3091 = vsub.f32 %v2817, %v3047
  %v3092 = vsub.f32 %v2819, %v3048
  %v3093 = vsub.f32 %v2822, %v3049
  %v3094 = vsub.f32 %v2824, %v3050
  %v3095 = vsub.f32 %v2827, %v3051
  %v3096 = vsub.f32 %v2829, %v3052
  %v3097 = vsub.f32 %v2832, %v3053
  %v3098 = vsub.f32 %v2834, %v3054
  %v3099 = vsub.f32 %v2837, %v3055
  %v3100 = vsub.f32 %v2839, %v3056
  %v3101 = vsub.f32 %v2842, %v3057
  %v3102 = vsub.f32 %v2844, %v3058
  %v3103 = vsub.f32 %v2847, %v3059
  %v3104 = vsub.f32 %v2849, %v3060
  %v3105 = vsub.f32 %v2852, %v3061
  %v3106 = vsub.f32 %v2854, %v3062
  %v3107 = vsub.f32 %v2857, %v3063
  %v3108 = vsub.f32 %v2859, %v3064
  %v3109 = vsub.f32 %v2862, %v3065
  %v3110 = vsub.f32 %v2864, %v3066
  %v3111 = vsub.f32 %v2867, %v3067
  %v3112 = vsub.f32 %v2869, %v3068
  %v3113 = vsub.f32 %v2872, %v3069
  %v3114 = vsub.f32 %v2874, %v3070
  %v3115 = vsub.f32 %v2877, %v3071
  %v3116 = vsub.f32 %v2879, %v3072
  %v3117 = vsub.f32 %v2882, %v3073
  %v3118 = vsub.f32 %v2884, %v3074
  %v3119 = vsub.f32 %v2887, %v3075
  %v3120 = vsub.f32 %v2889, %v3076
  %v3121 = vsub.f32 %v2892, %v3077
  %v3122 = vsub.f32 %v2894, %v3078
  %v3123 = vsub.f32 %v2897, %v3079
  %v3124 = vsub.f32 %v2899, %v3080
  %v3125 = vsub.f32 %v2902, %v3081
  %v3126 = vsub.f32 %v2904, %v3082
  %v3127 = vmul.f32 %v3083, %v3083
  %v3128 = vmul.f32 %v3084, %v3084
  %v3129 = vmul.f32 %v3085, %v3085
  %v3130 = vmul.f32 %v3086, %v3086
  %v3131 = vmul.f32 %v3087, %v3087
  %v3132 = vmul.f32 %v3088, %v3088
  %v3133 = vmul.f32 %v3089, %v3089
  %v3134 = vmul.f32 %v3090, %v3090
  %v3135 = vmul.f32 %v3091, %v3091
  %v3136 = vmul.f32 %v3092, %v3092
  %v3137 = vmul.f32 %v3093, %v3093
  %v3138 = vmul.f32 %v3094, %v3094
  %v3139 = vmul.f32 %v3095, %v3095
  %v3140 = vmul.f32 %v3096, %v3096
  %v3141 = vmul.f32 %v3097, %v3097
  %v3142 = vmul.f32 %v3098, %v3098
  %v3143 = vmul.f32 %v3099, %v3099
  %v3144 = vmul.f32 %v3100, %v3100
  %v3145 = vmul.f32 %v3101, %v3101
  %v3146 = vmul.f32 %v3102, %v3102
  %v3147 = vmul.f32 %v3103, %v3103
  %v3148 = vmul.f32 %v3104, %v3104
  %v3149 = vmul.f32 %v3105, %v3105
  %v3150 = vmul.f32 %v3106, %v3106
  %v3151 = vmul.f32 %v3107, %v3107
  %v3152 = vmul.f32 %v3108, %v3108
  %v3153 = vmul.f32 %v3109, %v3109
  %v3154 = vmul.f32 %v3110, %v3110
  %v3155 = vmul.f32 %v3111, %v3111
  %v3156 = vmul.f32 %v3112, %v3112
  %v3157 = vmul.f32 %v3113, %v3113
  %v3158 = vmul.f32 %v3114, %v3114
  %v3159 = vmul.f32 %v3115, %v3115
  %v3160 = vmul.f32 %v3116, %v3116
  %v3161 = vmul.f32 %v3117, %v3117
  %v3162 = vmul.f32 %v3118, %v3118
  %v3163 = vmul.f32 %v3119, %v3119
  %v3164 = vmul.f32 %v3120, %v3120
  %v3165 = vmul.f32 %v3121, %v3121
  %v3166 = vmul.f32 %v3122, %v3122
  %v3167 = vmul.f32 %v3123, %v3123
  %v3168 = vmul.f32 %v3124, %v3124
  %v3169 = vmul.f32 %v3125, %v3125
  %v3170 = vmul.f32 %v3126, %v3126
  %v3171 = vsel %vm2906, %v3127, 0.0
  %3172 = vadd.xlane.f32.xlu0 %v3171
  %v3173 = vpop.xlane.xlu0 %3172
  %v3174 = vsel %vm2906, %v3128, 0.0
  %3175 = vadd.xlane.f32.xlu0 %v3174
  %v3176 = vpop.xlane.xlu0 %3175
  %v3177 = vsel %vm2906, %v3129, 0.0
  %3178 = vadd.xlane.f32.xlu0 %v3177
  %v3179 = vpop.xlane.xlu0 %3178
  %v3180 = vsel %vm2906, %v3130, 0.0
  %3181 = vadd.xlane.f32.xlu0 %v3180
  %v3182 = vpop.xlane.xlu0 %3181
  %v3183 = vsel %vm2906, %v3131, 0.0
  %3184 = vadd.xlane.f32.xlu0 %v3183
  %v3185 = vpop.xlane.xlu0 %3184
  %v3186 = vsel %vm2906, %v3132, 0.0
  %3187 = vadd.xlane.f32.xlu0 %v3186
  %v3188 = vpop.xlane.xlu0 %3187
  %v3189 = vsel %vm2906, %v3133, 0.0
  %3190 = vadd.xlane.f32.xlu0 %v3189
  %v3191 = vpop.xlane.xlu0 %3190
  %v3192 = vsel %vm2906, %v3134, 0.0
  %3193 = vadd.xlane.f32.xlu0 %v3192
  %v3194 = vpop.xlane.xlu0 %3193
  %v3195 = vsel %vm2906, %v3135, 0.0
  %3196 = vadd.xlane.f32.xlu0 %v3195
  %v3197 = vpop.xlane.xlu0 %3196
  %v3198 = vsel %vm2906, %v3136, 0.0
  %3199 = vadd.xlane.f32.xlu0 %v3198
  %v3200 = vpop.xlane.xlu0 %3199
  %v3201 = vsel %vm2906, %v3137, 0.0
  %3202 = vadd.xlane.f32.xlu0 %v3201
  %v3203 = vpop.xlane.xlu0 %3202
  %v3204 = vsel %vm2906, %v3138, 0.0
  %3205 = vadd.xlane.f32.xlu0 %v3204
  %v3206 = vpop.xlane.xlu0 %3205
  %v3207 = vsel %vm2906, %v3139, 0.0
  %3208 = vadd.xlane.f32.xlu0 %v3207
  %v3209 = vpop.xlane.xlu0 %3208
  %v3210 = vsel %vm2906, %v3140, 0.0
  %3211 = vadd.xlane.f32.xlu0 %v3210
  %v3212 = vpop.xlane.xlu0 %3211
  %v3213 = vsel %vm2906, %v3141, 0.0
  %3214 = vadd.xlane.f32.xlu0 %v3213
  %v3215 = vpop.xlane.xlu0 %3214
  %v3216 = vsel %vm2906, %v3142, 0.0
  %3217 = vadd.xlane.f32.xlu0 %v3216
  %v3218 = vpop.xlane.xlu0 %3217
  %v3219 = vsel %vm2906, %v3143, 0.0
  %3220 = vadd.xlane.f32.xlu0 %v3219
  %v3221 = vpop.xlane.xlu0 %3220
  %v3222 = vsel %vm2906, %v3144, 0.0
  %3223 = vadd.xlane.f32.xlu0 %v3222
  %v3224 = vpop.xlane.xlu0 %3223
  %v3225 = vsel %vm2906, %v3145, 0.0
  %3226 = vadd.xlane.f32.xlu0 %v3225
  %v3227 = vpop.xlane.xlu0 %3226
  %v3228 = vsel %vm2906, %v3146, 0.0
  %3229 = vadd.xlane.f32.xlu0 %v3228
  %v3230 = vpop.xlane.xlu0 %3229
  %v3231 = vsel %vm2906, %v3147, 0.0
  %3232 = vadd.xlane.f32.xlu0 %v3231
  %v3233 = vpop.xlane.xlu0 %3232
  %v3234 = vsel %vm2906, %v3148, 0.0
  %3235 = vadd.xlane.f32.xlu0 %v3234
  %v3236 = vpop.xlane.xlu0 %3235
  %v3237 = vsel %vm2906, %v3149, 0.0
  %3238 = vadd.xlane.f32.xlu0 %v3237
  %v3239 = vpop.xlane.xlu0 %3238
  %v3240 = vsel %vm2906, %v3150, 0.0
  %3241 = vadd.xlane.f32.xlu0 %v3240
  %v3242 = vpop.xlane.xlu0 %3241
  %v3243 = vsel %vm2906, %v3151, 0.0
  %3244 = vadd.xlane.f32.xlu0 %v3243
  %v3245 = vpop.xlane.xlu0 %3244
  %v3246 = vsel %vm2906, %v3152, 0.0
  %3247 = vadd.xlane.f32.xlu0 %v3246
  %v3248 = vpop.xlane.xlu0 %3247
  %v3249 = vsel %vm2906, %v3153, 0.0
  %3250 = vadd.xlane.f32.xlu0 %v3249
  %v3251 = vpop.xlane.xlu0 %3250
  %v3252 = vsel %vm2906, %v3154, 0.0
  %3253 = vadd.xlane.f32.xlu0 %v3252
  %v3254 = vpop.xlane.xlu0 %3253
  %v3255 = vsel %vm2906, %v3155, 0.0
  %3256 = vadd.xlane.f32.xlu0 %v3255
  %v3257 = vpop.xlane.xlu0 %3256
  %v3258 = vsel %vm2906, %v3156, 0.0
  %3259 = vadd.xlane.f32.xlu0 %v3258
  %v3260 = vpop.xlane.xlu0 %3259
  %v3261 = vsel %vm2906, %v3157, 0.0
  %3262 = vadd.xlane.f32.xlu0 %v3261
  %v3263 = vpop.xlane.xlu0 %3262
  %v3264 = vsel %vm2906, %v3158, 0.0
  %3265 = vadd.xlane.f32.xlu0 %v3264
  %v3266 = vpop.xlane.xlu0 %3265
  %v3267 = vsel %vm2906, %v3159, 0.0
  %3268 = vadd.xlane.f32.xlu0 %v3267
  %v3269 = vpop.xlane.xlu0 %3268
  %v3270 = vsel %vm2906, %v3160, 0.0
  %3271 = vadd.xlane.f32.xlu0 %v3270
  %v3272 = vpop.xlane.xlu0 %3271
  %v3273 = vsel %vm2906, %v3161, 0.0
  %3274 = vadd.xlane.f32.xlu0 %v3273
  %v3275 = vpop.xlane.xlu0 %3274
  %v3276 = vsel %vm2906, %v3162, 0.0
  %3277 = vadd.xlane.f32.xlu0 %v3276
  %v3278 = vpop.xlane.xlu0 %3277
  %v3279 = vsel %vm2906, %v3163, 0.0
  %3280 = vadd.xlane.f32.xlu0 %v3279
  %v3281 = vpop.xlane.xlu0 %3280
  %v3282 = vsel %vm2906, %v3164, 0.0
  %3283 = vadd.xlane.f32.xlu0 %v3282
  %v3284 = vpop.xlane.xlu0 %3283
  %v3285 = vsel %vm2906, %v3165, 0.0
  %3286 = vadd.xlane.f32.xlu0 %v3285
  %v3287 = vpop.xlane.xlu0 %3286
  %v3288 = vsel %vm2906, %v3166, 0.0
  %3289 = vadd.xlane.f32.xlu0 %v3288
  %v3290 = vpop.xlane.xlu0 %3289
  %v3291 = vsel %vm2906, %v3167, 0.0
  %3292 = vadd.xlane.f32.xlu0 %v3291
  %v3293 = vpop.xlane.xlu0 %3292
  %v3294 = vsel %vm2906, %v3168, 0.0
  %3295 = vadd.xlane.f32.xlu0 %v3294
  %v3296 = vpop.xlane.xlu0 %3295
  %v3297 = vsel %vm2906, %v3169, 0.0
  %3298 = vadd.xlane.f32.xlu0 %v3297
  %v3299 = vpop.xlane.xlu0 %3298
  %v3300 = vsel %vm2906, %v3170, 0.0
  %3301 = vadd.xlane.f32.xlu0 %v3300
  %v3302 = vpop.xlane.xlu0 %3301
  %v3303 = vmul.f32 %v3173, 0.020408163
  %v3304 = vmul.f32 %v3176, 0.020408163
  %v3305 = vmul.f32 %v3179, 0.020408163
  %v3306 = vmul.f32 %v3182, 0.020408163
  %v3307 = vmul.f32 %v3185, 0.020408163
  %v3308 = vmul.f32 %v3188, 0.020408163
  %v3309 = vmul.f32 %v3191, 0.020408163
  %v3310 = vmul.f32 %v3194, 0.020408163
  %v3311 = vmul.f32 %v3197, 0.020408163
  %v3312 = vmul.f32 %v3200, 0.020408163
  %v3313 = vmul.f32 %v3203, 0.020408163
  %v3314 = vmul.f32 %v3206, 0.020408163
  %v3315 = vmul.f32 %v3209, 0.020408163
  %v3316 = vmul.f32 %v3212, 0.020408163
  %v3317 = vmul.f32 %v3215, 0.020408163
  %v3318 = vmul.f32 %v3218, 0.020408163
  %v3319 = vmul.f32 %v3221, 0.020408163
  %v3320 = vmul.f32 %v3224, 0.020408163
  %v3321 = vmul.f32 %v3227, 0.020408163
  %v3322 = vmul.f32 %v3230, 0.020408163
  %v3323 = vmul.f32 %v3233, 0.020408163
  %v3324 = vmul.f32 %v3236, 0.020408163
  %v3325 = vmul.f32 %v3239, 0.020408163
  %v3326 = vmul.f32 %v3242, 0.020408163
  %v3327 = vmul.f32 %v3245, 0.020408163
  %v3328 = vmul.f32 %v3248, 0.020408163
  %v3329 = vmul.f32 %v3251, 0.020408163
  %v3330 = vmul.f32 %v3254, 0.020408163
  %v3331 = vmul.f32 %v3257, 0.020408163
  %v3332 = vmul.f32 %v3260, 0.020408163
  %v3333 = vmul.f32 %v3263, 0.020408163
  %v3334 = vmul.f32 %v3266, 0.020408163
  %v3335 = vmul.f32 %v3269, 0.020408163
  %v3336 = vmul.f32 %v3272, 0.020408163
  %v3337 = vmul.f32 %v3275, 0.020408163
  %v3338 = vmul.f32 %v3278, 0.020408163
  %v3339 = vmul.f32 %v3281, 0.020408163
  %v3340 = vmul.f32 %v3284, 0.020408163
  %v3341 = vmul.f32 %v3287, 0.020408163
  %v3342 = vmul.f32 %v3290, 0.020408163
  %v3343 = vmul.f32 %v3293, 0.020408163
  %v3344 = vmul.f32 %v3296, 0.020408163
  %v3345 = vmul.f32 %v3299, 0.020408163
  %v3346 = vmul.f32 %v3302, 0.020408163
  %v3347 = vadd.f32 %v3303, 1e-05
  %v3348 = vadd.f32 %v3304, 1e-05
  %v3349 = vadd.f32 %v3305, 1e-05
  %v3350 = vadd.f32 %v3306, 1e-05
  %v3351 = vadd.f32 %v3307, 1e-05
  %v3352 = vadd.f32 %v3308, 1e-05
  %v3353 = vadd.f32 %v3309, 1e-05
  %v3354 = vadd.f32 %v3310, 1e-05
  %v3355 = vadd.f32 %v3311, 1e-05
  %v3356 = vadd.f32 %v3312, 1e-05
  %v3357 = vadd.f32 %v3313, 1e-05
  %v3358 = vadd.f32 %v3314, 1e-05
  %v3359 = vadd.f32 %v3315, 1e-05
  %v3360 = vadd.f32 %v3316, 1e-05
  %v3361 = vadd.f32 %v3317, 1e-05
  %v3362 = vadd.f32 %v3318, 1e-05
  %v3363 = vadd.f32 %v3319, 1e-05
  %v3364 = vadd.f32 %v3320, 1e-05
  %v3365 = vadd.f32 %v3321, 1e-05
  %v3366 = vadd.f32 %v3322, 1e-05
  %v3367 = vadd.f32 %v3323, 1e-05
  %v3368 = vadd.f32 %v3324, 1e-05
  %v3369 = vadd.f32 %v3325, 1e-05
  %v3370 = vadd.f32 %v3326, 1e-05
  %v3371 = vadd.f32 %v3327, 1e-05
  %v3372 = vadd.f32 %v3328, 1e-05
  %v3373 = vadd.f32 %v3329, 1e-05
  %v3374 = vadd.f32 %v3330, 1e-05
  %v3375 = vadd.f32 %v3331, 1e-05
  %v3376 = vadd.f32 %v3332, 1e-05
  %v3377 = vadd.f32 %v3333, 1e-05
  %v3378 = vadd.f32 %v3334, 1e-05
  %v3379 = vadd.f32 %v3335, 1e-05
  %v3380 = vadd.f32 %v3336, 1e-05
  %v3381 = vadd.f32 %v3337, 1e-05
  %v3382 = vadd.f32 %v3338, 1e-05
  %v3383 = vadd.f32 %v3339, 1e-05
  %v3384 = vadd.f32 %v3340, 1e-05
  %v3385 = vadd.f32 %v3341, 1e-05
  %v3386 = vadd.f32 %v3342, 1e-05
  %v3387 = vadd.f32 %v3343, 1e-05
  %v3388 = vadd.f32 %v3344, 1e-05
  %v3389 = vadd.f32 %v3345, 1e-05
  %v3390 = vadd.f32 %v3346, 1e-05
  %v3391 = vrsqrt.pop %v3347
  %v3392 = vmul.f32 %v3391, %v3347
  %v3393 = vmul.f32 %v3392, %v3391
  %v3394 = vmul.f32 0.5, %v3393
  %v3395 = vsub.f32 1.5, %v3394
  %v3396 = vmul.f32 %v3391, %v3395
  %vm3397 = vweird.f32 %v3347
  %vm3398 = vweird.f32 %v3391
  %vm3399 = vmor %vm3397, %vm3398
  %v3400 = vsel %vm3399, %v3391, %v3396
  %v3401 = vrsqrt.pop %v3348
  %v3402 = vmul.f32 %v3401, %v3348
  %v3403 = vmul.f32 %v3402, %v3401
  %v3404 = vmul.f32 0.5, %v3403
  %v3405 = vsub.f32 1.5, %v3404
  %v3406 = vmul.f32 %v3401, %v3405
  %vm3407 = vweird.f32 %v3348
  %vm3408 = vweird.f32 %v3401
  %vm3409 = vmor %vm3407, %vm3408
  %v3410 = vsel %vm3409, %v3401, %v3406
  %v3411 = vrsqrt.pop %v3349
  %v3412 = vmul.f32 %v3411, %v3349
  %v3413 = vmul.f32 %v3412, %v3411
  %v3414 = vmul.f32 0.5, %v3413
  %v3415 = vsub.f32 1.5, %v3414
  %v3416 = vmul.f32 %v3411, %v3415
  %vm3417 = vweird.f32 %v3349
  %vm3418 = vweird.f32 %v3411
  %vm3419 = vmor %vm3417, %vm3418
  %v3420 = vsel %vm3419, %v3411, %v3416
  %v3421 = vrsqrt.pop %v3350
  %v3422 = vmul.f32 %v3421, %v3350
  %v3423 = vmul.f32 %v3422, %v3421
  %v3424 = vmul.f32 0.5, %v3423
  %v3425 = vsub.f32 1.5, %v3424
  %v3426 = vmul.f32 %v3421, %v3425
  %vm3427 = vweird.f32 %v3350
  %vm3428 = vweird.f32 %v3421
  %vm3429 = vmor %vm3427, %vm3428
  %v3430 = vsel %vm3429, %v3421, %v3426
  %v3431 = vrsqrt.pop %v3351
  %v3432 = vmul.f32 %v3431, %v3351
  %v3433 = vmul.f32 %v3432, %v3431
  %v3434 = vmul.f32 0.5, %v3433
  %v3435 = vsub.f32 1.5, %v3434
  %v3436 = vmul.f32 %v3431, %v3435
  %vm3437 = vweird.f32 %v3351
  %vm3438 = vweird.f32 %v3431
  %vm3439 = vmor %vm3437, %vm3438
  %v3440 = vsel %vm3439, %v3431, %v3436
  %v3441 = vrsqrt.pop %v3352
  %v3442 = vmul.f32 %v3441, %v3352
  %v3443 = vmul.f32 %v3442, %v3441
  %v3444 = vmul.f32 0.5, %v3443
  %v3445 = vsub.f32 1.5, %v3444
  %v3446 = vmul.f32 %v3441, %v3445
  %vm3447 = vweird.f32 %v3352
  %vm3448 = vweird.f32 %v3441
  %vm3449 = vmor %vm3447, %vm3448
  %v3450 = vsel %vm3449, %v3441, %v3446
  %v3451 = vrsqrt.pop %v3353
  %v3452 = vmul.f32 %v3451, %v3353
  %v3453 = vmul.f32 %v3452, %v3451
  %v3454 = vmul.f32 0.5, %v3453
  %v3455 = vsub.f32 1.5, %v3454
  %v3456 = vmul.f32 %v3451, %v3455
  %vm3457 = vweird.f32 %v3353
  %vm3458 = vweird.f32 %v3451
  %vm3459 = vmor %vm3457, %vm3458
  %v3460 = vsel %vm3459, %v3451, %v3456
  %v3461 = vrsqrt.pop %v3354
  %v3462 = vmul.f32 %v3461, %v3354
  %v3463 = vmul.f32 %v3462, %v3461
  %v3464 = vmul.f32 0.5, %v3463
  %v3465 = vsub.f32 1.5, %v3464
  %v3466 = vmul.f32 %v3461, %v3465
  %vm3467 = vweird.f32 %v3354
  %vm3468 = vweird.f32 %v3461
  %vm3469 = vmor %vm3467, %vm3468
  %v3470 = vsel %vm3469, %v3461, %v3466
  %v3471 = vrsqrt.pop %v3355
  %v3472 = vmul.f32 %v3471, %v3355
  %v3473 = vmul.f32 %v3472, %v3471
  %v3474 = vmul.f32 0.5, %v3473
  %v3475 = vsub.f32 1.5, %v3474
  %v3476 = vmul.f32 %v3471, %v3475
  %vm3477 = vweird.f32 %v3355
  %vm3478 = vweird.f32 %v3471
  %vm3479 = vmor %vm3477, %vm3478
  %v3480 = vsel %vm3479, %v3471, %v3476
  %v3481 = vrsqrt.pop %v3356
  %v3482 = vmul.f32 %v3481, %v3356
  %v3483 = vmul.f32 %v3482, %v3481
  %v3484 = vmul.f32 0.5, %v3483
  %v3485 = vsub.f32 1.5, %v3484
  %v3486 = vmul.f32 %v3481, %v3485
  %vm3487 = vweird.f32 %v3356
  %vm3488 = vweird.f32 %v3481
  %vm3489 = vmor %vm3487, %vm3488
  %v3490 = vsel %vm3489, %v3481, %v3486
  %v3491 = vrsqrt.pop %v3357
  %v3492 = vmul.f32 %v3491, %v3357
  %v3493 = vmul.f32 %v3492, %v3491
  %v3494 = vmul.f32 0.5, %v3493
  %v3495 = vsub.f32 1.5, %v3494
  %v3496 = vmul.f32 %v3491, %v3495
  %vm3497 = vweird.f32 %v3357
  %vm3498 = vweird.f32 %v3491
  %vm3499 = vmor %vm3497, %vm3498
  %v3500 = vsel %vm3499, %v3491, %v3496
  %v3501 = vrsqrt.pop %v3358
  %v3502 = vmul.f32 %v3501, %v3358
  %v3503 = vmul.f32 %v3502, %v3501
  %v3504 = vmul.f32 0.5, %v3503
  %v3505 = vsub.f32 1.5, %v3504
  %v3506 = vmul.f32 %v3501, %v3505
  %vm3507 = vweird.f32 %v3358
  %vm3508 = vweird.f32 %v3501
  %vm3509 = vmor %vm3507, %vm3508
  %v3510 = vsel %vm3509, %v3501, %v3506
  %v3511 = vrsqrt.pop %v3359
  %v3512 = vmul.f32 %v3511, %v3359
  %v3513 = vmul.f32 %v3512, %v3511
  %v3514 = vmul.f32 0.5, %v3513
  %v3515 = vsub.f32 1.5, %v3514
  %v3516 = vmul.f32 %v3511, %v3515
  %vm3517 = vweird.f32 %v3359
  %vm3518 = vweird.f32 %v3511
  %vm3519 = vmor %vm3517, %vm3518
  %v3520 = vsel %vm3519, %v3511, %v3516
  %v3521 = vrsqrt.pop %v3360
  %v3522 = vmul.f32 %v3521, %v3360
  %v3523 = vmul.f32 %v3522, %v3521
  %v3524 = vmul.f32 0.5, %v3523
  %v3525 = vsub.f32 1.5, %v3524
  %v3526 = vmul.f32 %v3521, %v3525
  %vm3527 = vweird.f32 %v3360
  %vm3528 = vweird.f32 %v3521
  %vm3529 = vmor %vm3527, %vm3528
  %v3530 = vsel %vm3529, %v3521, %v3526
  %v3531 = vrsqrt.pop %v3361
  %v3532 = vmul.f32 %v3531, %v3361
  %v3533 = vmul.f32 %v3532, %v3531
  %v3534 = vmul.f32 0.5, %v3533
  %v3535 = vsub.f32 1.5, %v3534
  %v3536 = vmul.f32 %v3531, %v3535
  %vm3537 = vweird.f32 %v3361
  %vm3538 = vweird.f32 %v3531
  %vm3539 = vmor %vm3537, %vm3538
  %v3540 = vsel %vm3539, %v3531, %v3536
  %v3541 = vrsqrt.pop %v3362
  %v3542 = vmul.f32 %v3541, %v3362
  %v3543 = vmul.f32 %v3542, %v3541
  %v3544 = vmul.f32 0.5, %v3543
  %v3545 = vsub.f32 1.5, %v3544
  %v3546 = vmul.f32 %v3541, %v3545
  %vm3547 = vweird.f32 %v3362
  %vm3548 = vweird.f32 %v3541
  %vm3549 = vmor %vm3547, %vm3548
  %v3550 = vsel %vm3549, %v3541, %v3546
  %v3551 = vrsqrt.pop %v3363
  %v3552 = vmul.f32 %v3551, %v3363
  %v3553 = vmul.f32 %v3552, %v3551
  %v3554 = vmul.f32 0.5, %v3553
  %v3555 = vsub.f32 1.5, %v3554
  %v3556 = vmul.f32 %v3551, %v3555
  %vm3557 = vweird.f32 %v3363
  %vm3558 = vweird.f32 %v3551
  %vm3559 = vmor %vm3557, %vm3558
  %v3560 = vsel %vm3559, %v3551, %v3556
  %v3561 = vrsqrt.pop %v3364
  %v3562 = vmul.f32 %v3561, %v3364
  %v3563 = vmul.f32 %v3562, %v3561
  %v3564 = vmul.f32 0.5, %v3563
  %v3565 = vsub.f32 1.5, %v3564
  %v3566 = vmul.f32 %v3561, %v3565
  %vm3567 = vweird.f32 %v3364
  %vm3568 = vweird.f32 %v3561
  %vm3569 = vmor %vm3567, %vm3568
  %v3570 = vsel %vm3569, %v3561, %v3566
  %v3571 = vrsqrt.pop %v3365
  %v3572 = vmul.f32 %v3571, %v3365
  %v3573 = vmul.f32 %v3572, %v3571
  %v3574 = vmul.f32 0.5, %v3573
  %v3575 = vsub.f32 1.5, %v3574
  %v3576 = vmul.f32 %v3571, %v3575
  %vm3577 = vweird.f32 %v3365
  %vm3578 = vweird.f32 %v3571
  %vm3579 = vmor %vm3577, %vm3578
  %v3580 = vsel %vm3579, %v3571, %v3576
  %v3581 = vrsqrt.pop %v3366
  %v3582 = vmul.f32 %v3581, %v3366
  %v3583 = vmul.f32 %v3582, %v3581
  %v3584 = vmul.f32 0.5, %v3583
  %v3585 = vsub.f32 1.5, %v3584
  %v3586 = vmul.f32 %v3581, %v3585
  %vm3587 = vweird.f32 %v3366
  %vm3588 = vweird.f32 %v3581
  %vm3589 = vmor %vm3587, %vm3588
  %v3590 = vsel %vm3589, %v3581, %v3586
  %v3591 = vrsqrt.pop %v3367
  %v3592 = vmul.f32 %v3591, %v3367
  %v3593 = vmul.f32 %v3592, %v3591
  %v3594 = vmul.f32 0.5, %v3593
  %v3595 = vsub.f32 1.5, %v3594
  %v3596 = vmul.f32 %v3591, %v3595
  %vm3597 = vweird.f32 %v3367
  %vm3598 = vweird.f32 %v3591
  %vm3599 = vmor %vm3597, %vm3598
  %v3600 = vsel %vm3599, %v3591, %v3596
  %v3601 = vrsqrt.pop %v3368
  %v3602 = vmul.f32 %v3601, %v3368
  %v3603 = vmul.f32 %v3602, %v3601
  %v3604 = vmul.f32 0.5, %v3603
  %v3605 = vsub.f32 1.5, %v3604
  %v3606 = vmul.f32 %v3601, %v3605
  %vm3607 = vweird.f32 %v3368
  %vm3608 = vweird.f32 %v3601
  %vm3609 = vmor %vm3607, %vm3608
  %v3610 = vsel %vm3609, %v3601, %v3606
  %v3611 = vrsqrt.pop %v3369
  %v3612 = vmul.f32 %v3611, %v3369
  %v3613 = vmul.f32 %v3612, %v3611
  %v3614 = vmul.f32 0.5, %v3613
  %v3615 = vsub.f32 1.5, %v3614
  %v3616 = vmul.f32 %v3611, %v3615
  %vm3617 = vweird.f32 %v3369
  %vm3618 = vweird.f32 %v3611
  %vm3619 = vmor %vm3617, %vm3618
  %v3620 = vsel %vm3619, %v3611, %v3616
  %v3621 = vrsqrt.pop %v3370
  %v3622 = vmul.f32 %v3621, %v3370
  %v3623 = vmul.f32 %v3622, %v3621
  %v3624 = vmul.f32 0.5, %v3623
  %v3625 = vsub.f32 1.5, %v3624
  %v3626 = vmul.f32 %v3621, %v3625
  %vm3627 = vweird.f32 %v3370
  %vm3628 = vweird.f32 %v3621
  %vm3629 = vmor %vm3627, %vm3628
  %v3630 = vsel %vm3629, %v3621, %v3626
  %v3631 = vrsqrt.pop %v3371
  %v3632 = vmul.f32 %v3631, %v3371
  %v3633 = vmul.f32 %v3632, %v3631
  %v3634 = vmul.f32 0.5, %v3633
  %v3635 = vsub.f32 1.5, %v3634
  %v3636 = vmul.f32 %v3631, %v3635
  %vm3637 = vweird.f32 %v3371
  %vm3638 = vweird.f32 %v3631
  %vm3639 = vmor %vm3637, %vm3638
  %v3640 = vsel %vm3639, %v3631, %v3636
  %v3641 = vrsqrt.pop %v3372
  %v3642 = vmul.f32 %v3641, %v3372
  %v3643 = vmul.f32 %v3642, %v3641
  %v3644 = vmul.f32 0.5, %v3643
  %v3645 = vsub.f32 1.5, %v3644
  %v3646 = vmul.f32 %v3641, %v3645
  %vm3647 = vweird.f32 %v3372
  %vm3648 = vweird.f32 %v3641
  %vm3649 = vmor %vm3647, %vm3648
  %v3650 = vsel %vm3649, %v3641, %v3646
  %v3651 = vrsqrt.pop %v3373
  %v3652 = vmul.f32 %v3651, %v3373
  %v3653 = vmul.f32 %v3652, %v3651
  %v3654 = vmul.f32 0.5, %v3653
  %v3655 = vsub.f32 1.5, %v3654
  %v3656 = vmul.f32 %v3651, %v3655
  %vm3657 = vweird.f32 %v3373
  %vm3658 = vweird.f32 %v3651
  %vm3659 = vmor %vm3657, %vm3658
  %v3660 = vsel %vm3659, %v3651, %v3656
  %v3661 = vrsqrt.pop %v3374
  %v3662 = vmul.f32 %v3661, %v3374
  %v3663 = vmul.f32 %v3662, %v3661
  %v3664 = vmul.f32 0.5, %v3663
  %v3665 = vsub.f32 1.5, %v3664
  %v3666 = vmul.f32 %v3661, %v3665
  %vm3667 = vweird.f32 %v3374
  %vm3668 = vweird.f32 %v3661
  %vm3669 = vmor %vm3667, %vm3668
  %v3670 = vsel %vm3669, %v3661, %v3666
  %v3671 = vrsqrt.pop %v3375
  %v3672 = vmul.f32 %v3671, %v3375
  %v3673 = vmul.f32 %v3672, %v3671
  %v3674 = vmul.f32 0.5, %v3673
  %v3675 = vsub.f32 1.5, %v3674
  %v3676 = vmul.f32 %v3671, %v3675
  %vm3677 = vweird.f32 %v3375
  %vm3678 = vweird.f32 %v3671
  %vm3679 = vmor %vm3677, %vm3678
  %v3680 = vsel %vm3679, %v3671, %v3676
  %v3681 = vrsqrt.pop %v3376
  %v3682 = vmul.f32 %v3681, %v3376
  %v3683 = vmul.f32 %v3682, %v3681
  %v3684 = vmul.f32 0.5, %v3683
  %v3685 = vsub.f32 1.5, %v3684
  %v3686 = vmul.f32 %v3681, %v3685
  %vm3687 = vweird.f32 %v3376
  %vm3688 = vweird.f32 %v3681
  %vm3689 = vmor %vm3687, %vm3688
  %v3690 = vsel %vm3689, %v3681, %v3686
  %v3691 = vrsqrt.pop %v3377
  %v3692 = vmul.f32 %v3691, %v3377
  %v3693 = vmul.f32 %v3692, %v3691
  %v3694 = vmul.f32 0.5, %v3693
  %v3695 = vsub.f32 1.5, %v3694
  %v3696 = vmul.f32 %v3691, %v3695
  %vm3697 = vweird.f32 %v3377
  %vm3698 = vweird.f32 %v3691
  %vm3699 = vmor %vm3697, %vm3698
  %v3700 = vsel %vm3699, %v3691, %v3696
  %v3701 = vrsqrt.pop %v3378
  %v3702 = vmul.f32 %v3701, %v3378
  %v3703 = vmul.f32 %v3702, %v3701
  %v3704 = vmul.f32 0.5, %v3703
  %v3705 = vsub.f32 1.5, %v3704
  %v3706 = vmul.f32 %v3701, %v3705
  %vm3707 = vweird.f32 %v3378
  %vm3708 = vweird.f32 %v3701
  %vm3709 = vmor %vm3707, %vm3708
  %v3710 = vsel %vm3709, %v3701, %v3706
  %v3711 = vrsqrt.pop %v3379
  %v3712 = vmul.f32 %v3711, %v3379
  %v3713 = vmul.f32 %v3712, %v3711
  %v3714 = vmul.f32 0.5, %v3713
  %v3715 = vsub.f32 1.5, %v3714
  %v3716 = vmul.f32 %v3711, %v3715
  %vm3717 = vweird.f32 %v3379
  %vm3718 = vweird.f32 %v3711
  %vm3719 = vmor %vm3717, %vm3718
  %v3720 = vsel %vm3719, %v3711, %v3716
  %v3721 = vrsqrt.pop %v3380
  %v3722 = vmul.f32 %v3721, %v3380
  %v3723 = vmul.f32 %v3722, %v3721
  %v3724 = vmul.f32 0.5, %v3723
  %v3725 = vsub.f32 1.5, %v3724
  %v3726 = vmul.f32 %v3721, %v3725
  %vm3727 = vweird.f32 %v3380
  %vm3728 = vweird.f32 %v3721
  %vm3729 = vmor %vm3727, %vm3728
  %v3730 = vsel %vm3729, %v3721, %v3726
  %v3731 = vrsqrt.pop %v3381
  %v3732 = vmul.f32 %v3731, %v3381
  %v3733 = vmul.f32 %v3732, %v3731
  %v3734 = vmul.f32 0.5, %v3733
  %v3735 = vsub.f32 1.5, %v3734
  %v3736 = vmul.f32 %v3731, %v3735
  %vm3737 = vweird.f32 %v3381
  %vm3738 = vweird.f32 %v3731
  %vm3739 = vmor %vm3737, %vm3738
  %v3740 = vsel %vm3739, %v3731, %v3736
  %v3741 = vrsqrt.pop %v3382
  %v3742 = vmul.f32 %v3741, %v3382
  %v3743 = vmul.f32 %v3742, %v3741
  %v3744 = vmul.f32 0.5, %v3743
  %v3745 = vsub.f32 1.5, %v3744
  %v3746 = vmul.f32 %v3741, %v3745
  %vm3747 = vweird.f32 %v3382
  %vm3748 = vweird.f32 %v3741
  %vm3749 = vmor %vm3747, %vm3748
  %v3750 = vsel %vm3749, %v3741, %v3746
  %v3751 = vrsqrt.pop %v3383
  %v3752 = vmul.f32 %v3751, %v3383
  %v3753 = vmul.f32 %v3752, %v3751
  %v3754 = vmul.f32 0.5, %v3753
  %v3755 = vsub.f32 1.5, %v3754
  %v3756 = vmul.f32 %v3751, %v3755
  %vm3757 = vweird.f32 %v3383
  %vm3758 = vweird.f32 %v3751
  %vm3759 = vmor %vm3757, %vm3758
  %v3760 = vsel %vm3759, %v3751, %v3756
  %v3761 = vrsqrt.pop %v3384
  %v3762 = vmul.f32 %v3761, %v3384
  %v3763 = vmul.f32 %v3762, %v3761
  %v3764 = vmul.f32 0.5, %v3763
  %v3765 = vsub.f32 1.5, %v3764
  %v3766 = vmul.f32 %v3761, %v3765
  %vm3767 = vweird.f32 %v3384
  %vm3768 = vweird.f32 %v3761
  %vm3769 = vmor %vm3767, %vm3768
  %v3770 = vsel %vm3769, %v3761, %v3766
  %v3771 = vrsqrt.pop %v3385
  %v3772 = vmul.f32 %v3771, %v3385
  %v3773 = vmul.f32 %v3772, %v3771
  %v3774 = vmul.f32 0.5, %v3773
  %v3775 = vsub.f32 1.5, %v3774
  %v3776 = vmul.f32 %v3771, %v3775
  %vm3777 = vweird.f32 %v3385
  %vm3778 = vweird.f32 %v3771
  %vm3779 = vmor %vm3777, %vm3778
  %v3780 = vsel %vm3779, %v3771, %v3776
  %v3781 = vrsqrt.pop %v3386
  %v3782 = vmul.f32 %v3781, %v3386
  %v3783 = vmul.f32 %v3782, %v3781
  %v3784 = vmul.f32 0.5, %v3783
  %v3785 = vsub.f32 1.5, %v3784
  %v3786 = vmul.f32 %v3781, %v3785
  %vm3787 = vweird.f32 %v3386
  %vm3788 = vweird.f32 %v3781
  %vm3789 = vmor %vm3787, %vm3788
  %v3790 = vsel %vm3789, %v3781, %v3786
  %v3791 = vrsqrt.pop %v3387
  %v3792 = vmul.f32 %v3791, %v3387
  %v3793 = vmul.f32 %v3792, %v3791
  %v3794 = vmul.f32 0.5, %v3793
  %v3795 = vsub.f32 1.5, %v3794
  %v3796 = vmul.f32 %v3791, %v3795
  %vm3797 = vweird.f32 %v3387
  %vm3798 = vweird.f32 %v3791
  %vm3799 = vmor %vm3797, %vm3798
  %v3800 = vsel %vm3799, %v3791, %v3796
  %v3801 = vrsqrt.pop %v3388
  %v3802 = vmul.f32 %v3801, %v3388
  %v3803 = vmul.f32 %v3802, %v3801
  %v3804 = vmul.f32 0.5, %v3803
  %v3805 = vsub.f32 1.5, %v3804
  %v3806 = vmul.f32 %v3801, %v3805
  %vm3807 = vweird.f32 %v3388
  %vm3808 = vweird.f32 %v3801
  %vm3809 = vmor %vm3807, %vm3808
  %v3810 = vsel %vm3809, %v3801, %v3806
  %v3811 = vrsqrt.pop %v3389
  %v3812 = vmul.f32 %v3811, %v3389
  %v3813 = vmul.f32 %v3812, %v3811
  %v3814 = vmul.f32 0.5, %v3813
  %v3815 = vsub.f32 1.5, %v3814
  %v3816 = vmul.f32 %v3811, %v3815
  %vm3817 = vweird.f32 %v3389
  %vm3818 = vweird.f32 %v3811
  %vm3819 = vmor %vm3817, %vm3818
  %v3820 = vsel %vm3819, %v3811, %v3816
  %v3821 = vrsqrt.pop %v3390
  %v3822 = vmul.f32 %v3821, %v3390
  %v3823 = vmul.f32 %v3822, %v3821
  %v3824 = vmul.f32 0.5, %v3823
  %v3825 = vsub.f32 1.5, %v3824
  %v3826 = vmul.f32 %v3821, %v3825
  %vm3827 = vweird.f32 %v3390
  %vm3828 = vweird.f32 %v3821
  %vm3829 = vmor %vm3827, %vm3828
  %v3830 = vsel %vm3829, %v3821, %v3826
  %v3831 = vld [vmem:[%s4] sm:$0xff]
  %v3832 = vld [vmem:[%s4 + $0x8] sm:$0xff]
  %v3833 = vld [vmem:[%s4 + $0x10] sm:$0xff]
  %v3834 = vld [vmem:[%s4 + $0x18] sm:$0xff]
  %v3835 = vld [vmem:[%s4 + $0x20] sm:$0xff]
  %v3836 = vld [vmem:[%s4 + $0x28] sm:$0xff]
  %v3837 = vld [vmem:[%s4 + $0x30] sm:$0xff]
  %v3838 = vld [vmem:[%s4 + $0x38] sm:$0xff]
  %v3839 = vld [vmem:[%s4 + $0x40] sm:$0xff]
  %v3840 = vld [vmem:[%s4 + $0x48] sm:$0xff]
  %v3841 = vld [vmem:[%s4 + $0x50] sm:$0xff]
  %v3842 = vld [vmem:[%s4 + $0x58] sm:$0xff]
  %v3843 = vld [vmem:[%s4 + $0x60] sm:$0xff]
  %v3844 = vld [vmem:[%s4 + $0x68] sm:$0xff]
  %v3845 = vld [vmem:[%s4 + $0x70] sm:$0xff]
  %v3846 = vld [vmem:[%s4 + $0x78] sm:$0xff]
  %v3847 = vld [vmem:[%s4 + $0x80] sm:$0xff]
  %v3848 = vld [vmem:[%s4 + $0x88] sm:$0xff]
  %v3849 = vld [vmem:[%s4 + $0x90] sm:$0xff]
  %v3850 = vld [vmem:[%s4 + $0x98] sm:$0xff]
  %v3851 = vld [vmem:[%s4 + $0xa0] sm:$0xff]
  %v3852 = vld [vmem:[%s4 + $0xa8] sm:$0xff]
  %v3853 = vld [vmem:[%s4 + $0xb0] sm:$0xff]
  %v3854 = vld [vmem:[%s4 + $0xb8] sm:$0xff]
  %v3855 = vld [vmem:[%s4 + $0xc0] sm:$0xff]
  %v3856 = vld [vmem:[%s4 + $0xc8] sm:$0xff]
  %v3857 = vld [vmem:[%s4 + $0xd0] sm:$0xff]
  %v3858 = vld [vmem:[%s4 + $0xd8] sm:$0xff]
  %v3859 = vld [vmem:[%s4 + $0xe0] sm:$0xff]
  %v3860 = vld [vmem:[%s4 + $0xe8] sm:$0xff]
  %v3861 = vld [vmem:[%s4 + $0xf0] sm:$0xff]
  %v3862 = vld [vmem:[%s4 + $0xf8] sm:$0xff]
  %v3863 = vld [vmem:[%s4 + $0x100] sm:$0xff]
  %v3864 = vld [vmem:[%s4 + $0x108] sm:$0xff]
  %v3865 = vld [vmem:[%s4 + $0x110] sm:$0xff]
  %v3866 = vld [vmem:[%s4 + $0x118] sm:$0xff]
  %v3867 = vld [vmem:[%s4 + $0x120] sm:$0xff]
  %v3868 = vld [vmem:[%s4 + $0x128] sm:$0xff]
  %v3869 = vld [vmem:[%s4 + $0x130] sm:$0xff]
  %v3870 = vld [vmem:[%s4 + $0x138] sm:$0xff]
  %v3871 = vld [vmem:[%s4 + $0x140] sm:$0xff]
  %v3872 = vld [vmem:[%s4 + $0x148] sm:$0xff]
  %v3873 = vld [vmem:[%s4 + $0x150] sm:$0xff]
  %v3874 = vld [vmem:[%s4 + $0x158] sm:$0xff]
  %v3875 = vmul.f32 %v3400, %v3831
  %v3876 = vmul.f32 %v3410, %v3832
  %v3877 = vmul.f32 %v3420, %v3833
  %v3878 = vmul.f32 %v3430, %v3834
  %v3879 = vmul.f32 %v3440, %v3835
  %v3880 = vmul.f32 %v3450, %v3836
  %v3881 = vmul.f32 %v3460, %v3837
  %v3882 = vmul.f32 %v3470, %v3838
  %v3883 = vmul.f32 %v3480, %v3839
  %v3884 = vmul.f32 %v3490, %v3840
  %v3885 = vmul.f32 %v3500, %v3841
  %v3886 = vmul.f32 %v3510, %v3842
  %v3887 = vmul.f32 %v3520, %v3843
  %v3888 = vmul.f32 %v3530, %v3844
  %v3889 = vmul.f32 %v3540, %v3845
  %v3890 = vmul.f32 %v3550, %v3846
  %v3891 = vmul.f32 %v3560, %v3847
  %v3892 = vmul.f32 %v3570, %v3848
  %v3893 = vmul.f32 %v3580, %v3849
  %v3894 = vmul.f32 %v3590, %v3850
  %v3895 = vmul.f32 %v3600, %v3851
  %v3896 = vmul.f32 %v3610, %v3852
  %v3897 = vmul.f32 %v3620, %v3853
  %v3898 = vmul.f32 %v3630, %v3854
  %v3899 = vmul.f32 %v3640, %v3855
  %v3900 = vmul.f32 %v3650, %v3856
  %v3901 = vmul.f32 %v3660, %v3857
  %v3902 = vmul.f32 %v3670, %v3858
  %v3903 = vmul.f32 %v3680, %v3859
  %v3904 = vmul.f32 %v3690, %v3860
  %v3905 = vmul.f32 %v3700, %v3861
  %v3906 = vmul.f32 %v3710, %v3862
  %v3907 = vmul.f32 %v3720, %v3863
  %v3908 = vmul.f32 %v3730, %v3864
  %v3909 = vmul.f32 %v3740, %v3865
  %v3910 = vmul.f32 %v3750, %v3866
  %v3911 = vmul.f32 %v3760, %v3867
  %v3912 = vmul.f32 %v3770, %v3868
  %v3913 = vmul.f32 %v3780, %v3869
  %v3914 = vmul.f32 %v3790, %v3870
  %v3915 = vmul.f32 %v3800, %v3871
  %v3916 = vmul.f32 %v3810, %v3872
  %v3917 = vmul.f32 %v3820, %v3873
  %v3918 = vmul.f32 %v3830, %v3874
  %3920 = vset.pattern.permute.xlu0 0
  %3921 = vperm.xlu0 %3920, %v3875
  %v3922 = vpop.permute.xlu0 %3921
  %3925 = vset.pattern.permute.xlu0 0
  %3926 = vperm.xlu0 %3925, %v3876
  %v3927 = vpop.permute.xlu0 %3926
  %3930 = vset.pattern.permute.xlu0 0
  %3931 = vperm.xlu0 %3930, %v3877
  %v3932 = vpop.permute.xlu0 %3931
  %3935 = vset.pattern.permute.xlu0 0
  %3936 = vperm.xlu0 %3935, %v3878
  %v3937 = vpop.permute.xlu0 %3936
  %3940 = vset.pattern.permute.xlu0 0
  %3941 = vperm.xlu0 %3940, %v3879
  %v3942 = vpop.permute.xlu0 %3941
  %3945 = vset.pattern.permute.xlu0 0
  %3946 = vperm.xlu0 %3945, %v3880
  %v3947 = vpop.permute.xlu0 %3946
  %3950 = vset.pattern.permute.xlu0 0
  %3951 = vperm.xlu0 %3950, %v3881
  %v3952 = vpop.permute.xlu0 %3951
  %3955 = vset.pattern.permute.xlu0 0
  %3956 = vperm.xlu0 %3955, %v3882
  %v3957 = vpop.permute.xlu0 %3956
  %3960 = vset.pattern.permute.xlu0 0
  %3961 = vperm.xlu0 %3960, %v3883
  %v3962 = vpop.permute.xlu0 %3961
  %3965 = vset.pattern.permute.xlu0 0
  %3966 = vperm.xlu0 %3965, %v3884
  %v3967 = vpop.permute.xlu0 %3966
  %3970 = vset.pattern.permute.xlu0 0
  %3971 = vperm.xlu0 %3970, %v3885
  %v3972 = vpop.permute.xlu0 %3971
  %3975 = vset.pattern.permute.xlu0 0
  %3976 = vperm.xlu0 %3975, %v3886
  %v3977 = vpop.permute.xlu0 %3976
  %3980 = vset.pattern.permute.xlu0 0
  %3981 = vperm.xlu0 %3980, %v3887
  %v3982 = vpop.permute.xlu0 %3981
  %3985 = vset.pattern.permute.xlu0 0
  %3986 = vperm.xlu0 %3985, %v3888
  %v3987 = vpop.permute.xlu0 %3986
  %3990 = vset.pattern.permute.xlu0 0
  %3991 = vperm.xlu0 %3990, %v3889
  %v3992 = vpop.permute.xlu0 %3991
  %3995 = vset.pattern.permute.xlu0 0
  %3996 = vperm.xlu0 %3995, %v3890
  %v3997 = vpop.permute.xlu0 %3996
  %4000 = vset.pattern.permute.xlu0 0
  %4001 = vperm.xlu0 %4000, %v3891
  %v4002 = vpop.permute.xlu0 %4001
  %4005 = vset.pattern.permute.xlu0 0
  %4006 = vperm.xlu0 %4005, %v3892
  %v4007 = vpop.permute.xlu0 %4006
  %4010 = vset.pattern.permute.xlu0 0
  %4011 = vperm.xlu0 %4010, %v3893
  %v4012 = vpop.permute.xlu0 %4011
  %4015 = vset.pattern.permute.xlu0 0
  %4016 = vperm.xlu0 %4015, %v3894
  %v4017 = vpop.permute.xlu0 %4016
  %4020 = vset.pattern.permute.xlu0 0
  %4021 = vperm.xlu0 %4020, %v3895
  %v4022 = vpop.permute.xlu0 %4021
  %4025 = vset.pattern.permute.xlu0 0
  %4026 = vperm.xlu0 %4025, %v3896
  %v4027 = vpop.permute.xlu0 %4026
  %4030 = vset.pattern.permute.xlu0 0
  %4031 = vperm.xlu0 %4030, %v3897
  %v4032 = vpop.permute.xlu0 %4031
  %4035 = vset.pattern.permute.xlu0 0
  %4036 = vperm.xlu0 %4035, %v3898
  %v4037 = vpop.permute.xlu0 %4036
  %4040 = vset.pattern.permute.xlu0 0
  %4041 = vperm.xlu0 %4040, %v3899
  %v4042 = vpop.permute.xlu0 %4041
  %4045 = vset.pattern.permute.xlu0 0
  %4046 = vperm.xlu0 %4045, %v3900
  %v4047 = vpop.permute.xlu0 %4046
  %4050 = vset.pattern.permute.xlu0 0
  %4051 = vperm.xlu0 %4050, %v3901
  %v4052 = vpop.permute.xlu0 %4051
  %4055 = vset.pattern.permute.xlu0 0
  %4056 = vperm.xlu0 %4055, %v3902
  %v4057 = vpop.permute.xlu0 %4056
  %4060 = vset.pattern.permute.xlu0 0
  %4061 = vperm.xlu0 %4060, %v3903
  %v4062 = vpop.permute.xlu0 %4061
  %4065 = vset.pattern.permute.xlu0 0
  %4066 = vperm.xlu0 %4065, %v3904
  %v4067 = vpop.permute.xlu0 %4066
  %4070 = vset.pattern.permute.xlu0 0
  %4071 = vperm.xlu0 %4070, %v3905
  %v4072 = vpop.permute.xlu0 %4071
  %4075 = vset.pattern.permute.xlu0 0
  %4076 = vperm.xlu0 %4075, %v3906
  %v4077 = vpop.permute.xlu0 %4076
  %4080 = vset.pattern.permute.xlu0 0
  %4081 = vperm.xlu0 %4080, %v3907
  %v4082 = vpop.permute.xlu0 %4081
  %4085 = vset.pattern.permute.xlu0 0
  %4086 = vperm.xlu0 %4085, %v3908
  %v4087 = vpop.permute.xlu0 %4086
  %4090 = vset.pattern.permute.xlu0 0
  %4091 = vperm.xlu0 %4090, %v3909
  %v4092 = vpop.permute.xlu0 %4091
  %4095 = vset.pattern.permute.xlu0 0
  %4096 = vperm.xlu0 %4095, %v3910
  %v4097 = vpop.permute.xlu0 %4096
  %4100 = vset.pattern.permute.xlu0 0
  %4101 = vperm.xlu0 %4100, %v3911
  %v4102 = vpop.permute.xlu0 %4101
  %4105 = vset.pattern.permute.xlu0 0
  %4106 = vperm.xlu0 %4105, %v3912
  %v4107 = vpop.permute.xlu0 %4106
  %4110 = vset.pattern.permute.xlu0 0
  %4111 = vperm.xlu0 %4110, %v3913
  %v4112 = vpop.permute.xlu0 %4111
  %4115 = vset.pattern.permute.xlu0 0
  %4116 = vperm.xlu0 %4115, %v3914
  %v4117 = vpop.permute.xlu0 %4116
  %4120 = vset.pattern.permute.xlu0 0
  %4121 = vperm.xlu0 %4120, %v3915
  %v4122 = vpop.permute.xlu0 %4121
  %4125 = vset.pattern.permute.xlu0 0
  %4126 = vperm.xlu0 %4125, %v3916
  %v4127 = vpop.permute.xlu0 %4126
  %4130 = vset.pattern.permute.xlu0 0
  %4131 = vperm.xlu0 %4130, %v3917
  %v4132 = vpop.permute.xlu0 %4131
  %4135 = vset.pattern.permute.xlu0 0
  %4136 = vperm.xlu0 %4135, %v3918
  %v4137 = vpop.permute.xlu0 %4136
  %v4139 = vmul.f32 %v3083, %v3922
  %v4140 = vmul.f32 %v3084, %v3927
  %v4141 = vmul.f32 %v3085, %v3932
  %v4142 = vmul.f32 %v3086, %v3937
  %v4143 = vmul.f32 %v3087, %v3942
  %v4144 = vmul.f32 %v3088, %v3947
  %v4145 = vmul.f32 %v3089, %v3952
  %v4146 = vmul.f32 %v3090, %v3957
  %v4147 = vmul.f32 %v3091, %v3962
  %v4148 = vmul.f32 %v3092, %v3967
  %v4149 = vmul.f32 %v3093, %v3972
  %v4150 = vmul.f32 %v3094, %v3977
  %v4151 = vmul.f32 %v3095, %v3982
  %v4152 = vmul.f32 %v3096, %v3987
  %v4153 = vmul.f32 %v3097, %v3992
  %v4154 = vmul.f32 %v3098, %v3997
  %v4155 = vmul.f32 %v3099, %v4002
  %v4156 = vmul.f32 %v3100, %v4007
  %v4157 = vmul.f32 %v3101, %v4012
  %v4158 = vmul.f32 %v3102, %v4017
  %v4159 = vmul.f32 %v3103, %v4022
  %v4160 = vmul.f32 %v3104, %v4027
  %v4161 = vmul.f32 %v3105, %v4032
  %v4162 = vmul.f32 %v3106, %v4037
  %v4163 = vmul.f32 %v3107, %v4042
  %v4164 = vmul.f32 %v3108, %v4047
  %v4165 = vmul.f32 %v3109, %v4052
  %v4166 = vmul.f32 %v3110, %v4057
  %v4167 = vmul.f32 %v3111, %v4062
  %v4168 = vmul.f32 %v3112, %v4067
  %v4169 = vmul.f32 %v3113, %v4072
  %v4170 = vmul.f32 %v3114, %v4077
  %v4171 = vmul.f32 %v3115, %v4082
  %v4172 = vmul.f32 %v3116, %v4087
  %v4173 = vmul.f32 %v3117, %v4092
  %v4174 = vmul.f32 %v3118, %v4097
  %v4175 = vmul.f32 %v3119, %v4102
  %v4176 = vmul.f32 %v3120, %v4107
  %v4177 = vmul.f32 %v3121, %v4112
  %v4178 = vmul.f32 %v3122, %v4117
  %v4179 = vmul.f32 %v3123, %v4122
  %v4180 = vmul.f32 %v3124, %v4127
  %v4181 = vmul.f32 %v3125, %v4132
  %v4182 = vmul.f32 %v3126, %v4137
  %v4183 = vld [vmem:[%s5] sm:$0xff]
  %v4184 = vld [vmem:[%s5 + $0x8] sm:$0xff]
  %v4185 = vld [vmem:[%s5 + $0x10] sm:$0xff]
  %v4186 = vld [vmem:[%s5 + $0x18] sm:$0xff]
  %v4187 = vld [vmem:[%s5 + $0x20] sm:$0xff]
  %v4188 = vld [vmem:[%s5 + $0x28] sm:$0xff]
  %v4189 = vld [vmem:[%s5 + $0x30] sm:$0xff]
  %v4190 = vld [vmem:[%s5 + $0x38] sm:$0xff]
  %v4191 = vld [vmem:[%s5 + $0x40] sm:$0xff]
  %v4192 = vld [vmem:[%s5 + $0x48] sm:$0xff]
  %v4193 = vld [vmem:[%s5 + $0x50] sm:$0xff]
  %v4194 = vld [vmem:[%s5 + $0x58] sm:$0xff]
  %v4195 = vld [vmem:[%s5 + $0x60] sm:$0xff]
  %v4196 = vld [vmem:[%s5 + $0x68] sm:$0xff]
  %v4197 = vld [vmem:[%s5 + $0x70] sm:$0xff]
  %v4198 = vld [vmem:[%s5 + $0x78] sm:$0xff]
  %v4199 = vld [vmem:[%s5 + $0x80] sm:$0xff]
  %v4200 = vld [vmem:[%s5 + $0x88] sm:$0xff]
  %v4201 = vld [vmem:[%s5 + $0x90] sm:$0xff]
  %v4202 = vld [vmem:[%s5 + $0x98] sm:$0xff]
  %v4203 = vld [vmem:[%s5 + $0xa0] sm:$0xff]
  %v4204 = vld [vmem:[%s5 + $0xa8] sm:$0xff]
  %v4205 = vld [vmem:[%s5 + $0xb0] sm:$0xff]
  %v4206 = vld [vmem:[%s5 + $0xb8] sm:$0xff]
  %v4207 = vld [vmem:[%s5 + $0xc0] sm:$0xff]
  %v4208 = vld [vmem:[%s5 + $0xc8] sm:$0xff]
  %v4209 = vld [vmem:[%s5 + $0xd0] sm:$0xff]
  %v4210 = vld [vmem:[%s5 + $0xd8] sm:$0xff]
  %v4211 = vld [vmem:[%s5 + $0xe0] sm:$0xff]
  %v4212 = vld [vmem:[%s5 + $0xe8] sm:$0xff]
  %v4213 = vld [vmem:[%s5 + $0xf0] sm:$0xff]
  %v4214 = vld [vmem:[%s5 + $0xf8] sm:$0xff]
  %v4215 = vld [vmem:[%s5 + $0x100] sm:$0xff]
  %v4216 = vld [vmem:[%s5 + $0x108] sm:$0xff]
  %v4217 = vld [vmem:[%s5 + $0x110] sm:$0xff]
  %v4218 = vld [vmem:[%s5 + $0x118] sm:$0xff]
  %v4219 = vld [vmem:[%s5 + $0x120] sm:$0xff]
  %v4220 = vld [vmem:[%s5 + $0x128] sm:$0xff]
  %v4221 = vld [vmem:[%s5 + $0x130] sm:$0xff]
  %v4222 = vld [vmem:[%s5 + $0x138] sm:$0xff]
  %v4223 = vld [vmem:[%s5 + $0x140] sm:$0xff]
  %v4224 = vld [vmem:[%s5 + $0x148] sm:$0xff]
  %v4225 = vld [vmem:[%s5 + $0x150] sm:$0xff]
  %v4226 = vld [vmem:[%s5 + $0x158] sm:$0xff]
  %4228 = vset.pattern.permute.xlu0 0
  %4229 = vperm.xlu0 %4228, %v4183
  %v4230 = vpop.permute.xlu0 %4229
  %4233 = vset.pattern.permute.xlu0 0
  %4234 = vperm.xlu0 %4233, %v4184
  %v4235 = vpop.permute.xlu0 %4234
  %4238 = vset.pattern.permute.xlu0 0
  %4239 = vperm.xlu0 %4238, %v4185
  %v4240 = vpop.permute.xlu0 %4239
  %4243 = vset.pattern.permute.xlu0 0
  %4244 = vperm.xlu0 %4243, %v4186
  %v4245 = vpop.permute.xlu0 %4244
  %4248 = vset.pattern.permute.xlu0 0
  %4249 = vperm.xlu0 %4248, %v4187
  %v4250 = vpop.permute.xlu0 %4249
  %4253 = vset.pattern.permute.xlu0 0
  %4254 = vperm.xlu0 %4253, %v4188
  %v4255 = vpop.permute.xlu0 %4254
  %4258 = vset.pattern.permute.xlu0 0
  %4259 = vperm.xlu0 %4258, %v4189
  %v4260 = vpop.permute.xlu0 %4259
  %4263 = vset.pattern.permute.xlu0 0
  %4264 = vperm.xlu0 %4263, %v4190
  %v4265 = vpop.permute.xlu0 %4264
  %4268 = vset.pattern.permute.xlu0 0
  %4269 = vperm.xlu0 %4268, %v4191
  %v4270 = vpop.permute.xlu0 %4269
  %4273 = vset.pattern.permute.xlu0 0
  %4274 = vperm.xlu0 %4273, %v4192
  %v4275 = vpop.permute.xlu0 %4274
  %4278 = vset.pattern.permute.xlu0 0
  %4279 = vperm.xlu0 %4278, %v4193
  %v4280 = vpop.permute.xlu0 %4279
  %4283 = vset.pattern.permute.xlu0 0
  %4284 = vperm.xlu0 %4283, %v4194
  %v4285 = vpop.permute.xlu0 %4284
  %4288 = vset.pattern.permute.xlu0 0
  %4289 = vperm.xlu0 %4288, %v4195
  %v4290 = vpop.permute.xlu0 %4289
  %4293 = vset.pattern.permute.xlu0 0
  %4294 = vperm.xlu0 %4293, %v4196
  %v4295 = vpop.permute.xlu0 %4294
  %4298 = vset.pattern.permute.xlu0 0
  %4299 = vperm.xlu0 %4298, %v4197
  %v4300 = vpop.permute.xlu0 %4299
  %4303 = vset.pattern.permute.xlu0 0
  %4304 = vperm.xlu0 %4303, %v4198
  %v4305 = vpop.permute.xlu0 %4304
  %4308 = vset.pattern.permute.xlu0 0
  %4309 = vperm.xlu0 %4308, %v4199
  %v4310 = vpop.permute.xlu0 %4309
  %4313 = vset.pattern.permute.xlu0 0
  %4314 = vperm.xlu0 %4313, %v4200
  %v4315 = vpop.permute.xlu0 %4314
  %4318 = vset.pattern.permute.xlu0 0
  %4319 = vperm.xlu0 %4318, %v4201
  %v4320 = vpop.permute.xlu0 %4319
  %4323 = vset.pattern.permute.xlu0 0
  %4324 = vperm.xlu0 %4323, %v4202
  %v4325 = vpop.permute.xlu0 %4324
  %4328 = vset.pattern.permute.xlu0 0
  %4329 = vperm.xlu0 %4328, %v4203
  %v4330 = vpop.permute.xlu0 %4329
  %4333 = vset.pattern.permute.xlu0 0
  %4334 = vperm.xlu0 %4333, %v4204
  %v4335 = vpop.permute.xlu0 %4334
  %4338 = vset.pattern.permute.xlu0 0
  %4339 = vperm.xlu0 %4338, %v4205
  %v4340 = vpop.permute.xlu0 %4339
  %4343 = vset.pattern.permute.xlu0 0
  %4344 = vperm.xlu0 %4343, %v4206
  %v4345 = vpop.permute.xlu0 %4344
  %4348 = vset.pattern.permute.xlu0 0
  %4349 = vperm.xlu0 %4348, %v4207
  %v4350 = vpop.permute.xlu0 %4349
  %4353 = vset.pattern.permute.xlu0 0
  %4354 = vperm.xlu0 %4353, %v4208
  %v4355 = vpop.permute.xlu0 %4354
  %4358 = vset.pattern.permute.xlu0 0
  %4359 = vperm.xlu0 %4358, %v4209
  %v4360 = vpop.permute.xlu0 %4359
  %4363 = vset.pattern.permute.xlu0 0
  %4364 = vperm.xlu0 %4363, %v4210
  %v4365 = vpop.permute.xlu0 %4364
  %4368 = vset.pattern.permute.xlu0 0
  %4369 = vperm.xlu0 %4368, %v4211
  %v4370 = vpop.permute.xlu0 %4369
  %4373 = vset.pattern.permute.xlu0 0
  %4374 = vperm.xlu0 %4373, %v4212
  %v4375 = vpop.permute.xlu0 %4374
  %4378 = vset.pattern.permute.xlu0 0
  %4379 = vperm.xlu0 %4378, %v4213
  %v4380 = vpop.permute.xlu0 %4379
  %4383 = vset.pattern.permute.xlu0 0
  %4384 = vperm.xlu0 %4383, %v4214
  %v4385 = vpop.permute.xlu0 %4384
  %4388 = vset.pattern.permute.xlu0 0
  %4389 = vperm.xlu0 %4388, %v4215
  %v4390 = vpop.permute.xlu0 %4389
  %4393 = vset.pattern.permute.xlu0 0
  %4394 = vperm.xlu0 %4393, %v4216
  %v4395 = vpop.permute.xlu0 %4394
  %4398 = vset.pattern.permute.xlu0 0
  %4399 = vperm.xlu0 %4398, %v4217
  %v4400 = vpop.permute.xlu0 %4399
  %4403 = vset.pattern.permute.xlu0 0
  %4404 = vperm.xlu0 %4403, %v4218
  %v4405 = vpop.permute.xlu0 %4404
  %4408 = vset.pattern.permute.xlu0 0
  %4409 = vperm.xlu0 %4408, %v4219
  %v4410 = vpop.permute.xlu0 %4409
  %4413 = vset.pattern.permute.xlu0 0
  %4414 = vperm.xlu0 %4413, %v4220
  %v4415 = vpop.permute.xlu0 %4414
  %4418 = vset.pattern.permute.xlu0 0
  %4419 = vperm.xlu0 %4418, %v4221
  %v4420 = vpop.permute.xlu0 %4419
  %4423 = vset.pattern.permute.xlu0 0
  %4424 = vperm.xlu0 %4423, %v4222
  %v4425 = vpop.permute.xlu0 %4424
  %4428 = vset.pattern.permute.xlu0 0
  %4429 = vperm.xlu0 %4428, %v4223
  %v4430 = vpop.permute.xlu0 %4429
  %4433 = vset.pattern.permute.xlu0 0
  %4434 = vperm.xlu0 %4433, %v4224
  %v4435 = vpop.permute.xlu0 %4434
  %4438 = vset.pattern.permute.xlu0 0
  %4439 = vperm.xlu0 %4438, %v4225
  %v4440 = vpop.permute.xlu0 %4439
  %4443 = vset.pattern.permute.xlu0 0
  %4444 = vperm.xlu0 %4443, %v4226
  %v4445 = vpop.permute.xlu0 %4444
  %v4447 = vadd.f32 %v4139, %v4230
  %v4448 = vadd.f32 %v4140, %v4235
  %v4449 = vadd.f32 %v4141, %v4240
  %v4450 = vadd.f32 %v4142, %v4245
  %v4451 = vadd.f32 %v4143, %v4250
  %v4452 = vadd.f32 %v4144, %v4255
  %v4453 = vadd.f32 %v4145, %v4260
  %v4454 = vadd.f32 %v4146, %v4265
  %v4455 = vadd.f32 %v4147, %v4270
  %v4456 = vadd.f32 %v4148, %v4275
  %v4457 = vadd.f32 %v4149, %v4280
  %v4458 = vadd.f32 %v4150, %v4285
  %v4459 = vadd.f32 %v4151, %v4290
  %v4460 = vadd.f32 %v4152, %v4295
  %v4461 = vadd.f32 %v4153, %v4300
  %v4462 = vadd.f32 %v4154, %v4305
  %v4463 = vadd.f32 %v4155, %v4310
  %v4464 = vadd.f32 %v4156, %v4315
  %v4465 = vadd.f32 %v4157, %v4320
  %v4466 = vadd.f32 %v4158, %v4325
  %v4467 = vadd.f32 %v4159, %v4330
  %v4468 = vadd.f32 %v4160, %v4335
  %v4469 = vadd.f32 %v4161, %v4340
  %v4470 = vadd.f32 %v4162, %v4345
  %v4471 = vadd.f32 %v4163, %v4350
  %v4472 = vadd.f32 %v4164, %v4355
  %v4473 = vadd.f32 %v4165, %v4360
  %v4474 = vadd.f32 %v4166, %v4365
  %v4475 = vadd.f32 %v4167, %v4370
  %v4476 = vadd.f32 %v4168, %v4375
  %v4477 = vadd.f32 %v4169, %v4380
  %v4478 = vadd.f32 %v4170, %v4385
  %v4479 = vadd.f32 %v4171, %v4390
  %v4480 = vadd.f32 %v4172, %v4395
  %v4481 = vadd.f32 %v4173, %v4400
  %v4482 = vadd.f32 %v4174, %v4405
  %v4483 = vadd.f32 %v4175, %v4410
  %v4484 = vadd.f32 %v4176, %v4415
  %v4485 = vadd.f32 %v4177, %v4420
  %v4486 = vadd.f32 %v4178, %v4425
  %v4487 = vadd.f32 %v4179, %v4430
  %v4488 = vadd.f32 %v4180, %v4435
  %v4489 = vadd.f32 %v4181, %v4440
  %v4490 = vadd.f32 %v4182, %v4445
  %v4491 = vld [vmem:[%s2] sm:$0xff]
  %v4492 = vld [vmem:[%s2 + $0x8] sm:$0xff]
  %v4493 = vld [vmem:[%s2 + $0x10] sm:$0xff]
  %v4494 = vld [vmem:[%s2 + $0x18] sm:$0xff]
  %v4495 = vld [vmem:[%s2 + $0x20] sm:$0xff]
  %v4496 = vld [vmem:[%s2 + $0x28] sm:$0xff]
  %v4497 = vld [vmem:[%s2 + $0x30] sm:$0xff]
  %v4498 = vld [vmem:[%s2 + $0x38] sm:$0xff]
  %v4499 = vld [vmem:[%s2 + $0x40] sm:$0xff]
  %v4500 = vld [vmem:[%s2 + $0x48] sm:$0xff]
  %v4501 = vld [vmem:[%s2 + $0x50] sm:$0xff]
  %v4502 = vld [vmem:[%s2 + $0x58] sm:$0xff]
  %v4503 = vld [vmem:[%s2 + $0x60] sm:$0xff]
  %v4504 = vld [vmem:[%s2 + $0x68] sm:$0xff]
  %v4505 = vld [vmem:[%s2 + $0x70] sm:$0xff]
  %v4506 = vld [vmem:[%s2 + $0x78] sm:$0xff]
  %v4507 = vld [vmem:[%s2 + $0x80] sm:$0xff]
  %v4508 = vld [vmem:[%s2 + $0x88] sm:$0xff]
  %v4509 = vld [vmem:[%s2 + $0x90] sm:$0xff]
  %v4510 = vld [vmem:[%s2 + $0x98] sm:$0xff]
  %v4511 = vld [vmem:[%s2 + $0xa0] sm:$0xff]
  %v4512 = vld [vmem:[%s2 + $0xa8] sm:$0xff]
  %v4513 = vld [vmem:[%s2 + $0xb0] sm:$0xff]
  %v4514 = vld [vmem:[%s2 + $0xb8] sm:$0xff]
  %v4515 = vld [vmem:[%s2 + $0xc0] sm:$0xff]
  %v4516 = vld [vmem:[%s2 + $0xc8] sm:$0xff]
  %v4517 = vld [vmem:[%s2 + $0xd0] sm:$0xff]
  %v4518 = vld [vmem:[%s2 + $0xd8] sm:$0xff]
  %v4519 = vld [vmem:[%s2 + $0xe0] sm:$0xff]
  %v4520 = vld [vmem:[%s2 + $0xe8] sm:$0xff]
  %v4521 = vld [vmem:[%s2 + $0xf0] sm:$0xff]
  %v4522 = vld [vmem:[%s2 + $0xf8] sm:$0xff]
  %v4523 = vld [vmem:[%s2 + $0x100] sm:$0xff]
  %v4524 = vld [vmem:[%s2 + $0x108] sm:$0xff]
  %v4525 = vld [vmem:[%s2 + $0x110] sm:$0xff]
  %v4526 = vld [vmem:[%s2 + $0x118] sm:$0xff]
  %v4527 = vld [vmem:[%s2 + $0x120] sm:$0xff]
  %v4528 = vld [vmem:[%s2 + $0x128] sm:$0xff]
  %v4529 = vld [vmem:[%s2 + $0x130] sm:$0xff]
  %v4530 = vld [vmem:[%s2 + $0x138] sm:$0xff]
  %v4531 = vld [vmem:[%s2 + $0x140] sm:$0xff]
  %v4532 = vld [vmem:[%s2 + $0x148] sm:$0xff]
  %v4533 = vld [vmem:[%s2 + $0x150] sm:$0xff]
  %v4534 = vld [vmem:[%s2 + $0x158] sm:$0xff]
  %v4535 = vadd.f32 %v4491, %v4447
  %v4536 = vadd.f32 %v4492, %v4448
  %v4537 = vadd.f32 %v4493, %v4449
  %v4538 = vadd.f32 %v4494, %v4450
  %v4539 = vadd.f32 %v4495, %v4451
  %v4540 = vadd.f32 %v4496, %v4452
  %v4541 = vadd.f32 %v4497, %v4453
  %v4542 = vadd.f32 %v4498, %v4454
  %v4543 = vadd.f32 %v4499, %v4455
  %v4544 = vadd.f32 %v4500, %v4456
  %v4545 = vadd.f32 %v4501, %v4457
  %v4546 = vadd.f32 %v4502, %v4458
  %v4547 = vadd.f32 %v4503, %v4459
  %v4548 = vadd.f32 %v4504, %v4460
  %v4549 = vadd.f32 %v4505, %v4461
  %v4550 = vadd.f32 %v4506, %v4462
  %v4551 = vadd.f32 %v4507, %v4463
  %v4552 = vadd.f32 %v4508, %v4464
  %v4553 = vadd.f32 %v4509, %v4465
  %v4554 = vadd.f32 %v4510, %v4466
  %v4555 = vadd.f32 %v4511, %v4467
  %v4556 = vadd.f32 %v4512, %v4468
  %v4557 = vadd.f32 %v4513, %v4469
  %v4558 = vadd.f32 %v4514, %v4470
  %v4559 = vadd.f32 %v4515, %v4471
  %v4560 = vadd.f32 %v4516, %v4472
  %v4561 = vadd.f32 %v4517, %v4473
  %v4562 = vadd.f32 %v4518, %v4474
  %v4563 = vadd.f32 %v4519, %v4475
  %v4564 = vadd.f32 %v4520, %v4476
  %v4565 = vadd.f32 %v4521, %v4477
  %v4566 = vadd.f32 %v4522, %v4478
  %v4567 = vadd.f32 %v4523, %v4479
  %v4568 = vadd.f32 %v4524, %v4480
  %v4569 = vadd.f32 %v4525, %v4481
  %v4570 = vadd.f32 %v4526, %v4482
  %v4571 = vadd.f32 %v4527, %v4483
  %v4572 = vadd.f32 %v4528, %v4484
  %v4573 = vadd.f32 %v4529, %v4485
  %v4574 = vadd.f32 %v4530, %v4486
  %v4575 = vadd.f32 %v4531, %v4487
  %v4576 = vadd.f32 %v4532, %v4488
  %v4577 = vadd.f32 %v4533, %v4489
  %v4578 = vadd.f32 %v4534, %v4490
  %v4579 = vld [vmem:[%s6] sm:$0xff]
  %v4580 = vld [vmem:[%s6 + $0x8] sm:$0xf]
  %v4581 = vld [vmem:[%s6 + $0xc] sm:$0xff]
  %v4582 = vld [vmem:[%s6 + $0x14] sm:$0xf]
  %v4583 = vld [vmem:[%s6 + $0x18] sm:$0xff]
  %v4584 = vld [vmem:[%s6 + $0x20] sm:$0xf]
  %v4585 = vld [vmem:[%s6 + $0x24] sm:$0xff]
  %v4586 = vld [vmem:[%s6 + $0x2c] sm:$0xf]
  %v4587 = vld [vmem:[%s6 + $0x30] sm:$0xff]
  %v4588 = vld [vmem:[%s6 + $0x38] sm:$0xf]
  %v4589 = vld [vmem:[%s6 + $0x3c] sm:$0xff]
  %v4590 = vld [vmem:[%s6 + $0x44] sm:$0xf]
  %v4591 = vld [vmem:[%s6 + $0x48] sm:$0xff]
  %v4592 = vld [vmem:[%s6 + $0x50] sm:$0xf]
  %v4593 = vld [vmem:[%s6 + $0x54] sm:$0xff]
  %v4594 = vld [vmem:[%s6 + $0x5c] sm:$0xf]
  %v4595 = vld [vmem:[%s6 + $0x60] sm:$0xff]
  %v4596 = vld [vmem:[%s6 + $0x68] sm:$0xf]
  %v4597 = vld [vmem:[%s6 + $0x6c] sm:$0xff]
  %v4598 = vld [vmem:[%s6 + $0x74] sm:$0xf]
  %v4599 = vld [vmem:[%s6 + $0x78] sm:$0xff]
  %v4600 = vld [vmem:[%s6 + $0x80] sm:$0xf]
  %v4601 = vld [vmem:[%s6 + $0x84] sm:$0xff]
  %v4602 = vld [vmem:[%s6 + $0x8c] sm:$0xf]
  %v4603 = vld [vmem:[%s6 + $0x90] sm:$0xff]
  %v4604 = vld [vmem:[%s6 + $0x98] sm:$0xf]
  %v4605 = vld [vmem:[%s6 + $0x9c] sm:$0xff]
  %v4606 = vld [vmem:[%s6 + $0xa4] sm:$0xf]
  %v4607 = vld [vmem:[%s6 + $0xa8] sm:$0xff]
  %v4608 = vld [vmem:[%s6 + $0xb0] sm:$0xf]
  %v4609 = vld [vmem:[%s6 + $0xb4] sm:$0xff]
  %v4610 = vld [vmem:[%s6 + $0xbc] sm:$0xf]
  %v4611 = vld [vmem:[%s6 + $0xc0] sm:$0xff]
  %v4612 = vld [vmem:[%s6 + $0xc8] sm:$0xf]
  %v4613 = vld [vmem:[%s6 + $0xcc] sm:$0xff]
  %v4614 = vld [vmem:[%s6 + $0xd4] sm:$0xf]
  %v4615 = vld [vmem:[%s6 + $0xd8] sm:$0xff]
  %v4616 = vld [vmem:[%s6 + $0xe0] sm:$0xf]
  %v4617 = vld [vmem:[%s6 + $0xe4] sm:$0xff]
  %v4618 = vld [vmem:[%s6 + $0xec] sm:$0xf]
  %v4619 = vld [vmem:[%s6 + $0xf0] sm:$0xff]
  %v4620 = vld [vmem:[%s6 + $0xf8] sm:$0xf]
  %v4621 = vld [vmem:[%s6 + $0xfc] sm:$0xff]
  %v4622 = vld [vmem:[%s6 + $0x104] sm:$0xf]
  %v4623 = vld [vmem:[%s6 + $0x108] sm:$0xff]
  %v4624 = vld [vmem:[%s6 + $0x110] sm:$0xf]
  %v4625 = vld [vmem:[%s6 + $0x114] sm:$0xff]
  %v4626 = vld [vmem:[%s6 + $0x11c] sm:$0xf]
  %v4627 = vld [vmem:[%s6 + $0x120] sm:$0xff]
  %v4628 = vld [vmem:[%s6 + $0x128] sm:$0xf]
  %v4629 = vld [vmem:[%s6 + $0x12c] sm:$0xff]
  %v4630 = vld [vmem:[%s6 + $0x134] sm:$0xf]
  %v4631 = vld [vmem:[%s6 + $0x138] sm:$0xff]
  %v4632 = vld [vmem:[%s6 + $0x140] sm:$0xf]
  %v4633 = vld [vmem:[%s6 + $0x144] sm:$0xff]
  %v4634 = vld [vmem:[%s6 + $0x14c] sm:$0xf]
  %v4635 = vld [vmem:[%s6 + $0x150] sm:$0xff]
  %v4636 = vld [vmem:[%s6 + $0x158] sm:$0xf]
  %v4637 = vld [vmem:[%s6 + $0x15c] sm:$0xff]
  %v4638 = vld [vmem:[%s6 + $0x164] sm:$0xf]
  %v4639 = vld [vmem:[%s6 + $0x168] sm:$0xff]
  %v4640 = vld [vmem:[%s6 + $0x170] sm:$0xf]
  %v4641 = vld [vmem:[%s6 + $0x174] sm:$0xff]
  %v4642 = vld [vmem:[%s6 + $0x17c] sm:$0xf]
  %v4643 = vld [vmem:[%s6 + $0x180] sm:$0xff]
  %v4644 = vld [vmem:[%s6 + $0x188] sm:$0xf]
  %v4645 = vld [vmem:[%s6 + $0x18c] sm:$0xff]
  %v4646 = vld [vmem:[%s6 + $0x194] sm:$0xf]
  %v4647 = vld [vmem:[%s6 + $0x198] sm:$0xff]
  %v4648 = vld [vmem:[%s6 + $0x1a0] sm:$0xf]
  %v4649 = vld [vmem:[%s6 + $0x1a4] sm:$0xff]
  %v4650 = vld [vmem:[%s6 + $0x1ac] sm:$0xf]
  %v4651 = vld [vmem:[%s6 + $0x1b0] sm:$0xff]
  %v4652 = vld [vmem:[%s6 + $0x1b8] sm:$0xf]
  %v4653 = vld [vmem:[%s6 + $0x1bc] sm:$0xff]
  %v4654 = vld [vmem:[%s6 + $0x1c4] sm:$0xf]
  %v4655 = vld [vmem:[%s6 + $0x1c8] sm:$0xff]
  %v4656 = vld [vmem:[%s6 + $0x1d0] sm:$0xf]
  %v4657 = vld [vmem:[%s6 + $0x1d4] sm:$0xff]
  %v4658 = vld [vmem:[%s6 + $0x1dc] sm:$0xf]
  %v4659 = vld [vmem:[%s6 + $0x1e0] sm:$0xff]
  %v4660 = vld [vmem:[%s6 + $0x1e8] sm:$0xf]
  %v4661 = vld [vmem:[%s6 + $0x1ec] sm:$0xff]
  %v4662 = vld [vmem:[%s6 + $0x1f4] sm:$0xf]
  %v4663 = vld [vmem:[%s6 + $0x1f8] sm:$0xff]
  %v4664 = vld [vmem:[%s6 + $0x200] sm:$0xf]
  %v4665 = vld [vmem:[%s6 + $0x204] sm:$0xff]
  %v4666 = vld [vmem:[%s6 + $0x20c] sm:$0xf]
  %v4667 = vld [vmem:[%s6 + $0x210] sm:$0xff]
  %v4668 = vld [vmem:[%s6 + $0x218] sm:$0xf]
  %v4669 = vld [vmem:[%s6 + $0x21c] sm:$0xff]
  %v4670 = vld [vmem:[%s6 + $0x224] sm:$0xf]
  %v4671 = vld [vmem:[%s6 + $0x228] sm:$0xff]
  %v4672 = vld [vmem:[%s6 + $0x230] sm:$0xf]
  %v4673 = vld [vmem:[%s6 + $0x234] sm:$0xff]
  %v4674 = vld [vmem:[%s6 + $0x23c] sm:$0xf]
  %v4675 = vld [vmem:[%s6 + $0x240] sm:$0xff]
  %v4676 = vld [vmem:[%s6 + $0x248] sm:$0xf]
  %v4677 = vld [vmem:[%s6 + $0x24c] sm:$0xff]
  %v4678 = vld [vmem:[%s6 + $0x254] sm:$0xf]
  %v4679 = vld [vmem:[%s6 + $0x258] sm:$0xff]
  %v4680 = vld [vmem:[%s6 + $0x260] sm:$0xf]
  %v4681 = vld [vmem:[%s6 + $0x264] sm:$0xff]
  %v4682 = vld [vmem:[%s6 + $0x26c] sm:$0xf]
  %v4683 = vld [vmem:[%s6 + $0x270] sm:$0xff]
  %v4684 = vld [vmem:[%s6 + $0x278] sm:$0xf]
  %v4685 = vld [vmem:[%s6 + $0x27c] sm:$0xff]
  %v4686 = vld [vmem:[%s6 + $0x284] sm:$0xf]
  %v4687 = vld [vmem:[%s6 + $0x288] sm:$0xff]
  %v4688 = vld [vmem:[%s6 + $0x290] sm:$0xf]
  %v4689 = vld [vmem:[%s6 + $0x294] sm:$0xff]
  %v4690 = vld [vmem:[%s6 + $0x29c] sm:$0xf]
  %v4691 = vld [vmem:[%s6 + $0x2a0] sm:$0xff]
  %v4692 = vld [vmem:[%s6 + $0x2a8] sm:$0xf]
  %v4693 = vld [vmem:[%s6 + $0x2ac] sm:$0xff]
  %v4694 = vld [vmem:[%s6 + $0x2b4] sm:$0xf]
  %v4695 = vld [vmem:[%s6 + $0x2b8] sm:$0xff]
  %v4696 = vld [vmem:[%s6 + $0x2c0] sm:$0xf]
  %v4697 = vld [vmem:[%s6 + $0x2c4] sm:$0xff]
  %v4698 = vld [vmem:[%s6 + $0x2cc] sm:$0xf]
  %v4699 = vld [vmem:[%s6 + $0x2d0] sm:$0xff]
  %v4700 = vld [vmem:[%s6 + $0x2d8] sm:$0xf]
  %v4701 = vld [vmem:[%s6 + $0x2dc] sm:$0xff]
  %v4702 = vld [vmem:[%s6 + $0x2e4] sm:$0xf]
  %v4703 = vld [vmem:[%s6 + $0x2e8] sm:$0xff]
  %v4704 = vld [vmem:[%s6 + $0x2f0] sm:$0xf]
  %v4705 = vld [vmem:[%s6 + $0x2f4] sm:$0xff]
  %v4706 = vld [vmem:[%s6 + $0x2fc] sm:$0xf]
  %v4707 = vld [vmem:[%s6 + $0x300] sm:$0xff]
  %v4708 = vld [vmem:[%s6 + $0x308] sm:$0xf]
  %v4709 = vld [vmem:[%s6 + $0x30c] sm:$0xff]
  %v4710 = vld [vmem:[%s6 + $0x314] sm:$0xf]
  %v4711 = vld [vmem:[%s6 + $0x318] sm:$0xff]
  %v4712 = vld [vmem:[%s6 + $0x320] sm:$0xf]
  %v4713 = vld [vmem:[%s6 + $0x324] sm:$0xff]
  %v4714 = vld [vmem:[%s6 + $0x32c] sm:$0xf]
  %v4715 = vld [vmem:[%s6 + $0x330] sm:$0xff]
  %v4716 = vld [vmem:[%s6 + $0x338] sm:$0xf]
  %v4717 = vld [vmem:[%s6 + $0x33c] sm:$0xff]
  %v4718 = vld [vmem:[%s6 + $0x344] sm:$0xf]
  %v4719 = vld [vmem:[%s6 + $0x348] sm:$0xff]
  %v4720 = vld [vmem:[%s6 + $0x350] sm:$0xf]
  %v4721 = vld [vmem:[%s6 + $0x354] sm:$0xff]
  %v4722 = vld [vmem:[%s6 + $0x35c] sm:$0xf]
  %v4723 = vld [vmem:[%s6 + $0x360] sm:$0xff]
  %v4724 = vld [vmem:[%s6 + $0x368] sm:$0xf]
  %v4725 = vld [vmem:[%s6 + $0x36c] sm:$0xff]
  %v4726 = vld [vmem:[%s6 + $0x374] sm:$0xf]
  %v4727 = vld [vmem:[%s6 + $0x378] sm:$0xff]
  %v4728 = vld [vmem:[%s6 + $0x380] sm:$0xf]
  %v4729 = vld [vmem:[%s6 + $0x384] sm:$0xff]
  %v4730 = vld [vmem:[%s6 + $0x38c] sm:$0xf]
  %v4731 = vld [vmem:[%s6 + $0x390] sm:$0xff]
  %v4732 = vld [vmem:[%s6 + $0x398] sm:$0xf]
  %v4733 = vld [vmem:[%s6 + $0x39c] sm:$0xff]
  %v4734 = vld [vmem:[%s6 + $0x3a4] sm:$0xf]
  %v4735 = vld [vmem:[%s6 + $0x3a8] sm:$0xff]
  %v4736 = vld [vmem:[%s6 + $0x3b0] sm:$0xf]
  %v4737 = vld [vmem:[%s6 + $0x3b4] sm:$0xff]
  %v4738 = vld [vmem:[%s6 + $0x3bc] sm:$0xf]
  %v4739 = vld [vmem:[%s6 + $0x3c0] sm:$0xff]
  %v4740 = vld [vmem:[%s6 + $0x3c8] sm:$0xf]
  %v4741 = vld [vmem:[%s6 + $0x3cc] sm:$0xff]
  %v4742 = vld [vmem:[%s6 + $0x3d4] sm:$0xf]
  %v4743 = vld [vmem:[%s6 + $0x3d8] sm:$0xff]
  %v4744 = vld [vmem:[%s6 + $0x3e0] sm:$0xf]
  %v4745 = vld [vmem:[%s6 + $0x3e4] sm:$0xff]
  %v4746 = vld [vmem:[%s6 + $0x3ec] sm:$0xf]
  %v4747 = vld [vmem:[%s6 + $0x3f0] sm:$0xff]
  %v4748 = vld [vmem:[%s6 + $0x3f8] sm:$0xf]
  %v4749 = vld [vmem:[%s6 + $0x3fc] sm:$0xff]
  %v4750 = vld [vmem:[%s6 + $0x404] sm:$0xf]
  %v4751 = vld [vmem:[%s6 + $0x408] sm:$0xff]
  %v4752 = vld [vmem:[%s6 + $0x410] sm:$0xf]
  %v4753 = vld [vmem:[%s6 + $0x414] sm:$0xff]
  %v4754 = vld [vmem:[%s6 + $0x41c] sm:$0xf]
  %v4755 = vld [vmem:[%s6 + $0x420] sm:$0xff]
  %v4756 = vld [vmem:[%s6 + $0x428] sm:$0xf]
  %v4757 = vld [vmem:[%s6 + $0x42c] sm:$0xff]
  %v4758 = vld [vmem:[%s6 + $0x434] sm:$0xf]
  %v4759 = vld [vmem:[%s6 + $0x438] sm:$0xff]
  %v4760 = vld [vmem:[%s6 + $0x440] sm:$0xf]
  %v4761 = vld [vmem:[%s6 + $0x444] sm:$0xff]
  %v4762 = vld [vmem:[%s6 + $0x44c] sm:$0xf]
  %v4763 = vld [vmem:[%s6 + $0x450] sm:$0xff]
  %v4764 = vld [vmem:[%s6 + $0x458] sm:$0xf]
  %v4765 = vld [vmem:[%s6 + $0x45c] sm:$0xff]
  %v4766 = vld [vmem:[%s6 + $0x464] sm:$0xf]
  %v4767 = vld [vmem:[%s6 + $0x468] sm:$0xff]
  %v4768 = vld [vmem:[%s6 + $0x470] sm:$0xf]
  %v4769 = vld [vmem:[%s6 + $0x474] sm:$0xff]
  %v4770 = vld [vmem:[%s6 + $0x47c] sm:$0xf]
  %v4771 = vld [vmem:[%s6 + $0x480] sm:$0xff]
  %v4772 = vld [vmem:[%s6 + $0x488] sm:$0xf]
  %v4773 = vld [vmem:[%s6 + $0x48c] sm:$0xff]
  %v4774 = vld [vmem:[%s6 + $0x494] sm:$0xf]
  %v4775 = vld [vmem:[%s6 + $0x498] sm:$0xff]
  %v4776 = vld [vmem:[%s6 + $0x4a0] sm:$0xf]
  %v4777 = vld [vmem:[%s6 + $0x4a4] sm:$0xff]
  %v4778 = vld [vmem:[%s6 + $0x4ac] sm:$0xf]
  %v4779 = vld [vmem:[%s6 + $0x4b0] sm:$0xff]
  %v4780 = vld [vmem:[%s6 + $0x4b8] sm:$0xf]
  %v4781 = vld [vmem:[%s6 + $0x4bc] sm:$0xff]
  %v4782 = vld [vmem:[%s6 + $0x4c4] sm:$0xf]
  %v4783 = vld [vmem:[%s6 + $0x4c8] sm:$0xff]
  %v4784 = vld [vmem:[%s6 + $0x4d0] sm:$0xf]
  %v4785 = vld [vmem:[%s6 + $0x4d4] sm:$0xff]
  %v4786 = vld [vmem:[%s6 + $0x4dc] sm:$0xf]
  %v4787 = vld [vmem:[%s6 + $0x4e0] sm:$0xff]
  %v4788 = vld [vmem:[%s6 + $0x4e8] sm:$0xf]
  %v4789 = vld [vmem:[%s6 + $0x4ec] sm:$0xff]
  %v4790 = vld [vmem:[%s6 + $0x4f4] sm:$0xf]
  %v4791 = vld [vmem:[%s6 + $0x4f8] sm:$0xff]
  %v4792 = vld [vmem:[%s6 + $0x500] sm:$0xf]
  %v4793 = vld [vmem:[%s6 + $0x504] sm:$0xff]
  %v4794 = vld [vmem:[%s6 + $0x50c] sm:$0xf]
  %v4795 = vld [vmem:[%s6 + $0x510] sm:$0xff]
  %v4796 = vld [vmem:[%s6 + $0x518] sm:$0xf]
  %v4797 = vld [vmem:[%s6 + $0x51c] sm:$0xff]
  %v4798 = vld [vmem:[%s6 + $0x524] sm:$0xf]
  %v4799 = vld [vmem:[%s6 + $0x528] sm:$0xff]
  %v4800 = vld [vmem:[%s6 + $0x530] sm:$0xf]
  %v4801 = vld [vmem:[%s6 + $0x534] sm:$0xff]
  %v4802 = vld [vmem:[%s6 + $0x53c] sm:$0xf]
  %v4803 = vld [vmem:[%s6 + $0x540] sm:$0xff]
  %v4804 = vld [vmem:[%s6 + $0x548] sm:$0xf]
  %v4805 = vld [vmem:[%s6 + $0x54c] sm:$0xff]
  %v4806 = vld [vmem:[%s6 + $0x554] sm:$0xf]
  %v4807 = vld [vmem:[%s6 + $0x558] sm:$0xff]
  %v4808 = vld [vmem:[%s6 + $0x560] sm:$0xf]
  %v4809 = vld [vmem:[%s6 + $0x564] sm:$0xff]
  %v4810 = vld [vmem:[%s6 + $0x56c] sm:$0xf]
  %v4811 = vld [vmem:[%s6 + $0x570] sm:$0xff]
  %v4812 = vld [vmem:[%s6 + $0x578] sm:$0xf]
  %v4813 = vld [vmem:[%s6 + $0x57c] sm:$0xff]
  %v4814 = vld [vmem:[%s6 + $0x584] sm:$0xf]
  %v4815 = vld [vmem:[%s6 + $0x588] sm:$0xff]
  %v4816 = vld [vmem:[%s6 + $0x590] sm:$0xf]
  %v4817 = vld [vmem:[%s6 + $0x594] sm:$0xff]
  %v4818 = vld [vmem:[%s6 + $0x59c] sm:$0xf]
  %v4819 = vld [vmem:[%s6 + $0x5a0] sm:$0xff]
  %v4820 = vld [vmem:[%s6 + $0x5a8] sm:$0xf]
  %v4821 = vld [vmem:[%s6 + $0x5ac] sm:$0xff]
  %v4822 = vld [vmem:[%s6 + $0x5b4] sm:$0xf]
  %v4823 = vld [vmem:[%s6 + $0x5b8] sm:$0xff]
  %v4824 = vld [vmem:[%s6 + $0x5c0] sm:$0xf]
  %v4825 = vld [vmem:[%s6 + $0x5c4] sm:$0xff]
  %v4826 = vld [vmem:[%s6 + $0x5cc] sm:$0xf]
  %v4827 = vld [vmem:[%s6 + $0x5d0] sm:$0xff]
  %v4828 = vld [vmem:[%s6 + $0x5d8] sm:$0xf]
  %v4829 = vld [vmem:[%s6 + $0x5dc] sm:$0xff]
  %v4830 = vld [vmem:[%s6 + $0x5e4] sm:$0xf]
  %v4831 = vld [vmem:[%s6 + $0x5e8] sm:$0xff]
  %v4832 = vld [vmem:[%s6 + $0x5f0] sm:$0xf]
  %v4833 = vld [vmem:[%s6 + $0x5f4] sm:$0xff]
  %v4834 = vld [vmem:[%s6 + $0x5fc] sm:$0xf]
  %v4835 = vld [vmem:[%s6 + $0x600] sm:$0xff]
  %v4836 = vld [vmem:[%s6 + $0x608] sm:$0xf]
  %v4837 = vld [vmem:[%s6 + $0x60c] sm:$0xff]
  %v4838 = vld [vmem:[%s6 + $0x614] sm:$0xf]
  %v4839 = vld [vmem:[%s6 + $0x618] sm:$0xff]
  %v4840 = vld [vmem:[%s6 + $0x620] sm:$0xf]
  %v4841 = vld [vmem:[%s6 + $0x624] sm:$0xff]
  %v4842 = vld [vmem:[%s6 + $0x62c] sm:$0xf]
  %v4843 = vld [vmem:[%s6 + $0x630] sm:$0xff]
  %v4844 = vld [vmem:[%s6 + $0x638] sm:$0xf]
  %v4845 = vld [vmem:[%s6 + $0x63c] sm:$0xff]
  %v4846 = vld [vmem:[%s6 + $0x644] sm:$0xf]
  %v4847 = vld [vmem:[%s6 + $0x648] sm:$0xff]
  %v4848 = vld [vmem:[%s6 + $0x650] sm:$0xf]
  %v4849 = vld [vmem:[%s6 + $0x654] sm:$0xff]
  %v4850 = vld [vmem:[%s6 + $0x65c] sm:$0xf]
  %v4851 = vld [vmem:[%s6 + $0x660] sm:$0xff]
  %v4852 = vld [vmem:[%s6 + $0x668] sm:$0xf]
  %v4853 = vld [vmem:[%s6 + $0x66c] sm:$0xff]
  %v4854 = vld [vmem:[%s6 + $0x674] sm:$0xf]
  %v4855 = vld [vmem:[%s6 + $0x678] sm:$0xff]
  %v4856 = vld [vmem:[%s6 + $0x680] sm:$0xf]
  %v4857 = vld [vmem:[%s6 + $0x684] sm:$0xff]
  %v4858 = vld [vmem:[%s6 + $0x68c] sm:$0xf]
  %v4859 = vld [vmem:[%s6 + $0x690] sm:$0xff]
  %v4860 = vld [vmem:[%s6 + $0x698] sm:$0xf]
  %v4861 = vld [vmem:[%s6 + $0x69c] sm:$0xff]
  %v4862 = vld [vmem:[%s6 + $0x6a4] sm:$0xf]
  %v4863 = vld [vmem:[%s6 + $0x6a8] sm:$0xff]
  %v4864 = vld [vmem:[%s6 + $0x6b0] sm:$0xf]
  %v4865 = vld [vmem:[%s6 + $0x6b4] sm:$0xff]
  %v4866 = vld [vmem:[%s6 + $0x6bc] sm:$0xf]
  %v4867 = vld [vmem:[%s6 + $0x6c0] sm:$0xff]
  %v4868 = vld [vmem:[%s6 + $0x6c8] sm:$0xf]
  %v4869 = vld [vmem:[%s6 + $0x6cc] sm:$0xff]
  %v4870 = vld [vmem:[%s6 + $0x6d4] sm:$0xf]
  %v4871 = vld [vmem:[%s6 + $0x6d8] sm:$0xff]
  %v4872 = vld [vmem:[%s6 + $0x6e0] sm:$0xf]
  %v4873 = vld [vmem:[%s6 + $0x6e4] sm:$0xff]
  %v4874 = vld [vmem:[%s6 + $0x6ec] sm:$0xf]
  %v4875 = vld [vmem:[%s6 + $0x6f0] sm:$0xff]
  %v4876 = vld [vmem:[%s6 + $0x6f8] sm:$0xf]
  %v4877 = vld [vmem:[%s6 + $0x6fc] sm:$0xff]
  %v4878 = vld [vmem:[%s6 + $0x704] sm:$0xf]
  %v4879 = vld [vmem:[%s6 + $0x708] sm:$0xff]
  %v4880 = vld [vmem:[%s6 + $0x710] sm:$0xf]
  %v4881 = vld [vmem:[%s6 + $0x714] sm:$0xff]
  %v4882 = vld [vmem:[%s6 + $0x71c] sm:$0xf]
  %v4883 = vld [vmem:[%s6 + $0x720] sm:$0xff]
  %v4884 = vld [vmem:[%s6 + $0x728] sm:$0xf]
  %v4885 = vld [vmem:[%s6 + $0x72c] sm:$0xff]
  %v4886 = vld [vmem:[%s6 + $0x734] sm:$0xf]
  %v4887 = vld [vmem:[%s6 + $0x738] sm:$0xff]
  %v4888 = vld [vmem:[%s6 + $0x740] sm:$0xf]
  %v4889 = vld [vmem:[%s6 + $0x744] sm:$0xff]
  %v4890 = vld [vmem:[%s6 + $0x74c] sm:$0xf]
  %v4891 = vld [vmem:[%s6 + $0x750] sm:$0xff]
  %v4892 = vld [vmem:[%s6 + $0x758] sm:$0xf]
  %v4893 = vld [vmem:[%s6 + $0x75c] sm:$0xff]
  %v4894 = vld [vmem:[%s6 + $0x764] sm:$0xf]
  %v4895 = vld [vmem:[%s6 + $0x768] sm:$0xff]
  %v4896 = vld [vmem:[%s6 + $0x770] sm:$0xf]
  %v4897 = vld [vmem:[%s6 + $0x774] sm:$0xff]
  %v4898 = vld [vmem:[%s6 + $0x77c] sm:$0xf]
  %v4899 = vld [vmem:[%s6 + $0x780] sm:$0xff]
  %v4900 = vld [vmem:[%s6 + $0x788] sm:$0xf]
  %v4901 = vld [vmem:[%s6 + $0x78c] sm:$0xff]
  %v4902 = vld [vmem:[%s6 + $0x794] sm:$0xf]
  %v4903 = vld [vmem:[%s6 + $0x798] sm:$0xff]
  %v4904 = vld [vmem:[%s6 + $0x7a0] sm:$0xf]
  %v4905 = vld [vmem:[%s6 + $0x7a4] sm:$0xff]
  %v4906 = vld [vmem:[%s6 + $0x7ac] sm:$0xf]
  %v4907 = vld [vmem:[%s6 + $0x7b0] sm:$0xff]
  %v4908 = vld [vmem:[%s6 + $0x7b8] sm:$0xf]
  %v4909 = vld [vmem:[%s6 + $0x7bc] sm:$0xff]
  %v4910 = vld [vmem:[%s6 + $0x7c4] sm:$0xf]
  %v4911 = vld [vmem:[%s6 + $0x7c8] sm:$0xff]
  %v4912 = vld [vmem:[%s6 + $0x7d0] sm:$0xf]
  %v4913 = vld [vmem:[%s6 + $0x7d4] sm:$0xff]
  %v4914 = vld [vmem:[%s6 + $0x7dc] sm:$0xf]
  %v4915 = vld [vmem:[%s6 + $0x7e0] sm:$0xff]
  %v4916 = vld [vmem:[%s6 + $0x7e8] sm:$0xf]
  %v4917 = vld [vmem:[%s6 + $0x7ec] sm:$0xff]
  %v4918 = vld [vmem:[%s6 + $0x7f4] sm:$0xf]
  %v4919 = vld [vmem:[%s6 + $0x7f8] sm:$0xff]
  %v4920 = vld [vmem:[%s6 + $0x800] sm:$0xf]
  %v4921 = vld [vmem:[%s6 + $0x804] sm:$0xff]
  %v4922 = vld [vmem:[%s6 + $0x80c] sm:$0xf]
  %v4923 = vld [vmem:[%s6 + $0x810] sm:$0xff]
  %v4924 = vld [vmem:[%s6 + $0x818] sm:$0xf]
  %v4925 = vld [vmem:[%s6 + $0x81c] sm:$0xff]
  %v4926 = vld [vmem:[%s6 + $0x824] sm:$0xf]
  %v4927 = vld [vmem:[%s6 + $0x828] sm:$0xff]
  %v4928 = vld [vmem:[%s6 + $0x830] sm:$0xf]
  %v4929 = vld [vmem:[%s6 + $0x834] sm:$0xff]
  %v4930 = vld [vmem:[%s6 + $0x83c] sm:$0xf]
  %v4931 = vpack.c.bf16 %v4536, %v4535
  %v4932 = vpack.c.bf16 %v4538, %v4537
  %v4933 = vpack.c.bf16 %v4540, %v4539
  %v4934 = vpack.c.bf16 %v4542, %v4541
  %v4935 = vpack.c.bf16 %v4544, %v4543
  %v4936 = vpack.c.bf16 %v4546, %v4545
  %v4937 = vpack.c.bf16 %v4548, %v4547
  %v4938 = vpack.c.bf16 %v4550, %v4549
  %v4939 = vpack.c.bf16 %v4552, %v4551
  %v4940 = vpack.c.bf16 %v4554, %v4553
  %v4941 = vpack.c.bf16 %v4556, %v4555
  %v4942 = vpack.c.bf16 %v4558, %v4557
  %v4943 = vpack.c.bf16 %v4560, %v4559
  %v4944 = vpack.c.bf16 %v4562, %v4561
  %v4945 = vpack.c.bf16 %v4564, %v4563
  %v4946 = vpack.c.bf16 %v4566, %v4565
  %v4947 = vpack.c.bf16 %v4568, %v4567
  %v4948 = vpack.c.bf16 %v4570, %v4569
  %v4949 = vpack.c.bf16 %v4572, %v4571
  %v4950 = vpack.c.bf16 %v4574, %v4573
  %v4951 = vpack.c.bf16 %v4576, %v4575
  %v4952 = vpack.c.bf16 %v4578, %v4577
  %v5305 = vunpack.c.l.b16 %v4579
  %v5306 = vunpack.c.h.b16 %v4579
  %v5307 = vunpack.c.l.b16 %v4580
  %v5308 = vunpack.c.l.b16 %v4581
  %v5309 = vunpack.c.h.b16 %v4581
  %v5310 = vunpack.c.l.b16 %v4582
  %v5311 = vunpack.c.l.b16 %v4583
  %v5312 = vunpack.c.h.b16 %v4583
  %v5313 = vunpack.c.l.b16 %v4584
  %v5314 = vunpack.c.l.b16 %v4585
  %v5315 = vunpack.c.h.b16 %v4585
  %v5316 = vunpack.c.l.b16 %v4586
  %v5317 = vunpack.c.l.b16 %v4587
  %v5318 = vunpack.c.h.b16 %v4587
  %v5319 = vunpack.c.l.b16 %v4588
  %v5320 = vunpack.c.l.b16 %v4589
  %v5321 = vunpack.c.h.b16 %v4589
  %v5322 = vunpack.c.l.b16 %v4590
  %v5323 = vunpack.c.l.b16 %v4591
  %v5324 = vunpack.c.h.b16 %v4591
  %v5325 = vunpack.c.l.b16 %v4592
  %v5326 = vunpack.c.l.b16 %v4593
  %v5327 = vunpack.c.h.b16 %v4593
  %v5328 = vunpack.c.l.b16 %v4594
  %v5329 = vunpack.c.l.b16 %v4595
  %v5330 = vunpack.c.h.b16 %v4595
  %v5331 = vunpack.c.l.b16 %v4596
  %v5332 = vunpack.c.l.b16 %v4597
  %v5333 = vunpack.c.h.b16 %v4597
  %v5334 = vunpack.c.l.b16 %v4598
  %v5335 = vunpack.c.l.b16 %v4599
  %v5336 = vunpack.c.h.b16 %v4599
  %v5337 = vunpack.c.l.b16 %v4600
  %v5338 = vunpack.c.l.b16 %v4601
  %v5339 = vunpack.c.h.b16 %v4601
  %v5340 = vunpack.c.l.b16 %v4602
  %v5341 = vunpack.c.l.b16 %v4603
  %v5342 = vunpack.c.h.b16 %v4603
  %v5343 = vunpack.c.l.b16 %v4604
  %v5344 = vunpack.c.l.b16 %v4605
  %v5345 = vunpack.c.h.b16 %v4605
  %v5346 = vunpack.c.l.b16 %v4606
  %v5347 = vunpack.c.l.b16 %v4607
  %v5348 = vunpack.c.h.b16 %v4607
  %v5349 = vunpack.c.l.b16 %v4608
  %v5350 = vunpack.c.l.b16 %v4609
  %v5351 = vunpack.c.h.b16 %v4609
  %v5352 = vunpack.c.l.b16 %v4610
  %v5353 = vunpack.c.l.b16 %v4611
  %v5354 = vunpack.c.h.b16 %v4611
  %v5355 = vunpack.c.l.b16 %v4612
  %v5356 = vunpack.c.l.b16 %v4613
  %v5357 = vunpack.c.h.b16 %v4613
  %v5358 = vunpack.c.l.b16 %v4614
  %v5359 = vunpack.c.l.b16 %v4615
  %v5360 = vunpack.c.h.b16 %v4615
  %v5361 = vunpack.c.l.b16 %v4616
  %v5362 = vunpack.c.l.b16 %v4617
  %v5363 = vunpack.c.h.b16 %v4617
  %v5364 = vunpack.c.l.b16 %v4618
  %v5365 = vunpack.c.l.b16 %v4619
  %v5366 = vunpack.c.h.b16 %v4619
  %v5367 = vunpack.c.l.b16 %v4620
  %v5368 = vunpack.c.l.b16 %v4621
  %v5369 = vunpack.c.h.b16 %v4621
  %v5370 = vunpack.c.l.b16 %v4622
  %v5371 = vunpack.c.l.b16 %v4623
  %v5372 = vunpack.c.h.b16 %v4623
  %v5373 = vunpack.c.l.b16 %v4624
  %v5374 = vunpack.c.l.b16 %v4625
  %v5375 = vunpack.c.h.b16 %v4625
  %v5376 = vunpack.c.l.b16 %v4626
  %v5377 = vunpack.c.l.b16 %v4627
  %v5378 = vunpack.c.h.b16 %v4627
  %v5379 = vunpack.c.l.b16 %v4628
  %v5380 = vunpack.c.l.b16 %v4629
  %v5381 = vunpack.c.h.b16 %v4629
  %v5382 = vunpack.c.l.b16 %v4630
  %v5383 = vunpack.c.l.b16 %v4631
  %v5384 = vunpack.c.h.b16 %v4631
  %v5385 = vunpack.c.l.b16 %v4632
  %v5386 = vunpack.c.l.b16 %v4633
  %v5387 = vunpack.c.h.b16 %v4633
  %v5388 = vunpack.c.l.b16 %v4634
  %v5389 = vunpack.c.l.b16 %v4635
  %v5390 = vunpack.c.h.b16 %v4635
  %v5391 = vunpack.c.l.b16 %v4636
  %v5392 = vunpack.c.l.b16 %v4637
  %v5393 = vunpack.c.h.b16 %v4637
  %v5394 = vunpack.c.l.b16 %v4638
  %v5395 = vunpack.c.l.b16 %v4639
  %v5396 = vunpack.c.h.b16 %v4639
  %v5397 = vunpack.c.l.b16 %v4640
  %v5398 = vunpack.c.l.b16 %v4641
  %v5399 = vunpack.c.h.b16 %v4641
  %v5400 = vunpack.c.l.b16 %v4642
  %v5401 = vunpack.c.l.b16 %v4643
  %v5402 = vunpack.c.h.b16 %v4643
  %v5403 = vunpack.c.l.b16 %v4644
  %v5404 = vunpack.c.l.b16 %v4645
  %v5405 = vunpack.c.h.b16 %v4645
  %v5406 = vunpack.c.l.b16 %v4646
  %v5407 = vunpack.c.l.b16 %v4647
  %v5408 = vunpack.c.h.b16 %v4647
  %v5409 = vunpack.c.l.b16 %v4648
  %v5410 = vunpack.c.l.b16 %v4649
  %v5411 = vunpack.c.h.b16 %v4649
  %v5412 = vunpack.c.l.b16 %v4650
  %v5413 = vunpack.c.l.b16 %v4651
  %v5414 = vunpack.c.h.b16 %v4651
  %v5415 = vunpack.c.l.b16 %v4652
  %v5416 = vunpack.c.l.b16 %v4653
  %v5417 = vunpack.c.h.b16 %v4653
  %v5418 = vunpack.c.l.b16 %v4654
  %v5419 = vunpack.c.l.b16 %v4655
  %v5420 = vunpack.c.h.b16 %v4655
  %v5421 = vunpack.c.l.b16 %v4656
  %v5422 = vunpack.c.l.b16 %v4657
  %v5423 = vunpack.c.h.b16 %v4657
  %v5424 = vunpack.c.l.b16 %v4658
  %v5425 = vunpack.c.l.b16 %v4659
  %v5426 = vunpack.c.h.b16 %v4659
  %v5427 = vunpack.c.l.b16 %v4660
  %v5428 = vunpack.c.l.b16 %v4661
  %v5429 = vunpack.c.h.b16 %v4661
  %v5430 = vunpack.c.l.b16 %v4662
  %v5431 = vunpack.c.l.b16 %v4663
  %v5432 = vunpack.c.h.b16 %v4663
  %v5433 = vunpack.c.l.b16 %v4664
  %v5434 = vunpack.c.l.b16 %v4665
  %v5435 = vunpack.c.h.b16 %v4665
  %v5436 = vunpack.c.l.b16 %v4666
  %v5437 = vunpack.c.l.b16 %v4667
  %v5438 = vunpack.c.h.b16 %v4667
  %v5439 = vunpack.c.l.b16 %v4668
  %v5440 = vunpack.c.l.b16 %v4669
  %v5441 = vunpack.c.h.b16 %v4669
  %v5442 = vunpack.c.l.b16 %v4670
  %v5443 = vunpack.c.l.b16 %v4671
  %v5444 = vunpack.c.h.b16 %v4671
  %v5445 = vunpack.c.l.b16 %v4672
  %v5446 = vunpack.c.l.b16 %v4673
  %v5447 = vunpack.c.h.b16 %v4673
  %v5448 = vunpack.c.l.b16 %v4674
  %v5449 = vunpack.c.l.b16 %v4675
  %v5450 = vunpack.c.h.b16 %v4675
  %v5451 = vunpack.c.l.b16 %v4676
  %v5452 = vunpack.c.l.b16 %v4677
  %v5453 = vunpack.c.h.b16 %v4677
  %v5454 = vunpack.c.l.b16 %v4678
  %v5455 = vunpack.c.l.b16 %v4679
  %v5456 = vunpack.c.h.b16 %v4679
  %v5457 = vunpack.c.l.b16 %v4680
  %v5458 = vunpack.c.l.b16 %v4681
  %v5459 = vunpack.c.h.b16 %v4681
  %v5460 = vunpack.c.l.b16 %v4682
  %v5461 = vunpack.c.l.b16 %v4683
  %v5462 = vunpack.c.h.b16 %v4683
  %v5463 = vunpack.c.l.b16 %v4684
  %v5464 = vunpack.c.l.b16 %v4685
  %v5465 = vunpack.c.h.b16 %v4685
  %v5466 = vunpack.c.l.b16 %v4686
  %v5467 = vunpack.c.l.b16 %v4687
  %v5468 = vunpack.c.h.b16 %v4687
  %v5469 = vunpack.c.l.b16 %v4688
  %v5470 = vunpack.c.l.b16 %v4689
  %v5471 = vunpack.c.h.b16 %v4689
  %v5472 = vunpack.c.l.b16 %v4690
  %v5473 = vunpack.c.l.b16 %v4691
  %v5474 = vunpack.c.h.b16 %v4691
  %v5475 = vunpack.c.l.b16 %v4692
  %v5476 = vunpack.c.l.b16 %v4693
  %v5477 = vunpack.c.h.b16 %v4693
  %v5478 = vunpack.c.l.b16 %v4694
  %v5479 = vunpack.c.l.b16 %v4695
  %v5480 = vunpack.c.h.b16 %v4695
  %v5481 = vunpack.c.l.b16 %v4696
  %v5482 = vunpack.c.l.b16 %v4697
  %v5483 = vunpack.c.h.b16 %v4697
  %v5484 = vunpack.c.l.b16 %v4698
  %v5485 = vunpack.c.l.b16 %v4699
  %v5486 = vunpack.c.h.b16 %v4699
  %v5487 = vunpack.c.l.b16 %v4700
  %v5488 = vunpack.c.l.b16 %v4701
  %v5489 = vunpack.c.h.b16 %v4701
  %v5490 = vunpack.c.l.b16 %v4702
  %v5491 = vunpack.c.l.b16 %v4703
  %v5492 = vunpack.c.h.b16 %v4703
  %v5493 = vunpack.c.l.b16 %v4704
  %v5494 = vunpack.c.l.b16 %v4705
  %v5495 = vunpack.c.h.b16 %v4705
  %v5496 = vunpack.c.l.b16 %v4706
  %v5497 = vunpack.c.l.b16 %v4707
  %v5498 = vunpack.c.h.b16 %v4707
  %v5499 = vunpack.c.l.b16 %v4708
  %v5500 = vunpack.c.l.b16 %v4709
  %v5501 = vunpack.c.h.b16 %v4709
  %v5502 = vunpack.c.l.b16 %v4710
  %v5503 = vunpack.c.l.b16 %v4711
  %v5504 = vunpack.c.h.b16 %v4711
  %v5505 = vunpack.c.l.b16 %v4712
  %v5506 = vunpack.c.l.b16 %v4713
  %v5507 = vunpack.c.h.b16 %v4713
  %v5508 = vunpack.c.l.b16 %v4714
  %v5509 = vunpack.c.l.b16 %v4715
  %v5510 = vunpack.c.h.b16 %v4715
  %v5511 = vunpack.c.l.b16 %v4716
  %v5512 = vunpack.c.l.b16 %v4717
  %v5513 = vunpack.c.h.b16 %v4717
  %v5514 = vunpack.c.l.b16 %v4718
  %v5515 = vunpack.c.l.b16 %v4719
  %v5516 = vunpack.c.h.b16 %v4719
  %v5517 = vunpack.c.l.b16 %v4720
  %v5518 = vunpack.c.l.b16 %v4721
  %v5519 = vunpack.c.h.b16 %v4721
  %v5520 = vunpack.c.l.b16 %v4722
  %v5521 = vunpack.c.l.b16 %v4723
  %v5522 = vunpack.c.h.b16 %v4723
  %v5523 = vunpack.c.l.b16 %v4724
  %v5524 = vunpack.c.l.b16 %v4725
  %v5525 = vunpack.c.h.b16 %v4725
  %v5526 = vunpack.c.l.b16 %v4726
  %v5527 = vunpack.c.l.b16 %v4727
  %v5528 = vunpack.c.h.b16 %v4727
  %v5529 = vunpack.c.l.b16 %v4728
  %v5530 = vunpack.c.l.b16 %v4729
  %v5531 = vunpack.c.h.b16 %v4729
  %v5532 = vunpack.c.l.b16 %v4730
  %v5533 = vunpack.c.l.b16 %v4731
  %v5534 = vunpack.c.h.b16 %v4731
  %v5535 = vunpack.c.l.b16 %v4732
  %v5536 = vunpack.c.l.b16 %v4733
  %v5537 = vunpack.c.h.b16 %v4733
  %v5538 = vunpack.c.l.b16 %v4734
  %v5539 = vunpack.c.l.b16 %v4735
  %v5540 = vunpack.c.h.b16 %v4735
  %v5541 = vunpack.c.l.b16 %v4736
  %v5542 = vunpack.c.l.b16 %v4737
  %v5543 = vunpack.c.h.b16 %v4737
  %v5544 = vunpack.c.l.b16 %v4738
  %v5545 = vunpack.c.l.b16 %v4739
  %v5546 = vunpack.c.h.b16 %v4739
  %v5547 = vunpack.c.l.b16 %v4740
  %v5548 = vunpack.c.l.b16 %v4741
  %v5549 = vunpack.c.h.b16 %v4741
  %v5550 = vunpack.c.l.b16 %v4742
  %v5551 = vunpack.c.l.b16 %v4743
  %v5552 = vunpack.c.h.b16 %v4743
  %v5553 = vunpack.c.l.b16 %v4744
  %v5554 = vunpack.c.l.b16 %v4745
  %v5555 = vunpack.c.h.b16 %v4745
  %v5556 = vunpack.c.l.b16 %v4746
  %v5557 = vunpack.c.l.b16 %v4747
  %v5558 = vunpack.c.h.b16 %v4747
  %v5559 = vunpack.c.l.b16 %v4748
  %v5560 = vunpack.c.l.b16 %v4749
  %v5561 = vunpack.c.h.b16 %v4749
  %v5562 = vunpack.c.l.b16 %v4750
  %v5563 = vunpack.c.l.b16 %v4751
  %v5564 = vunpack.c.h.b16 %v4751
  %v5565 = vunpack.c.l.b16 %v4752
  %v5566 = vunpack.c.l.b16 %v4753
  %v5567 = vunpack.c.h.b16 %v4753
  %v5568 = vunpack.c.l.b16 %v4754
  %v5569 = vunpack.c.l.b16 %v4755
  %v5570 = vunpack.c.h.b16 %v4755
  %v5571 = vunpack.c.l.b16 %v4756
  %v5572 = vunpack.c.l.b16 %v4757
  %v5573 = vunpack.c.h.b16 %v4757
  %v5574 = vunpack.c.l.b16 %v4758
  %v5575 = vunpack.c.l.b16 %v4759
  %v5576 = vunpack.c.h.b16 %v4759
  %v5577 = vunpack.c.l.b16 %v4760
  %v5578 = vunpack.c.l.b16 %v4761
  %v5579 = vunpack.c.h.b16 %v4761
  %v5580 = vunpack.c.l.b16 %v4762
  %v5581 = vunpack.c.l.b16 %v4763
  %v5582 = vunpack.c.h.b16 %v4763
  %v5583 = vunpack.c.l.b16 %v4764
  %v5584 = vunpack.c.l.b16 %v4765
  %v5585 = vunpack.c.h.b16 %v4765
  %v5586 = vunpack.c.l.b16 %v4766
  %v5587 = vunpack.c.l.b16 %v4767
  %v5588 = vunpack.c.h.b16 %v4767
  %v5589 = vunpack.c.l.b16 %v4768
  %v5590 = vunpack.c.l.b16 %v4769
  %v5591 = vunpack.c.h.b16 %v4769
  %v5592 = vunpack.c.l.b16 %v4770
  %v5593 = vunpack.c.l.b16 %v4771
  %v5594 = vunpack.c.h.b16 %v4771
  %v5595 = vunpack.c.l.b16 %v4772
  %v5596 = vunpack.c.l.b16 %v4773
  %v5597 = vunpack.c.h.b16 %v4773
  %v5598 = vunpack.c.l.b16 %v4774
  %v5599 = vunpack.c.l.b16 %v4775
  %v5600 = vunpack.c.h.b16 %v4775
  %v5601 = vunpack.c.l.b16 %v4776
  %v5602 = vunpack.c.l.b16 %v4777
  %v5603 = vunpack.c.h.b16 %v4777
  %v5604 = vunpack.c.l.b16 %v4778
  %v5605 = vunpack.c.l.b16 %v4779
  %v5606 = vunpack.c.h.b16 %v4779
  %v5607 = vunpack.c.l.b16 %v4780
  %v5608 = vunpack.c.l.b16 %v4781
  %v5609 = vunpack.c.h.b16 %v4781
  %v5610 = vunpack.c.l.b16 %v4782
  %v5611 = vunpack.c.l.b16 %v4783
  %v5612 = vunpack.c.h.b16 %v4783
  %v5613 = vunpack.c.l.b16 %v4784
  %v5614 = vunpack.c.l.b16 %v4785
  %v5615 = vunpack.c.h.b16 %v4785
  %v5616 = vunpack.c.l.b16 %v4786
  %v5617 = vunpack.c.l.b16 %v4787
  %v5618 = vunpack.c.h.b16 %v4787
  %v5619 = vunpack.c.l.b16 %v4788
  %v5620 = vunpack.c.l.b16 %v4789
  %v5621 = vunpack.c.h.b16 %v4789
  %v5622 = vunpack.c.l.b16 %v4790
  %v5623 = vunpack.c.l.b16 %v4791
  %v5624 = vunpack.c.h.b16 %v4791
  %v5625 = vunpack.c.l.b16 %v4792
  %v5626 = vunpack.c.l.b16 %v4793
  %v5627 = vunpack.c.h.b16 %v4793
  %v5628 = vunpack.c.l.b16 %v4794
  %v5629 = vunpack.c.l.b16 %v4795
  %v5630 = vunpack.c.h.b16 %v4795
  %v5631 = vunpack.c.l.b16 %v4796
  %v5632 = vunpack.c.l.b16 %v4797
  %v5633 = vunpack.c.h.b16 %v4797
  %v5634 = vunpack.c.l.b16 %v4798
  %v5635 = vunpack.c.l.b16 %v4799
  %v5636 = vunpack.c.h.b16 %v4799
  %v5637 = vunpack.c.l.b16 %v4800
  %v5638 = vunpack.c.l.b16 %v4801
  %v5639 = vunpack.c.h.b16 %v4801
  %v5640 = vunpack.c.l.b16 %v4802
  %v5641 = vunpack.c.l.b16 %v4803
  %v5642 = vunpack.c.h.b16 %v4803
  %v5643 = vunpack.c.l.b16 %v4804
  %v5644 = vunpack.c.l.b16 %v4805
  %v5645 = vunpack.c.h.b16 %v4805
  %v5646 = vunpack.c.l.b16 %v4806
  %v5647 = vunpack.c.l.b16 %v4807
  %v5648 = vunpack.c.h.b16 %v4807
  %v5649 = vunpack.c.l.b16 %v4808
  %v5650 = vunpack.c.l.b16 %v4809
  %v5651 = vunpack.c.h.b16 %v4809
  %v5652 = vunpack.c.l.b16 %v4810
  %v5653 = vunpack.c.l.b16 %v4811
  %v5654 = vunpack.c.h.b16 %v4811
  %v5655 = vunpack.c.l.b16 %v4812
  %v5656 = vunpack.c.l.b16 %v4813
  %v5657 = vunpack.c.h.b16 %v4813
  %v5658 = vunpack.c.l.b16 %v4814
  %v5659 = vunpack.c.l.b16 %v4815
  %v5660 = vunpack.c.h.b16 %v4815
  %v5661 = vunpack.c.l.b16 %v4816
  %v5662 = vunpack.c.l.b16 %v4817
  %v5663 = vunpack.c.h.b16 %v4817
  %v5664 = vunpack.c.l.b16 %v4818
  %v5665 = vunpack.c.l.b16 %v4819
  %v5666 = vunpack.c.h.b16 %v4819
  %v5667 = vunpack.c.l.b16 %v4820
  %v5668 = vunpack.c.l.b16 %v4821
  %v5669 = vunpack.c.h.b16 %v4821
  %v5670 = vunpack.c.l.b16 %v4822
  %v5671 = vunpack.c.l.b16 %v4823
  %v5672 = vunpack.c.h.b16 %v4823
  %v5673 = vunpack.c.l.b16 %v4824
  %v5674 = vunpack.c.l.b16 %v4825
  %v5675 = vunpack.c.h.b16 %v4825
  %v5676 = vunpack.c.l.b16 %v4826
  %v5677 = vunpack.c.l.b16 %v4827
  %v5678 = vunpack.c.h.b16 %v4827
  %v5679 = vunpack.c.l.b16 %v4828
  %v5680 = vunpack.c.l.b16 %v4829
  %v5681 = vunpack.c.h.b16 %v4829
  %v5682 = vunpack.c.l.b16 %v4830
  %v5683 = vunpack.c.l.b16 %v4831
  %v5684 = vunpack.c.h.b16 %v4831
  %v5685 = vunpack.c.l.b16 %v4832
  %v5686 = vunpack.c.l.b16 %v4833
  %v5687 = vunpack.c.h.b16 %v4833
  %v5688 = vunpack.c.l.b16 %v4834
  %v5689 = vunpack.c.l.b16 %v4835
  %v5690 = vunpack.c.h.b16 %v4835
  %v5691 = vunpack.c.l.b16 %v4836
  %v5692 = vunpack.c.l.b16 %v4837
  %v5693 = vunpack.c.h.b16 %v4837
  %v5694 = vunpack.c.l.b16 %v4838
  %v5695 = vunpack.c.l.b16 %v4839
  %v5696 = vunpack.c.h.b16 %v4839
  %v5697 = vunpack.c.l.b16 %v4840
  %v5698 = vunpack.c.l.b16 %v4841
  %v5699 = vunpack.c.h.b16 %v4841
  %v5700 = vunpack.c.l.b16 %v4842
  %v5701 = vunpack.c.l.b16 %v4843
  %v5702 = vunpack.c.h.b16 %v4843
  %v5703 = vunpack.c.l.b16 %v4844
  %v5704 = vunpack.c.l.b16 %v4845
  %v5705 = vunpack.c.h.b16 %v4845
  %v5706 = vunpack.c.l.b16 %v4846
  %v5707 = vunpack.c.l.b16 %v4847
  %v5708 = vunpack.c.h.b16 %v4847
  %v5709 = vunpack.c.l.b16 %v4848
  %v5710 = vunpack.c.l.b16 %v4849
  %v5711 = vunpack.c.h.b16 %v4849
  %v5712 = vunpack.c.l.b16 %v4850
  %v5713 = vunpack.c.l.b16 %v4851
  %v5714 = vunpack.c.h.b16 %v4851
  %v5715 = vunpack.c.l.b16 %v4852
  %v5716 = vunpack.c.l.b16 %v4853
  %v5717 = vunpack.c.h.b16 %v4853
  %v5718 = vunpack.c.l.b16 %v4854
  %v5719 = vunpack.c.l.b16 %v4855
  %v5720 = vunpack.c.h.b16 %v4855
  %v5721 = vunpack.c.l.b16 %v4856
  %v5722 = vunpack.c.l.b16 %v4857
  %v5723 = vunpack.c.h.b16 %v4857
  %v5724 = vunpack.c.l.b16 %v4858
  %v5725 = vunpack.c.l.b16 %v4859
  %v5726 = vunpack.c.h.b16 %v4859
  %v5727 = vunpack.c.l.b16 %v4860
  %v5728 = vunpack.c.l.b16 %v4861
  %v5729 = vunpack.c.h.b16 %v4861
  %v5730 = vunpack.c.l.b16 %v4862
  %v5731 = vunpack.c.l.b16 %v4863
  %v5732 = vunpack.c.h.b16 %v4863
  %v5733 = vunpack.c.l.b16 %v4864
  %v5734 = vunpack.c.l.b16 %v4865
  %v5735 = vunpack.c.h.b16 %v4865
  %v5736 = vunpack.c.l.b16 %v4866
  %v5737 = vunpack.c.l.b16 %v4867
  %v5738 = vunpack.c.h.b16 %v4867
  %v5739 = vunpack.c.l.b16 %v4868
  %v5740 = vunpack.c.l.b16 %v4869
  %v5741 = vunpack.c.h.b16 %v4869
  %v5742 = vunpack.c.l.b16 %v4870
  %v5743 = vunpack.c.l.b16 %v4871
  %v5744 = vunpack.c.h.b16 %v4871
  %v5745 = vunpack.c.l.b16 %v4872
  %v5746 = vunpack.c.l.b16 %v4873
  %v5747 = vunpack.c.h.b16 %v4873
  %v5748 = vunpack.c.l.b16 %v4874
  %v5749 = vunpack.c.l.b16 %v4875
  %v5750 = vunpack.c.h.b16 %v4875
  %v5751 = vunpack.c.l.b16 %v4876
  %v5752 = vunpack.c.l.b16 %v4877
  %v5753 = vunpack.c.h.b16 %v4877
  %v5754 = vunpack.c.l.b16 %v4878
  %v5755 = vunpack.c.l.b16 %v4879
  %v5756 = vunpack.c.h.b16 %v4879
  %v5757 = vunpack.c.l.b16 %v4880
  %v5758 = vunpack.c.l.b16 %v4881
  %v5759 = vunpack.c.h.b16 %v4881
  %v5760 = vunpack.c.l.b16 %v4882
  %v5761 = vunpack.c.l.b16 %v4883
  %v5762 = vunpack.c.h.b16 %v4883
  %v5763 = vunpack.c.l.b16 %v4884
  %v5764 = vunpack.c.l.b16 %v4885
  %v5765 = vunpack.c.h.b16 %v4885
  %v5766 = vunpack.c.l.b16 %v4886
  %v5767 = vunpack.c.l.b16 %v4887
  %v5768 = vunpack.c.h.b16 %v4887
  %v5769 = vunpack.c.l.b16 %v4888
  %v5770 = vunpack.c.l.b16 %v4889
  %v5771 = vunpack.c.h.b16 %v4889
  %v5772 = vunpack.c.l.b16 %v4890
  %v5773 = vunpack.c.l.b16 %v4891
  %v5774 = vunpack.c.h.b16 %v4891
  %v5775 = vunpack.c.l.b16 %v4892
  %v5776 = vunpack.c.l.b16 %v4893
  %v5777 = vunpack.c.h.b16 %v4893
  %v5778 = vunpack.c.l.b16 %v4894
  %v5779 = vunpack.c.l.b16 %v4895
  %v5780 = vunpack.c.h.b16 %v4895
  %v5781 = vunpack.c.l.b16 %v4896
  %v5782 = vunpack.c.l.b16 %v4897
  %v5783 = vunpack.c.h.b16 %v4897
  %v5784 = vunpack.c.l.b16 %v4898
  %v5785 = vunpack.c.l.b16 %v4899
  %v5786 = vunpack.c.h.b16 %v4899
  %v5787 = vunpack.c.l.b16 %v4900
  %v5788 = vunpack.c.l.b16 %v4901
  %v5789 = vunpack.c.h.b16 %v4901
  %v5790 = vunpack.c.l.b16 %v4902
  %v5791 = vunpack.c.l.b16 %v4903
  %v5792 = vunpack.c.h.b16 %v4903
  %v5793 = vunpack.c.l.b16 %v4904
  %v5794 = vunpack.c.l.b16 %v4905
  %v5795 = vunpack.c.h.b16 %v4905
  %v5796 = vunpack.c.l.b16 %v4906
  %v5797 = vunpack.c.l.b16 %v4907
  %v5798 = vunpack.c.h.b16 %v4907
  %v5799 = vunpack.c.l.b16 %v4908
  %v5800 = vunpack.c.l.b16 %v4909
  %v5801 = vunpack.c.h.b16 %v4909
  %v5802 = vunpack.c.l.b16 %v4910
  %v5803 = vunpack.c.l.b16 %v4911
  %v5804 = vunpack.c.h.b16 %v4911
  %v5805 = vunpack.c.l.b16 %v4912
  %v5806 = vunpack.c.l.b16 %v4913
  %v5807 = vunpack.c.h.b16 %v4913
  %v5808 = vunpack.c.l.b16 %v4914
  %v5809 = vunpack.c.l.b16 %v4915
  %v5810 = vunpack.c.h.b16 %v4915
  %v5811 = vunpack.c.l.b16 %v4916
  %v5812 = vunpack.c.l.b16 %v4917
  %v5813 = vunpack.c.h.b16 %v4917
  %v5814 = vunpack.c.l.b16 %v4918
  %v5815 = vunpack.c.l.b16 %v4919
  %v5816 = vunpack.c.h.b16 %v4919
  %v5817 = vunpack.c.l.b16 %v4920
  %v5818 = vunpack.c.l.b16 %v4921
  %v5819 = vunpack.c.h.b16 %v4921
  %v5820 = vunpack.c.l.b16 %v4922
  %v5821 = vunpack.c.l.b16 %v4923
  %v5822 = vunpack.c.h.b16 %v4923
  %v5823 = vunpack.c.l.b16 %v4924
  %v5824 = vunpack.c.l.b16 %v4925
  %v5825 = vunpack.c.h.b16 %v4925
  %v5826 = vunpack.c.l.b16 %v4926
  %v5827 = vunpack.c.l.b16 %v4927
  %v5828 = vunpack.c.h.b16 %v4927
  %v5829 = vunpack.c.l.b16 %v4928
  %v5830 = vunpack.c.l.b16 %v4929
  %v5831 = vunpack.c.h.b16 %v4929
  %v5832 = vunpack.c.l.b16 %v4930
  %v5833 = vpack.c.b16 %v5308, %v5305
  %v5834 = vpack.c.b16 %v5309, %v5306
  %v5835 = vpack.c.b16 %v5310, %v5307
  %v5836 = vpack.c.b16 %v5314, %v5311
  %v5837 = vpack.c.b16 %v5315, %v5312
  %v5838 = vpack.c.b16 %v5316, %v5313
  %v5839 = vpack.c.b16 %v5320, %v5317
  %v5840 = vpack.c.b16 %v5321, %v5318
  %v5841 = vpack.c.b16 %v5322, %v5319
  %v5842 = vpack.c.b16 %v5326, %v5323
  %v5843 = vpack.c.b16 %v5327, %v5324
  %v5844 = vpack.c.b16 %v5328, %v5325
  %v5845 = vpack.c.b16 %v5332, %v5329
  %v5846 = vpack.c.b16 %v5333, %v5330
  %v5847 = vpack.c.b16 %v5334, %v5331
  %v5848 = vpack.c.b16 %v5338, %v5335
  %v5849 = vpack.c.b16 %v5339, %v5336
  %v5850 = vpack.c.b16 %v5340, %v5337
  %v5851 = vpack.c.b16 %v5344, %v5341
  %v5852 = vpack.c.b16 %v5345, %v5342
  %v5853 = vpack.c.b16 %v5346, %v5343
  %v5854 = vpack.c.b16 %v5350, %v5347
  %v5855 = vpack.c.b16 %v5351, %v5348
  %v5856 = vpack.c.b16 %v5352, %v5349
  %v5857 = vpack.c.b16 %v5356, %v5353
  %v5858 = vpack.c.b16 %v5357, %v5354
  %v5859 = vpack.c.b16 %v5358, %v5355
  %v5860 = vpack.c.b16 %v5362, %v5359
  %v5861 = vpack.c.b16 %v5363, %v5360
  %v5862 = vpack.c.b16 %v5364, %v5361
  %v5863 = vpack.c.b16 %v5368, %v5365
  %v5864 = vpack.c.b16 %v5369, %v5366
  %v5865 = vpack.c.b16 %v5370, %v5367
  %v5866 = vpack.c.b16 %v5374, %v5371
  %v5867 = vpack.c.b16 %v5375, %v5372
  %v5868 = vpack.c.b16 %v5376, %v5373
  %v5869 = vpack.c.b16 %v5380, %v5377
  %v5870 = vpack.c.b16 %v5381, %v5378
  %v5871 = vpack.c.b16 %v5382, %v5379
  %v5872 = vpack.c.b16 %v5386, %v5383
  %v5873 = vpack.c.b16 %v5387, %v5384
  %v5874 = vpack.c.b16 %v5388, %v5385
  %v5875 = vpack.c.b16 %v5392, %v5389
  %v5876 = vpack.c.b16 %v5393, %v5390
  %v5877 = vpack.c.b16 %v5394, %v5391
  %v5878 = vpack.c.b16 %v5398, %v5395
  %v5879 = vpack.c.b16 %v5399, %v5396
  %v5880 = vpack.c.b16 %v5400, %v5397
  %v5881 = vpack.c.b16 %v5404, %v5401
  %v5882 = vpack.c.b16 %v5405, %v5402
  %v5883 = vpack.c.b16 %v5406, %v5403
  %v5884 = vpack.c.b16 %v5410, %v5407
  %v5885 = vpack.c.b16 %v5411, %v5408
  %v5886 = vpack.c.b16 %v5412, %v5409
  %v5887 = vpack.c.b16 %v5416, %v5413
  %v5888 = vpack.c.b16 %v5417, %v5414
  %v5889 = vpack.c.b16 %v5418, %v5415
  %v5890 = vpack.c.b16 %v5422, %v5419
  %v5891 = vpack.c.b16 %v5423, %v5420
  %v5892 = vpack.c.b16 %v5424, %v5421
  %v5893 = vpack.c.b16 %v5428, %v5425
  %v5894 = vpack.c.b16 %v5429, %v5426
  %v5895 = vpack.c.b16 %v5430, %v5427
  %v5896 = vpack.c.b16 %v5434, %v5431
  %v5897 = vpack.c.b16 %v5435, %v5432
  %v5898 = vpack.c.b16 %v5436, %v5433
  %v5899 = vpack.c.b16 %v5440, %v5437
  %v5900 = vpack.c.b16 %v5441, %v5438
  %v5901 = vpack.c.b16 %v5442, %v5439
  %v5902 = vpack.c.b16 %v5446, %v5443
  %v5903 = vpack.c.b16 %v5447, %v5444
  %v5904 = vpack.c.b16 %v5448, %v5445
  %v5905 = vpack.c.b16 %v5452, %v5449
  %v5906 = vpack.c.b16 %v5453, %v5450
  %v5907 = vpack.c.b16 %v5454, %v5451
  %v5908 = vpack.c.b16 %v5458, %v5455
  %v5909 = vpack.c.b16 %v5459, %v5456
  %v5910 = vpack.c.b16 %v5460, %v5457
  %v5911 = vpack.c.b16 %v5464, %v5461
  %v5912 = vpack.c.b16 %v5465, %v5462
  %v5913 = vpack.c.b16 %v5466, %v5463
  %v5914 = vpack.c.b16 %v5470, %v5467
  %v5915 = vpack.c.b16 %v5471, %v5468
  %v5916 = vpack.c.b16 %v5472, %v5469
  %v5917 = vpack.c.b16 %v5476, %v5473
  %v5918 = vpack.c.b16 %v5477, %v5474
  %v5919 = vpack.c.b16 %v5478, %v5475
  %v5920 = vpack.c.b16 %v5482, %v5479
  %v5921 = vpack.c.b16 %v5483, %v5480
  %v5922 = vpack.c.b16 %v5484, %v5481
  %v5923 = vpack.c.b16 %v5488, %v5485
  %v5924 = vpack.c.b16 %v5489, %v5486
  %v5925 = vpack.c.b16 %v5490, %v5487
  %v5926 = vpack.c.b16 %v5494, %v5491
  %v5927 = vpack.c.b16 %v5495, %v5492
  %v5928 = vpack.c.b16 %v5496, %v5493
  %v5929 = vpack.c.b16 %v5500, %v5497
  %v5930 = vpack.c.b16 %v5501, %v5498
  %v5931 = vpack.c.b16 %v5502, %v5499
  %v5932 = vpack.c.b16 %v5506, %v5503
  %v5933 = vpack.c.b16 %v5507, %v5504
  %v5934 = vpack.c.b16 %v5508, %v5505
  %v5935 = vpack.c.b16 %v5512, %v5509
  %v5936 = vpack.c.b16 %v5513, %v5510
  %v5937 = vpack.c.b16 %v5514, %v5511
  %v5938 = vpack.c.b16 %v5518, %v5515
  %v5939 = vpack.c.b16 %v5519, %v5516
  %v5940 = vpack.c.b16 %v5520, %v5517
  %v5941 = vpack.c.b16 %v5524, %v5521
  %v5942 = vpack.c.b16 %v5525, %v5522
  %v5943 = vpack.c.b16 %v5526, %v5523
  %v5944 = vpack.c.b16 %v5530, %v5527
  %v5945 = vpack.c.b16 %v5531, %v5528
  %v5946 = vpack.c.b16 %v5532, %v5529
  %v5947 = vpack.c.b16 %v5536, %v5533
  %v5948 = vpack.c.b16 %v5537, %v5534
  %v5949 = vpack.c.b16 %v5538, %v5535
  %v5950 = vpack.c.b16 %v5542, %v5539
  %v5951 = vpack.c.b16 %v5543, %v5540
  %v5952 = vpack.c.b16 %v5544, %v5541
  %v5953 = vpack.c.b16 %v5548, %v5545
  %v5954 = vpack.c.b16 %v5549, %v5546
  %v5955 = vpack.c.b16 %v5550, %v5547
  %v5956 = vpack.c.b16 %v5554, %v5551
  %v5957 = vpack.c.b16 %v5555, %v5552
  %v5958 = vpack.c.b16 %v5556, %v5553
  %v5959 = vpack.c.b16 %v5560, %v5557
  %v5960 = vpack.c.b16 %v5561, %v5558
  %v5961 = vpack.c.b16 %v5562, %v5559
  %v5962 = vpack.c.b16 %v5566, %v5563
  %v5963 = vpack.c.b16 %v5567, %v5564
  %v5964 = vpack.c.b16 %v5568, %v5565
  %v5965 = vpack.c.b16 %v5572, %v5569
  %v5966 = vpack.c.b16 %v5573, %v5570
  %v5967 = vpack.c.b16 %v5574, %v5571
  %v5968 = vpack.c.b16 %v5578, %v5575
  %v5969 = vpack.c.b16 %v5579, %v5576
  %v5970 = vpack.c.b16 %v5580, %v5577
  %v5971 = vpack.c.b16 %v5584, %v5581
  %v5972 = vpack.c.b16 %v5585, %v5582
  %v5973 = vpack.c.b16 %v5586, %v5583
  %v5974 = vpack.c.b16 %v5590, %v5587
  %v5975 = vpack.c.b16 %v5591, %v5588
  %v5976 = vpack.c.b16 %v5592, %v5589
  %v5977 = vpack.c.b16 %v5596, %v5593
  %v5978 = vpack.c.b16 %v5597, %v5594
  %v5979 = vpack.c.b16 %v5598, %v5595
  %v5980 = vpack.c.b16 %v5602, %v5599
  %v5981 = vpack.c.b16 %v5603, %v5600
  %v5982 = vpack.c.b16 %v5604, %v5601
  %v5983 = vpack.c.b16 %v5608, %v5605
  %v5984 = vpack.c.b16 %v5609, %v5606
  %v5985 = vpack.c.b16 %v5610, %v5607
  %v5986 = vpack.c.b16 %v5614, %v5611
  %v5987 = vpack.c.b16 %v5615, %v5612
  %v5988 = vpack.c.b16 %v5616, %v5613
  %v5989 = vpack.c.b16 %v5620, %v5617
  %v5990 = vpack.c.b16 %v5621, %v5618
  %v5991 = vpack.c.b16 %v5622, %v5619
  %v5992 = vpack.c.b16 %v5626, %v5623
  %v5993 = vpack.c.b16 %v5627, %v5624
  %v5994 = vpack.c.b16 %v5628, %v5625
  %v5995 = vpack.c.b16 %v5632, %v5629
  %v5996 = vpack.c.b16 %v5633, %v5630
  %v5997 = vpack.c.b16 %v5634, %v5631
  %v5998 = vpack.c.b16 %v5638, %v5635
  %v5999 = vpack.c.b16 %v5639, %v5636
  %v6000 = vpack.c.b16 %v5640, %v5637
  %v6001 = vpack.c.b16 %v5644, %v5641
  %v6002 = vpack.c.b16 %v5645, %v5642
  %v6003 = vpack.c.b16 %v5646, %v5643
  %v6004 = vpack.c.b16 %v5650, %v5647
  %v6005 = vpack.c.b16 %v5651, %v5648
  %v6006 = vpack.c.b16 %v5652, %v5649
  %v6007 = vpack.c.b16 %v5656, %v5653
  %v6008 = vpack.c.b16 %v5657, %v5654
  %v6009 = vpack.c.b16 %v5658, %v5655
  %v6010 = vpack.c.b16 %v5662, %v5659
  %v6011 = vpack.c.b16 %v5663, %v5660
  %v6012 = vpack.c.b16 %v5664, %v5661
  %v6013 = vpack.c.b16 %v5668, %v5665
  %v6014 = vpack.c.b16 %v5669, %v5666
  %v6015 = vpack.c.b16 %v5670, %v5667
  %v6016 = vpack.c.b16 %v5674, %v5671
  %v6017 = vpack.c.b16 %v5675, %v5672
  %v6018 = vpack.c.b16 %v5676, %v5673
  %v6019 = vpack.c.b16 %v5680, %v5677
  %v6020 = vpack.c.b16 %v5681, %v5678
  %v6021 = vpack.c.b16 %v5682, %v5679
  %v6022 = vpack.c.b16 %v5686, %v5683
  %v6023 = vpack.c.b16 %v5687, %v5684
  %v6024 = vpack.c.b16 %v5688, %v5685
  %v6025 = vpack.c.b16 %v5692, %v5689
  %v6026 = vpack.c.b16 %v5693, %v5690
  %v6027 = vpack.c.b16 %v5694, %v5691
  %v6028 = vpack.c.b16 %v5698, %v5695
  %v6029 = vpack.c.b16 %v5699, %v5696
  %v6030 = vpack.c.b16 %v5700, %v5697
  %v6031 = vpack.c.b16 %v5704, %v5701
  %v6032 = vpack.c.b16 %v5705, %v5702
  %v6033 = vpack.c.b16 %v5706, %v5703
  %v6034 = vpack.c.b16 %v5710, %v5707
  %v6035 = vpack.c.b16 %v5711, %v5708
  %v6036 = vpack.c.b16 %v5712, %v5709
  %v6037 = vpack.c.b16 %v5716, %v5713
  %v6038 = vpack.c.b16 %v5717, %v5714
  %v6039 = vpack.c.b16 %v5718, %v5715
  %v6040 = vpack.c.b16 %v5722, %v5719
  %v6041 = vpack.c.b16 %v5723, %v5720
  %v6042 = vpack.c.b16 %v5724, %v5721
  %v6043 = vpack.c.b16 %v5728, %v5725
  %v6044 = vpack.c.b16 %v5729, %v5726
  %v6045 = vpack.c.b16 %v5730, %v5727
  %v6046 = vpack.c.b16 %v5734, %v5731
  %v6047 = vpack.c.b16 %v5735, %v5732
  %v6048 = vpack.c.b16 %v5736, %v5733
  %v6049 = vpack.c.b16 %v5740, %v5737
  %v6050 = vpack.c.b16 %v5741, %v5738
  %v6051 = vpack.c.b16 %v5742, %v5739
  %v6052 = vpack.c.b16 %v5746, %v5743
  %v6053 = vpack.c.b16 %v5747, %v5744
  %v6054 = vpack.c.b16 %v5748, %v5745
  %v6055 = vpack.c.b16 %v5752, %v5749
  %v6056 = vpack.c.b16 %v5753, %v5750
  %v6057 = vpack.c.b16 %v5754, %v5751
  %v6058 = vpack.c.b16 %v5758, %v5755
  %v6059 = vpack.c.b16 %v5759, %v5756
  %v6060 = vpack.c.b16 %v5760, %v5757
  %v6061 = vpack.c.b16 %v5764, %v5761
  %v6062 = vpack.c.b16 %v5765, %v5762
  %v6063 = vpack.c.b16 %v5766, %v5763
  %v6064 = vpack.c.b16 %v5770, %v5767
  %v6065 = vpack.c.b16 %v5771, %v5768
  %v6066 = vpack.c.b16 %v5772, %v5769
  %v6067 = vpack.c.b16 %v5776, %v5773
  %v6068 = vpack.c.b16 %v5777, %v5774
  %v6069 = vpack.c.b16 %v5778, %v5775
  %v6070 = vpack.c.b16 %v5782, %v5779
  %v6071 = vpack.c.b16 %v5783, %v5780
  %v6072 = vpack.c.b16 %v5784, %v5781
  %v6073 = vpack.c.b16 %v5788, %v5785
  %v6074 = vpack.c.b16 %v5789, %v5786
  %v6075 = vpack.c.b16 %v5790, %v5787
  %v6076 = vpack.c.b16 %v5794, %v5791
  %v6077 = vpack.c.b16 %v5795, %v5792
  %v6078 = vpack.c.b16 %v5796, %v5793
  %v6079 = vpack.c.b16 %v5800, %v5797
  %v6080 = vpack.c.b16 %v5801, %v5798
  %v6081 = vpack.c.b16 %v5802, %v5799
  %v6082 = vpack.c.b16 %v5806, %v5803
  %v6083 = vpack.c.b16 %v5807, %v5804
  %v6084 = vpack.c.b16 %v5808, %v5805
  %v6085 = vpack.c.b16 %v5812, %v5809
  %v6086 = vpack.c.b16 %v5813, %v5810
  %v6087 = vpack.c.b16 %v5814, %v5811
  %v6088 = vpack.c.b16 %v5818, %v5815
  %v6089 = vpack.c.b16 %v5819, %v5816
  %v6090 = vpack.c.b16 %v5820, %v5817
  %v6091 = vpack.c.b16 %v5824, %v5821
  %v6092 = vpack.c.b16 %v5825, %v5822
  %v6093 = vpack.c.b16 %v5826, %v5823
  %v6094 = vpack.c.b16 %v5830, %v5827
  %v6095 = vpack.c.b16 %v5831, %v5828
  %v6096 = vpack.c.b16 %v5832, %v5829
  %v6274 = vsel %vm1649, %v5835, 0
  %v6277 = vsel %vm1649, %v5838, 0
  %v6280 = vsel %vm1649, %v5841, 0
  %v6283 = vsel %vm1649, %v5844, 0
  %v6286 = vsel %vm1649, %v5847, 0
  %v6289 = vsel %vm1649, %v5850, 0
  %v6292 = vsel %vm1649, %v5853, 0
  %v6295 = vsel %vm1649, %v5856, 0
  %v6298 = vsel %vm1649, %v5859, 0
  %v6301 = vsel %vm1649, %v5862, 0
  %v6304 = vsel %vm1649, %v5865, 0
  %v6307 = vsel %vm1649, %v5868, 0
  %v6310 = vsel %vm1649, %v5871, 0
  %v6313 = vsel %vm1649, %v5874, 0
  %v6316 = vsel %vm1649, %v5877, 0
  %v6319 = vsel %vm1649, %v5880, 0
  %v6322 = vsel %vm1649, %v5883, 0
  %v6325 = vsel %vm1649, %v5886, 0
  %v6328 = vsel %vm1649, %v5889, 0
  %v6331 = vsel %vm1649, %v5892, 0
  %v6334 = vsel %vm1649, %v5895, 0
  %v6337 = vsel %vm1649, %v5898, 0
  %v6340 = vsel %vm1649, %v5901, 0
  %v6343 = vsel %vm1649, %v5904, 0
  %v6346 = vsel %vm1649, %v5907, 0
  %v6349 = vsel %vm1649, %v5910, 0
  %v6352 = vsel %vm1649, %v5913, 0
  %v6355 = vsel %vm1649, %v5916, 0
  %v6358 = vsel %vm1649, %v5919, 0
  %v6361 = vsel %vm1649, %v5922, 0
  %v6364 = vsel %vm1649, %v5925, 0
  %v6367 = vsel %vm1649, %v5928, 0
  %v6370 = vsel %vm1649, %v5931, 0
  %v6373 = vsel %vm1649, %v5934, 0
  %v6376 = vsel %vm1649, %v5937, 0
  %v6379 = vsel %vm1649, %v5940, 0
  %v6382 = vsel %vm1649, %v5943, 0
  %v6385 = vsel %vm1649, %v5946, 0
  %v6388 = vsel %vm1649, %v5949, 0
  %v6391 = vsel %vm1649, %v5952, 0
  %v6394 = vsel %vm1649, %v5955, 0
  %v6397 = vsel %vm1649, %v5958, 0
  %v6400 = vsel %vm1649, %v5961, 0
  %v6403 = vsel %vm1649, %v5964, 0
  %v6406 = vsel %vm1649, %v5967, 0
  %v6409 = vsel %vm1649, %v5970, 0
  %v6412 = vsel %vm1649, %v5973, 0
  %v6415 = vsel %vm1649, %v5976, 0
  %v6418 = vsel %vm1649, %v5979, 0
  %v6421 = vsel %vm1649, %v5982, 0
  %v6424 = vsel %vm1649, %v5985, 0
  %v6427 = vsel %vm1649, %v5988, 0
  %v6430 = vsel %vm1649, %v5991, 0
  %v6433 = vsel %vm1649, %v5994, 0
  %v6436 = vsel %vm1649, %v5997, 0
  %v6439 = vsel %vm1649, %v6000, 0
  %v6442 = vsel %vm1649, %v6003, 0
  %v6445 = vsel %vm1649, %v6006, 0
  %v6448 = vsel %vm1649, %v6009, 0
  %v6451 = vsel %vm1649, %v6012, 0
  %v6454 = vsel %vm1649, %v6015, 0
  %v6457 = vsel %vm1649, %v6018, 0
  %v6460 = vsel %vm1649, %v6021, 0
  %v6463 = vsel %vm1649, %v6024, 0
  %v6466 = vsel %vm1649, %v6027, 0
  %v6469 = vsel %vm1649, %v6030, 0
  %v6472 = vsel %vm1649, %v6033, 0
  %v6475 = vsel %vm1649, %v6036, 0
  %v6478 = vsel %vm1649, %v6039, 0
  %v6481 = vsel %vm1649, %v6042, 0
  %v6484 = vsel %vm1649, %v6045, 0
  %v6487 = vsel %vm1649, %v6048, 0
  %v6490 = vsel %vm1649, %v6051, 0
  %v6493 = vsel %vm1649, %v6054, 0
  %v6496 = vsel %vm1649, %v6057, 0
  %v6499 = vsel %vm1649, %v6060, 0
  %v6502 = vsel %vm1649, %v6063, 0
  %v6505 = vsel %vm1649, %v6066, 0
  %v6508 = vsel %vm1649, %v6069, 0
  %v6511 = vsel %vm1649, %v6072, 0
  %v6514 = vsel %vm1649, %v6075, 0
  %v6517 = vsel %vm1649, %v6078, 0
  %v6520 = vsel %vm1649, %v6081, 0
  %v6523 = vsel %vm1649, %v6084, 0
  %v6526 = vsel %vm1649, %v6087, 0
  %v6529 = vsel %vm1649, %v6090, 0
  %v6532 = vsel %vm1649, %v6093, 0
  %v6535 = vsel %vm1649, %v6096, 0
  %6537 = vmatpush.bf16.msra.mxu0 %v4938
  %6538 = vmatpush.bf16.msra.mxu0 %v4937
  %6539 = vmatpush.bf16.msra.mxu0 %v4936
  %6540 = vmatpush.bf16.msra.mxu0 %v4935
  %6541 = vmatpush.bf16.msra.mxu0 %v4934
  %6542 = vmatpush.bf16.msra.mxu0 %v4933
  %6543 = vmatpush.bf16.msra.mxu0 %v4932
  %6544 = vmatpush.bf16.msra.mxu0 %v4931
  %6545 = vmatmul.bf16.gmra.mxu0 %v5833
  %v6546 = vpop.f32.mrf.mxu0
  %v6547 = vadd.f32 0.0, %v6546
  %v6548 = vpop.f32.mrf.mxu0
  %v6549 = vadd.f32 0.0, %v6548
  %6550 = vmatmul.bf16.gmra.mxu0 %v5836
  %v6551 = vpop.f32.mrf.mxu0
  %v6552 = vadd.f32 0.0, %v6551
  %v6553 = vpop.f32.mrf.mxu0
  %v6554 = vadd.f32 0.0, %v6553
  %6555 = vmatmul.bf16.gmra.mxu0 %v5839
  %v6556 = vpop.f32.mrf.mxu0
  %v6557 = vadd.f32 0.0, %v6556
  %v6558 = vpop.f32.mrf.mxu0
  %v6559 = vadd.f32 0.0, %v6558
  %6560 = vmatmul.bf16.gmra.mxu0 %v5842
  %v6561 = vpop.f32.mrf.mxu0
  %v6562 = vadd.f32 0.0, %v6561
  %v6563 = vpop.f32.mrf.mxu0
  %v6564 = vadd.f32 0.0, %v6563
  %6565 = vmatmul.bf16.gmra.mxu0 %v5845
  %v6566 = vpop.f32.mrf.mxu0
  %v6567 = vadd.f32 0.0, %v6566
  %v6568 = vpop.f32.mrf.mxu0
  %v6569 = vadd.f32 0.0, %v6568
  %6570 = vmatmul.bf16.gmra.mxu0 %v5848
  %v6571 = vpop.f32.mrf.mxu0
  %v6572 = vadd.f32 0.0, %v6571
  %v6573 = vpop.f32.mrf.mxu0
  %v6574 = vadd.f32 0.0, %v6573
  %6575 = vmatmul.bf16.gmra.mxu0 %v5851
  %v6576 = vpop.f32.mrf.mxu0
  %v6577 = vadd.f32 0.0, %v6576
  %v6578 = vpop.f32.mrf.mxu0
  %v6579 = vadd.f32 0.0, %v6578
  %6580 = vmatmul.bf16.gmra.mxu0 %v5854
  %v6581 = vpop.f32.mrf.mxu0
  %v6582 = vadd.f32 0.0, %v6581
  %v6583 = vpop.f32.mrf.mxu0
  %v6584 = vadd.f32 0.0, %v6583
  %6585 = vmatmul.bf16.gmra.mxu0 %v5857
  %v6586 = vpop.f32.mrf.mxu0
  %v6587 = vadd.f32 0.0, %v6586
  %v6588 = vpop.f32.mrf.mxu0
  %v6589 = vadd.f32 0.0, %v6588
  %6590 = vmatmul.bf16.gmra.mxu0 %v5860
  %v6591 = vpop.f32.mrf.mxu0
  %v6592 = vadd.f32 0.0, %v6591
  %v6593 = vpop.f32.mrf.mxu0
  %v6594 = vadd.f32 0.0, %v6593
  %6595 = vmatmul.bf16.gmra.mxu0 %v5863
  %v6596 = vpop.f32.mrf.mxu0
  %v6597 = vadd.f32 0.0, %v6596
  %v6598 = vpop.f32.mrf.mxu0
  %v6599 = vadd.f32 0.0, %v6598
  %6600 = vmatmul.bf16.gmra.mxu0 %v5866
  %v6601 = vpop.f32.mrf.mxu0
  %v6602 = vadd.f32 0.0, %v6601
  %v6603 = vpop.f32.mrf.mxu0
  %v6604 = vadd.f32 0.0, %v6603
  %6605 = vmatmul.bf16.gmra.mxu0 %v5869
  %v6606 = vpop.f32.mrf.mxu0
  %v6607 = vadd.f32 0.0, %v6606
  %v6608 = vpop.f32.mrf.mxu0
  %v6609 = vadd.f32 0.0, %v6608
  %6610 = vmatmul.bf16.gmra.mxu0 %v5872
  %v6611 = vpop.f32.mrf.mxu0
  %v6612 = vadd.f32 0.0, %v6611
  %v6613 = vpop.f32.mrf.mxu0
  %v6614 = vadd.f32 0.0, %v6613
  %6615 = vmatmul.bf16.gmra.mxu0 %v5875
  %v6616 = vpop.f32.mrf.mxu0
  %v6617 = vadd.f32 0.0, %v6616
  %v6618 = vpop.f32.mrf.mxu0
  %v6619 = vadd.f32 0.0, %v6618
  %6620 = vmatmul.bf16.gmra.mxu0 %v5878
  %v6621 = vpop.f32.mrf.mxu0
  %v6622 = vadd.f32 0.0, %v6621
  %v6623 = vpop.f32.mrf.mxu0
  %v6624 = vadd.f32 0.0, %v6623
  %6625 = vmatmul.bf16.gmra.mxu0 %v5881
  %v6626 = vpop.f32.mrf.mxu0
  %v6627 = vadd.f32 0.0, %v6626
  %v6628 = vpop.f32.mrf.mxu0
  %v6629 = vadd.f32 0.0, %v6628
  %6630 = vmatmul.bf16.gmra.mxu0 %v5884
  %v6631 = vpop.f32.mrf.mxu0
  %v6632 = vadd.f32 0.0, %v6631
  %v6633 = vpop.f32.mrf.mxu0
  %v6634 = vadd.f32 0.0, %v6633
  %6635 = vmatmul.bf16.gmra.mxu0 %v5887
  %v6636 = vpop.f32.mrf.mxu0
  %v6637 = vadd.f32 0.0, %v6636
  %v6638 = vpop.f32.mrf.mxu0
  %v6639 = vadd.f32 0.0, %v6638
  %6640 = vmatmul.bf16.gmra.mxu0 %v5890
  %v6641 = vpop.f32.mrf.mxu0
  %v6642 = vadd.f32 0.0, %v6641
  %v6643 = vpop.f32.mrf.mxu0
  %v6644 = vadd.f32 0.0, %v6643
  %6645 = vmatmul.bf16.gmra.mxu0 %v5893
  %v6646 = vpop.f32.mrf.mxu0
  %v6647 = vadd.f32 0.0, %v6646
  %v6648 = vpop.f32.mrf.mxu0
  %v6649 = vadd.f32 0.0, %v6648
  %6650 = vmatmul.bf16.gmra.mxu0 %v5896
  %v6651 = vpop.f32.mrf.mxu0
  %v6652 = vadd.f32 0.0, %v6651
  %v6653 = vpop.f32.mrf.mxu0
  %v6654 = vadd.f32 0.0, %v6653
  %6655 = vmatmul.bf16.gmra.mxu0 %v5899
  %v6656 = vpop.f32.mrf.mxu0
  %v6657 = vadd.f32 0.0, %v6656
  %v6658 = vpop.f32.mrf.mxu0
  %v6659 = vadd.f32 0.0, %v6658
  %6660 = vmatmul.bf16.gmra.mxu0 %v5902
  %v6661 = vpop.f32.mrf.mxu0
  %v6662 = vadd.f32 0.0, %v6661
  %v6663 = vpop.f32.mrf.mxu0
  %v6664 = vadd.f32 0.0, %v6663
  %6665 = vmatmul.bf16.gmra.mxu0 %v5905
  %v6666 = vpop.f32.mrf.mxu0
  %v6667 = vadd.f32 0.0, %v6666
  %v6668 = vpop.f32.mrf.mxu0
  %v6669 = vadd.f32 0.0, %v6668
  %6670 = vmatmul.bf16.gmra.mxu0 %v5908
  %v6671 = vpop.f32.mrf.mxu0
  %v6672 = vadd.f32 0.0, %v6671
  %v6673 = vpop.f32.mrf.mxu0
  %v6674 = vadd.f32 0.0, %v6673
  %6675 = vmatmul.bf16.gmra.mxu0 %v5911
  %v6676 = vpop.f32.mrf.mxu0
  %v6677 = vadd.f32 0.0, %v6676
  %v6678 = vpop.f32.mrf.mxu0
  %v6679 = vadd.f32 0.0, %v6678
  %6680 = vmatmul.bf16.gmra.mxu0 %v5914
  %v6681 = vpop.f32.mrf.mxu0
  %v6682 = vadd.f32 0.0, %v6681
  %v6683 = vpop.f32.mrf.mxu0
  %v6684 = vadd.f32 0.0, %v6683
  %6685 = vmatmul.bf16.gmra.mxu0 %v5917
  %v6686 = vpop.f32.mrf.mxu0
  %v6687 = vadd.f32 0.0, %v6686
  %v6688 = vpop.f32.mrf.mxu0
  %v6689 = vadd.f32 0.0, %v6688
  %6690 = vmatmul.bf16.gmra.mxu0 %v5920
  %v6691 = vpop.f32.mrf.mxu0
  %v6692 = vadd.f32 0.0, %v6691
  %v6693 = vpop.f32.mrf.mxu0
  %v6694 = vadd.f32 0.0, %v6693
  %6695 = vmatmul.bf16.gmra.mxu0 %v5923
  %v6696 = vpop.f32.mrf.mxu0
  %v6697 = vadd.f32 0.0, %v6696
  %v6698 = vpop.f32.mrf.mxu0
  %v6699 = vadd.f32 0.0, %v6698
  %6700 = vmatmul.bf16.gmra.mxu0 %v5926
  %v6701 = vpop.f32.mrf.mxu0
  %v6702 = vadd.f32 0.0, %v6701
  %v6703 = vpop.f32.mrf.mxu0
  %v6704 = vadd.f32 0.0, %v6703
  %6705 = vmatmul.bf16.gmra.mxu0 %v5929
  %v6706 = vpop.f32.mrf.mxu0
  %v6707 = vadd.f32 0.0, %v6706
  %v6708 = vpop.f32.mrf.mxu0
  %v6709 = vadd.f32 0.0, %v6708
  %6710 = vmatmul.bf16.gmra.mxu0 %v5932
  %v6711 = vpop.f32.mrf.mxu0
  %v6712 = vadd.f32 0.0, %v6711
  %v6713 = vpop.f32.mrf.mxu0
  %v6714 = vadd.f32 0.0, %v6713
  %6715 = vmatmul.bf16.gmra.mxu0 %v5935
  %v6716 = vpop.f32.mrf.mxu0
  %v6717 = vadd.f32 0.0, %v6716
  %v6718 = vpop.f32.mrf.mxu0
  %v6719 = vadd.f32 0.0, %v6718
  %6720 = vmatmul.bf16.gmra.mxu0 %v5938
  %v6721 = vpop.f32.mrf.mxu0
  %v6722 = vadd.f32 0.0, %v6721
  %v6723 = vpop.f32.mrf.mxu0
  %v6724 = vadd.f32 0.0, %v6723
  %6725 = vmatmul.bf16.gmra.mxu0 %v5941
  %v6726 = vpop.f32.mrf.mxu0
  %v6727 = vadd.f32 0.0, %v6726
  %v6728 = vpop.f32.mrf.mxu0
  %v6729 = vadd.f32 0.0, %v6728
  %6730 = vmatmul.bf16.gmra.mxu0 %v5944
  %v6731 = vpop.f32.mrf.mxu0
  %v6732 = vadd.f32 0.0, %v6731
  %v6733 = vpop.f32.mrf.mxu0
  %v6734 = vadd.f32 0.0, %v6733
  %6735 = vmatmul.bf16.gmra.mxu0 %v5947
  %v6736 = vpop.f32.mrf.mxu0
  %v6737 = vadd.f32 0.0, %v6736
  %v6738 = vpop.f32.mrf.mxu0
  %v6739 = vadd.f32 0.0, %v6738
  %6740 = vmatmul.bf16.gmra.mxu0 %v5950
  %v6741 = vpop.f32.mrf.mxu0
  %v6742 = vadd.f32 0.0, %v6741
  %v6743 = vpop.f32.mrf.mxu0
  %v6744 = vadd.f32 0.0, %v6743
  %6745 = vmatmul.bf16.gmra.mxu0 %v5953
  %v6746 = vpop.f32.mrf.mxu0
  %v6747 = vadd.f32 0.0, %v6746
  %v6748 = vpop.f32.mrf.mxu0
  %v6749 = vadd.f32 0.0, %v6748
  %6750 = vmatmul.bf16.gmra.mxu0 %v5956
  %v6751 = vpop.f32.mrf.mxu0
  %v6752 = vadd.f32 0.0, %v6751
  %v6753 = vpop.f32.mrf.mxu0
  %v6754 = vadd.f32 0.0, %v6753
  %6755 = vmatmul.bf16.gmra.mxu0 %v5959
  %v6756 = vpop.f32.mrf.mxu0
  %v6757 = vadd.f32 0.0, %v6756
  %v6758 = vpop.f32.mrf.mxu0
  %v6759 = vadd.f32 0.0, %v6758
  %6760 = vmatmul.bf16.gmra.mxu0 %v5962
  %v6761 = vpop.f32.mrf.mxu0
  %v6762 = vadd.f32 0.0, %v6761
  %v6763 = vpop.f32.mrf.mxu0
  %v6764 = vadd.f32 0.0, %v6763
  %6765 = vmatmul.bf16.gmra.mxu0 %v5965
  %v6766 = vpop.f32.mrf.mxu0
  %v6767 = vadd.f32 0.0, %v6766
  %v6768 = vpop.f32.mrf.mxu0
  %v6769 = vadd.f32 0.0, %v6768
  %6770 = vmatmul.bf16.gmra.mxu0 %v5968
  %v6771 = vpop.f32.mrf.mxu0
  %v6772 = vadd.f32 0.0, %v6771
  %v6773 = vpop.f32.mrf.mxu0
  %v6774 = vadd.f32 0.0, %v6773
  %6775 = vmatmul.bf16.gmra.mxu0 %v5971
  %v6776 = vpop.f32.mrf.mxu0
  %v6777 = vadd.f32 0.0, %v6776
  %v6778 = vpop.f32.mrf.mxu0
  %v6779 = vadd.f32 0.0, %v6778
  %6780 = vmatmul.bf16.gmra.mxu0 %v5974
  %v6781 = vpop.f32.mrf.mxu0
  %v6782 = vadd.f32 0.0, %v6781
  %v6783 = vpop.f32.mrf.mxu0
  %v6784 = vadd.f32 0.0, %v6783
  %6785 = vmatmul.bf16.gmra.mxu0 %v5977
  %v6786 = vpop.f32.mrf.mxu0
  %v6787 = vadd.f32 0.0, %v6786
  %v6788 = vpop.f32.mrf.mxu0
  %v6789 = vadd.f32 0.0, %v6788
  %6790 = vmatmul.bf16.gmra.mxu0 %v5980
  %v6791 = vpop.f32.mrf.mxu0
  %v6792 = vadd.f32 0.0, %v6791
  %v6793 = vpop.f32.mrf.mxu0
  %v6794 = vadd.f32 0.0, %v6793
  %6795 = vmatmul.bf16.gmra.mxu0 %v5983
  %v6796 = vpop.f32.mrf.mxu0
  %v6797 = vadd.f32 0.0, %v6796
  %v6798 = vpop.f32.mrf.mxu0
  %v6799 = vadd.f32 0.0, %v6798
  %6800 = vmatmul.bf16.gmra.mxu0 %v5986
  %v6801 = vpop.f32.mrf.mxu0
  %v6802 = vadd.f32 0.0, %v6801
  %v6803 = vpop.f32.mrf.mxu0
  %v6804 = vadd.f32 0.0, %v6803
  %6805 = vmatmul.bf16.gmra.mxu0 %v5989
  %v6806 = vpop.f32.mrf.mxu0
  %v6807 = vadd.f32 0.0, %v6806
  %v6808 = vpop.f32.mrf.mxu0
  %v6809 = vadd.f32 0.0, %v6808
  %6810 = vmatmul.bf16.gmra.mxu0 %v5992
  %v6811 = vpop.f32.mrf.mxu0
  %v6812 = vadd.f32 0.0, %v6811
  %v6813 = vpop.f32.mrf.mxu0
  %v6814 = vadd.f32 0.0, %v6813
  %6815 = vmatmul.bf16.gmra.mxu0 %v5995
  %v6816 = vpop.f32.mrf.mxu0
  %v6817 = vadd.f32 0.0, %v6816
  %v6818 = vpop.f32.mrf.mxu0
  %v6819 = vadd.f32 0.0, %v6818
  %6820 = vmatmul.bf16.gmra.mxu0 %v5998
  %v6821 = vpop.f32.mrf.mxu0
  %v6822 = vadd.f32 0.0, %v6821
  %v6823 = vpop.f32.mrf.mxu0
  %v6824 = vadd.f32 0.0, %v6823
  %6825 = vmatmul.bf16.gmra.mxu0 %v6001
  %v6826 = vpop.f32.mrf.mxu0
  %v6827 = vadd.f32 0.0, %v6826
  %v6828 = vpop.f32.mrf.mxu0
  %v6829 = vadd.f32 0.0, %v6828
  %6830 = vmatmul.bf16.gmra.mxu0 %v6004
  %v6831 = vpop.f32.mrf.mxu0
  %v6832 = vadd.f32 0.0, %v6831
  %v6833 = vpop.f32.mrf.mxu0
  %v6834 = vadd.f32 0.0, %v6833
  %6835 = vmatmul.bf16.gmra.mxu0 %v6007
  %v6836 = vpop.f32.mrf.mxu0
  %v6837 = vadd.f32 0.0, %v6836
  %v6838 = vpop.f32.mrf.mxu0
  %v6839 = vadd.f32 0.0, %v6838
  %6840 = vmatmul.bf16.gmra.mxu0 %v6010
  %v6841 = vpop.f32.mrf.mxu0
  %v6842 = vadd.f32 0.0, %v6841
  %v6843 = vpop.f32.mrf.mxu0
  %v6844 = vadd.f32 0.0, %v6843
  %6845 = vmatmul.bf16.gmra.mxu0 %v6013
  %v6846 = vpop.f32.mrf.mxu0
  %v6847 = vadd.f32 0.0, %v6846
  %v6848 = vpop.f32.mrf.mxu0
  %v6849 = vadd.f32 0.0, %v6848
  %6850 = vmatmul.bf16.gmra.mxu0 %v6016
  %v6851 = vpop.f32.mrf.mxu0
  %v6852 = vadd.f32 0.0, %v6851
  %v6853 = vpop.f32.mrf.mxu0
  %v6854 = vadd.f32 0.0, %v6853
  %6855 = vmatmul.bf16.gmra.mxu0 %v6019
  %v6856 = vpop.f32.mrf.mxu0
  %v6857 = vadd.f32 0.0, %v6856
  %v6858 = vpop.f32.mrf.mxu0
  %v6859 = vadd.f32 0.0, %v6858
  %6860 = vmatmul.bf16.gmra.mxu0 %v6022
  %v6861 = vpop.f32.mrf.mxu0
  %v6862 = vadd.f32 0.0, %v6861
  %v6863 = vpop.f32.mrf.mxu0
  %v6864 = vadd.f32 0.0, %v6863
  %6865 = vmatmul.bf16.gmra.mxu0 %v6025
  %v6866 = vpop.f32.mrf.mxu0
  %v6867 = vadd.f32 0.0, %v6866
  %v6868 = vpop.f32.mrf.mxu0
  %v6869 = vadd.f32 0.0, %v6868
  %6870 = vmatmul.bf16.gmra.mxu0 %v6028
  %v6871 = vpop.f32.mrf.mxu0
  %v6872 = vadd.f32 0.0, %v6871
  %v6873 = vpop.f32.mrf.mxu0
  %v6874 = vadd.f32 0.0, %v6873
  %6875 = vmatmul.bf16.gmra.mxu0 %v6031
  %v6876 = vpop.f32.mrf.mxu0
  %v6877 = vadd.f32 0.0, %v6876
  %v6878 = vpop.f32.mrf.mxu0
  %v6879 = vadd.f32 0.0, %v6878
  %6880 = vmatmul.bf16.gmra.mxu0 %v6034
  %v6881 = vpop.f32.mrf.mxu0
  %v6882 = vadd.f32 0.0, %v6881
  %v6883 = vpop.f32.mrf.mxu0
  %v6884 = vadd.f32 0.0, %v6883
  %6885 = vmatmul.bf16.gmra.mxu0 %v6037
  %v6886 = vpop.f32.mrf.mxu0
  %v6887 = vadd.f32 0.0, %v6886
  %v6888 = vpop.f32.mrf.mxu0
  %v6889 = vadd.f32 0.0, %v6888
  %6890 = vmatmul.bf16.gmra.mxu0 %v6040
  %v6891 = vpop.f32.mrf.mxu0
  %v6892 = vadd.f32 0.0, %v6891
  %v6893 = vpop.f32.mrf.mxu0
  %v6894 = vadd.f32 0.0, %v6893
  %6895 = vmatmul.bf16.gmra.mxu0 %v6043
  %v6896 = vpop.f32.mrf.mxu0
  %v6897 = vadd.f32 0.0, %v6896
  %v6898 = vpop.f32.mrf.mxu0
  %v6899 = vadd.f32 0.0, %v6898
  %6900 = vmatmul.bf16.gmra.mxu0 %v6046
  %v6901 = vpop.f32.mrf.mxu0
  %v6902 = vadd.f32 0.0, %v6901
  %v6903 = vpop.f32.mrf.mxu0
  %v6904 = vadd.f32 0.0, %v6903
  %6905 = vmatmul.bf16.gmra.mxu0 %v6049
  %v6906 = vpop.f32.mrf.mxu0
  %v6907 = vadd.f32 0.0, %v6906
  %v6908 = vpop.f32.mrf.mxu0
  %v6909 = vadd.f32 0.0, %v6908
  %6910 = vmatmul.bf16.gmra.mxu0 %v6052
  %v6911 = vpop.f32.mrf.mxu0
  %v6912 = vadd.f32 0.0, %v6911
  %v6913 = vpop.f32.mrf.mxu0
  %v6914 = vadd.f32 0.0, %v6913
  %6915 = vmatmul.bf16.gmra.mxu0 %v6055
  %v6916 = vpop.f32.mrf.mxu0
  %v6917 = vadd.f32 0.0, %v6916
  %v6918 = vpop.f32.mrf.mxu0
  %v6919 = vadd.f32 0.0, %v6918
  %6920 = vmatmul.bf16.gmra.mxu0 %v6058
  %v6921 = vpop.f32.mrf.mxu0
  %v6922 = vadd.f32 0.0, %v6921
  %v6923 = vpop.f32.mrf.mxu0
  %v6924 = vadd.f32 0.0, %v6923
  %6925 = vmatmul.bf16.gmra.mxu0 %v6061
  %v6926 = vpop.f32.mrf.mxu0
  %v6927 = vadd.f32 0.0, %v6926
  %v6928 = vpop.f32.mrf.mxu0
  %v6929 = vadd.f32 0.0, %v6928
  %6930 = vmatmul.bf16.gmra.mxu0 %v6064
  %v6931 = vpop.f32.mrf.mxu0
  %v6932 = vadd.f32 0.0, %v6931
  %v6933 = vpop.f32.mrf.mxu0
  %v6934 = vadd.f32 0.0, %v6933
  %6935 = vmatmul.bf16.gmra.mxu0 %v6067
  %v6936 = vpop.f32.mrf.mxu0
  %v6937 = vadd.f32 0.0, %v6936
  %v6938 = vpop.f32.mrf.mxu0
  %v6939 = vadd.f32 0.0, %v6938
  %6940 = vmatmul.bf16.gmra.mxu0 %v6070
  %v6941 = vpop.f32.mrf.mxu0
  %v6942 = vadd.f32 0.0, %v6941
  %v6943 = vpop.f32.mrf.mxu0
  %v6944 = vadd.f32 0.0, %v6943
  %6945 = vmatmul.bf16.gmra.mxu0 %v6073
  %v6946 = vpop.f32.mrf.mxu0
  %v6947 = vadd.f32 0.0, %v6946
  %v6948 = vpop.f32.mrf.mxu0
  %v6949 = vadd.f32 0.0, %v6948
  %6950 = vmatmul.bf16.gmra.mxu0 %v6076
  %v6951 = vpop.f32.mrf.mxu0
  %v6952 = vadd.f32 0.0, %v6951
  %v6953 = vpop.f32.mrf.mxu0
  %v6954 = vadd.f32 0.0, %v6953
  %6955 = vmatmul.bf16.gmra.mxu0 %v6079
  %v6956 = vpop.f32.mrf.mxu0
  %v6957 = vadd.f32 0.0, %v6956
  %v6958 = vpop.f32.mrf.mxu0
  %v6959 = vadd.f32 0.0, %v6958
  %6960 = vmatmul.bf16.gmra.mxu0 %v6082
  %v6961 = vpop.f32.mrf.mxu0
  %v6962 = vadd.f32 0.0, %v6961
  %v6963 = vpop.f32.mrf.mxu0
  %v6964 = vadd.f32 0.0, %v6963
  %6965 = vmatmul.bf16.gmra.mxu0 %v6085
  %v6966 = vpop.f32.mrf.mxu0
  %v6967 = vadd.f32 0.0, %v6966
  %v6968 = vpop.f32.mrf.mxu0
  %v6969 = vadd.f32 0.0, %v6968
  %6970 = vmatmul.bf16.gmra.mxu0 %v6088
  %v6971 = vpop.f32.mrf.mxu0
  %v6972 = vadd.f32 0.0, %v6971
  %v6973 = vpop.f32.mrf.mxu0
  %v6974 = vadd.f32 0.0, %v6973
  %6975 = vmatmul.bf16.gmra.mxu0 %v6091
  %v6976 = vpop.f32.mrf.mxu0
  %v6977 = vadd.f32 0.0, %v6976
  %v6978 = vpop.f32.mrf.mxu0
  %v6979 = vadd.f32 0.0, %v6978
  %6980 = vmatmul.bf16.gmra.mxu0 %v6094
  %v6981 = vpop.f32.mrf.mxu0
  %v6982 = vadd.f32 0.0, %v6981
  %v6983 = vpop.f32.mrf.mxu0
  %v6984 = vadd.f32 0.0, %v6983
  %6985 = vdwg.mxu0
  %6986 = vmatpush.bf16.msra.mxu0 %v4946
  %6987 = vmatpush.bf16.msra.mxu0 %v4945
  %6988 = vmatpush.bf16.msra.mxu0 %v4944
  %6989 = vmatpush.bf16.msra.mxu0 %v4943
  %6990 = vmatpush.bf16.msra.mxu0 %v4942
  %6991 = vmatpush.bf16.msra.mxu0 %v4941
  %6992 = vmatpush.bf16.msra.mxu0 %v4940
  %6993 = vmatpush.bf16.msra.mxu0 %v4939
  %6994 = vmatmul.bf16.gmra.mxu0 %v5834
  %v6995 = vpop.f32.mrf.mxu0
  %v6996 = vadd.f32 %v6547, %v6995
  %v6997 = vpop.f32.mrf.mxu0
  %v6998 = vadd.f32 %v6549, %v6997
  %6999 = vmatmul.bf16.gmra.mxu0 %v5837
  %v7000 = vpop.f32.mrf.mxu0
  %v7001 = vadd.f32 %v6552, %v7000
  %v7002 = vpop.f32.mrf.mxu0
  %v7003 = vadd.f32 %v6554, %v7002
  %7004 = vmatmul.bf16.gmra.mxu0 %v5840
  %v7005 = vpop.f32.mrf.mxu0
  %v7006 = vadd.f32 %v6557, %v7005
  %v7007 = vpop.f32.mrf.mxu0
  %v7008 = vadd.f32 %v6559, %v7007
  %7009 = vmatmul.bf16.gmra.mxu0 %v5843
  %v7010 = vpop.f32.mrf.mxu0
  %v7011 = vadd.f32 %v6562, %v7010
  %v7012 = vpop.f32.mrf.mxu0
  %v7013 = vadd.f32 %v6564, %v7012
  %7014 = vmatmul.bf16.gmra.mxu0 %v5846
  %v7015 = vpop.f32.mrf.mxu0
  %v7016 = vadd.f32 %v6567, %v7015
  %v7017 = vpop.f32.mrf.mxu0
  %v7018 = vadd.f32 %v6569, %v7017
  %7019 = vmatmul.bf16.gmra.mxu0 %v5849
  %v7020 = vpop.f32.mrf.mxu0
  %v7021 = vadd.f32 %v6572, %v7020
  %v7022 = vpop.f32.mrf.mxu0
  %v7023 = vadd.f32 %v6574, %v7022
  %7024 = vmatmul.bf16.gmra.mxu0 %v5852
  %v7025 = vpop.f32.mrf.mxu0
  %v7026 = vadd.f32 %v6577, %v7025
  %v7027 = vpop.f32.mrf.mxu0
  %v7028 = vadd.f32 %v6579, %v7027
  %7029 = vmatmul.bf16.gmra.mxu0 %v5855
  %v7030 = vpop.f32.mrf.mxu0
  %v7031 = vadd.f32 %v6582, %v7030
  %v7032 = vpop.f32.mrf.mxu0
  %v7033 = vadd.f32 %v6584, %v7032
  %7034 = vmatmul.bf16.gmra.mxu0 %v5858
  %v7035 = vpop.f32.mrf.mxu0
  %v7036 = vadd.f32 %v6587, %v7035
  %v7037 = vpop.f32.mrf.mxu0
  %v7038 = vadd.f32 %v6589, %v7037
  %7039 = vmatmul.bf16.gmra.mxu0 %v5861
  %v7040 = vpop.f32.mrf.mxu0
  %v7041 = vadd.f32 %v6592, %v7040
  %v7042 = vpop.f32.mrf.mxu0
  %v7043 = vadd.f32 %v6594, %v7042
  %7044 = vmatmul.bf16.gmra.mxu0 %v5864
  %v7045 = vpop.f32.mrf.mxu0
  %v7046 = vadd.f32 %v6597, %v7045
  %v7047 = vpop.f32.mrf.mxu0
  %v7048 = vadd.f32 %v6599, %v7047
  %7049 = vmatmul.bf16.gmra.mxu0 %v5867
  %v7050 = vpop.f32.mrf.mxu0
  %v7051 = vadd.f32 %v6602, %v7050
  %v7052 = vpop.f32.mrf.mxu0
  %v7053 = vadd.f32 %v6604, %v7052
  %7054 = vmatmul.bf16.gmra.mxu0 %v5870
  %v7055 = vpop.f32.mrf.mxu0
  %v7056 = vadd.f32 %v6607, %v7055
  %v7057 = vpop.f32.mrf.mxu0
  %v7058 = vadd.f32 %v6609, %v7057
  %7059 = vmatmul.bf16.gmra.mxu0 %v5873
  %v7060 = vpop.f32.mrf.mxu0
  %v7061 = vadd.f32 %v6612, %v7060
  %v7062 = vpop.f32.mrf.mxu0
  %v7063 = vadd.f32 %v6614, %v7062
  %7064 = vmatmul.bf16.gmra.mxu0 %v5876
  %v7065 = vpop.f32.mrf.mxu0
  %v7066 = vadd.f32 %v6617, %v7065
  %v7067 = vpop.f32.mrf.mxu0
  %v7068 = vadd.f32 %v6619, %v7067
  %7069 = vmatmul.bf16.gmra.mxu0 %v5879
  %v7070 = vpop.f32.mrf.mxu0
  %v7071 = vadd.f32 %v6622, %v7070
  %v7072 = vpop.f32.mrf.mxu0
  %v7073 = vadd.f32 %v6624, %v7072
  %7074 = vmatmul.bf16.gmra.mxu0 %v5882
  %v7075 = vpop.f32.mrf.mxu0
  %v7076 = vadd.f32 %v6627, %v7075
  %v7077 = vpop.f32.mrf.mxu0
  %v7078 = vadd.f32 %v6629, %v7077
  %7079 = vmatmul.bf16.gmra.mxu0 %v5885
  %v7080 = vpop.f32.mrf.mxu0
  %v7081 = vadd.f32 %v6632, %v7080
  %v7082 = vpop.f32.mrf.mxu0
  %v7083 = vadd.f32 %v6634, %v7082
  %7084 = vmatmul.bf16.gmra.mxu0 %v5888
  %v7085 = vpop.f32.mrf.mxu0
  %v7086 = vadd.f32 %v6637, %v7085
  %v7087 = vpop.f32.mrf.mxu0
  %v7088 = vadd.f32 %v6639, %v7087
  %7089 = vmatmul.bf16.gmra.mxu0 %v5891
  %v7090 = vpop.f32.mrf.mxu0
  %v7091 = vadd.f32 %v6642, %v7090
  %v7092 = vpop.f32.mrf.mxu0
  %v7093 = vadd.f32 %v6644, %v7092
  %7094 = vmatmul.bf16.gmra.mxu0 %v5894
  %v7095 = vpop.f32.mrf.mxu0
  %v7096 = vadd.f32 %v6647, %v7095
  %v7097 = vpop.f32.mrf.mxu0
  %v7098 = vadd.f32 %v6649, %v7097
  %7099 = vmatmul.bf16.gmra.mxu0 %v5897
  %v7100 = vpop.f32.mrf.mxu0
  %v7101 = vadd.f32 %v6652, %v7100
  %v7102 = vpop.f32.mrf.mxu0
  %v7103 = vadd.f32 %v6654, %v7102
  %7104 = vmatmul.bf16.gmra.mxu0 %v5900
  %v7105 = vpop.f32.mrf.mxu0
  %v7106 = vadd.f32 %v6657, %v7105
  %v7107 = vpop.f32.mrf.mxu0
  %v7108 = vadd.f32 %v6659, %v7107
  %7109 = vmatmul.bf16.gmra.mxu0 %v5903
  %v7110 = vpop.f32.mrf.mxu0
  %v7111 = vadd.f32 %v6662, %v7110
  %v7112 = vpop.f32.mrf.mxu0
  %v7113 = vadd.f32 %v6664, %v7112
  %7114 = vmatmul.bf16.gmra.mxu0 %v5906
  %v7115 = vpop.f32.mrf.mxu0
  %v7116 = vadd.f32 %v6667, %v7115
  %v7117 = vpop.f32.mrf.mxu0
  %v7118 = vadd.f32 %v6669, %v7117
  %7119 = vmatmul.bf16.gmra.mxu0 %v5909
  %v7120 = vpop.f32.mrf.mxu0
  %v7121 = vadd.f32 %v6672, %v7120
  %v7122 = vpop.f32.mrf.mxu0
  %v7123 = vadd.f32 %v6674, %v7122
  %7124 = vmatmul.bf16.gmra.mxu0 %v5912
  %v7125 = vpop.f32.mrf.mxu0
  %v7126 = vadd.f32 %v6677, %v7125
  %v7127 = vpop.f32.mrf.mxu0
  %v7128 = vadd.f32 %v6679, %v7127
  %7129 = vmatmul.bf16.gmra.mxu0 %v5915
  %v7130 = vpop.f32.mrf.mxu0
  %v7131 = vadd.f32 %v6682, %v7130
  %v7132 = vpop.f32.mrf.mxu0
  %v7133 = vadd.f32 %v6684, %v7132
  %7134 = vmatmul.bf16.gmra.mxu0 %v5918
  %v7135 = vpop.f32.mrf.mxu0
  %v7136 = vadd.f32 %v6687, %v7135
  %v7137 = vpop.f32.mrf.mxu0
  %v7138 = vadd.f32 %v6689, %v7137
  %7139 = vmatmul.bf16.gmra.mxu0 %v5921
  %v7140 = vpop.f32.mrf.mxu0
  %v7141 = vadd.f32 %v6692, %v7140
  %v7142 = vpop.f32.mrf.mxu0
  %v7143 = vadd.f32 %v6694, %v7142
  %7144 = vmatmul.bf16.gmra.mxu0 %v5924
  %v7145 = vpop.f32.mrf.mxu0
  %v7146 = vadd.f32 %v6697, %v7145
  %v7147 = vpop.f32.mrf.mxu0
  %v7148 = vadd.f32 %v6699, %v7147
  %7149 = vmatmul.bf16.gmra.mxu0 %v5927
  %v7150 = vpop.f32.mrf.mxu0
  %v7151 = vadd.f32 %v6702, %v7150
  %v7152 = vpop.f32.mrf.mxu0
  %v7153 = vadd.f32 %v6704, %v7152
  %7154 = vmatmul.bf16.gmra.mxu0 %v5930
  %v7155 = vpop.f32.mrf.mxu0
  %v7156 = vadd.f32 %v6707, %v7155
  %v7157 = vpop.f32.mrf.mxu0
  %v7158 = vadd.f32 %v6709, %v7157
  %7159 = vmatmul.bf16.gmra.mxu0 %v5933
  %v7160 = vpop.f32.mrf.mxu0
  %v7161 = vadd.f32 %v6712, %v7160
  %v7162 = vpop.f32.mrf.mxu0
  %v7163 = vadd.f32 %v6714, %v7162
  %7164 = vmatmul.bf16.gmra.mxu0 %v5936
  %v7165 = vpop.f32.mrf.mxu0
  %v7166 = vadd.f32 %v6717, %v7165
  %v7167 = vpop.f32.mrf.mxu0
  %v7168 = vadd.f32 %v6719, %v7167
  %7169 = vmatmul.bf16.gmra.mxu0 %v5939
  %v7170 = vpop.f32.mrf.mxu0
  %v7171 = vadd.f32 %v6722, %v7170
  %v7172 = vpop.f32.mrf.mxu0
  %v7173 = vadd.f32 %v6724, %v7172
  %7174 = vmatmul.bf16.gmra.mxu0 %v5942
  %v7175 = vpop.f32.mrf.mxu0
  %v7176 = vadd.f32 %v6727, %v7175
  %v7177 = vpop.f32.mrf.mxu0
  %v7178 = vadd.f32 %v6729, %v7177
  %7179 = vmatmul.bf16.gmra.mxu0 %v5945
  %v7180 = vpop.f32.mrf.mxu0
  %v7181 = vadd.f32 %v6732, %v7180
  %v7182 = vpop.f32.mrf.mxu0
  %v7183 = vadd.f32 %v6734, %v7182
  %7184 = vmatmul.bf16.gmra.mxu0 %v5948
  %v7185 = vpop.f32.mrf.mxu0
  %v7186 = vadd.f32 %v6737, %v7185
  %v7187 = vpop.f32.mrf.mxu0
  %v7188 = vadd.f32 %v6739, %v7187
  %7189 = vmatmul.bf16.gmra.mxu0 %v5951
  %v7190 = vpop.f32.mrf.mxu0
  %v7191 = vadd.f32 %v6742, %v7190
  %v7192 = vpop.f32.mrf.mxu0
  %v7193 = vadd.f32 %v6744, %v7192
  %7194 = vmatmul.bf16.gmra.mxu0 %v5954
  %v7195 = vpop.f32.mrf.mxu0
  %v7196 = vadd.f32 %v6747, %v7195
  %v7197 = vpop.f32.mrf.mxu0
  %v7198 = vadd.f32 %v6749, %v7197
  %7199 = vmatmul.bf16.gmra.mxu0 %v5957
  %v7200 = vpop.f32.mrf.mxu0
  %v7201 = vadd.f32 %v6752, %v7200
  %v7202 = vpop.f32.mrf.mxu0
  %v7203 = vadd.f32 %v6754, %v7202
  %7204 = vmatmul.bf16.gmra.mxu0 %v5960
  %v7205 = vpop.f32.mrf.mxu0
  %v7206 = vadd.f32 %v6757, %v7205
  %v7207 = vpop.f32.mrf.mxu0
  %v7208 = vadd.f32 %v6759, %v7207
  %7209 = vmatmul.bf16.gmra.mxu0 %v5963
  %v7210 = vpop.f32.mrf.mxu0
  %v7211 = vadd.f32 %v6762, %v7210
  %v7212 = vpop.f32.mrf.mxu0
  %v7213 = vadd.f32 %v6764, %v7212
  %7214 = vmatmul.bf16.gmra.mxu0 %v5966
  %v7215 = vpop.f32.mrf.mxu0
  %v7216 = vadd.f32 %v6767, %v7215
  %v7217 = vpop.f32.mrf.mxu0
  %v7218 = vadd.f32 %v6769, %v7217
  %7219 = vmatmul.bf16.gmra.mxu0 %v5969
  %v7220 = vpop.f32.mrf.mxu0
  %v7221 = vadd.f32 %v6772, %v7220
  %v7222 = vpop.f32.mrf.mxu0
  %v7223 = vadd.f32 %v6774, %v7222
  %7224 = vmatmul.bf16.gmra.mxu0 %v5972
  %v7225 = vpop.f32.mrf.mxu0
  %v7226 = vadd.f32 %v6777, %v7225
  %v7227 = vpop.f32.mrf.mxu0
  %v7228 = vadd.f32 %v6779, %v7227
  %7229 = vmatmul.bf16.gmra.mxu0 %v5975
  %v7230 = vpop.f32.mrf.mxu0
  %v7231 = vadd.f32 %v6782, %v7230
  %v7232 = vpop.f32.mrf.mxu0
  %v7233 = vadd.f32 %v6784, %v7232
  %7234 = vmatmul.bf16.gmra.mxu0 %v5978
  %v7235 = vpop.f32.mrf.mxu0
  %v7236 = vadd.f32 %v6787, %v7235
  %v7237 = vpop.f32.mrf.mxu0
  %v7238 = vadd.f32 %v6789, %v7237
  %7239 = vmatmul.bf16.gmra.mxu0 %v5981
  %v7240 = vpop.f32.mrf.mxu0
  %v7241 = vadd.f32 %v6792, %v7240
  %v7242 = vpop.f32.mrf.mxu0
  %v7243 = vadd.f32 %v6794, %v7242
  %7244 = vmatmul.bf16.gmra.mxu0 %v5984
  %v7245 = vpop.f32.mrf.mxu0
  %v7246 = vadd.f32 %v6797, %v7245
  %v7247 = vpop.f32.mrf.mxu0
  %v7248 = vadd.f32 %v6799, %v7247
  %7249 = vmatmul.bf16.gmra.mxu0 %v5987
  %v7250 = vpop.f32.mrf.mxu0
  %v7251 = vadd.f32 %v6802, %v7250
  %v7252 = vpop.f32.mrf.mxu0
  %v7253 = vadd.f32 %v6804, %v7252
  %7254 = vmatmul.bf16.gmra.mxu0 %v5990
  %v7255 = vpop.f32.mrf.mxu0
  %v7256 = vadd.f32 %v6807, %v7255
  %v7257 = vpop.f32.mrf.mxu0
  %v7258 = vadd.f32 %v6809, %v7257
  %7259 = vmatmul.bf16.gmra.mxu0 %v5993
  %v7260 = vpop.f32.mrf.mxu0
  %v7261 = vadd.f32 %v6812, %v7260
  %v7262 = vpop.f32.mrf.mxu0
  %v7263 = vadd.f32 %v6814, %v7262
  %7264 = vmatmul.bf16.gmra.mxu0 %v5996
  %v7265 = vpop.f32.mrf.mxu0
  %v7266 = vadd.f32 %v6817, %v7265
  %v7267 = vpop.f32.mrf.mxu0
  %v7268 = vadd.f32 %v6819, %v7267
  %7269 = vmatmul.bf16.gmra.mxu0 %v5999
  %v7270 = vpop.f32.mrf.mxu0
  %v7271 = vadd.f32 %v6822, %v7270
  %v7272 = vpop.f32.mrf.mxu0
  %v7273 = vadd.f32 %v6824, %v7272
  %7274 = vmatmul.bf16.gmra.mxu0 %v6002
  %v7275 = vpop.f32.mrf.mxu0
  %v7276 = vadd.f32 %v6827, %v7275
  %v7277 = vpop.f32.mrf.mxu0
  %v7278 = vadd.f32 %v6829, %v7277
  %7279 = vmatmul.bf16.gmra.mxu0 %v6005
  %v7280 = vpop.f32.mrf.mxu0
  %v7281 = vadd.f32 %v6832, %v7280
  %v7282 = vpop.f32.mrf.mxu0
  %v7283 = vadd.f32 %v6834, %v7282
  %7284 = vmatmul.bf16.gmra.mxu0 %v6008
  %v7285 = vpop.f32.mrf.mxu0
  %v7286 = vadd.f32 %v6837, %v7285
  %v7287 = vpop.f32.mrf.mxu0
  %v7288 = vadd.f32 %v6839, %v7287
  %7289 = vmatmul.bf16.gmra.mxu0 %v6011
  %v7290 = vpop.f32.mrf.mxu0
  %v7291 = vadd.f32 %v6842, %v7290
  %v7292 = vpop.f32.mrf.mxu0
  %v7293 = vadd.f32 %v6844, %v7292
  %7294 = vmatmul.bf16.gmra.mxu0 %v6014
  %v7295 = vpop.f32.mrf.mxu0
  %v7296 = vadd.f32 %v6847, %v7295
  %v7297 = vpop.f32.mrf.mxu0
  %v7298 = vadd.f32 %v6849, %v7297
  %7299 = vmatmul.bf16.gmra.mxu0 %v6017
  %v7300 = vpop.f32.mrf.mxu0
  %v7301 = vadd.f32 %v6852, %v7300
  %v7302 = vpop.f32.mrf.mxu0
  %v7303 = vadd.f32 %v6854, %v7302
  %7304 = vmatmul.bf16.gmra.mxu0 %v6020
  %v7305 = vpop.f32.mrf.mxu0
  %v7306 = vadd.f32 %v6857, %v7305
  %v7307 = vpop.f32.mrf.mxu0
  %v7308 = vadd.f32 %v6859, %v7307
  %7309 = vmatmul.bf16.gmra.mxu0 %v6023
  %v7310 = vpop.f32.mrf.mxu0
  %v7311 = vadd.f32 %v6862, %v7310
  %v7312 = vpop.f32.mrf.mxu0
  %v7313 = vadd.f32 %v6864, %v7312
  %7314 = vmatmul.bf16.gmra.mxu0 %v6026
  %v7315 = vpop.f32.mrf.mxu0
  %v7316 = vadd.f32 %v6867, %v7315
  %v7317 = vpop.f32.mrf.mxu0
  %v7318 = vadd.f32 %v6869, %v7317
  %7319 = vmatmul.bf16.gmra.mxu0 %v6029
  %v7320 = vpop.f32.mrf.mxu0
  %v7321 = vadd.f32 %v6872, %v7320
  %v7322 = vpop.f32.mrf.mxu0
  %v7323 = vadd.f32 %v6874, %v7322
  %7324 = vmatmul.bf16.gmra.mxu0 %v6032
  %v7325 = vpop.f32.mrf.mxu0
  %v7326 = vadd.f32 %v6877, %v7325
  %v7327 = vpop.f32.mrf.mxu0
  %v7328 = vadd.f32 %v6879, %v7327
  %7329 = vmatmul.bf16.gmra.mxu0 %v6035
  %v7330 = vpop.f32.mrf.mxu0
  %v7331 = vadd.f32 %v6882, %v7330
  %v7332 = vpop.f32.mrf.mxu0
  %v7333 = vadd.f32 %v6884, %v7332
  %7334 = vmatmul.bf16.gmra.mxu0 %v6038
  %v7335 = vpop.f32.mrf.mxu0
  %v7336 = vadd.f32 %v6887, %v7335
  %v7337 = vpop.f32.mrf.mxu0
  %v7338 = vadd.f32 %v6889, %v7337
  %7339 = vmatmul.bf16.gmra.mxu0 %v6041
  %v7340 = vpop.f32.mrf.mxu0
  %v7341 = vadd.f32 %v6892, %v7340
  %v7342 = vpop.f32.mrf.mxu0
  %v7343 = vadd.f32 %v6894, %v7342
  %7344 = vmatmul.bf16.gmra.mxu0 %v6044
  %v7345 = vpop.f32.mrf.mxu0
  %v7346 = vadd.f32 %v6897, %v7345
  %v7347 = vpop.f32.mrf.mxu0
  %v7348 = vadd.f32 %v6899, %v7347
  %7349 = vmatmul.bf16.gmra.mxu0 %v6047
  %v7350 = vpop.f32.mrf.mxu0
  %v7351 = vadd.f32 %v6902, %v7350
  %v7352 = vpop.f32.mrf.mxu0
  %v7353 = vadd.f32 %v6904, %v7352
  %7354 = vmatmul.bf16.gmra.mxu0 %v6050
  %v7355 = vpop.f32.mrf.mxu0
  %v7356 = vadd.f32 %v6907, %v7355
  %v7357 = vpop.f32.mrf.mxu0
  %v7358 = vadd.f32 %v6909, %v7357
  %7359 = vmatmul.bf16.gmra.mxu0 %v6053
  %v7360 = vpop.f32.mrf.mxu0
  %v7361 = vadd.f32 %v6912, %v7360
  %v7362 = vpop.f32.mrf.mxu0
  %v7363 = vadd.f32 %v6914, %v7362
  %7364 = vmatmul.bf16.gmra.mxu0 %v6056
  %v7365 = vpop.f32.mrf.mxu0
  %v7366 = vadd.f32 %v6917, %v7365
  %v7367 = vpop.f32.mrf.mxu0
  %v7368 = vadd.f32 %v6919, %v7367
  %7369 = vmatmul.bf16.gmra.mxu0 %v6059
  %v7370 = vpop.f32.mrf.mxu0
  %v7371 = vadd.f32 %v6922, %v7370
  %v7372 = vpop.f32.mrf.mxu0
  %v7373 = vadd.f32 %v6924, %v7372
  %7374 = vmatmul.bf16.gmra.mxu0 %v6062
  %v7375 = vpop.f32.mrf.mxu0
  %v7376 = vadd.f32 %v6927, %v7375
  %v7377 = vpop.f32.mrf.mxu0
  %v7378 = vadd.f32 %v6929, %v7377
  %7379 = vmatmul.bf16.gmra.mxu0 %v6065
  %v7380 = vpop.f32.mrf.mxu0
  %v7381 = vadd.f32 %v6932, %v7380
  %v7382 = vpop.f32.mrf.mxu0
  %v7383 = vadd.f32 %v6934, %v7382
  %7384 = vmatmul.bf16.gmra.mxu0 %v6068
  %v7385 = vpop.f32.mrf.mxu0
  %v7386 = vadd.f32 %v6937, %v7385
  %v7387 = vpop.f32.mrf.mxu0
  %v7388 = vadd.f32 %v6939, %v7387
  %7389 = vmatmul.bf16.gmra.mxu0 %v6071
  %v7390 = vpop.f32.mrf.mxu0
  %v7391 = vadd.f32 %v6942, %v7390
  %v7392 = vpop.f32.mrf.mxu0
  %v7393 = vadd.f32 %v6944, %v7392
  %7394 = vmatmul.bf16.gmra.mxu0 %v6074
  %v7395 = vpop.f32.mrf.mxu0
  %v7396 = vadd.f32 %v6947, %v7395
  %v7397 = vpop.f32.mrf.mxu0
  %v7398 = vadd.f32 %v6949, %v7397
  %7399 = vmatmul.bf16.gmra.mxu0 %v6077
  %v7400 = vpop.f32.mrf.mxu0
  %v7401 = vadd.f32 %v6952, %v7400
  %v7402 = vpop.f32.mrf.mxu0
  %v7403 = vadd.f32 %v6954, %v7402
  %7404 = vmatmul.bf16.gmra.mxu0 %v6080
  %v7405 = vpop.f32.mrf.mxu0
  %v7406 = vadd.f32 %v6957, %v7405
  %v7407 = vpop.f32.mrf.mxu0
  %v7408 = vadd.f32 %v6959, %v7407
  %7409 = vmatmul.bf16.gmra.mxu0 %v6083
  %v7410 = vpop.f32.mrf.mxu0
  %v7411 = vadd.f32 %v6962, %v7410
  %v7412 = vpop.f32.mrf.mxu0
  %v7413 = vadd.f32 %v6964, %v7412
  %7414 = vmatmul.bf16.gmra.mxu0 %v6086
  %v7415 = vpop.f32.mrf.mxu0
  %v7416 = vadd.f32 %v6967, %v7415
  %v7417 = vpop.f32.mrf.mxu0
  %v7418 = vadd.f32 %v6969, %v7417
  %7419 = vmatmul.bf16.gmra.mxu0 %v6089
  %v7420 = vpop.f32.mrf.mxu0
  %v7421 = vadd.f32 %v6972, %v7420
  %v7422 = vpop.f32.mrf.mxu0
  %v7423 = vadd.f32 %v6974, %v7422
  %7424 = vmatmul.bf16.gmra.mxu0 %v6092
  %v7425 = vpop.f32.mrf.mxu0
  %v7426 = vadd.f32 %v6977, %v7425
  %v7427 = vpop.f32.mrf.mxu0
  %v7428 = vadd.f32 %v6979, %v7427
  %7429 = vmatmul.bf16.gmra.mxu0 %v6095
  %v7430 = vpop.f32.mrf.mxu0
  %v7431 = vadd.f32 %v6982, %v7430
  %v7432 = vpop.f32.mrf.mxu0
  %v7433 = vadd.f32 %v6984, %v7432
  %7434 = vdwg.mxu0
  %7435 = vmatpush.bf16.msra.mxu0 0
  %7436 = vmatpush.bf16.msra.mxu0 0
  %7437 = vmatpush.bf16.msra.mxu0 %v4952
  %7438 = vmatpush.bf16.msra.mxu0 %v4951
  %7439 = vmatpush.bf16.msra.mxu0 %v4950
  %7440 = vmatpush.bf16.msra.mxu0 %v4949
  %7441 = vmatpush.bf16.msra.mxu0 %v4948
  %7442 = vmatpush.bf16.msra.mxu0 %v4947
  %7443 = vmatmul.bf16.gmra.mxu0 %v6274
  %v7444 = vpop.f32.mrf.mxu0
  %v7445 = vadd.f32 %v6996, %v7444
  %v7446 = vpop.f32.mrf.mxu0
  %v7447 = vadd.f32 %v6998, %v7446
  %7448 = vmatmul.bf16.gmra.mxu0 %v6277
  %v7449 = vpop.f32.mrf.mxu0
  %v7450 = vadd.f32 %v7001, %v7449
  %v7451 = vpop.f32.mrf.mxu0
  %v7452 = vadd.f32 %v7003, %v7451
  %7453 = vmatmul.bf16.gmra.mxu0 %v6280
  %v7454 = vpop.f32.mrf.mxu0
  %v7455 = vadd.f32 %v7006, %v7454
  %v7456 = vpop.f32.mrf.mxu0
  %v7457 = vadd.f32 %v7008, %v7456
  %7458 = vmatmul.bf16.gmra.mxu0 %v6283
  %v7459 = vpop.f32.mrf.mxu0
  %v7460 = vadd.f32 %v7011, %v7459
  %v7461 = vpop.f32.mrf.mxu0
  %v7462 = vadd.f32 %v7013, %v7461
  %7463 = vmatmul.bf16.gmra.mxu0 %v6286
  %v7464 = vpop.f32.mrf.mxu0
  %v7465 = vadd.f32 %v7016, %v7464
  %v7466 = vpop.f32.mrf.mxu0
  %v7467 = vadd.f32 %v7018, %v7466
  %7468 = vmatmul.bf16.gmra.mxu0 %v6289
  %v7469 = vpop.f32.mrf.mxu0
  %v7470 = vadd.f32 %v7021, %v7469
  %v7471 = vpop.f32.mrf.mxu0
  %v7472 = vadd.f32 %v7023, %v7471
  %7473 = vmatmul.bf16.gmra.mxu0 %v6292
  %v7474 = vpop.f32.mrf.mxu0
  %v7475 = vadd.f32 %v7026, %v7474
  %v7476 = vpop.f32.mrf.mxu0
  %v7477 = vadd.f32 %v7028, %v7476
  %7478 = vmatmul.bf16.gmra.mxu0 %v6295
  %v7479 = vpop.f32.mrf.mxu0
  %v7480 = vadd.f32 %v7031, %v7479
  %v7481 = vpop.f32.mrf.mxu0
  %v7482 = vadd.f32 %v7033, %v7481
  %7483 = vmatmul.bf16.gmra.mxu0 %v6298
  %v7484 = vpop.f32.mrf.mxu0
  %v7485 = vadd.f32 %v7036, %v7484
  %v7486 = vpop.f32.mrf.mxu0
  %v7487 = vadd.f32 %v7038, %v7486
  %7488 = vmatmul.bf16.gmra.mxu0 %v6301
  %v7489 = vpop.f32.mrf.mxu0
  %v7490 = vadd.f32 %v7041, %v7489
  %v7491 = vpop.f32.mrf.mxu0
  %v7492 = vadd.f32 %v7043, %v7491
  %7493 = vmatmul.bf16.gmra.mxu0 %v6304
  %v7494 = vpop.f32.mrf.mxu0
  %v7495 = vadd.f32 %v7046, %v7494
  %v7496 = vpop.f32.mrf.mxu0
  %v7497 = vadd.f32 %v7048, %v7496
  %7498 = vmatmul.bf16.gmra.mxu0 %v6307
  %v7499 = vpop.f32.mrf.mxu0
  %v7500 = vadd.f32 %v7051, %v7499
  %v7501 = vpop.f32.mrf.mxu0
  %v7502 = vadd.f32 %v7053, %v7501
  %7503 = vmatmul.bf16.gmra.mxu0 %v6310
  %v7504 = vpop.f32.mrf.mxu0
  %v7505 = vadd.f32 %v7056, %v7504
  %v7506 = vpop.f32.mrf.mxu0
  %v7507 = vadd.f32 %v7058, %v7506
  %7508 = vmatmul.bf16.gmra.mxu0 %v6313
  %v7509 = vpop.f32.mrf.mxu0
  %v7510 = vadd.f32 %v7061, %v7509
  %v7511 = vpop.f32.mrf.mxu0
  %v7512 = vadd.f32 %v7063, %v7511
  %7513 = vmatmul.bf16.gmra.mxu0 %v6316
  %v7514 = vpop.f32.mrf.mxu0
  %v7515 = vadd.f32 %v7066, %v7514
  %v7516 = vpop.f32.mrf.mxu0
  %v7517 = vadd.f32 %v7068, %v7516
  %7518 = vmatmul.bf16.gmra.mxu0 %v6319
  %v7519 = vpop.f32.mrf.mxu0
  %v7520 = vadd.f32 %v7071, %v7519
  %v7521 = vpop.f32.mrf.mxu0
  %v7522 = vadd.f32 %v7073, %v7521
  %7523 = vmatmul.bf16.gmra.mxu0 %v6322
  %v7524 = vpop.f32.mrf.mxu0
  %v7525 = vadd.f32 %v7076, %v7524
  %v7526 = vpop.f32.mrf.mxu0
  %v7527 = vadd.f32 %v7078, %v7526
  %7528 = vmatmul.bf16.gmra.mxu0 %v6325
  %v7529 = vpop.f32.mrf.mxu0
  %v7530 = vadd.f32 %v7081, %v7529
  %v7531 = vpop.f32.mrf.mxu0
  %v7532 = vadd.f32 %v7083, %v7531
  %7533 = vmatmul.bf16.gmra.mxu0 %v6328
  %v7534 = vpop.f32.mrf.mxu0
  %v7535 = vadd.f32 %v7086, %v7534
  %v7536 = vpop.f32.mrf.mxu0
  %v7537 = vadd.f32 %v7088, %v7536
  %7538 = vmatmul.bf16.gmra.mxu0 %v6331
  %v7539 = vpop.f32.mrf.mxu0
  %v7540 = vadd.f32 %v7091, %v7539
  %v7541 = vpop.f32.mrf.mxu0
  %v7542 = vadd.f32 %v7093, %v7541
  %7543 = vmatmul.bf16.gmra.mxu0 %v6334
  %v7544 = vpop.f32.mrf.mxu0
  %v7545 = vadd.f32 %v7096, %v7544
  %v7546 = vpop.f32.mrf.mxu0
  %v7547 = vadd.f32 %v7098, %v7546
  %7548 = vmatmul.bf16.gmra.mxu0 %v6337
  %v7549 = vpop.f32.mrf.mxu0
  %v7550 = vadd.f32 %v7101, %v7549
  %v7551 = vpop.f32.mrf.mxu0
  %v7552 = vadd.f32 %v7103, %v7551
  %7553 = vmatmul.bf16.gmra.mxu0 %v6340
  %v7554 = vpop.f32.mrf.mxu0
  %v7555 = vadd.f32 %v7106, %v7554
  %v7556 = vpop.f32.mrf.mxu0
  %v7557 = vadd.f32 %v7108, %v7556
  %7558 = vmatmul.bf16.gmra.mxu0 %v6343
  %v7559 = vpop.f32.mrf.mxu0
  %v7560 = vadd.f32 %v7111, %v7559
  %v7561 = vpop.f32.mrf.mxu0
  %v7562 = vadd.f32 %v7113, %v7561
  %7563 = vmatmul.bf16.gmra.mxu0 %v6346
  %v7564 = vpop.f32.mrf.mxu0
  %v7565 = vadd.f32 %v7116, %v7564
  %v7566 = vpop.f32.mrf.mxu0
  %v7567 = vadd.f32 %v7118, %v7566
  %7568 = vmatmul.bf16.gmra.mxu0 %v6349
  %v7569 = vpop.f32.mrf.mxu0
  %v7570 = vadd.f32 %v7121, %v7569
  %v7571 = vpop.f32.mrf.mxu0
  %v7572 = vadd.f32 %v7123, %v7571
  %7573 = vmatmul.bf16.gmra.mxu0 %v6352
  %v7574 = vpop.f32.mrf.mxu0
  %v7575 = vadd.f32 %v7126, %v7574
  %v7576 = vpop.f32.mrf.mxu0
  %v7577 = vadd.f32 %v7128, %v7576
  %7578 = vmatmul.bf16.gmra.mxu0 %v6355
  %v7579 = vpop.f32.mrf.mxu0
  %v7580 = vadd.f32 %v7131, %v7579
  %v7581 = vpop.f32.mrf.mxu0
  %v7582 = vadd.f32 %v7133, %v7581
  %7583 = vmatmul.bf16.gmra.mxu0 %v6358
  %v7584 = vpop.f32.mrf.mxu0
  %v7585 = vadd.f32 %v7136, %v7584
  %v7586 = vpop.f32.mrf.mxu0
  %v7587 = vadd.f32 %v7138, %v7586
  %7588 = vmatmul.bf16.gmra.mxu0 %v6361
  %v7589 = vpop.f32.mrf.mxu0
  %v7590 = vadd.f32 %v7141, %v7589
  %v7591 = vpop.f32.mrf.mxu0
  %v7592 = vadd.f32 %v7143, %v7591
  %7593 = vmatmul.bf16.gmra.mxu0 %v6364
  %v7594 = vpop.f32.mrf.mxu0
  %v7595 = vadd.f32 %v7146, %v7594
  %v7596 = vpop.f32.mrf.mxu0
  %v7597 = vadd.f32 %v7148, %v7596
  %7598 = vmatmul.bf16.gmra.mxu0 %v6367
  %v7599 = vpop.f32.mrf.mxu0
  %v7600 = vadd.f32 %v7151, %v7599
  %v7601 = vpop.f32.mrf.mxu0
  %v7602 = vadd.f32 %v7153, %v7601
  %7603 = vmatmul.bf16.gmra.mxu0 %v6370
  %v7604 = vpop.f32.mrf.mxu0
  %v7605 = vadd.f32 %v7156, %v7604
  %v7606 = vpop.f32.mrf.mxu0
  %v7607 = vadd.f32 %v7158, %v7606
  %7608 = vmatmul.bf16.gmra.mxu0 %v6373
  %v7609 = vpop.f32.mrf.mxu0
  %v7610 = vadd.f32 %v7161, %v7609
  %v7611 = vpop.f32.mrf.mxu0
  %v7612 = vadd.f32 %v7163, %v7611
  %7613 = vmatmul.bf16.gmra.mxu0 %v6376
  %v7614 = vpop.f32.mrf.mxu0
  %v7615 = vadd.f32 %v7166, %v7614
  %v7616 = vpop.f32.mrf.mxu0
  %v7617 = vadd.f32 %v7168, %v7616
  %7618 = vmatmul.bf16.gmra.mxu0 %v6379
  %v7619 = vpop.f32.mrf.mxu0
  %v7620 = vadd.f32 %v7171, %v7619
  %v7621 = vpop.f32.mrf.mxu0
  %v7622 = vadd.f32 %v7173, %v7621
  %7623 = vmatmul.bf16.gmra.mxu0 %v6382
  %v7624 = vpop.f32.mrf.mxu0
  %v7625 = vadd.f32 %v7176, %v7624
  %v7626 = vpop.f32.mrf.mxu0
  %v7627 = vadd.f32 %v7178, %v7626
  %7628 = vmatmul.bf16.gmra.mxu0 %v6385
  %v7629 = vpop.f32.mrf.mxu0
  %v7630 = vadd.f32 %v7181, %v7629
  %v7631 = vpop.f32.mrf.mxu0
  %v7632 = vadd.f32 %v7183, %v7631
  %7633 = vmatmul.bf16.gmra.mxu0 %v6388
  %v7634 = vpop.f32.mrf.mxu0
  %v7635 = vadd.f32 %v7186, %v7634
  %v7636 = vpop.f32.mrf.mxu0
  %v7637 = vadd.f32 %v7188, %v7636
  %7638 = vmatmul.bf16.gmra.mxu0 %v6391
  %v7639 = vpop.f32.mrf.mxu0
  %v7640 = vadd.f32 %v7191, %v7639
  %v7641 = vpop.f32.mrf.mxu0
  %v7642 = vadd.f32 %v7193, %v7641
  %7643 = vmatmul.bf16.gmra.mxu0 %v6394
  %v7644 = vpop.f32.mrf.mxu0
  %v7645 = vadd.f32 %v7196, %v7644
  %v7646 = vpop.f32.mrf.mxu0
  %v7647 = vadd.f32 %v7198, %v7646
  %7648 = vmatmul.bf16.gmra.mxu0 %v6397
  %v7649 = vpop.f32.mrf.mxu0
  %v7650 = vadd.f32 %v7201, %v7649
  %v7651 = vpop.f32.mrf.mxu0
  %v7652 = vadd.f32 %v7203, %v7651
  %7653 = vmatmul.bf16.gmra.mxu0 %v6400
  %v7654 = vpop.f32.mrf.mxu0
  %v7655 = vadd.f32 %v7206, %v7654
  %v7656 = vpop.f32.mrf.mxu0
  %v7657 = vadd.f32 %v7208, %v7656
  %7658 = vmatmul.bf16.gmra.mxu0 %v6403
  %v7659 = vpop.f32.mrf.mxu0
  %v7660 = vadd.f32 %v7211, %v7659
  %v7661 = vpop.f32.mrf.mxu0
  %v7662 = vadd.f32 %v7213, %v7661
  %7663 = vmatmul.bf16.gmra.mxu0 %v6406
  %v7664 = vpop.f32.mrf.mxu0
  %v7665 = vadd.f32 %v7216, %v7664
  %v7666 = vpop.f32.mrf.mxu0
  %v7667 = vadd.f32 %v7218, %v7666
  %7668 = vmatmul.bf16.gmra.mxu0 %v6409
  %v7669 = vpop.f32.mrf.mxu0
  %v7670 = vadd.f32 %v7221, %v7669
  %v7671 = vpop.f32.mrf.mxu0
  %v7672 = vadd.f32 %v7223, %v7671
  %7673 = vmatmul.bf16.gmra.mxu0 %v6412
  %v7674 = vpop.f32.mrf.mxu0
  %v7675 = vadd.f32 %v7226, %v7674
  %v7676 = vpop.f32.mrf.mxu0
  %v7677 = vadd.f32 %v7228, %v7676
  %7678 = vmatmul.bf16.gmra.mxu0 %v6415
  %v7679 = vpop.f32.mrf.mxu0
  %v7680 = vadd.f32 %v7231, %v7679
  %v7681 = vpop.f32.mrf.mxu0
  %v7682 = vadd.f32 %v7233, %v7681
  %7683 = vmatmul.bf16.gmra.mxu0 %v6418
  %v7684 = vpop.f32.mrf.mxu0
  %v7685 = vadd.f32 %v7236, %v7684
  %v7686 = vpop.f32.mrf.mxu0
  %v7687 = vadd.f32 %v7238, %v7686
  %7688 = vmatmul.bf16.gmra.mxu0 %v6421
  %v7689 = vpop.f32.mrf.mxu0
  %v7690 = vadd.f32 %v7241, %v7689
  %v7691 = vpop.f32.mrf.mxu0
  %v7692 = vadd.f32 %v7243, %v7691
  %7693 = vmatmul.bf16.gmra.mxu0 %v6424
  %v7694 = vpop.f32.mrf.mxu0
  %v7695 = vadd.f32 %v7246, %v7694
  %v7696 = vpop.f32.mrf.mxu0
  %v7697 = vadd.f32 %v7248, %v7696
  %7698 = vmatmul.bf16.gmra.mxu0 %v6427
  %v7699 = vpop.f32.mrf.mxu0
  %v7700 = vadd.f32 %v7251, %v7699
  %v7701 = vpop.f32.mrf.mxu0
  %v7702 = vadd.f32 %v7253, %v7701
  %7703 = vmatmul.bf16.gmra.mxu0 %v6430
  %v7704 = vpop.f32.mrf.mxu0
  %v7705 = vadd.f32 %v7256, %v7704
  %v7706 = vpop.f32.mrf.mxu0
  %v7707 = vadd.f32 %v7258, %v7706
  %7708 = vmatmul.bf16.gmra.mxu0 %v6433
  %v7709 = vpop.f32.mrf.mxu0
  %v7710 = vadd.f32 %v7261, %v7709
  %v7711 = vpop.f32.mrf.mxu0
  %v7712 = vadd.f32 %v7263, %v7711
  %7713 = vmatmul.bf16.gmra.mxu0 %v6436
  %v7714 = vpop.f32.mrf.mxu0
  %v7715 = vadd.f32 %v7266, %v7714
  %v7716 = vpop.f32.mrf.mxu0
  %v7717 = vadd.f32 %v7268, %v7716
  %7718 = vmatmul.bf16.gmra.mxu0 %v6439
  %v7719 = vpop.f32.mrf.mxu0
  %v7720 = vadd.f32 %v7271, %v7719
  %v7721 = vpop.f32.mrf.mxu0
  %v7722 = vadd.f32 %v7273, %v7721
  %7723 = vmatmul.bf16.gmra.mxu0 %v6442
  %v7724 = vpop.f32.mrf.mxu0
  %v7725 = vadd.f32 %v7276, %v7724
  %v7726 = vpop.f32.mrf.mxu0
  %v7727 = vadd.f32 %v7278, %v7726
  %7728 = vmatmul.bf16.gmra.mxu0 %v6445
  %v7729 = vpop.f32.mrf.mxu0
  %v7730 = vadd.f32 %v7281, %v7729
  %v7731 = vpop.f32.mrf.mxu0
  %v7732 = vadd.f32 %v7283, %v7731
  %7733 = vmatmul.bf16.gmra.mxu0 %v6448
  %v7734 = vpop.f32.mrf.mxu0
  %v7735 = vadd.f32 %v7286, %v7734
  %v7736 = vpop.f32.mrf.mxu0
  %v7737 = vadd.f32 %v7288, %v7736
  %7738 = vmatmul.bf16.gmra.mxu0 %v6451
  %v7739 = vpop.f32.mrf.mxu0
  %v7740 = vadd.f32 %v7291, %v7739
  %v7741 = vpop.f32.mrf.mxu0
  %v7742 = vadd.f32 %v7293, %v7741
  %7743 = vmatmul.bf16.gmra.mxu0 %v6454
  %v7744 = vpop.f32.mrf.mxu0
  %v7745 = vadd.f32 %v7296, %v7744
  %v7746 = vpop.f32.mrf.mxu0
  %v7747 = vadd.f32 %v7298, %v7746
  %7748 = vmatmul.bf16.gmra.mxu0 %v6457
  %v7749 = vpop.f32.mrf.mxu0
  %v7750 = vadd.f32 %v7301, %v7749
  %v7751 = vpop.f32.mrf.mxu0
  %v7752 = vadd.f32 %v7303, %v7751
  %7753 = vmatmul.bf16.gmra.mxu0 %v6460
  %v7754 = vpop.f32.mrf.mxu0
  %v7755 = vadd.f32 %v7306, %v7754
  %v7756 = vpop.f32.mrf.mxu0
  %v7757 = vadd.f32 %v7308, %v7756
  %7758 = vmatmul.bf16.gmra.mxu0 %v6463
  %v7759 = vpop.f32.mrf.mxu0
  %v7760 = vadd.f32 %v7311, %v7759
  %v7761 = vpop.f32.mrf.mxu0
  %v7762 = vadd.f32 %v7313, %v7761
  %7763 = vmatmul.bf16.gmra.mxu0 %v6466
  %v7764 = vpop.f32.mrf.mxu0
  %v7765 = vadd.f32 %v7316, %v7764
  %v7766 = vpop.f32.mrf.mxu0
  %v7767 = vadd.f32 %v7318, %v7766
  %7768 = vmatmul.bf16.gmra.mxu0 %v6469
  %v7769 = vpop.f32.mrf.mxu0
  %v7770 = vadd.f32 %v7321, %v7769
  %v7771 = vpop.f32.mrf.mxu0
  %v7772 = vadd.f32 %v7323, %v7771
  %7773 = vmatmul.bf16.gmra.mxu0 %v6472
  %v7774 = vpop.f32.mrf.mxu0
  %v7775 = vadd.f32 %v7326, %v7774
  %v7776 = vpop.f32.mrf.mxu0
  %v7777 = vadd.f32 %v7328, %v7776
  %7778 = vmatmul.bf16.gmra.mxu0 %v6475
  %v7779 = vpop.f32.mrf.mxu0
  %v7780 = vadd.f32 %v7331, %v7779
  %v7781 = vpop.f32.mrf.mxu0
  %v7782 = vadd.f32 %v7333, %v7781
  %7783 = vmatmul.bf16.gmra.mxu0 %v6478
  %v7784 = vpop.f32.mrf.mxu0
  %v7785 = vadd.f32 %v7336, %v7784
  %v7786 = vpop.f32.mrf.mxu0
  %v7787 = vadd.f32 %v7338, %v7786
  %7788 = vmatmul.bf16.gmra.mxu0 %v6481
  %v7789 = vpop.f32.mrf.mxu0
  %v7790 = vadd.f32 %v7341, %v7789
  %v7791 = vpop.f32.mrf.mxu0
  %v7792 = vadd.f32 %v7343, %v7791
  %7793 = vmatmul.bf16.gmra.mxu0 %v6484
  %v7794 = vpop.f32.mrf.mxu0
  %v7795 = vadd.f32 %v7346, %v7794
  %v7796 = vpop.f32.mrf.mxu0
  %v7797 = vadd.f32 %v7348, %v7796
  %7798 = vmatmul.bf16.gmra.mxu0 %v6487
  %v7799 = vpop.f32.mrf.mxu0
  %v7800 = vadd.f32 %v7351, %v7799
  %v7801 = vpop.f32.mrf.mxu0
  %v7802 = vadd.f32 %v7353, %v7801
  %7803 = vmatmul.bf16.gmra.mxu0 %v6490
  %v7804 = vpop.f32.mrf.mxu0
  %v7805 = vadd.f32 %v7356, %v7804
  %v7806 = vpop.f32.mrf.mxu0
  %v7807 = vadd.f32 %v7358, %v7806
  %7808 = vmatmul.bf16.gmra.mxu0 %v6493
  %v7809 = vpop.f32.mrf.mxu0
  %v7810 = vadd.f32 %v7361, %v7809
  %v7811 = vpop.f32.mrf.mxu0
  %v7812 = vadd.f32 %v7363, %v7811
  %7813 = vmatmul.bf16.gmra.mxu0 %v6496
  %v7814 = vpop.f32.mrf.mxu0
  %v7815 = vadd.f32 %v7366, %v7814
  %v7816 = vpop.f32.mrf.mxu0
  %v7817 = vadd.f32 %v7368, %v7816
  %7818 = vmatmul.bf16.gmra.mxu0 %v6499
  %v7819 = vpop.f32.mrf.mxu0
  %v7820 = vadd.f32 %v7371, %v7819
  %v7821 = vpop.f32.mrf.mxu0
  %v7822 = vadd.f32 %v7373, %v7821
  %7823 = vmatmul.bf16.gmra.mxu0 %v6502
  %v7824 = vpop.f32.mrf.mxu0
  %v7825 = vadd.f32 %v7376, %v7824
  %v7826 = vpop.f32.mrf.mxu0
  %v7827 = vadd.f32 %v7378, %v7826
  %7828 = vmatmul.bf16.gmra.mxu0 %v6505
  %v7829 = vpop.f32.mrf.mxu0
  %v7830 = vadd.f32 %v7381, %v7829
  %v7831 = vpop.f32.mrf.mxu0
  %v7832 = vadd.f32 %v7383, %v7831
  %7833 = vmatmul.bf16.gmra.mxu0 %v6508
  %v7834 = vpop.f32.mrf.mxu0
  %v7835 = vadd.f32 %v7386, %v7834
  %v7836 = vpop.f32.mrf.mxu0
  %v7837 = vadd.f32 %v7388, %v7836
  %7838 = vmatmul.bf16.gmra.mxu0 %v6511
  %v7839 = vpop.f32.mrf.mxu0
  %v7840 = vadd.f32 %v7391, %v7839
  %v7841 = vpop.f32.mrf.mxu0
  %v7842 = vadd.f32 %v7393, %v7841
  %7843 = vmatmul.bf16.gmra.mxu0 %v6514
  %v7844 = vpop.f32.mrf.mxu0
  %v7845 = vadd.f32 %v7396, %v7844
  %v7846 = vpop.f32.mrf.mxu0
  %v7847 = vadd.f32 %v7398, %v7846
  %7848 = vmatmul.bf16.gmra.mxu0 %v6517
  %v7849 = vpop.f32.mrf.mxu0
  %v7850 = vadd.f32 %v7401, %v7849
  %v7851 = vpop.f32.mrf.mxu0
  %v7852 = vadd.f32 %v7403, %v7851
  %7853 = vmatmul.bf16.gmra.mxu0 %v6520
  %v7854 = vpop.f32.mrf.mxu0
  %v7855 = vadd.f32 %v7406, %v7854
  %v7856 = vpop.f32.mrf.mxu0
  %v7857 = vadd.f32 %v7408, %v7856
  %7858 = vmatmul.bf16.gmra.mxu0 %v6523
  %v7859 = vpop.f32.mrf.mxu0
  %v7860 = vadd.f32 %v7411, %v7859
  %v7861 = vpop.f32.mrf.mxu0
  %v7862 = vadd.f32 %v7413, %v7861
  %7863 = vmatmul.bf16.gmra.mxu0 %v6526
  %v7864 = vpop.f32.mrf.mxu0
  %v7865 = vadd.f32 %v7416, %v7864
  %v7866 = vpop.f32.mrf.mxu0
  %v7867 = vadd.f32 %v7418, %v7866
  %7868 = vmatmul.bf16.gmra.mxu0 %v6529
  %v7869 = vpop.f32.mrf.mxu0
  %v7870 = vadd.f32 %v7421, %v7869
  %v7871 = vpop.f32.mrf.mxu0
  %v7872 = vadd.f32 %v7423, %v7871
  %7873 = vmatmul.bf16.gmra.mxu0 %v6532
  %v7874 = vpop.f32.mrf.mxu0
  %v7875 = vadd.f32 %v7426, %v7874
  %v7876 = vpop.f32.mrf.mxu0
  %v7877 = vadd.f32 %v7428, %v7876
  %7878 = vmatmul.bf16.gmra.mxu0 %v6535
  %v7879 = vpop.f32.mrf.mxu0
  %v7880 = vadd.f32 %v7431, %v7879
  %v7881 = vpop.f32.mrf.mxu0
  %v7882 = vadd.f32 %v7433, %v7881
  %7883 = vdwg.mxu0
  %v7884 = vsel %vm2906, %v7445, 0.0
  %7885 = vadd.xlane.f32.xlu0 %v7884
  %v7886 = vpop.xlane.xlu0 %7885
  %v7887 = vsel %vm2906, %v7447, 0.0
  %7888 = vadd.xlane.f32.xlu0 %v7887
  %v7889 = vpop.xlane.xlu0 %7888
  %v7890 = vsel %vm2906, %v7450, 0.0
  %7891 = vadd.xlane.f32.xlu0 %v7890
  %v7892 = vpop.xlane.xlu0 %7891
  %v7893 = vsel %vm2906, %v7452, 0.0
  %7894 = vadd.xlane.f32.xlu0 %v7893
  %v7895 = vpop.xlane.xlu0 %7894
  %v7896 = vsel %vm2906, %v7455, 0.0
  %7897 = vadd.xlane.f32.xlu0 %v7896
  %v7898 = vpop.xlane.xlu0 %7897
  %v7899 = vsel %vm2906, %v7457, 0.0
  %7900 = vadd.xlane.f32.xlu0 %v7899
  %v7901 = vpop.xlane.xlu0 %7900
  %v7902 = vsel %vm2906, %v7460, 0.0
  %7903 = vadd.xlane.f32.xlu0 %v7902
  %v7904 = vpop.xlane.xlu0 %7903
  %v7905 = vsel %vm2906, %v7462, 0.0
  %7906 = vadd.xlane.f32.xlu0 %v7905
  %v7907 = vpop.xlane.xlu0 %7906
  %v7908 = vsel %vm2906, %v7465, 0.0
  %7909 = vadd.xlane.f32.xlu0 %v7908
  %v7910 = vpop.xlane.xlu0 %7909
  %v7911 = vsel %vm2906, %v7467, 0.0
  %7912 = vadd.xlane.f32.xlu0 %v7911
  %v7913 = vpop.xlane.xlu0 %7912
  %v7914 = vsel %vm2906, %v7470, 0.0
  %7915 = vadd.xlane.f32.xlu0 %v7914
  %v7916 = vpop.xlane.xlu0 %7915
  %v7917 = vsel %vm2906, %v7472, 0.0
  %7918 = vadd.xlane.f32.xlu0 %v7917
  %v7919 = vpop.xlane.xlu0 %7918
  %v7920 = vsel %vm2906, %v7475, 0.0
  %7921 = vadd.xlane.f32.xlu0 %v7920
  %v7922 = vpop.xlane.xlu0 %7921
  %v7923 = vsel %vm2906, %v7477, 0.0
  %7924 = vadd.xlane.f32.xlu0 %v7923
  %v7925 = vpop.xlane.xlu0 %7924
  %v7926 = vsel %vm2906, %v7480, 0.0
  %7927 = vadd.xlane.f32.xlu0 %v7926
  %v7928 = vpop.xlane.xlu0 %7927
  %v7929 = vsel %vm2906, %v7482, 0.0
  %7930 = vadd.xlane.f32.xlu0 %v7929
  %v7931 = vpop.xlane.xlu0 %7930
  %v7932 = vsel %vm2906, %v7485, 0.0
  %7933 = vadd.xlane.f32.xlu0 %v7932
  %v7934 = vpop.xlane.xlu0 %7933
  %v7935 = vsel %vm2906, %v7487, 0.0
  %7936 = vadd.xlane.f32.xlu0 %v7935
  %v7937 = vpop.xlane.xlu0 %7936
  %v7938 = vsel %vm2906, %v7490, 0.0
  %7939 = vadd.xlane.f32.xlu0 %v7938
  %v7940 = vpop.xlane.xlu0 %7939
  %v7941 = vsel %vm2906, %v7492, 0.0
  %7942 = vadd.xlane.f32.xlu0 %v7941
  %v7943 = vpop.xlane.xlu0 %7942
  %v7944 = vsel %vm2906, %v7495, 0.0
  %7945 = vadd.xlane.f32.xlu0 %v7944
  %v7946 = vpop.xlane.xlu0 %7945
  %v7947 = vsel %vm2906, %v7497, 0.0
  %7948 = vadd.xlane.f32.xlu0 %v7947
  %v7949 = vpop.xlane.xlu0 %7948
  %v7950 = vsel %vm2906, %v7500, 0.0
  %7951 = vadd.xlane.f32.xlu0 %v7950
  %v7952 = vpop.xlane.xlu0 %7951
  %v7953 = vsel %vm2906, %v7502, 0.0
  %7954 = vadd.xlane.f32.xlu0 %v7953
  %v7955 = vpop.xlane.xlu0 %7954
  %v7956 = vsel %vm2906, %v7505, 0.0
  %7957 = vadd.xlane.f32.xlu0 %v7956
  %v7958 = vpop.xlane.xlu0 %7957
  %v7959 = vsel %vm2906, %v7507, 0.0
  %7960 = vadd.xlane.f32.xlu0 %v7959
  %v7961 = vpop.xlane.xlu0 %7960
  %v7962 = vsel %vm2906, %v7510, 0.0
  %7963 = vadd.xlane.f32.xlu0 %v7962
  %v7964 = vpop.xlane.xlu0 %7963
  %v7965 = vsel %vm2906, %v7512, 0.0
  %7966 = vadd.xlane.f32.xlu0 %v7965
  %v7967 = vpop.xlane.xlu0 %7966
  %v7968 = vsel %vm2906, %v7515, 0.0
  %7969 = vadd.xlane.f32.xlu0 %v7968
  %v7970 = vpop.xlane.xlu0 %7969
  %v7971 = vsel %vm2906, %v7517, 0.0
  %7972 = vadd.xlane.f32.xlu0 %v7971
  %v7973 = vpop.xlane.xlu0 %7972
  %v7974 = vsel %vm2906, %v7520, 0.0
  %7975 = vadd.xlane.f32.xlu0 %v7974
  %v7976 = vpop.xlane.xlu0 %7975
  %v7977 = vsel %vm2906, %v7522, 0.0
  %7978 = vadd.xlane.f32.xlu0 %v7977
  %v7979 = vpop.xlane.xlu0 %7978
  %v7980 = vsel %vm2906, %v7525, 0.0
  %7981 = vadd.xlane.f32.xlu0 %v7980
  %v7982 = vpop.xlane.xlu0 %7981
  %v7983 = vsel %vm2906, %v7527, 0.0
  %7984 = vadd.xlane.f32.xlu0 %v7983
  %v7985 = vpop.xlane.xlu0 %7984
  %v7986 = vsel %vm2906, %v7530, 0.0
  %7987 = vadd.xlane.f32.xlu0 %v7986
  %v7988 = vpop.xlane.xlu0 %7987
  %v7989 = vsel %vm2906, %v7532, 0.0
  %7990 = vadd.xlane.f32.xlu0 %v7989
  %v7991 = vpop.xlane.xlu0 %7990
  %v7992 = vsel %vm2906, %v7535, 0.0
  %7993 = vadd.xlane.f32.xlu0 %v7992
  %v7994 = vpop.xlane.xlu0 %7993
  %v7995 = vsel %vm2906, %v7537, 0.0
  %7996 = vadd.xlane.f32.xlu0 %v7995
  %v7997 = vpop.xlane.xlu0 %7996
  %v7998 = vsel %vm2906, %v7540, 0.0
  %7999 = vadd.xlane.f32.xlu0 %v7998
  %v8000 = vpop.xlane.xlu0 %7999
  %v8001 = vsel %vm2906, %v7542, 0.0
  %8002 = vadd.xlane.f32.xlu0 %v8001
  %v8003 = vpop.xlane.xlu0 %8002
  %v8004 = vsel %vm2906, %v7545, 0.0
  %8005 = vadd.xlane.f32.xlu0 %v8004
  %v8006 = vpop.xlane.xlu0 %8005
  %v8007 = vsel %vm2906, %v7547, 0.0
  %8008 = vadd.xlane.f32.xlu0 %v8007
  %v8009 = vpop.xlane.xlu0 %8008
  %v8010 = vsel %vm2906, %v7550, 0.0
  %8011 = vadd.xlane.f32.xlu0 %v8010
  %v8012 = vpop.xlane.xlu0 %8011
  %v8013 = vsel %vm2906, %v7552, 0.0
  %8014 = vadd.xlane.f32.xlu0 %v8013
  %v8015 = vpop.xlane.xlu0 %8014
  %v8016 = vsel %vm2906, %v7555, 0.0
  %8017 = vadd.xlane.f32.xlu0 %v8016
  %v8018 = vpop.xlane.xlu0 %8017
  %v8019 = vsel %vm2906, %v7557, 0.0
  %8020 = vadd.xlane.f32.xlu0 %v8019
  %v8021 = vpop.xlane.xlu0 %8020
  %v8022 = vsel %vm2906, %v7560, 0.0
  %8023 = vadd.xlane.f32.xlu0 %v8022
  %v8024 = vpop.xlane.xlu0 %8023
  %v8025 = vsel %vm2906, %v7562, 0.0
  %8026 = vadd.xlane.f32.xlu0 %v8025
  %v8027 = vpop.xlane.xlu0 %8026
  %v8028 = vsel %vm2906, %v7565, 0.0
  %8029 = vadd.xlane.f32.xlu0 %v8028
  %v8030 = vpop.xlane.xlu0 %8029
  %v8031 = vsel %vm2906, %v7567, 0.0
  %8032 = vadd.xlane.f32.xlu0 %v8031
  %v8033 = vpop.xlane.xlu0 %8032
  %v8034 = vsel %vm2906, %v7570, 0.0
  %8035 = vadd.xlane.f32.xlu0 %v8034
  %v8036 = vpop.xlane.xlu0 %8035
  %v8037 = vsel %vm2906, %v7572, 0.0
  %8038 = vadd.xlane.f32.xlu0 %v8037
  %v8039 = vpop.xlane.xlu0 %8038
  %v8040 = vsel %vm2906, %v7575, 0.0
  %8041 = vadd.xlane.f32.xlu0 %v8040
  %v8042 = vpop.xlane.xlu0 %8041
  %v8043 = vsel %vm2906, %v7577, 0.0
  %8044 = vadd.xlane.f32.xlu0 %v8043
  %v8045 = vpop.xlane.xlu0 %8044
  %v8046 = vsel %vm2906, %v7580, 0.0
  %8047 = vadd.xlane.f32.xlu0 %v8046
  %v8048 = vpop.xlane.xlu0 %8047
  %v8049 = vsel %vm2906, %v7582, 0.0
  %8050 = vadd.xlane.f32.xlu0 %v8049
  %v8051 = vpop.xlane.xlu0 %8050
  %v8052 = vsel %vm2906, %v7585, 0.0
  %8053 = vadd.xlane.f32.xlu0 %v8052
  %v8054 = vpop.xlane.xlu0 %8053
  %v8055 = vsel %vm2906, %v7587, 0.0
  %8056 = vadd.xlane.f32.xlu0 %v8055
  %v8057 = vpop.xlane.xlu0 %8056
  %v8058 = vsel %vm2906, %v7590, 0.0
  %8059 = vadd.xlane.f32.xlu0 %v8058
  %v8060 = vpop.xlane.xlu0 %8059
  %v8061 = vsel %vm2906, %v7592, 0.0
  %8062 = vadd.xlane.f32.xlu0 %v8061
  %v8063 = vpop.xlane.xlu0 %8062
  %v8064 = vsel %vm2906, %v7595, 0.0
  %8065 = vadd.xlane.f32.xlu0 %v8064
  %v8066 = vpop.xlane.xlu0 %8065
  %v8067 = vsel %vm2906, %v7597, 0.0
  %8068 = vadd.xlane.f32.xlu0 %v8067
  %v8069 = vpop.xlane.xlu0 %8068
  %v8070 = vsel %vm2906, %v7600, 0.0
  %8071 = vadd.xlane.f32.xlu0 %v8070
  %v8072 = vpop.xlane.xlu0 %8071
  %v8073 = vsel %vm2906, %v7602, 0.0
  %8074 = vadd.xlane.f32.xlu0 %v8073
  %v8075 = vpop.xlane.xlu0 %8074
  %v8076 = vsel %vm2906, %v7605, 0.0
  %8077 = vadd.xlane.f32.xlu0 %v8076
  %v8078 = vpop.xlane.xlu0 %8077
  %v8079 = vsel %vm2906, %v7607, 0.0
  %8080 = vadd.xlane.f32.xlu0 %v8079
  %v8081 = vpop.xlane.xlu0 %8080
  %v8082 = vsel %vm2906, %v7610, 0.0
  %8083 = vadd.xlane.f32.xlu0 %v8082
  %v8084 = vpop.xlane.xlu0 %8083
  %v8085 = vsel %vm2906, %v7612, 0.0
  %8086 = vadd.xlane.f32.xlu0 %v8085
  %v8087 = vpop.xlane.xlu0 %8086
  %v8088 = vsel %vm2906, %v7615, 0.0
  %8089 = vadd.xlane.f32.xlu0 %v8088
  %v8090 = vpop.xlane.xlu0 %8089
  %v8091 = vsel %vm2906, %v7617, 0.0
  %8092 = vadd.xlane.f32.xlu0 %v8091
  %v8093 = vpop.xlane.xlu0 %8092
  %v8094 = vsel %vm2906, %v7620, 0.0
  %8095 = vadd.xlane.f32.xlu0 %v8094
  %v8096 = vpop.xlane.xlu0 %8095
  %v8097 = vsel %vm2906, %v7622, 0.0
  %8098 = vadd.xlane.f32.xlu0 %v8097
  %v8099 = vpop.xlane.xlu0 %8098
  %v8100 = vsel %vm2906, %v7625, 0.0
  %8101 = vadd.xlane.f32.xlu0 %v8100
  %v8102 = vpop.xlane.xlu0 %8101
  %v8103 = vsel %vm2906, %v7627, 0.0
  %8104 = vadd.xlane.f32.xlu0 %v8103
  %v8105 = vpop.xlane.xlu0 %8104
  %v8106 = vsel %vm2906, %v7630, 0.0
  %8107 = vadd.xlane.f32.xlu0 %v8106
  %v8108 = vpop.xlane.xlu0 %8107
  %v8109 = vsel %vm2906, %v7632, 0.0
  %8110 = vadd.xlane.f32.xlu0 %v8109
  %v8111 = vpop.xlane.xlu0 %8110
  %v8112 = vsel %vm2906, %v7635, 0.0
  %8113 = vadd.xlane.f32.xlu0 %v8112
  %v8114 = vpop.xlane.xlu0 %8113
  %v8115 = vsel %vm2906, %v7637, 0.0
  %8116 = vadd.xlane.f32.xlu0 %v8115
  %v8117 = vpop.xlane.xlu0 %8116
  %v8118 = vsel %vm2906, %v7640, 0.0
  %8119 = vadd.xlane.f32.xlu0 %v8118
  %v8120 = vpop.xlane.xlu0 %8119
  %v8121 = vsel %vm2906, %v7642, 0.0
  %8122 = vadd.xlane.f32.xlu0 %v8121
  %v8123 = vpop.xlane.xlu0 %8122
  %v8124 = vsel %vm2906, %v7645, 0.0
  %8125 = vadd.xlane.f32.xlu0 %v8124
  %v8126 = vpop.xlane.xlu0 %8125
  %v8127 = vsel %vm2906, %v7647, 0.0
  %8128 = vadd.xlane.f32.xlu0 %v8127
  %v8129 = vpop.xlane.xlu0 %8128
  %v8130 = vsel %vm2906, %v7650, 0.0
  %8131 = vadd.xlane.f32.xlu0 %v8130
  %v8132 = vpop.xlane.xlu0 %8131
  %v8133 = vsel %vm2906, %v7652, 0.0
  %8134 = vadd.xlane.f32.xlu0 %v8133
  %v8135 = vpop.xlane.xlu0 %8134
  %v8136 = vsel %vm2906, %v7655, 0.0
  %8137 = vadd.xlane.f32.xlu0 %v8136
  %v8138 = vpop.xlane.xlu0 %8137
  %v8139 = vsel %vm2906, %v7657, 0.0
  %8140 = vadd.xlane.f32.xlu0 %v8139
  %v8141 = vpop.xlane.xlu0 %8140
  %v8142 = vsel %vm2906, %v7660, 0.0
  %8143 = vadd.xlane.f32.xlu0 %v8142
  %v8144 = vpop.xlane.xlu0 %8143
  %v8145 = vsel %vm2906, %v7662, 0.0
  %8146 = vadd.xlane.f32.xlu0 %v8145
  %v8147 = vpop.xlane.xlu0 %8146
  %v8148 = vsel %vm2906, %v7665, 0.0
  %8149 = vadd.xlane.f32.xlu0 %v8148
  %v8150 = vpop.xlane.xlu0 %8149
  %v8151 = vsel %vm2906, %v7667, 0.0
  %8152 = vadd.xlane.f32.xlu0 %v8151
  %v8153 = vpop.xlane.xlu0 %8152
  %v8154 = vsel %vm2906, %v7670, 0.0
  %8155 = vadd.xlane.f32.xlu0 %v8154
  %v8156 = vpop.xlane.xlu0 %8155
  %v8157 = vsel %vm2906, %v7672, 0.0
  %8158 = vadd.xlane.f32.xlu0 %v8157
  %v8159 = vpop.xlane.xlu0 %8158
  %v8160 = vsel %vm2906, %v7675, 0.0
  %8161 = vadd.xlane.f32.xlu0 %v8160
  %v8162 = vpop.xlane.xlu0 %8161
  %v8163 = vsel %vm2906, %v7677, 0.0
  %8164 = vadd.xlane.f32.xlu0 %v8163
  %v8165 = vpop.xlane.xlu0 %8164
  %v8166 = vsel %vm2906, %v7680, 0.0
  %8167 = vadd.xlane.f32.xlu0 %v8166
  %v8168 = vpop.xlane.xlu0 %8167
  %v8169 = vsel %vm2906, %v7682, 0.0
  %8170 = vadd.xlane.f32.xlu0 %v8169
  %v8171 = vpop.xlane.xlu0 %8170
  %v8172 = vsel %vm2906, %v7685, 0.0
  %8173 = vadd.xlane.f32.xlu0 %v8172
  %v8174 = vpop.xlane.xlu0 %8173
  %v8175 = vsel %vm2906, %v7687, 0.0
  %8176 = vadd.xlane.f32.xlu0 %v8175
  %v8177 = vpop.xlane.xlu0 %8176
  %v8178 = vsel %vm2906, %v7690, 0.0
  %8179 = vadd.xlane.f32.xlu0 %v8178
  %v8180 = vpop.xlane.xlu0 %8179
  %v8181 = vsel %vm2906, %v7692, 0.0
  %8182 = vadd.xlane.f32.xlu0 %v8181
  %v8183 = vpop.xlane.xlu0 %8182
  %v8184 = vsel %vm2906, %v7695, 0.0
  %8185 = vadd.xlane.f32.xlu0 %v8184
  %v8186 = vpop.xlane.xlu0 %8185
  %v8187 = vsel %vm2906, %v7697, 0.0
  %8188 = vadd.xlane.f32.xlu0 %v8187
  %v8189 = vpop.xlane.xlu0 %8188
  %v8190 = vsel %vm2906, %v7700, 0.0
  %8191 = vadd.xlane.f32.xlu0 %v8190
  %v8192 = vpop.xlane.xlu0 %8191
  %v8193 = vsel %vm2906, %v7702, 0.0
  %8194 = vadd.xlane.f32.xlu0 %v8193
  %v8195 = vpop.xlane.xlu0 %8194
  %v8196 = vsel %vm2906, %v7705, 0.0
  %8197 = vadd.xlane.f32.xlu0 %v8196
  %v8198 = vpop.xlane.xlu0 %8197
  %v8199 = vsel %vm2906, %v7707, 0.0
  %8200 = vadd.xlane.f32.xlu0 %v8199
  %v8201 = vpop.xlane.xlu0 %8200
  %v8202 = vsel %vm2906, %v7710, 0.0
  %8203 = vadd.xlane.f32.xlu0 %v8202
  %v8204 = vpop.xlane.xlu0 %8203
  %v8205 = vsel %vm2906, %v7712, 0.0
  %8206 = vadd.xlane.f32.xlu0 %v8205
  %v8207 = vpop.xlane.xlu0 %8206
  %v8208 = vsel %vm2906, %v7715, 0.0
  %8209 = vadd.xlane.f32.xlu0 %v8208
  %v8210 = vpop.xlane.xlu0 %8209
  %v8211 = vsel %vm2906, %v7717, 0.0
  %8212 = vadd.xlane.f32.xlu0 %v8211
  %v8213 = vpop.xlane.xlu0 %8212
  %v8214 = vsel %vm2906, %v7720, 0.0
  %8215 = vadd.xlane.f32.xlu0 %v8214
  %v8216 = vpop.xlane.xlu0 %8215
  %v8217 = vsel %vm2906, %v7722, 0.0
  %8218 = vadd.xlane.f32.xlu0 %v8217
  %v8219 = vpop.xlane.xlu0 %8218
  %v8220 = vsel %vm2906, %v7725, 0.0
  %8221 = vadd.xlane.f32.xlu0 %v8220
  %v8222 = vpop.xlane.xlu0 %8221
  %v8223 = vsel %vm2906, %v7727, 0.0
  %8224 = vadd.xlane.f32.xlu0 %v8223
  %v8225 = vpop.xlane.xlu0 %8224
  %v8226 = vsel %vm2906, %v7730, 0.0
  %8227 = vadd.xlane.f32.xlu0 %v8226
  %v8228 = vpop.xlane.xlu0 %8227
  %v8229 = vsel %vm2906, %v7732, 0.0
  %8230 = vadd.xlane.f32.xlu0 %v8229
  %v8231 = vpop.xlane.xlu0 %8230
  %v8232 = vsel %vm2906, %v7735, 0.0
  %8233 = vadd.xlane.f32.xlu0 %v8232
  %v8234 = vpop.xlane.xlu0 %8233
  %v8235 = vsel %vm2906, %v7737, 0.0
  %8236 = vadd.xlane.f32.xlu0 %v8235
  %v8237 = vpop.xlane.xlu0 %8236
  %v8238 = vsel %vm2906, %v7740, 0.0
  %8239 = vadd.xlane.f32.xlu0 %v8238
  %v8240 = vpop.xlane.xlu0 %8239
  %v8241 = vsel %vm2906, %v7742, 0.0
  %8242 = vadd.xlane.f32.xlu0 %v8241
  %v8243 = vpop.xlane.xlu0 %8242
  %v8244 = vsel %vm2906, %v7745, 0.0
  %8245 = vadd.xlane.f32.xlu0 %v8244
  %v8246 = vpop.xlane.xlu0 %8245
  %v8247 = vsel %vm2906, %v7747, 0.0
  %8248 = vadd.xlane.f32.xlu0 %v8247
  %v8249 = vpop.xlane.xlu0 %8248
  %v8250 = vsel %vm2906, %v7750, 0.0
  %8251 = vadd.xlane.f32.xlu0 %v8250
  %v8252 = vpop.xlane.xlu0 %8251
  %v8253 = vsel %vm2906, %v7752, 0.0
  %8254 = vadd.xlane.f32.xlu0 %v8253
  %v8255 = vpop.xlane.xlu0 %8254
  %v8256 = vsel %vm2906, %v7755, 0.0
  %8257 = vadd.xlane.f32.xlu0 %v8256
  %v8258 = vpop.xlane.xlu0 %8257
  %v8259 = vsel %vm2906, %v7757, 0.0
  %8260 = vadd.xlane.f32.xlu0 %v8259
  %v8261 = vpop.xlane.xlu0 %8260
  %v8262 = vsel %vm2906, %v7760, 0.0
  %8263 = vadd.xlane.f32.xlu0 %v8262
  %v8264 = vpop.xlane.xlu0 %8263
  %v8265 = vsel %vm2906, %v7762, 0.0
  %8266 = vadd.xlane.f32.xlu0 %v8265
  %v8267 = vpop.xlane.xlu0 %8266
  %v8268 = vsel %vm2906, %v7765, 0.0
  %8269 = vadd.xlane.f32.xlu0 %v8268
  %v8270 = vpop.xlane.xlu0 %8269
  %v8271 = vsel %vm2906, %v7767, 0.0
  %8272 = vadd.xlane.f32.xlu0 %v8271
  %v8273 = vpop.xlane.xlu0 %8272
  %v8274 = vsel %vm2906, %v7770, 0.0
  %8275 = vadd.xlane.f32.xlu0 %v8274
  %v8276 = vpop.xlane.xlu0 %8275
  %v8277 = vsel %vm2906, %v7772, 0.0
  %8278 = vadd.xlane.f32.xlu0 %v8277
  %v8279 = vpop.xlane.xlu0 %8278
  %v8280 = vsel %vm2906, %v7775, 0.0
  %8281 = vadd.xlane.f32.xlu0 %v8280
  %v8282 = vpop.xlane.xlu0 %8281
  %v8283 = vsel %vm2906, %v7777, 0.0
  %8284 = vadd.xlane.f32.xlu0 %v8283
  %v8285 = vpop.xlane.xlu0 %8284
  %v8286 = vsel %vm2906, %v7780, 0.0
  %8287 = vadd.xlane.f32.xlu0 %v8286
  %v8288 = vpop.xlane.xlu0 %8287
  %v8289 = vsel %vm2906, %v7782, 0.0
  %8290 = vadd.xlane.f32.xlu0 %v8289
  %v8291 = vpop.xlane.xlu0 %8290
  %v8292 = vsel %vm2906, %v7785, 0.0
  %8293 = vadd.xlane.f32.xlu0 %v8292
  %v8294 = vpop.xlane.xlu0 %8293
  %v8295 = vsel %vm2906, %v7787, 0.0
  %8296 = vadd.xlane.f32.xlu0 %v8295
  %v8297 = vpop.xlane.xlu0 %8296
  %v8298 = vsel %vm2906, %v7790, 0.0
  %8299 = vadd.xlane.f32.xlu0 %v8298
  %v8300 = vpop.xlane.xlu0 %8299
  %v8301 = vsel %vm2906, %v7792, 0.0
  %8302 = vadd.xlane.f32.xlu0 %v8301
  %v8303 = vpop.xlane.xlu0 %8302
  %v8304 = vsel %vm2906, %v7795, 0.0
  %8305 = vadd.xlane.f32.xlu0 %v8304
  %v8306 = vpop.xlane.xlu0 %8305
  %v8307 = vsel %vm2906, %v7797, 0.0
  %8308 = vadd.xlane.f32.xlu0 %v8307
  %v8309 = vpop.xlane.xlu0 %8308
  %v8310 = vsel %vm2906, %v7800, 0.0
  %8311 = vadd.xlane.f32.xlu0 %v8310
  %v8312 = vpop.xlane.xlu0 %8311
  %v8313 = vsel %vm2906, %v7802, 0.0
  %8314 = vadd.xlane.f32.xlu0 %v8313
  %v8315 = vpop.xlane.xlu0 %8314
  %v8316 = vsel %vm2906, %v7805, 0.0
  %8317 = vadd.xlane.f32.xlu0 %v8316
  %v8318 = vpop.xlane.xlu0 %8317
  %v8319 = vsel %vm2906, %v7807, 0.0
  %8320 = vadd.xlane.f32.xlu0 %v8319
  %v8321 = vpop.xlane.xlu0 %8320
  %v8322 = vsel %vm2906, %v7810, 0.0
  %8323 = vadd.xlane.f32.xlu0 %v8322
  %v8324 = vpop.xlane.xlu0 %8323
  %v8325 = vsel %vm2906, %v7812, 0.0
  %8326 = vadd.xlane.f32.xlu0 %v8325
  %v8327 = vpop.xlane.xlu0 %8326
  %v8328 = vsel %vm2906, %v7815, 0.0
  %8329 = vadd.xlane.f32.xlu0 %v8328
  %v8330 = vpop.xlane.xlu0 %8329
  %v8331 = vsel %vm2906, %v7817, 0.0
  %8332 = vadd.xlane.f32.xlu0 %v8331
  %v8333 = vpop.xlane.xlu0 %8332
  %v8334 = vsel %vm2906, %v7820, 0.0
  %8335 = vadd.xlane.f32.xlu0 %v8334
  %v8336 = vpop.xlane.xlu0 %8335
  %v8337 = vsel %vm2906, %v7822, 0.0
  %8338 = vadd.xlane.f32.xlu0 %v8337
  %v8339 = vpop.xlane.xlu0 %8338
  %v8340 = vsel %vm2906, %v7825, 0.0
  %8341 = vadd.xlane.f32.xlu0 %v8340
  %v8342 = vpop.xlane.xlu0 %8341
  %v8343 = vsel %vm2906, %v7827, 0.0
  %8344 = vadd.xlane.f32.xlu0 %v8343
  %v8345 = vpop.xlane.xlu0 %8344
  %v8346 = vsel %vm2906, %v7830, 0.0
  %8347 = vadd.xlane.f32.xlu0 %v8346
  %v8348 = vpop.xlane.xlu0 %8347
  %v8349 = vsel %vm2906, %v7832, 0.0
  %8350 = vadd.xlane.f32.xlu0 %v8349
  %v8351 = vpop.xlane.xlu0 %8350
  %v8352 = vsel %vm2906, %v7835, 0.0
  %8353 = vadd.xlane.f32.xlu0 %v8352
  %v8354 = vpop.xlane.xlu0 %8353
  %v8355 = vsel %vm2906, %v7837, 0.0
  %8356 = vadd.xlane.f32.xlu0 %v8355
  %v8357 = vpop.xlane.xlu0 %8356
  %v8358 = vsel %vm2906, %v7840, 0.0
  %8359 = vadd.xlane.f32.xlu0 %v8358
  %v8360 = vpop.xlane.xlu0 %8359
  %v8361 = vsel %vm2906, %v7842, 0.0
  %8362 = vadd.xlane.f32.xlu0 %v8361
  %v8363 = vpop.xlane.xlu0 %8362
  %v8364 = vsel %vm2906, %v7845, 0.0
  %8365 = vadd.xlane.f32.xlu0 %v8364
  %v8366 = vpop.xlane.xlu0 %8365
  %v8367 = vsel %vm2906, %v7847, 0.0
  %8368 = vadd.xlane.f32.xlu0 %v8367
  %v8369 = vpop.xlane.xlu0 %8368
  %v8370 = vsel %vm2906, %v7850, 0.0
  %8371 = vadd.xlane.f32.xlu0 %v8370
  %v8372 = vpop.xlane.xlu0 %8371
  %v8373 = vsel %vm2906, %v7852, 0.0
  %8374 = vadd.xlane.f32.xlu0 %v8373
  %v8375 = vpop.xlane.xlu0 %8374
  %v8376 = vsel %vm2906, %v7855, 0.0
  %8377 = vadd.xlane.f32.xlu0 %v8376
  %v8378 = vpop.xlane.xlu0 %8377
  %v8379 = vsel %vm2906, %v7857, 0.0
  %8380 = vadd.xlane.f32.xlu0 %v8379
  %v8381 = vpop.xlane.xlu0 %8380
  %v8382 = vsel %vm2906, %v7860, 0.0
  %8383 = vadd.xlane.f32.xlu0 %v8382
  %v8384 = vpop.xlane.xlu0 %8383
  %v8385 = vsel %vm2906, %v7862, 0.0
  %8386 = vadd.xlane.f32.xlu0 %v8385
  %v8387 = vpop.xlane.xlu0 %8386
  %v8388 = vsel %vm2906, %v7865, 0.0
  %8389 = vadd.xlane.f32.xlu0 %v8388
  %v8390 = vpop.xlane.xlu0 %8389
  %v8391 = vsel %vm2906, %v7867, 0.0
  %8392 = vadd.xlane.f32.xlu0 %v8391
  %v8393 = vpop.xlane.xlu0 %8392
  %v8394 = vsel %vm2906, %v7870, 0.0
  %8395 = vadd.xlane.f32.xlu0 %v8394
  %v8396 = vpop.xlane.xlu0 %8395
  %v8397 = vsel %vm2906, %v7872, 0.0
  %8398 = vadd.xlane.f32.xlu0 %v8397
  %v8399 = vpop.xlane.xlu0 %8398
  %v8400 = vsel %vm2906, %v7875, 0.0
  %8401 = vadd.xlane.f32.xlu0 %v8400
  %v8402 = vpop.xlane.xlu0 %8401
  %v8403 = vsel %vm2906, %v7877, 0.0
  %8404 = vadd.xlane.f32.xlu0 %v8403
  %v8405 = vpop.xlane.xlu0 %8404
  %v8406 = vsel %vm2906, %v7880, 0.0
  %8407 = vadd.xlane.f32.xlu0 %v8406
  %v8408 = vpop.xlane.xlu0 %8407
  %v8409 = vsel %vm2906, %v7882, 0.0
  %8410 = vadd.xlane.f32.xlu0 %v8409
  %v8411 = vpop.xlane.xlu0 %8410
  %v8412 = vmul.f32 %v7886, 0.020408163
  %v8413 = vmul.f32 %v7889, 0.020408163
  %v8414 = vmul.f32 %v7892, 0.020408163
  %v8415 = vmul.f32 %v7895, 0.020408163
  %v8416 = vmul.f32 %v7898, 0.020408163
  %v8417 = vmul.f32 %v7901, 0.020408163
  %v8418 = vmul.f32 %v7904, 0.020408163
  %v8419 = vmul.f32 %v7907, 0.020408163
  %v8420 = vmul.f32 %v7910, 0.020408163
  %v8421 = vmul.f32 %v7913, 0.020408163
  %v8422 = vmul.f32 %v7916, 0.020408163
  %v8423 = vmul.f32 %v7919, 0.020408163
  %v8424 = vmul.f32 %v7922, 0.020408163
  %v8425 = vmul.f32 %v7925, 0.020408163
  %v8426 = vmul.f32 %v7928, 0.020408163
  %v8427 = vmul.f32 %v7931, 0.020408163
  %v8428 = vmul.f32 %v7934, 0.020408163
  %v8429 = vmul.f32 %v7937, 0.020408163
  %v8430 = vmul.f32 %v7940, 0.020408163
  %v8431 = vmul.f32 %v7943, 0.020408163
  %v8432 = vmul.f32 %v7946, 0.020408163
  %v8433 = vmul.f32 %v7949, 0.020408163
  %v8434 = vmul.f32 %v7952, 0.020408163
  %v8435 = vmul.f32 %v7955, 0.020408163
  %v8436 = vmul.f32 %v7958, 0.020408163
  %v8437 = vmul.f32 %v7961, 0.020408163
  %v8438 = vmul.f32 %v7964, 0.020408163
  %v8439 = vmul.f32 %v7967, 0.020408163
  %v8440 = vmul.f32 %v7970, 0.020408163
  %v8441 = vmul.f32 %v7973, 0.020408163
  %v8442 = vmul.f32 %v7976, 0.020408163
  %v8443 = vmul.f32 %v7979, 0.020408163
  %v8444 = vmul.f32 %v7982, 0.020408163
  %v8445 = vmul.f32 %v7985, 0.020408163
  %v8446 = vmul.f32 %v7988, 0.020408163
  %v8447 = vmul.f32 %v7991, 0.020408163
  %v8448 = vmul.f32 %v7994, 0.020408163
  %v8449 = vmul.f32 %v7997, 0.020408163
  %v8450 = vmul.f32 %v8000, 0.020408163
  %v8451 = vmul.f32 %v8003, 0.020408163
  %v8452 = vmul.f32 %v8006, 0.020408163
  %v8453 = vmul.f32 %v8009, 0.020408163
  %v8454 = vmul.f32 %v8012, 0.020408163
  %v8455 = vmul.f32 %v8015, 0.020408163
  %v8456 = vmul.f32 %v8018, 0.020408163
  %v8457 = vmul.f32 %v8021, 0.020408163
  %v8458 = vmul.f32 %v8024, 0.020408163
  %v8459 = vmul.f32 %v8027, 0.020408163
  %v8460 = vmul.f32 %v8030, 0.020408163
  %v8461 = vmul.f32 %v8033, 0.020408163
  %v8462 = vmul.f32 %v8036, 0.020408163
  %v8463 = vmul.f32 %v8039, 0.020408163
  %v8464 = vmul.f32 %v8042, 0.020408163
  %v8465 = vmul.f32 %v8045, 0.020408163
  %v8466 = vmul.f32 %v8048, 0.020408163
  %v8467 = vmul.f32 %v8051, 0.020408163
  %v8468 = vmul.f32 %v8054, 0.020408163
  %v8469 = vmul.f32 %v8057, 0.020408163
  %v8470 = vmul.f32 %v8060, 0.020408163
  %v8471 = vmul.f32 %v8063, 0.020408163
  %v8472 = vmul.f32 %v8066, 0.020408163
  %v8473 = vmul.f32 %v8069, 0.020408163
  %v8474 = vmul.f32 %v8072, 0.020408163
  %v8475 = vmul.f32 %v8075, 0.020408163
  %v8476 = vmul.f32 %v8078, 0.020408163
  %v8477 = vmul.f32 %v8081, 0.020408163
  %v8478 = vmul.f32 %v8084, 0.020408163
  %v8479 = vmul.f32 %v8087, 0.020408163
  %v8480 = vmul.f32 %v8090, 0.020408163
  %v8481 = vmul.f32 %v8093, 0.020408163
  %v8482 = vmul.f32 %v8096, 0.020408163
  %v8483 = vmul.f32 %v8099, 0.020408163
  %v8484 = vmul.f32 %v8102, 0.020408163
  %v8485 = vmul.f32 %v8105, 0.020408163
  %v8486 = vmul.f32 %v8108, 0.020408163
  %v8487 = vmul.f32 %v8111, 0.020408163
  %v8488 = vmul.f32 %v8114, 0.020408163
  %v8489 = vmul.f32 %v8117, 0.020408163
  %v8490 = vmul.f32 %v8120, 0.020408163
  %v8491 = vmul.f32 %v8123, 0.020408163
  %v8492 = vmul.f32 %v8126, 0.020408163
  %v8493 = vmul.f32 %v8129, 0.020408163
  %v8494 = vmul.f32 %v8132, 0.020408163
  %v8495 = vmul.f32 %v8135, 0.020408163
  %v8496 = vmul.f32 %v8138, 0.020408163
  %v8497 = vmul.f32 %v8141, 0.020408163
  %v8498 = vmul.f32 %v8144, 0.020408163
  %v8499 = vmul.f32 %v8147, 0.020408163
  %v8500 = vmul.f32 %v8150, 0.020408163
  %v8501 = vmul.f32 %v8153, 0.020408163
  %v8502 = vmul.f32 %v8156, 0.020408163
  %v8503 = vmul.f32 %v8159, 0.020408163
  %v8504 = vmul.f32 %v8162, 0.020408163
  %v8505 = vmul.f32 %v8165, 0.020408163
  %v8506 = vmul.f32 %v8168, 0.020408163
  %v8507 = vmul.f32 %v8171, 0.020408163
  %v8508 = vmul.f32 %v8174, 0.020408163
  %v8509 = vmul.f32 %v8177, 0.020408163
  %v8510 = vmul.f32 %v8180, 0.020408163
  %v8511 = vmul.f32 %v8183, 0.020408163
  %v8512 = vmul.f32 %v8186, 0.020408163
  %v8513 = vmul.f32 %v8189, 0.020408163
  %v8514 = vmul.f32 %v8192, 0.020408163
  %v8515 = vmul.f32 %v8195, 0.020408163
  %v8516 = vmul.f32 %v8198, 0.020408163
  %v8517 = vmul.f32 %v8201, 0.020408163
  %v8518 = vmul.f32 %v8204, 0.020408163
  %v8519 = vmul.f32 %v8207, 0.020408163
  %v8520 = vmul.f32 %v8210, 0.020408163
  %v8521 = vmul.f32 %v8213, 0.020408163
  %v8522 = vmul.f32 %v8216, 0.020408163
  %v8523 = vmul.f32 %v8219, 0.020408163
  %v8524 = vmul.f32 %v8222, 0.020408163
  %v8525 = vmul.f32 %v8225, 0.020408163
  %v8526 = vmul.f32 %v8228, 0.020408163
  %v8527 = vmul.f32 %v8231, 0.020408163
  %v8528 = vmul.f32 %v8234, 0.020408163
  %v8529 = vmul.f32 %v8237, 0.020408163
  %v8530 = vmul.f32 %v8240, 0.020408163
  %v8531 = vmul.f32 %v8243, 0.020408163
  %v8532 = vmul.f32 %v8246, 0.020408163
  %v8533 = vmul.f32 %v8249, 0.020408163
  %v8534 = vmul.f32 %v8252, 0.020408163
  %v8535 = vmul.f32 %v8255, 0.020408163
  %v8536 = vmul.f32 %v8258, 0.020408163
  %v8537 = vmul.f32 %v8261, 0.020408163
  %v8538 = vmul.f32 %v8264, 0.020408163
  %v8539 = vmul.f32 %v8267, 0.020408163
  %v8540 = vmul.f32 %v8270, 0.020408163
  %v8541 = vmul.f32 %v8273, 0.020408163
  %v8542 = vmul.f32 %v8276, 0.020408163
  %v8543 = vmul.f32 %v8279, 0.020408163
  %v8544 = vmul.f32 %v8282, 0.020408163
  %v8545 = vmul.f32 %v8285, 0.020408163
  %v8546 = vmul.f32 %v8288, 0.020408163
  %v8547 = vmul.f32 %v8291, 0.020408163
  %v8548 = vmul.f32 %v8294, 0.020408163
  %v8549 = vmul.f32 %v8297, 0.020408163
  %v8550 = vmul.f32 %v8300, 0.020408163
  %v8551 = vmul.f32 %v8303, 0.020408163
  %v8552 = vmul.f32 %v8306, 0.020408163
  %v8553 = vmul.f32 %v8309, 0.020408163
  %v8554 = vmul.f32 %v8312, 0.020408163
  %v8555 = vmul.f32 %v8315, 0.020408163
  %v8556 = vmul.f32 %v8318, 0.020408163
  %v8557 = vmul.f32 %v8321, 0.020408163
  %v8558 = vmul.f32 %v8324, 0.020408163
  %v8559 = vmul.f32 %v8327, 0.020408163
  %v8560 = vmul.f32 %v8330, 0.020408163
  %v8561 = vmul.f32 %v8333, 0.020408163
  %v8562 = vmul.f32 %v8336, 0.020408163
  %v8563 = vmul.f32 %v8339, 0.020408163
  %v8564 = vmul.f32 %v8342, 0.020408163
  %v8565 = vmul.f32 %v8345, 0.020408163
  %v8566 = vmul.f32 %v8348, 0.020408163
  %v8567 = vmul.f32 %v8351, 0.020408163
  %v8568 = vmul.f32 %v8354, 0.020408163
  %v8569 = vmul.f32 %v8357, 0.020408163
  %v8570 = vmul.f32 %v8360, 0.020408163
  %v8571 = vmul.f32 %v8363, 0.020408163
  %v8572 = vmul.f32 %v8366, 0.020408163
  %v8573 = vmul.f32 %v8369, 0.020408163
  %v8574 = vmul.f32 %v8372, 0.020408163
  %v8575 = vmul.f32 %v8375, 0.020408163
  %v8576 = vmul.f32 %v8378, 0.020408163
  %v8577 = vmul.f32 %v8381, 0.020408163
  %v8578 = vmul.f32 %v8384, 0.020408163
  %v8579 = vmul.f32 %v8387, 0.020408163
  %v8580 = vmul.f32 %v8390, 0.020408163
  %v8581 = vmul.f32 %v8393, 0.020408163
  %v8582 = vmul.f32 %v8396, 0.020408163
  %v8583 = vmul.f32 %v8399, 0.020408163
  %v8584 = vmul.f32 %v8402, 0.020408163
  %v8585 = vmul.f32 %v8405, 0.020408163
  %v8586 = vmul.f32 %v8408, 0.020408163
  %v8587 = vmul.f32 %v8411, 0.020408163
  %v8588 = vsub.f32 %v7445, %v8412
  %v8589 = vsub.f32 %v7447, %v8413
  %v8590 = vsub.f32 %v7450, %v8414
  %v8591 = vsub.f32 %v7452, %v8415
  %v8592 = vsub.f32 %v7455, %v8416
  %v8593 = vsub.f32 %v7457, %v8417
  %v8594 = vsub.f32 %v7460, %v8418
  %v8595 = vsub.f32 %v7462, %v8419
  %v8596 = vsub.f32 %v7465, %v8420
  %v8597 = vsub.f32 %v7467, %v8421
  %v8598 = vsub.f32 %v7470, %v8422
  %v8599 = vsub.f32 %v7472, %v8423
  %v8600 = vsub.f32 %v7475, %v8424
  %v8601 = vsub.f32 %v7477, %v8425
  %v8602 = vsub.f32 %v7480, %v8426
  %v8603 = vsub.f32 %v7482, %v8427
  %v8604 = vsub.f32 %v7485, %v8428
  %v8605 = vsub.f32 %v7487, %v8429
  %v8606 = vsub.f32 %v7490, %v8430
  %v8607 = vsub.f32 %v7492, %v8431
  %v8608 = vsub.f32 %v7495, %v8432
  %v8609 = vsub.f32 %v7497, %v8433
  %v8610 = vsub.f32 %v7500, %v8434
  %v8611 = vsub.f32 %v7502, %v8435
  %v8612 = vsub.f32 %v7505, %v8436
  %v8613 = vsub.f32 %v7507, %v8437
  %v8614 = vsub.f32 %v7510, %v8438
  %v8615 = vsub.f32 %v7512, %v8439
  %v8616 = vsub.f32 %v7515, %v8440
  %v8617 = vsub.f32 %v7517, %v8441
  %v8618 = vsub.f32 %v7520, %v8442
  %v8619 = vsub.f32 %v7522, %v8443
  %v8620 = vsub.f32 %v7525, %v8444
  %v8621 = vsub.f32 %v7527, %v8445
  %v8622 = vsub.f32 %v7530, %v8446
  %v8623 = vsub.f32 %v7532, %v8447
  %v8624 = vsub.f32 %v7535, %v8448
  %v8625 = vsub.f32 %v7537, %v8449
  %v8626 = vsub.f32 %v7540, %v8450
  %v8627 = vsub.f32 %v7542, %v8451
  %v8628 = vsub.f32 %v7545, %v8452
  %v8629 = vsub.f32 %v7547, %v8453
  %v8630 = vsub.f32 %v7550, %v8454
  %v8631 = vsub.f32 %v7552, %v8455
  %v8632 = vsub.f32 %v7555, %v8456
  %v8633 = vsub.f32 %v7557, %v8457
  %v8634 = vsub.f32 %v7560, %v8458
  %v8635 = vsub.f32 %v7562, %v8459
  %v8636 = vsub.f32 %v7565, %v8460
  %v8637 = vsub.f32 %v7567, %v8461
  %v8638 = vsub.f32 %v7570, %v8462
  %v8639 = vsub.f32 %v7572, %v8463
  %v8640 = vsub.f32 %v7575, %v8464
  %v8641 = vsub.f32 %v7577, %v8465
  %v8642 = vsub.f32 %v7580, %v8466
  %v8643 = vsub.f32 %v7582, %v8467
  %v8644 = vsub.f32 %v7585, %v8468
  %v8645 = vsub.f32 %v7587, %v8469
  %v8646 = vsub.f32 %v7590, %v8470
  %v8647 = vsub.f32 %v7592, %v8471
  %v8648 = vsub.f32 %v7595, %v8472
  %v8649 = vsub.f32 %v7597, %v8473
  %v8650 = vsub.f32 %v7600, %v8474
  %v8651 = vsub.f32 %v7602, %v8475
  %v8652 = vsub.f32 %v7605, %v8476
  %v8653 = vsub.f32 %v7607, %v8477
  %v8654 = vsub.f32 %v7610, %v8478
  %v8655 = vsub.f32 %v7612, %v8479
  %v8656 = vsub.f32 %v7615, %v8480
  %v8657 = vsub.f32 %v7617, %v8481
  %v8658 = vsub.f32 %v7620, %v8482
  %v8659 = vsub.f32 %v7622, %v8483
  %v8660 = vsub.f32 %v7625, %v8484
  %v8661 = vsub.f32 %v7627, %v8485
  %v8662 = vsub.f32 %v7630, %v8486
  %v8663 = vsub.f32 %v7632, %v8487
  %v8664 = vsub.f32 %v7635, %v8488
  %v8665 = vsub.f32 %v7637, %v8489
  %v8666 = vsub.f32 %v7640, %v8490
  %v8667 = vsub.f32 %v7642, %v8491
  %v8668 = vsub.f32 %v7645, %v8492
  %v8669 = vsub.f32 %v7647, %v8493
  %v8670 = vsub.f32 %v7650, %v8494
  %v8671 = vsub.f32 %v7652, %v8495
  %v8672 = vsub.f32 %v7655, %v8496
  %v8673 = vsub.f32 %v7657, %v8497
  %v8674 = vsub.f32 %v7660, %v8498
  %v8675 = vsub.f32 %v7662, %v8499
  %v8676 = vsub.f32 %v7665, %v8500
  %v8677 = vsub.f32 %v7667, %v8501
  %v8678 = vsub.f32 %v7670, %v8502
  %v8679 = vsub.f32 %v7672, %v8503
  %v8680 = vsub.f32 %v7675, %v8504
  %v8681 = vsub.f32 %v7677, %v8505
  %v8682 = vsub.f32 %v7680, %v8506
  %v8683 = vsub.f32 %v7682, %v8507
  %v8684 = vsub.f32 %v7685, %v8508
  %v8685 = vsub.f32 %v7687, %v8509
  %v8686 = vsub.f32 %v7690, %v8510
  %v8687 = vsub.f32 %v7692, %v8511
  %v8688 = vsub.f32 %v7695, %v8512
  %v8689 = vsub.f32 %v7697, %v8513
  %v8690 = vsub.f32 %v7700, %v8514
  %v8691 = vsub.f32 %v7702, %v8515
  %v8692 = vsub.f32 %v7705, %v8516
  %v8693 = vsub.f32 %v7707, %v8517
  %v8694 = vsub.f32 %v7710, %v8518
  %v8695 = vsub.f32 %v7712, %v8519
  %v8696 = vsub.f32 %v7715, %v8520
  %v8697 = vsub.f32 %v7717, %v8521
  %v8698 = vsub.f32 %v7720, %v8522
  %v8699 = vsub.f32 %v7722, %v8523
  %v8700 = vsub.f32 %v7725, %v8524
  %v8701 = vsub.f32 %v7727, %v8525
  %v8702 = vsub.f32 %v7730, %v8526
  %v8703 = vsub.f32 %v7732, %v8527
  %v8704 = vsub.f32 %v7735, %v8528
  %v8705 = vsub.f32 %v7737, %v8529
  %v8706 = vsub.f32 %v7740, %v8530
  %v8707 = vsub.f32 %v7742, %v8531
  %v8708 = vsub.f32 %v7745, %v8532
  %v8709 = vsub.f32 %v7747, %v8533
  %v8710 = vsub.f32 %v7750, %v8534
  %v8711 = vsub.f32 %v7752, %v8535
  %v8712 = vsub.f32 %v7755, %v8536
  %v8713 = vsub.f32 %v7757, %v8537
  %v8714 = vsub.f32 %v7760, %v8538
  %v8715 = vsub.f32 %v7762, %v8539
  %v8716 = vsub.f32 %v7765, %v8540
  %v8717 = vsub.f32 %v7767, %v8541
  %v8718 = vsub.f32 %v7770, %v8542
  %v8719 = vsub.f32 %v7772, %v8543
  %v8720 = vsub.f32 %v7775, %v8544
  %v8721 = vsub.f32 %v7777, %v8545
  %v8722 = vsub.f32 %v7780, %v8546
  %v8723 = vsub.f32 %v7782, %v8547
  %v8724 = vsub.f32 %v7785, %v8548
  %v8725 = vsub.f32 %v7787, %v8549
  %v8726 = vsub.f32 %v7790, %v8550
  %v8727 = vsub.f32 %v7792, %v8551
  %v8728 = vsub.f32 %v7795, %v8552
  %v8729 = vsub.f32 %v7797, %v8553
  %v8730 = vsub.f32 %v7800, %v8554
  %v8731 = vsub.f32 %v7802, %v8555
  %v8732 = vsub.f32 %v7805, %v8556
  %v8733 = vsub.f32 %v7807, %v8557
  %v8734 = vsub.f32 %v7810, %v8558
  %v8735 = vsub.f32 %v7812, %v8559
  %v8736 = vsub.f32 %v7815, %v8560
  %v8737 = vsub.f32 %v7817, %v8561
  %v8738 = vsub.f32 %v7820, %v8562
  %v8739 = vsub.f32 %v7822, %v8563
  %v8740 = vsub.f32 %v7825, %v8564
  %v8741 = vsub.f32 %v7827, %v8565
  %v8742 = vsub.f32 %v7830, %v8566
  %v8743 = vsub.f32 %v7832, %v8567
  %v8744 = vsub.f32 %v7835, %v8568
  %v8745 = vsub.f32 %v7837, %v8569
  %v8746 = vsub.f32 %v7840, %v8570
  %v8747 = vsub.f32 %v7842, %v8571
  %v8748 = vsub.f32 %v7845, %v8572
  %v8749 = vsub.f32 %v7847, %v8573
  %v8750 = vsub.f32 %v7850, %v8574
  %v8751 = vsub.f32 %v7852, %v8575
  %v8752 = vsub.f32 %v7855, %v8576
  %v8753 = vsub.f32 %v7857, %v8577
  %v8754 = vsub.f32 %v7860, %v8578
  %v8755 = vsub.f32 %v7862, %v8579
  %v8756 = vsub.f32 %v7865, %v8580
  %v8757 = vsub.f32 %v7867, %v8581
  %v8758 = vsub.f32 %v7870, %v8582
  %v8759 = vsub.f32 %v7872, %v8583
  %v8760 = vsub.f32 %v7875, %v8584
  %v8761 = vsub.f32 %v7877, %v8585
  %v8762 = vsub.f32 %v7880, %v8586
  %v8763 = vsub.f32 %v7882, %v8587
  %v8764 = vmul.f32 %v8588, %v8588
  %v8765 = vmul.f32 %v8589, %v8589
  %v8766 = vmul.f32 %v8590, %v8590
  %v8767 = vmul.f32 %v8591, %v8591
  %v8768 = vmul.f32 %v8592, %v8592
  %v8769 = vmul.f32 %v8593, %v8593
  %v8770 = vmul.f32 %v8594, %v8594
  %v8771 = vmul.f32 %v8595, %v8595
  %v8772 = vmul.f32 %v8596, %v8596
  %v8773 = vmul.f32 %v8597, %v8597
  %v8774 = vmul.f32 %v8598, %v8598
  %v8775 = vmul.f32 %v8599, %v8599
  %v8776 = vmul.f32 %v8600, %v8600
  %v8777 = vmul.f32 %v8601, %v8601
  %v8778 = vmul.f32 %v8602, %v8602
  %v8779 = vmul.f32 %v8603, %v8603
  %v8780 = vmul.f32 %v8604, %v8604
  %v8781 = vmul.f32 %v8605, %v8605
  %v8782 = vmul.f32 %v8606, %v8606
  %v8783 = vmul.f32 %v8607, %v8607
  %v8784 = vmul.f32 %v8608, %v8608
  %v8785 = vmul.f32 %v8609, %v8609
  %v8786 = vmul.f32 %v8610, %v8610
  %v8787 = vmul.f32 %v8611, %v8611
  %v8788 = vmul.f32 %v8612, %v8612
  %v8789 = vmul.f32 %v8613, %v8613
  %v8790 = vmul.f32 %v8614, %v8614
  %v8791 = vmul.f32 %v8615, %v8615
  %v8792 = vmul.f32 %v8616, %v8616
  %v8793 = vmul.f32 %v8617, %v8617
  %v8794 = vmul.f32 %v8618, %v8618
  %v8795 = vmul.f32 %v8619, %v8619
  %v8796 = vmul.f32 %v8620, %v8620
  %v8797 = vmul.f32 %v8621, %v8621
  %v8798 = vmul.f32 %v8622, %v8622
  %v8799 = vmul.f32 %v8623, %v8623
  %v8800 = vmul.f32 %v8624, %v8624
  %v8801 = vmul.f32 %v8625, %v8625
  %v8802 = vmul.f32 %v8626, %v8626
  %v8803 = vmul.f32 %v8627, %v8627
  %v8804 = vmul.f32 %v8628, %v8628
  %v8805 = vmul.f32 %v8629, %v8629
  %v8806 = vmul.f32 %v8630, %v8630
  %v8807 = vmul.f32 %v8631, %v8631
  %v8808 = vmul.f32 %v8632, %v8632
  %v8809 = vmul.f32 %v8633, %v8633
  %v8810 = vmul.f32 %v8634, %v8634
  %v8811 = vmul.f32 %v8635, %v8635
  %v8812 = vmul.f32 %v8636, %v8636
  %v8813 = vmul.f32 %v8637, %v8637
  %v8814 = vmul.f32 %v8638, %v8638
  %v8815 = vmul.f32 %v8639, %v8639
  %v8816 = vmul.f32 %v8640, %v8640
  %v8817 = vmul.f32 %v8641, %v8641
  %v8818 = vmul.f32 %v8642, %v8642
  %v8819 = vmul.f32 %v8643, %v8643
  %v8820 = vmul.f32 %v8644, %v8644
  %v8821 = vmul.f32 %v8645, %v8645
  %v8822 = vmul.f32 %v8646, %v8646
  %v8823 = vmul.f32 %v8647, %v8647
  %v8824 = vmul.f32 %v8648, %v8648
  %v8825 = vmul.f32 %v8649, %v8649
  %v8826 = vmul.f32 %v8650, %v8650
  %v8827 = vmul.f32 %v8651, %v8651
  %v8828 = vmul.f32 %v8652, %v8652
  %v8829 = vmul.f32 %v8653, %v8653
  %v8830 = vmul.f32 %v8654, %v8654
  %v8831 = vmul.f32 %v8655, %v8655
  %v8832 = vmul.f32 %v8656, %v8656
  %v8833 = vmul.f32 %v8657, %v8657
  %v8834 = vmul.f32 %v8658, %v8658
  %v8835 = vmul.f32 %v8659, %v8659
  %v8836 = vmul.f32 %v8660, %v8660
  %v8837 = vmul.f32 %v8661, %v8661
  %v8838 = vmul.f32 %v8662, %v8662
  %v8839 = vmul.f32 %v8663, %v8663
  %v8840 = vmul.f32 %v8664, %v8664
  %v8841 = vmul.f32 %v8665, %v8665
  %v8842 = vmul.f32 %v8666, %v8666
  %v8843 = vmul.f32 %v8667, %v8667
  %v8844 = vmul.f32 %v8668, %v8668
  %v8845 = vmul.f32 %v8669, %v8669
  %v8846 = vmul.f32 %v8670, %v8670
  %v8847 = vmul.f32 %v8671, %v8671
  %v8848 = vmul.f32 %v8672, %v8672
  %v8849 = vmul.f32 %v8673, %v8673
  %v8850 = vmul.f32 %v8674, %v8674
  %v8851 = vmul.f32 %v8675, %v8675
  %v8852 = vmul.f32 %v8676, %v8676
  %v8853 = vmul.f32 %v8677, %v8677
  %v8854 = vmul.f32 %v8678, %v8678
  %v8855 = vmul.f32 %v8679, %v8679
  %v8856 = vmul.f32 %v8680, %v8680
  %v8857 = vmul.f32 %v8681, %v8681
  %v8858 = vmul.f32 %v8682, %v8682
  %v8859 = vmul.f32 %v8683, %v8683
  %v8860 = vmul.f32 %v8684, %v8684
  %v8861 = vmul.f32 %v8685, %v8685
  %v8862 = vmul.f32 %v8686, %v8686
  %v8863 = vmul.f32 %v8687, %v8687
  %v8864 = vmul.f32 %v8688, %v8688
  %v8865 = vmul.f32 %v8689, %v8689
  %v8866 = vmul.f32 %v8690, %v8690
  %v8867 = vmul.f32 %v8691, %v8691
  %v8868 = vmul.f32 %v8692, %v8692
  %v8869 = vmul.f32 %v8693, %v8693
  %v8870 = vmul.f32 %v8694, %v8694
  %v8871 = vmul.f32 %v8695, %v8695
  %v8872 = vmul.f32 %v8696, %v8696
  %v8873 = vmul.f32 %v8697, %v8697
  %v8874 = vmul.f32 %v8698, %v8698
  %v8875 = vmul.f32 %v8699, %v8699
  %v8876 = vmul.f32 %v8700, %v8700
  %v8877 = vmul.f32 %v8701, %v8701
  %v8878 = vmul.f32 %v8702, %v8702
  %v8879 = vmul.f32 %v8703, %v8703
  %v8880 = vmul.f32 %v8704, %v8704
  %v8881 = vmul.f32 %v8705, %v8705
  %v8882 = vmul.f32 %v8706, %v8706
  %v8883 = vmul.f32 %v8707, %v8707
  %v8884 = vmul.f32 %v8708, %v8708
  %v8885 = vmul.f32 %v8709, %v8709
  %v8886 = vmul.f32 %v8710, %v8710
  %v8887 = vmul.f32 %v8711, %v8711
  %v8888 = vmul.f32 %v8712, %v8712
  %v8889 = vmul.f32 %v8713, %v8713
  %v8890 = vmul.f32 %v8714, %v8714
  %v8891 = vmul.f32 %v8715, %v8715
  %v8892 = vmul.f32 %v8716, %v8716
  %v8893 = vmul.f32 %v8717, %v8717
  %v8894 = vmul.f32 %v8718, %v8718
  %v8895 = vmul.f32 %v8719, %v8719
  %v8896 = vmul.f32 %v8720, %v8720
  %v8897 = vmul.f32 %v8721, %v8721
  %v8898 = vmul.f32 %v8722, %v8722
  %v8899 = vmul.f32 %v8723, %v8723
  %v8900 = vmul.f32 %v8724, %v8724
  %v8901 = vmul.f32 %v8725, %v8725
  %v8902 = vmul.f32 %v8726, %v8726
  %v8903 = vmul.f32 %v8727, %v8727
  %v8904 = vmul.f32 %v8728, %v8728
  %v8905 = vmul.f32 %v8729, %v8729
  %v8906 = vmul.f32 %v8730, %v8730
  %v8907 = vmul.f32 %v8731, %v8731
  %v8908 = vmul.f32 %v8732, %v8732
  %v8909 = vmul.f32 %v8733, %v8733
  %v8910 = vmul.f32 %v8734, %v8734
  %v8911 = vmul.f32 %v8735, %v8735
  %v8912 = vmul.f32 %v8736, %v8736
  %v8913 = vmul.f32 %v8737, %v8737
  %v8914 = vmul.f32 %v8738, %v8738
  %v8915 = vmul.f32 %v8739, %v8739
  %v8916 = vmul.f32 %v8740, %v8740
  %v8917 = vmul.f32 %v8741, %v8741
  %v8918 = vmul.f32 %v8742, %v8742
  %v8919 = vmul.f32 %v8743, %v8743
  %v8920 = vmul.f32 %v8744, %v8744
  %v8921 = vmul.f32 %v8745, %v8745
  %v8922 = vmul.f32 %v8746, %v8746
  %v8923 = vmul.f32 %v8747, %v8747
  %v8924 = vmul.f32 %v8748, %v8748
  %v8925 = vmul.f32 %v8749, %v8749
  %v8926 = vmul.f32 %v8750, %v8750
  %v8927 = vmul.f32 %v8751, %v8751
  %v8928 = vmul.f32 %v8752, %v8752
  %v8929 = vmul.f32 %v8753, %v8753
  %v8930 = vmul.f32 %v8754, %v8754
  %v8931 = vmul.f32 %v8755, %v8755
  %v8932 = vmul.f32 %v8756, %v8756
  %v8933 = vmul.f32 %v8757, %v8757
  %v8934 = vmul.f32 %v8758, %v8758
  %v8935 = vmul.f32 %v8759, %v8759
  %v8936 = vmul.f32 %v8760, %v8760
  %v8937 = vmul.f32 %v8761, %v8761
  %v8938 = vmul.f32 %v8762, %v8762
  %v8939 = vmul.f32 %v8763, %v8763
  %v8940 = vsel %vm2906, %v8764, 0.0
  %8941 = vadd.xlane.f32.xlu0 %v8940
  %v8942 = vpop.xlane.xlu0 %8941
  %v8943 = vsel %vm2906, %v8765, 0.0
  %8944 = vadd.xlane.f32.xlu0 %v8943
  %v8945 = vpop.xlane.xlu0 %8944
  %v8946 = vsel %vm2906, %v8766, 0.0
  %8947 = vadd.xlane.f32.xlu0 %v8946
  %v8948 = vpop.xlane.xlu0 %8947
  %v8949 = vsel %vm2906, %v8767, 0.0
  %8950 = vadd.xlane.f32.xlu0 %v8949
  %v8951 = vpop.xlane.xlu0 %8950
  %v8952 = vsel %vm2906, %v8768, 0.0
  %8953 = vadd.xlane.f32.xlu0 %v8952
  %v8954 = vpop.xlane.xlu0 %8953
  %v8955 = vsel %vm2906, %v8769, 0.0
  %8956 = vadd.xlane.f32.xlu0 %v8955
  %v8957 = vpop.xlane.xlu0 %8956
  %v8958 = vsel %vm2906, %v8770, 0.0
  %8959 = vadd.xlane.f32.xlu0 %v8958
  %v8960 = vpop.xlane.xlu0 %8959
  %v8961 = vsel %vm2906, %v8771, 0.0
  %8962 = vadd.xlane.f32.xlu0 %v8961
  %v8963 = vpop.xlane.xlu0 %8962
  %v8964 = vsel %vm2906, %v8772, 0.0
  %8965 = vadd.xlane.f32.xlu0 %v8964
  %v8966 = vpop.xlane.xlu0 %8965
  %v8967 = vsel %vm2906, %v8773, 0.0
  %8968 = vadd.xlane.f32.xlu0 %v8967
  %v8969 = vpop.xlane.xlu0 %8968
  %v8970 = vsel %vm2906, %v8774, 0.0
  %8971 = vadd.xlane.f32.xlu0 %v8970
  %v8972 = vpop.xlane.xlu0 %8971
  %v8973 = vsel %vm2906, %v8775, 0.0
  %8974 = vadd.xlane.f32.xlu0 %v8973
  %v8975 = vpop.xlane.xlu0 %8974
  %v8976 = vsel %vm2906, %v8776, 0.0
  %8977 = vadd.xlane.f32.xlu0 %v8976
  %v8978 = vpop.xlane.xlu0 %8977
  %v8979 = vsel %vm2906, %v8777, 0.0
  %8980 = vadd.xlane.f32.xlu0 %v8979
  %v8981 = vpop.xlane.xlu0 %8980
  %v8982 = vsel %vm2906, %v8778, 0.0
  %8983 = vadd.xlane.f32.xlu0 %v8982
  %v8984 = vpop.xlane.xlu0 %8983
  %v8985 = vsel %vm2906, %v8779, 0.0
  %8986 = vadd.xlane.f32.xlu0 %v8985
  %v8987 = vpop.xlane.xlu0 %8986
  %v8988 = vsel %vm2906, %v8780, 0.0
  %8989 = vadd.xlane.f32.xlu0 %v8988
  %v8990 = vpop.xlane.xlu0 %8989
  %v8991 = vsel %vm2906, %v8781, 0.0
  %8992 = vadd.xlane.f32.xlu0 %v8991
  %v8993 = vpop.xlane.xlu0 %8992
  %v8994 = vsel %vm2906, %v8782, 0.0
  %8995 = vadd.xlane.f32.xlu0 %v8994
  %v8996 = vpop.xlane.xlu0 %8995
  %v8997 = vsel %vm2906, %v8783, 0.0
  %8998 = vadd.xlane.f32.xlu0 %v8997
  %v8999 = vpop.xlane.xlu0 %8998
  %v9000 = vsel %vm2906, %v8784, 0.0
  %9001 = vadd.xlane.f32.xlu0 %v9000
  %v9002 = vpop.xlane.xlu0 %9001
  %v9003 = vsel %vm2906, %v8785, 0.0
  %9004 = vadd.xlane.f32.xlu0 %v9003
  %v9005 = vpop.xlane.xlu0 %9004
  %v9006 = vsel %vm2906, %v8786, 0.0
  %9007 = vadd.xlane.f32.xlu0 %v9006
  %v9008 = vpop.xlane.xlu0 %9007
  %v9009 = vsel %vm2906, %v8787, 0.0
  %9010 = vadd.xlane.f32.xlu0 %v9009
  %v9011 = vpop.xlane.xlu0 %9010
  %v9012 = vsel %vm2906, %v8788, 0.0
  %9013 = vadd.xlane.f32.xlu0 %v9012
  %v9014 = vpop.xlane.xlu0 %9013
  %v9015 = vsel %vm2906, %v8789, 0.0
  %9016 = vadd.xlane.f32.xlu0 %v9015
  %v9017 = vpop.xlane.xlu0 %9016
  %v9018 = vsel %vm2906, %v8790, 0.0
  %9019 = vadd.xlane.f32.xlu0 %v9018
  %v9020 = vpop.xlane.xlu0 %9019
  %v9021 = vsel %vm2906, %v8791, 0.0
  %9022 = vadd.xlane.f32.xlu0 %v9021
  %v9023 = vpop.xlane.xlu0 %9022
  %v9024 = vsel %vm2906, %v8792, 0.0
  %9025 = vadd.xlane.f32.xlu0 %v9024
  %v9026 = vpop.xlane.xlu0 %9025
  %v9027 = vsel %vm2906, %v8793, 0.0
  %9028 = vadd.xlane.f32.xlu0 %v9027
  %v9029 = vpop.xlane.xlu0 %9028
  %v9030 = vsel %vm2906, %v8794, 0.0
  %9031 = vadd.xlane.f32.xlu0 %v9030
  %v9032 = vpop.xlane.xlu0 %9031
  %v9033 = vsel %vm2906, %v8795, 0.0
  %9034 = vadd.xlane.f32.xlu0 %v9033
  %v9035 = vpop.xlane.xlu0 %9034
  %v9036 = vsel %vm2906, %v8796, 0.0
  %9037 = vadd.xlane.f32.xlu0 %v9036
  %v9038 = vpop.xlane.xlu0 %9037
  %v9039 = vsel %vm2906, %v8797, 0.0
  %9040 = vadd.xlane.f32.xlu0 %v9039
  %v9041 = vpop.xlane.xlu0 %9040
  %v9042 = vsel %vm2906, %v8798, 0.0
  %9043 = vadd.xlane.f32.xlu0 %v9042
  %v9044 = vpop.xlane.xlu0 %9043
  %v9045 = vsel %vm2906, %v8799, 0.0
  %9046 = vadd.xlane.f32.xlu0 %v9045
  %v9047 = vpop.xlane.xlu0 %9046
  %v9048 = vsel %vm2906, %v8800, 0.0
  %9049 = vadd.xlane.f32.xlu0 %v9048
  %v9050 = vpop.xlane.xlu0 %9049
  %v9051 = vsel %vm2906, %v8801, 0.0
  %9052 = vadd.xlane.f32.xlu0 %v9051
  %v9053 = vpop.xlane.xlu0 %9052
  %v9054 = vsel %vm2906, %v8802, 0.0
  %9055 = vadd.xlane.f32.xlu0 %v9054
  %v9056 = vpop.xlane.xlu0 %9055
  %v9057 = vsel %vm2906, %v8803, 0.0
  %9058 = vadd.xlane.f32.xlu0 %v9057
  %v9059 = vpop.xlane.xlu0 %9058
  %v9060 = vsel %vm2906, %v8804, 0.0
  %9061 = vadd.xlane.f32.xlu0 %v9060
  %v9062 = vpop.xlane.xlu0 %9061
  %v9063 = vsel %vm2906, %v8805, 0.0
  %9064 = vadd.xlane.f32.xlu0 %v9063
  %v9065 = vpop.xlane.xlu0 %9064
  %v9066 = vsel %vm2906, %v8806, 0.0
  %9067 = vadd.xlane.f32.xlu0 %v9066
  %v9068 = vpop.xlane.xlu0 %9067
  %v9069 = vsel %vm2906, %v8807, 0.0
  %9070 = vadd.xlane.f32.xlu0 %v9069
  %v9071 = vpop.xlane.xlu0 %9070
  %v9072 = vsel %vm2906, %v8808, 0.0
  %9073 = vadd.xlane.f32.xlu0 %v9072
  %v9074 = vpop.xlane.xlu0 %9073
  %v9075 = vsel %vm2906, %v8809, 0.0
  %9076 = vadd.xlane.f32.xlu0 %v9075
  %v9077 = vpop.xlane.xlu0 %9076
  %v9078 = vsel %vm2906, %v8810, 0.0
  %9079 = vadd.xlane.f32.xlu0 %v9078
  %v9080 = vpop.xlane.xlu0 %9079
  %v9081 = vsel %vm2906, %v8811, 0.0
  %9082 = vadd.xlane.f32.xlu0 %v9081
  %v9083 = vpop.xlane.xlu0 %9082
  %v9084 = vsel %vm2906, %v8812, 0.0
  %9085 = vadd.xlane.f32.xlu0 %v9084
  %v9086 = vpop.xlane.xlu0 %9085
  %v9087 = vsel %vm2906, %v8813, 0.0
  %9088 = vadd.xlane.f32.xlu0 %v9087
  %v9089 = vpop.xlane.xlu0 %9088
  %v9090 = vsel %vm2906, %v8814, 0.0
  %9091 = vadd.xlane.f32.xlu0 %v9090
  %v9092 = vpop.xlane.xlu0 %9091
  %v9093 = vsel %vm2906, %v8815, 0.0
  %9094 = vadd.xlane.f32.xlu0 %v9093
  %v9095 = vpop.xlane.xlu0 %9094
  %v9096 = vsel %vm2906, %v8816, 0.0
  %9097 = vadd.xlane.f32.xlu0 %v9096
  %v9098 = vpop.xlane.xlu0 %9097
  %v9099 = vsel %vm2906, %v8817, 0.0
  %9100 = vadd.xlane.f32.xlu0 %v9099
  %v9101 = vpop.xlane.xlu0 %9100
  %v9102 = vsel %vm2906, %v8818, 0.0
  %9103 = vadd.xlane.f32.xlu0 %v9102
  %v9104 = vpop.xlane.xlu0 %9103
  %v9105 = vsel %vm2906, %v8819, 0.0
  %9106 = vadd.xlane.f32.xlu0 %v9105
  %v9107 = vpop.xlane.xlu0 %9106
  %v9108 = vsel %vm2906, %v8820, 0.0
  %9109 = vadd.xlane.f32.xlu0 %v9108
  %v9110 = vpop.xlane.xlu0 %9109
  %v9111 = vsel %vm2906, %v8821, 0.0
  %9112 = vadd.xlane.f32.xlu0 %v9111
  %v9113 = vpop.xlane.xlu0 %9112
  %v9114 = vsel %vm2906, %v8822, 0.0
  %9115 = vadd.xlane.f32.xlu0 %v9114
  %v9116 = vpop.xlane.xlu0 %9115
  %v9117 = vsel %vm2906, %v8823, 0.0
  %9118 = vadd.xlane.f32.xlu0 %v9117
  %v9119 = vpop.xlane.xlu0 %9118
  %v9120 = vsel %vm2906, %v8824, 0.0
  %9121 = vadd.xlane.f32.xlu0 %v9120
  %v9122 = vpop.xlane.xlu0 %9121
  %v9123 = vsel %vm2906, %v8825, 0.0
  %9124 = vadd.xlane.f32.xlu0 %v9123
  %v9125 = vpop.xlane.xlu0 %9124
  %v9126 = vsel %vm2906, %v8826, 0.0
  %9127 = vadd.xlane.f32.xlu0 %v9126
  %v9128 = vpop.xlane.xlu0 %9127
  %v9129 = vsel %vm2906, %v8827, 0.0
  %9130 = vadd.xlane.f32.xlu0 %v9129
  %v9131 = vpop.xlane.xlu0 %9130
  %v9132 = vsel %vm2906, %v8828, 0.0
  %9133 = vadd.xlane.f32.xlu0 %v9132
  %v9134 = vpop.xlane.xlu0 %9133
  %v9135 = vsel %vm2906, %v8829, 0.0
  %9136 = vadd.xlane.f32.xlu0 %v9135
  %v9137 = vpop.xlane.xlu0 %9136
  %v9138 = vsel %vm2906, %v8830, 0.0
  %9139 = vadd.xlane.f32.xlu0 %v9138
  %v9140 = vpop.xlane.xlu0 %9139
  %v9141 = vsel %vm2906, %v8831, 0.0
  %9142 = vadd.xlane.f32.xlu0 %v9141
  %v9143 = vpop.xlane.xlu0 %9142
  %v9144 = vsel %vm2906, %v8832, 0.0
  %9145 = vadd.xlane.f32.xlu0 %v9144
  %v9146 = vpop.xlane.xlu0 %9145
  %v9147 = vsel %vm2906, %v8833, 0.0
  %9148 = vadd.xlane.f32.xlu0 %v9147
  %v9149 = vpop.xlane.xlu0 %9148
  %v9150 = vsel %vm2906, %v8834, 0.0
  %9151 = vadd.xlane.f32.xlu0 %v9150
  %v9152 = vpop.xlane.xlu0 %9151
  %v9153 = vsel %vm2906, %v8835, 0.0
  %9154 = vadd.xlane.f32.xlu0 %v9153
  %v9155 = vpop.xlane.xlu0 %9154
  %v9156 = vsel %vm2906, %v8836, 0.0
  %9157 = vadd.xlane.f32.xlu0 %v9156
  %v9158 = vpop.xlane.xlu0 %9157
  %v9159 = vsel %vm2906, %v8837, 0.0
  %9160 = vadd.xlane.f32.xlu0 %v9159
  %v9161 = vpop.xlane.xlu0 %9160
  %v9162 = vsel %vm2906, %v8838, 0.0
  %9163 = vadd.xlane.f32.xlu0 %v9162
  %v9164 = vpop.xlane.xlu0 %9163
  %v9165 = vsel %vm2906, %v8839, 0.0
  %9166 = vadd.xlane.f32.xlu0 %v9165
  %v9167 = vpop.xlane.xlu0 %9166
  %v9168 = vsel %vm2906, %v8840, 0.0
  %9169 = vadd.xlane.f32.xlu0 %v9168
  %v9170 = vpop.xlane.xlu0 %9169
  %v9171 = vsel %vm2906, %v8841, 0.0
  %9172 = vadd.xlane.f32.xlu0 %v9171
  %v9173 = vpop.xlane.xlu0 %9172
  %v9174 = vsel %vm2906, %v8842, 0.0
  %9175 = vadd.xlane.f32.xlu0 %v9174
  %v9176 = vpop.xlane.xlu0 %9175
  %v9177 = vsel %vm2906, %v8843, 0.0
  %9178 = vadd.xlane.f32.xlu0 %v9177
  %v9179 = vpop.xlane.xlu0 %9178
  %v9180 = vsel %vm2906, %v8844, 0.0
  %9181 = vadd.xlane.f32.xlu0 %v9180
  %v9182 = vpop.xlane.xlu0 %9181
  %v9183 = vsel %vm2906, %v8845, 0.0
  %9184 = vadd.xlane.f32.xlu0 %v9183
  %v9185 = vpop.xlane.xlu0 %9184
  %v9186 = vsel %vm2906, %v8846, 0.0
  %9187 = vadd.xlane.f32.xlu0 %v9186
  %v9188 = vpop.xlane.xlu0 %9187
  %v9189 = vsel %vm2906, %v8847, 0.0
  %9190 = vadd.xlane.f32.xlu0 %v9189
  %v9191 = vpop.xlane.xlu0 %9190
  %v9192 = vsel %vm2906, %v8848, 0.0
  %9193 = vadd.xlane.f32.xlu0 %v9192
  %v9194 = vpop.xlane.xlu0 %9193
  %v9195 = vsel %vm2906, %v8849, 0.0
  %9196 = vadd.xlane.f32.xlu0 %v9195
  %v9197 = vpop.xlane.xlu0 %9196
  %v9198 = vsel %vm2906, %v8850, 0.0
  %9199 = vadd.xlane.f32.xlu0 %v9198
  %v9200 = vpop.xlane.xlu0 %9199
  %v9201 = vsel %vm2906, %v8851, 0.0
  %9202 = vadd.xlane.f32.xlu0 %v9201
  %v9203 = vpop.xlane.xlu0 %9202
  %v9204 = vsel %vm2906, %v8852, 0.0
  %9205 = vadd.xlane.f32.xlu0 %v9204
  %v9206 = vpop.xlane.xlu0 %9205
  %v9207 = vsel %vm2906, %v8853, 0.0
  %9208 = vadd.xlane.f32.xlu0 %v9207
  %v9209 = vpop.xlane.xlu0 %9208
  %v9210 = vsel %vm2906, %v8854, 0.0
  %9211 = vadd.xlane.f32.xlu0 %v9210
  %v9212 = vpop.xlane.xlu0 %9211
  %v9213 = vsel %vm2906, %v8855, 0.0
  %9214 = vadd.xlane.f32.xlu0 %v9213
  %v9215 = vpop.xlane.xlu0 %9214
  %v9216 = vsel %vm2906, %v8856, 0.0
  %9217 = vadd.xlane.f32.xlu0 %v9216
  %v9218 = vpop.xlane.xlu0 %9217
  %v9219 = vsel %vm2906, %v8857, 0.0
  %9220 = vadd.xlane.f32.xlu0 %v9219
  %v9221 = vpop.xlane.xlu0 %9220
  %v9222 = vsel %vm2906, %v8858, 0.0
  %9223 = vadd.xlane.f32.xlu0 %v9222
  %v9224 = vpop.xlane.xlu0 %9223
  %v9225 = vsel %vm2906, %v8859, 0.0
  %9226 = vadd.xlane.f32.xlu0 %v9225
  %v9227 = vpop.xlane.xlu0 %9226
  %v9228 = vsel %vm2906, %v8860, 0.0
  %9229 = vadd.xlane.f32.xlu0 %v9228
  %v9230 = vpop.xlane.xlu0 %9229
  %v9231 = vsel %vm2906, %v8861, 0.0
  %9232 = vadd.xlane.f32.xlu0 %v9231
  %v9233 = vpop.xlane.xlu0 %9232
  %v9234 = vsel %vm2906, %v8862, 0.0
  %9235 = vadd.xlane.f32.xlu0 %v9234
  %v9236 = vpop.xlane.xlu0 %9235
  %v9237 = vsel %vm2906, %v8863, 0.0
  %9238 = vadd.xlane.f32.xlu0 %v9237
  %v9239 = vpop.xlane.xlu0 %9238
  %v9240 = vsel %vm2906, %v8864, 0.0
  %9241 = vadd.xlane.f32.xlu0 %v9240
  %v9242 = vpop.xlane.xlu0 %9241
  %v9243 = vsel %vm2906, %v8865, 0.0
  %9244 = vadd.xlane.f32.xlu0 %v9243
  %v9245 = vpop.xlane.xlu0 %9244
  %v9246 = vsel %vm2906, %v8866, 0.0
  %9247 = vadd.xlane.f32.xlu0 %v9246
  %v9248 = vpop.xlane.xlu0 %9247
  %v9249 = vsel %vm2906, %v8867, 0.0
  %9250 = vadd.xlane.f32.xlu0 %v9249
  %v9251 = vpop.xlane.xlu0 %9250
  %v9252 = vsel %vm2906, %v8868, 0.0
  %9253 = vadd.xlane.f32.xlu0 %v9252
  %v9254 = vpop.xlane.xlu0 %9253
  %v9255 = vsel %vm2906, %v8869, 0.0
  %9256 = vadd.xlane.f32.xlu0 %v9255
  %v9257 = vpop.xlane.xlu0 %9256
  %v9258 = vsel %vm2906, %v8870, 0.0
  %9259 = vadd.xlane.f32.xlu0 %v9258
  %v9260 = vpop.xlane.xlu0 %9259
  %v9261 = vsel %vm2906, %v8871, 0.0
  %9262 = vadd.xlane.f32.xlu0 %v9261
  %v9263 = vpop.xlane.xlu0 %9262
  %v9264 = vsel %vm2906, %v8872, 0.0
  %9265 = vadd.xlane.f32.xlu0 %v9264
  %v9266 = vpop.xlane.xlu0 %9265
  %v9267 = vsel %vm2906, %v8873, 0.0
  %9268 = vadd.xlane.f32.xlu0 %v9267
  %v9269 = vpop.xlane.xlu0 %9268
  %v9270 = vsel %vm2906, %v8874, 0.0
  %9271 = vadd.xlane.f32.xlu0 %v9270
  %v9272 = vpop.xlane.xlu0 %9271
  %v9273 = vsel %vm2906, %v8875, 0.0
  %9274 = vadd.xlane.f32.xlu0 %v9273
  %v9275 = vpop.xlane.xlu0 %9274
  %v9276 = vsel %vm2906, %v8876, 0.0
  %9277 = vadd.xlane.f32.xlu0 %v9276
  %v9278 = vpop.xlane.xlu0 %9277
  %v9279 = vsel %vm2906, %v8877, 0.0
  %9280 = vadd.xlane.f32.xlu0 %v9279
  %v9281 = vpop.xlane.xlu0 %9280
  %v9282 = vsel %vm2906, %v8878, 0.0
  %9283 = vadd.xlane.f32.xlu0 %v9282
  %v9284 = vpop.xlane.xlu0 %9283
  %v9285 = vsel %vm2906, %v8879, 0.0
  %9286 = vadd.xlane.f32.xlu0 %v9285
  %v9287 = vpop.xlane.xlu0 %9286
  %v9288 = vsel %vm2906, %v8880, 0.0
  %9289 = vadd.xlane.f32.xlu0 %v9288
  %v9290 = vpop.xlane.xlu0 %9289
  %v9291 = vsel %vm2906, %v8881, 0.0
  %9292 = vadd.xlane.f32.xlu0 %v9291
  %v9293 = vpop.xlane.xlu0 %9292
  %v9294 = vsel %vm2906, %v8882, 0.0
  %9295 = vadd.xlane.f32.xlu0 %v9294
  %v9296 = vpop.xlane.xlu0 %9295
  %v9297 = vsel %vm2906, %v8883, 0.0
  %9298 = vadd.xlane.f32.xlu0 %v9297
  %v9299 = vpop.xlane.xlu0 %9298
  %v9300 = vsel %vm2906, %v8884, 0.0
  %9301 = vadd.xlane.f32.xlu0 %v9300
  %v9302 = vpop.xlane.xlu0 %9301
  %v9303 = vsel %vm2906, %v8885, 0.0
  %9304 = vadd.xlane.f32.xlu0 %v9303
  %v9305 = vpop.xlane.xlu0 %9304
  %v9306 = vsel %vm2906, %v8886, 0.0
  %9307 = vadd.xlane.f32.xlu0 %v9306
  %v9308 = vpop.xlane.xlu0 %9307
  %v9309 = vsel %vm2906, %v8887, 0.0
  %9310 = vadd.xlane.f32.xlu0 %v9309
  %v9311 = vpop.xlane.xlu0 %9310
  %v9312 = vsel %vm2906, %v8888, 0.0
  %9313 = vadd.xlane.f32.xlu0 %v9312
  %v9314 = vpop.xlane.xlu0 %9313
  %v9315 = vsel %vm2906, %v8889, 0.0
  %9316 = vadd.xlane.f32.xlu0 %v9315
  %v9317 = vpop.xlane.xlu0 %9316
  %v9318 = vsel %vm2906, %v8890, 0.0
  %9319 = vadd.xlane.f32.xlu0 %v9318
  %v9320 = vpop.xlane.xlu0 %9319
  %v9321 = vsel %vm2906, %v8891, 0.0
  %9322 = vadd.xlane.f32.xlu0 %v9321
  %v9323 = vpop.xlane.xlu0 %9322
  %v9324 = vsel %vm2906, %v8892, 0.0
  %9325 = vadd.xlane.f32.xlu0 %v9324
  %v9326 = vpop.xlane.xlu0 %9325
  %v9327 = vsel %vm2906, %v8893, 0.0
  %9328 = vadd.xlane.f32.xlu0 %v9327
  %v9329 = vpop.xlane.xlu0 %9328
  %v9330 = vsel %vm2906, %v8894, 0.0
  %9331 = vadd.xlane.f32.xlu0 %v9330
  %v9332 = vpop.xlane.xlu0 %9331
  %v9333 = vsel %vm2906, %v8895, 0.0
  %9334 = vadd.xlane.f32.xlu0 %v9333
  %v9335 = vpop.xlane.xlu0 %9334
  %v9336 = vsel %vm2906, %v8896, 0.0
  %9337 = vadd.xlane.f32.xlu0 %v9336
  %v9338 = vpop.xlane.xlu0 %9337
  %v9339 = vsel %vm2906, %v8897, 0.0
  %9340 = vadd.xlane.f32.xlu0 %v9339
  %v9341 = vpop.xlane.xlu0 %9340
  %v9342 = vsel %vm2906, %v8898, 0.0
  %9343 = vadd.xlane.f32.xlu0 %v9342
  %v9344 = vpop.xlane.xlu0 %9343
  %v9345 = vsel %vm2906, %v8899, 0.0
  %9346 = vadd.xlane.f32.xlu0 %v9345
  %v9347 = vpop.xlane.xlu0 %9346
  %v9348 = vsel %vm2906, %v8900, 0.0
  %9349 = vadd.xlane.f32.xlu0 %v9348
  %v9350 = vpop.xlane.xlu0 %9349
  %v9351 = vsel %vm2906, %v8901, 0.0
  %9352 = vadd.xlane.f32.xlu0 %v9351
  %v9353 = vpop.xlane.xlu0 %9352
  %v9354 = vsel %vm2906, %v8902, 0.0
  %9355 = vadd.xlane.f32.xlu0 %v9354
  %v9356 = vpop.xlane.xlu0 %9355
  %v9357 = vsel %vm2906, %v8903, 0.0
  %9358 = vadd.xlane.f32.xlu0 %v9357
  %v9359 = vpop.xlane.xlu0 %9358
  %v9360 = vsel %vm2906, %v8904, 0.0
  %9361 = vadd.xlane.f32.xlu0 %v9360
  %v9362 = vpop.xlane.xlu0 %9361
  %v9363 = vsel %vm2906, %v8905, 0.0
  %9364 = vadd.xlane.f32.xlu0 %v9363
  %v9365 = vpop.xlane.xlu0 %9364
  %v9366 = vsel %vm2906, %v8906, 0.0
  %9367 = vadd.xlane.f32.xlu0 %v9366
  %v9368 = vpop.xlane.xlu0 %9367
  %v9369 = vsel %vm2906, %v8907, 0.0
  %9370 = vadd.xlane.f32.xlu0 %v9369
  %v9371 = vpop.xlane.xlu0 %9370
  %v9372 = vsel %vm2906, %v8908, 0.0
  %9373 = vadd.xlane.f32.xlu0 %v9372
  %v9374 = vpop.xlane.xlu0 %9373
  %v9375 = vsel %vm2906, %v8909, 0.0
  %9376 = vadd.xlane.f32.xlu0 %v9375
  %v9377 = vpop.xlane.xlu0 %9376
  %v9378 = vsel %vm2906, %v8910, 0.0
  %9379 = vadd.xlane.f32.xlu0 %v9378
  %v9380 = vpop.xlane.xlu0 %9379
  %v9381 = vsel %vm2906, %v8911, 0.0
  %9382 = vadd.xlane.f32.xlu0 %v9381
  %v9383 = vpop.xlane.xlu0 %9382
  %v9384 = vsel %vm2906, %v8912, 0.0
  %9385 = vadd.xlane.f32.xlu0 %v9384
  %v9386 = vpop.xlane.xlu0 %9385
  %v9387 = vsel %vm2906, %v8913, 0.0
  %9388 = vadd.xlane.f32.xlu0 %v9387
  %v9389 = vpop.xlane.xlu0 %9388
  %v9390 = vsel %vm2906, %v8914, 0.0
  %9391 = vadd.xlane.f32.xlu0 %v9390
  %v9392 = vpop.xlane.xlu0 %9391
  %v9393 = vsel %vm2906, %v8915, 0.0
  %9394 = vadd.xlane.f32.xlu0 %v9393
  %v9395 = vpop.xlane.xlu0 %9394
  %v9396 = vsel %vm2906, %v8916, 0.0
  %9397 = vadd.xlane.f32.xlu0 %v9396
  %v9398 = vpop.xlane.xlu0 %9397
  %v9399 = vsel %vm2906, %v8917, 0.0
  %9400 = vadd.xlane.f32.xlu0 %v9399
  %v9401 = vpop.xlane.xlu0 %9400
  %v9402 = vsel %vm2906, %v8918, 0.0
  %9403 = vadd.xlane.f32.xlu0 %v9402
  %v9404 = vpop.xlane.xlu0 %9403
  %v9405 = vsel %vm2906, %v8919, 0.0
  %9406 = vadd.xlane.f32.xlu0 %v9405
  %v9407 = vpop.xlane.xlu0 %9406
  %v9408 = vsel %vm2906, %v8920, 0.0
  %9409 = vadd.xlane.f32.xlu0 %v9408
  %v9410 = vpop.xlane.xlu0 %9409
  %v9411 = vsel %vm2906, %v8921, 0.0
  %9412 = vadd.xlane.f32.xlu0 %v9411
  %v9413 = vpop.xlane.xlu0 %9412
  %v9414 = vsel %vm2906, %v8922, 0.0
  %9415 = vadd.xlane.f32.xlu0 %v9414
  %v9416 = vpop.xlane.xlu0 %9415
  %v9417 = vsel %vm2906, %v8923, 0.0
  %9418 = vadd.xlane.f32.xlu0 %v9417
  %v9419 = vpop.xlane.xlu0 %9418
  %v9420 = vsel %vm2906, %v8924, 0.0
  %9421 = vadd.xlane.f32.xlu0 %v9420
  %v9422 = vpop.xlane.xlu0 %9421
  %v9423 = vsel %vm2906, %v8925, 0.0
  %9424 = vadd.xlane.f32.xlu0 %v9423
  %v9425 = vpop.xlane.xlu0 %9424
  %v9426 = vsel %vm2906, %v8926, 0.0
  %9427 = vadd.xlane.f32.xlu0 %v9426
  %v9428 = vpop.xlane.xlu0 %9427
  %v9429 = vsel %vm2906, %v8927, 0.0
  %9430 = vadd.xlane.f32.xlu0 %v9429
  %v9431 = vpop.xlane.xlu0 %9430
  %v9432 = vsel %vm2906, %v8928, 0.0
  %9433 = vadd.xlane.f32.xlu0 %v9432
  %v9434 = vpop.xlane.xlu0 %9433
  %v9435 = vsel %vm2906, %v8929, 0.0
  %9436 = vadd.xlane.f32.xlu0 %v9435
  %v9437 = vpop.xlane.xlu0 %9436
  %v9438 = vsel %vm2906, %v8930, 0.0
  %9439 = vadd.xlane.f32.xlu0 %v9438
  %v9440 = vpop.xlane.xlu0 %9439
  %v9441 = vsel %vm2906, %v8931, 0.0
  %9442 = vadd.xlane.f32.xlu0 %v9441
  %v9443 = vpop.xlane.xlu0 %9442
  %v9444 = vsel %vm2906, %v8932, 0.0
  %9445 = vadd.xlane.f32.xlu0 %v9444
  %v9446 = vpop.xlane.xlu0 %9445
  %v9447 = vsel %vm2906, %v8933, 0.0
  %9448 = vadd.xlane.f32.xlu0 %v9447
  %v9449 = vpop.xlane.xlu0 %9448
  %v9450 = vsel %vm2906, %v8934, 0.0
  %9451 = vadd.xlane.f32.xlu0 %v9450
  %v9452 = vpop.xlane.xlu0 %9451
  %v9453 = vsel %vm2906, %v8935, 0.0
  %9454 = vadd.xlane.f32.xlu0 %v9453
  %v9455 = vpop.xlane.xlu0 %9454
  %v9456 = vsel %vm2906, %v8936, 0.0
  %9457 = vadd.xlane.f32.xlu0 %v9456
  %v9458 = vpop.xlane.xlu0 %9457
  %v9459 = vsel %vm2906, %v8937, 0.0
  %9460 = vadd.xlane.f32.xlu0 %v9459
  %v9461 = vpop.xlane.xlu0 %9460
  %v9462 = vsel %vm2906, %v8938, 0.0
  %9463 = vadd.xlane.f32.xlu0 %v9462
  %v9464 = vpop.xlane.xlu0 %9463
  %v9465 = vsel %vm2906, %v8939, 0.0
  %9466 = vadd.xlane.f32.xlu0 %v9465
  %v9467 = vpop.xlane.xlu0 %9466
  %v9468 = vmul.f32 %v8942, 0.020408163
  %v9469 = vmul.f32 %v8945, 0.020408163
  %v9470 = vmul.f32 %v8948, 0.020408163
  %v9471 = vmul.f32 %v8951, 0.020408163
  %v9472 = vmul.f32 %v8954, 0.020408163
  %v9473 = vmul.f32 %v8957, 0.020408163
  %v9474 = vmul.f32 %v8960, 0.020408163
  %v9475 = vmul.f32 %v8963, 0.020408163
  %v9476 = vmul.f32 %v8966, 0.020408163
  %v9477 = vmul.f32 %v8969, 0.020408163
  %v9478 = vmul.f32 %v8972, 0.020408163
  %v9479 = vmul.f32 %v8975, 0.020408163
  %v9480 = vmul.f32 %v8978, 0.020408163
  %v9481 = vmul.f32 %v8981, 0.020408163
  %v9482 = vmul.f32 %v8984, 0.020408163
  %v9483 = vmul.f32 %v8987, 0.020408163
  %v9484 = vmul.f32 %v8990, 0.020408163
  %v9485 = vmul.f32 %v8993, 0.020408163
  %v9486 = vmul.f32 %v8996, 0.020408163
  %v9487 = vmul.f32 %v8999, 0.020408163
  %v9488 = vmul.f32 %v9002, 0.020408163
  %v9489 = vmul.f32 %v9005, 0.020408163
  %v9490 = vmul.f32 %v9008, 0.020408163
  %v9491 = vmul.f32 %v9011, 0.020408163
  %v9492 = vmul.f32 %v9014, 0.020408163
  %v9493 = vmul.f32 %v9017, 0.020408163
  %v9494 = vmul.f32 %v9020, 0.020408163
  %v9495 = vmul.f32 %v9023, 0.020408163
  %v9496 = vmul.f32 %v9026, 0.020408163
  %v9497 = vmul.f32 %v9029, 0.020408163
  %v9498 = vmul.f32 %v9032, 0.020408163
  %v9499 = vmul.f32 %v9035, 0.020408163
  %v9500 = vmul.f32 %v9038, 0.020408163
  %v9501 = vmul.f32 %v9041, 0.020408163
  %v9502 = vmul.f32 %v9044, 0.020408163
  %v9503 = vmul.f32 %v9047, 0.020408163
  %v9504 = vmul.f32 %v9050, 0.020408163
  %v9505 = vmul.f32 %v9053, 0.020408163
  %v9506 = vmul.f32 %v9056, 0.020408163
  %v9507 = vmul.f32 %v9059, 0.020408163
  %v9508 = vmul.f32 %v9062, 0.020408163
  %v9509 = vmul.f32 %v9065, 0.020408163
  %v9510 = vmul.f32 %v9068, 0.020408163
  %v9511 = vmul.f32 %v9071, 0.020408163
  %v9512 = vmul.f32 %v9074, 0.020408163
  %v9513 = vmul.f32 %v9077, 0.020408163
  %v9514 = vmul.f32 %v9080, 0.020408163
  %v9515 = vmul.f32 %v9083, 0.020408163
  %v9516 = vmul.f32 %v9086, 0.020408163
  %v9517 = vmul.f32 %v9089, 0.020408163
  %v9518 = vmul.f32 %v9092, 0.020408163
  %v9519 = vmul.f32 %v9095, 0.020408163
  %v9520 = vmul.f32 %v9098, 0.020408163
  %v9521 = vmul.f32 %v9101, 0.020408163
  %v9522 = vmul.f32 %v9104, 0.020408163
  %v9523 = vmul.f32 %v9107, 0.020408163
  %v9524 = vmul.f32 %v9110, 0.020408163
  %v9525 = vmul.f32 %v9113, 0.020408163
  %v9526 = vmul.f32 %v9116, 0.020408163
  %v9527 = vmul.f32 %v9119, 0.020408163
  %v9528 = vmul.f32 %v9122, 0.020408163
  %v9529 = vmul.f32 %v9125, 0.020408163
  %v9530 = vmul.f32 %v9128, 0.020408163
  %v9531 = vmul.f32 %v9131, 0.020408163
  %v9532 = vmul.f32 %v9134, 0.020408163
  %v9533 = vmul.f32 %v9137, 0.020408163
  %v9534 = vmul.f32 %v9140, 0.020408163
  %v9535 = vmul.f32 %v9143, 0.020408163
  %v9536 = vmul.f32 %v9146, 0.020408163
  %v9537 = vmul.f32 %v9149, 0.020408163
  %v9538 = vmul.f32 %v9152, 0.020408163
  %v9539 = vmul.f32 %v9155, 0.020408163
  %v9540 = vmul.f32 %v9158, 0.020408163
  %v9541 = vmul.f32 %v9161, 0.020408163
  %v9542 = vmul.f32 %v9164, 0.020408163
  %v9543 = vmul.f32 %v9167, 0.020408163
  %v9544 = vmul.f32 %v9170, 0.020408163
  %v9545 = vmul.f32 %v9173, 0.020408163
  %v9546 = vmul.f32 %v9176, 0.020408163
  %v9547 = vmul.f32 %v9179, 0.020408163
  %v9548 = vmul.f32 %v9182, 0.020408163
  %v9549 = vmul.f32 %v9185, 0.020408163
  %v9550 = vmul.f32 %v9188, 0.020408163
  %v9551 = vmul.f32 %v9191, 0.020408163
  %v9552 = vmul.f32 %v9194, 0.020408163
  %v9553 = vmul.f32 %v9197, 0.020408163
  %v9554 = vmul.f32 %v9200, 0.020408163
  %v9555 = vmul.f32 %v9203, 0.020408163
  %v9556 = vmul.f32 %v9206, 0.020408163
  %v9557 = vmul.f32 %v9209, 0.020408163
  %v9558 = vmul.f32 %v9212, 0.020408163
  %v9559 = vmul.f32 %v9215, 0.020408163
  %v9560 = vmul.f32 %v9218, 0.020408163
  %v9561 = vmul.f32 %v9221, 0.020408163
  %v9562 = vmul.f32 %v9224, 0.020408163
  %v9563 = vmul.f32 %v9227, 0.020408163
  %v9564 = vmul.f32 %v9230, 0.020408163
  %v9565 = vmul.f32 %v9233, 0.020408163
  %v9566 = vmul.f32 %v9236, 0.020408163
  %v9567 = vmul.f32 %v9239, 0.020408163
  %v9568 = vmul.f32 %v9242, 0.020408163
  %v9569 = vmul.f32 %v9245, 0.020408163
  %v9570 = vmul.f32 %v9248, 0.020408163
  %v9571 = vmul.f32 %v9251, 0.020408163
  %v9572 = vmul.f32 %v9254, 0.020408163
  %v9573 = vmul.f32 %v9257, 0.020408163
  %v9574 = vmul.f32 %v9260, 0.020408163
  %v9575 = vmul.f32 %v9263, 0.020408163
  %v9576 = vmul.f32 %v9266, 0.020408163
  %v9577 = vmul.f32 %v9269, 0.020408163
  %v9578 = vmul.f32 %v9272, 0.020408163
  %v9579 = vmul.f32 %v9275, 0.020408163
  %v9580 = vmul.f32 %v9278, 0.020408163
  %v9581 = vmul.f32 %v9281, 0.020408163
  %v9582 = vmul.f32 %v9284, 0.020408163
  %v9583 = vmul.f32 %v9287, 0.020408163
  %v9584 = vmul.f32 %v9290, 0.020408163
  %v9585 = vmul.f32 %v9293, 0.020408163
  %v9586 = vmul.f32 %v9296, 0.020408163
  %v9587 = vmul.f32 %v9299, 0.020408163
  %v9588 = vmul.f32 %v9302, 0.020408163
  %v9589 = vmul.f32 %v9305, 0.020408163
  %v9590 = vmul.f32 %v9308, 0.020408163
  %v9591 = vmul.f32 %v9311, 0.020408163
  %v9592 = vmul.f32 %v9314, 0.020408163
  %v9593 = vmul.f32 %v9317, 0.020408163
  %v9594 = vmul.f32 %v9320, 0.020408163
  %v9595 = vmul.f32 %v9323, 0.020408163
  %v9596 = vmul.f32 %v9326, 0.020408163
  %v9597 = vmul.f32 %v9329, 0.020408163
  %v9598 = vmul.f32 %v9332, 0.020408163
  %v9599 = vmul.f32 %v9335, 0.020408163
  %v9600 = vmul.f32 %v9338, 0.020408163
  %v9601 = vmul.f32 %v9341, 0.020408163
  %v9602 = vmul.f32 %v9344, 0.020408163
  %v9603 = vmul.f32 %v9347, 0.020408163
  %v9604 = vmul.f32 %v9350, 0.020408163
  %v9605 = vmul.f32 %v9353, 0.020408163
  %v9606 = vmul.f32 %v9356, 0.020408163
  %v9607 = vmul.f32 %v9359, 0.020408163
  %v9608 = vmul.f32 %v9362, 0.020408163
  %v9609 = vmul.f32 %v9365, 0.020408163
  %v9610 = vmul.f32 %v9368, 0.020408163
  %v9611 = vmul.f32 %v9371, 0.020408163
  %v9612 = vmul.f32 %v9374, 0.020408163
  %v9613 = vmul.f32 %v9377, 0.020408163
  %v9614 = vmul.f32 %v9380, 0.020408163
  %v9615 = vmul.f32 %v9383, 0.020408163
  %v9616 = vmul.f32 %v9386, 0.020408163
  %v9617 = vmul.f32 %v9389, 0.020408163
  %v9618 = vmul.f32 %v9392, 0.020408163
  %v9619 = vmul.f32 %v9395, 0.020408163
  %v9620 = vmul.f32 %v9398, 0.020408163
  %v9621 = vmul.f32 %v9401, 0.020408163
  %v9622 = vmul.f32 %v9404, 0.020408163
  %v9623 = vmul.f32 %v9407, 0.020408163
  %v9624 = vmul.f32 %v9410, 0.020408163
  %v9625 = vmul.f32 %v9413, 0.020408163
  %v9626 = vmul.f32 %v9416, 0.020408163
  %v9627 = vmul.f32 %v9419, 0.020408163
  %v9628 = vmul.f32 %v9422, 0.020408163
  %v9629 = vmul.f32 %v9425, 0.020408163
  %v9630 = vmul.f32 %v9428, 0.020408163
  %v9631 = vmul.f32 %v9431, 0.020408163
  %v9632 = vmul.f32 %v9434, 0.020408163
  %v9633 = vmul.f32 %v9437, 0.020408163
  %v9634 = vmul.f32 %v9440, 0.020408163
  %v9635 = vmul.f32 %v9443, 0.020408163
  %v9636 = vmul.f32 %v9446, 0.020408163
  %v9637 = vmul.f32 %v9449, 0.020408163
  %v9638 = vmul.f32 %v9452, 0.020408163
  %v9639 = vmul.f32 %v9455, 0.020408163
  %v9640 = vmul.f32 %v9458, 0.020408163
  %v9641 = vmul.f32 %v9461, 0.020408163
  %v9642 = vmul.f32 %v9464, 0.020408163
  %v9643 = vmul.f32 %v9467, 0.020408163
  %v9644 = vadd.f32 %v9468, 1e-05
  %v9645 = vadd.f32 %v9469, 1e-05
  %v9646 = vadd.f32 %v9470, 1e-05
  %v9647 = vadd.f32 %v9471, 1e-05
  %v9648 = vadd.f32 %v9472, 1e-05
  %v9649 = vadd.f32 %v9473, 1e-05
  %v9650 = vadd.f32 %v9474, 1e-05
  %v9651 = vadd.f32 %v9475, 1e-05
  %v9652 = vadd.f32 %v9476, 1e-05
  %v9653 = vadd.f32 %v9477, 1e-05
  %v9654 = vadd.f32 %v9478, 1e-05
  %v9655 = vadd.f32 %v9479, 1e-05
  %v9656 = vadd.f32 %v9480, 1e-05
  %v9657 = vadd.f32 %v9481, 1e-05
  %v9658 = vadd.f32 %v9482, 1e-05
  %v9659 = vadd.f32 %v9483, 1e-05
  %v9660 = vadd.f32 %v9484, 1e-05
  %v9661 = vadd.f32 %v9485, 1e-05
  %v9662 = vadd.f32 %v9486, 1e-05
  %v9663 = vadd.f32 %v9487, 1e-05
  %v9664 = vadd.f32 %v9488, 1e-05
  %v9665 = vadd.f32 %v9489, 1e-05
  %v9666 = vadd.f32 %v9490, 1e-05
  %v9667 = vadd.f32 %v9491, 1e-05
  %v9668 = vadd.f32 %v9492, 1e-05
  %v9669 = vadd.f32 %v9493, 1e-05
  %v9670 = vadd.f32 %v9494, 1e-05
  %v9671 = vadd.f32 %v9495, 1e-05
  %v9672 = vadd.f32 %v9496, 1e-05
  %v9673 = vadd.f32 %v9497, 1e-05
  %v9674 = vadd.f32 %v9498, 1e-05
  %v9675 = vadd.f32 %v9499, 1e-05
  %v9676 = vadd.f32 %v9500, 1e-05
  %v9677 = vadd.f32 %v9501, 1e-05
  %v9678 = vadd.f32 %v9502, 1e-05
  %v9679 = vadd.f32 %v9503, 1e-05
  %v9680 = vadd.f32 %v9504, 1e-05
  %v9681 = vadd.f32 %v9505, 1e-05
  %v9682 = vadd.f32 %v9506, 1e-05
  %v9683 = vadd.f32 %v9507, 1e-05
  %v9684 = vadd.f32 %v9508, 1e-05
  %v9685 = vadd.f32 %v9509, 1e-05
  %v9686 = vadd.f32 %v9510, 1e-05
  %v9687 = vadd.f32 %v9511, 1e-05
  %v9688 = vadd.f32 %v9512, 1e-05
  %v9689 = vadd.f32 %v9513, 1e-05
  %v9690 = vadd.f32 %v9514, 1e-05
  %v9691 = vadd.f32 %v9515, 1e-05
  %v9692 = vadd.f32 %v9516, 1e-05
  %v9693 = vadd.f32 %v9517, 1e-05
  %v9694 = vadd.f32 %v9518, 1e-05
  %v9695 = vadd.f32 %v9519, 1e-05
  %v9696 = vadd.f32 %v9520, 1e-05
  %v9697 = vadd.f32 %v9521, 1e-05
  %v9698 = vadd.f32 %v9522, 1e-05
  %v9699 = vadd.f32 %v9523, 1e-05
  %v9700 = vadd.f32 %v9524, 1e-05
  %v9701 = vadd.f32 %v9525, 1e-05
  %v9702 = vadd.f32 %v9526, 1e-05
  %v9703 = vadd.f32 %v9527, 1e-05
  %v9704 = vadd.f32 %v9528, 1e-05
  %v9705 = vadd.f32 %v9529, 1e-05
  %v9706 = vadd.f32 %v9530, 1e-05
  %v9707 = vadd.f32 %v9531, 1e-05
  %v9708 = vadd.f32 %v9532, 1e-05
  %v9709 = vadd.f32 %v9533, 1e-05
  %v9710 = vadd.f32 %v9534, 1e-05
  %v9711 = vadd.f32 %v9535, 1e-05
  %v9712 = vadd.f32 %v9536, 1e-05
  %v9713 = vadd.f32 %v9537, 1e-05
  %v9714 = vadd.f32 %v9538, 1e-05
  %v9715 = vadd.f32 %v9539, 1e-05
  %v9716 = vadd.f32 %v9540, 1e-05
  %v9717 = vadd.f32 %v9541, 1e-05
  %v9718 = vadd.f32 %v9542, 1e-05
  %v9719 = vadd.f32 %v9543, 1e-05
  %v9720 = vadd.f32 %v9544, 1e-05
  %v9721 = vadd.f32 %v9545, 1e-05
  %v9722 = vadd.f32 %v9546, 1e-05
  %v9723 = vadd.f32 %v9547, 1e-05
  %v9724 = vadd.f32 %v9548, 1e-05
  %v9725 = vadd.f32 %v9549, 1e-05
  %v9726 = vadd.f32 %v9550, 1e-05
  %v9727 = vadd.f32 %v9551, 1e-05
  %v9728 = vadd.f32 %v9552, 1e-05
  %v9729 = vadd.f32 %v9553, 1e-05
  %v9730 = vadd.f32 %v9554, 1e-05
  %v9731 = vadd.f32 %v9555, 1e-05
  %v9732 = vadd.f32 %v9556, 1e-05
  %v9733 = vadd.f32 %v9557, 1e-05
  %v9734 = vadd.f32 %v9558, 1e-05
  %v9735 = vadd.f32 %v9559, 1e-05
  %v9736 = vadd.f32 %v9560, 1e-05
  %v9737 = vadd.f32 %v9561, 1e-05
  %v9738 = vadd.f32 %v9562, 1e-05
  %v9739 = vadd.f32 %v9563, 1e-05
  %v9740 = vadd.f32 %v9564, 1e-05
  %v9741 = vadd.f32 %v9565, 1e-05
  %v9742 = vadd.f32 %v9566, 1e-05
  %v9743 = vadd.f32 %v9567, 1e-05
  %v9744 = vadd.f32 %v9568, 1e-05
  %v9745 = vadd.f32 %v9569, 1e-05
  %v9746 = vadd.f32 %v9570, 1e-05
  %v9747 = vadd.f32 %v9571, 1e-05
  %v9748 = vadd.f32 %v9572, 1e-05
  %v9749 = vadd.f32 %v9573, 1e-05
  %v9750 = vadd.f32 %v9574, 1e-05
  %v9751 = vadd.f32 %v9575, 1e-05
  %v9752 = vadd.f32 %v9576, 1e-05
  %v9753 = vadd.f32 %v9577, 1e-05
  %v9754 = vadd.f32 %v9578, 1e-05
  %v9755 = vadd.f32 %v9579, 1e-05
  %v9756 = vadd.f32 %v9580, 1e-05
  %v9757 = vadd.f32 %v9581, 1e-05
  %v9758 = vadd.f32 %v9582, 1e-05
  %v9759 = vadd.f32 %v9583, 1e-05
  %v9760 = vadd.f32 %v9584, 1e-05
  %v9761 = vadd.f32 %v9585, 1e-05
  %v9762 = vadd.f32 %v9586, 1e-05
  %v9763 = vadd.f32 %v9587, 1e-05
  %v9764 = vadd.f32 %v9588, 1e-05
  %v9765 = vadd.f32 %v9589, 1e-05
  %v9766 = vadd.f32 %v9590, 1e-05
  %v9767 = vadd.f32 %v9591, 1e-05
  %v9768 = vadd.f32 %v9592, 1e-05
  %v9769 = vadd.f32 %v9593, 1e-05
  %v9770 = vadd.f32 %v9594, 1e-05
  %v9771 = vadd.f32 %v9595, 1e-05
  %v9772 = vadd.f32 %v9596, 1e-05
  %v9773 = vadd.f32 %v9597, 1e-05
  %v9774 = vadd.f32 %v9598, 1e-05
  %v9775 = vadd.f32 %v9599, 1e-05
  %v9776 = vadd.f32 %v9600, 1e-05
  %v9777 = vadd.f32 %v9601, 1e-05
  %v9778 = vadd.f32 %v9602, 1e-05
  %v9779 = vadd.f32 %v9603, 1e-05
  %v9780 = vadd.f32 %v9604, 1e-05
  %v9781 = vadd.f32 %v9605, 1e-05
  %v9782 = vadd.f32 %v9606, 1e-05
  %v9783 = vadd.f32 %v9607, 1e-05
  %v9784 = vadd.f32 %v9608, 1e-05
  %v9785 = vadd.f32 %v9609, 1e-05
  %v9786 = vadd.f32 %v9610, 1e-05
  %v9787 = vadd.f32 %v9611, 1e-05
  %v9788 = vadd.f32 %v9612, 1e-05
  %v9789 = vadd.f32 %v9613, 1e-05
  %v9790 = vadd.f32 %v9614, 1e-05
  %v9791 = vadd.f32 %v9615, 1e-05
  %v9792 = vadd.f32 %v9616, 1e-05
  %v9793 = vadd.f32 %v9617, 1e-05
  %v9794 = vadd.f32 %v9618, 1e-05
  %v9795 = vadd.f32 %v9619, 1e-05
  %v9796 = vadd.f32 %v9620, 1e-05
  %v9797 = vadd.f32 %v9621, 1e-05
  %v9798 = vadd.f32 %v9622, 1e-05
  %v9799 = vadd.f32 %v9623, 1e-05
  %v9800 = vadd.f32 %v9624, 1e-05
  %v9801 = vadd.f32 %v9625, 1e-05
  %v9802 = vadd.f32 %v9626, 1e-05
  %v9803 = vadd.f32 %v9627, 1e-05
  %v9804 = vadd.f32 %v9628, 1e-05
  %v9805 = vadd.f32 %v9629, 1e-05
  %v9806 = vadd.f32 %v9630, 1e-05
  %v9807 = vadd.f32 %v9631, 1e-05
  %v9808 = vadd.f32 %v9632, 1e-05
  %v9809 = vadd.f32 %v9633, 1e-05
  %v9810 = vadd.f32 %v9634, 1e-05
  %v9811 = vadd.f32 %v9635, 1e-05
  %v9812 = vadd.f32 %v9636, 1e-05
  %v9813 = vadd.f32 %v9637, 1e-05
  %v9814 = vadd.f32 %v9638, 1e-05
  %v9815 = vadd.f32 %v9639, 1e-05
  %v9816 = vadd.f32 %v9640, 1e-05
  %v9817 = vadd.f32 %v9641, 1e-05
  %v9818 = vadd.f32 %v9642, 1e-05
  %v9819 = vadd.f32 %v9643, 1e-05
  %v9820 = vrsqrt.pop %v9644
  %v9821 = vmul.f32 %v9820, %v9644
  %v9822 = vmul.f32 %v9821, %v9820
  %v9823 = vmul.f32 0.5, %v9822
  %v9824 = vsub.f32 1.5, %v9823
  %v9825 = vmul.f32 %v9820, %v9824
  %vm9826 = vweird.f32 %v9644
  %vm9827 = vweird.f32 %v9820
  %vm9828 = vmor %vm9826, %vm9827
  %v9829 = vsel %vm9828, %v9820, %v9825
  %v9830 = vrsqrt.pop %v9645
  %v9831 = vmul.f32 %v9830, %v9645
  %v9832 = vmul.f32 %v9831, %v9830
  %v9833 = vmul.f32 0.5, %v9832
  %v9834 = vsub.f32 1.5, %v9833
  %v9835 = vmul.f32 %v9830, %v9834
  %vm9836 = vweird.f32 %v9645
  %vm9837 = vweird.f32 %v9830
  %vm9838 = vmor %vm9836, %vm9837
  %v9839 = vsel %vm9838, %v9830, %v9835
  %v9840 = vrsqrt.pop %v9646
  %v9841 = vmul.f32 %v9840, %v9646
  %v9842 = vmul.f32 %v9841, %v9840
  %v9843 = vmul.f32 0.5, %v9842
  %v9844 = vsub.f32 1.5, %v9843
  %v9845 = vmul.f32 %v9840, %v9844
  %vm9846 = vweird.f32 %v9646
  %vm9847 = vweird.f32 %v9840
  %vm9848 = vmor %vm9846, %vm9847
  %v9849 = vsel %vm9848, %v9840, %v9845
  %v9850 = vrsqrt.pop %v9647
  %v9851 = vmul.f32 %v9850, %v9647
  %v9852 = vmul.f32 %v9851, %v9850
  %v9853 = vmul.f32 0.5, %v9852
  %v9854 = vsub.f32 1.5, %v9853
  %v9855 = vmul.f32 %v9850, %v9854
  %vm9856 = vweird.f32 %v9647
  %vm9857 = vweird.f32 %v9850
  %vm9858 = vmor %vm9856, %vm9857
  %v9859 = vsel %vm9858, %v9850, %v9855
  %v9860 = vrsqrt.pop %v9648
  %v9861 = vmul.f32 %v9860, %v9648
  %v9862 = vmul.f32 %v9861, %v9860
  %v9863 = vmul.f32 0.5, %v9862
  %v9864 = vsub.f32 1.5, %v9863
  %v9865 = vmul.f32 %v9860, %v9864
  %vm9866 = vweird.f32 %v9648
  %vm9867 = vweird.f32 %v9860
  %vm9868 = vmor %vm9866, %vm9867
  %v9869 = vsel %vm9868, %v9860, %v9865
  %v9870 = vrsqrt.pop %v9649
  %v9871 = vmul.f32 %v9870, %v9649
  %v9872 = vmul.f32 %v9871, %v9870
  %v9873 = vmul.f32 0.5, %v9872
  %v9874 = vsub.f32 1.5, %v9873
  %v9875 = vmul.f32 %v9870, %v9874
  %vm9876 = vweird.f32 %v9649
  %vm9877 = vweird.f32 %v9870
  %vm9878 = vmor %vm9876, %vm9877
  %v9879 = vsel %vm9878, %v9870, %v9875
  %v9880 = vrsqrt.pop %v9650
  %v9881 = vmul.f32 %v9880, %v9650
  %v9882 = vmul.f32 %v9881, %v9880
  %v9883 = vmul.f32 0.5, %v9882
  %v9884 = vsub.f32 1.5, %v9883
  %v9885 = vmul.f32 %v9880, %v9884
  %vm9886 = vweird.f32 %v9650
  %vm9887 = vweird.f32 %v9880
  %vm9888 = vmor %vm9886, %vm9887
  %v9889 = vsel %vm9888, %v9880, %v9885
  %v9890 = vrsqrt.pop %v9651
  %v9891 = vmul.f32 %v9890, %v9651
  %v9892 = vmul.f32 %v9891, %v9890
  %v9893 = vmul.f32 0.5, %v9892
  %v9894 = vsub.f32 1.5, %v9893
  %v9895 = vmul.f32 %v9890, %v9894
  %vm9896 = vweird.f32 %v9651
  %vm9897 = vweird.f32 %v9890
  %vm9898 = vmor %vm9896, %vm9897
  %v9899 = vsel %vm9898, %v9890, %v9895
  %v9900 = vrsqrt.pop %v9652
  %v9901 = vmul.f32 %v9900, %v9652
  %v9902 = vmul.f32 %v9901, %v9900
  %v9903 = vmul.f32 0.5, %v9902
  %v9904 = vsub.f32 1.5, %v9903
  %v9905 = vmul.f32 %v9900, %v9904
  %vm9906 = vweird.f32 %v9652
  %vm9907 = vweird.f32 %v9900
  %vm9908 = vmor %vm9906, %vm9907
  %v9909 = vsel %vm9908, %v9900, %v9905
  %v9910 = vrsqrt.pop %v9653
  %v9911 = vmul.f32 %v9910, %v9653
  %v9912 = vmul.f32 %v9911, %v9910
  %v9913 = vmul.f32 0.5, %v9912
  %v9914 = vsub.f32 1.5, %v9913
  %v9915 = vmul.f32 %v9910, %v9914
  %vm9916 = vweird.f32 %v9653
  %vm9917 = vweird.f32 %v9910
  %vm9918 = vmor %vm9916, %vm9917
  %v9919 = vsel %vm9918, %v9910, %v9915
  %v9920 = vrsqrt.pop %v9654
  %v9921 = vmul.f32 %v9920, %v9654
  %v9922 = vmul.f32 %v9921, %v9920
  %v9923 = vmul.f32 0.5, %v9922
  %v9924 = vsub.f32 1.5, %v9923
  %v9925 = vmul.f32 %v9920, %v9924
  %vm9926 = vweird.f32 %v9654
  %vm9927 = vweird.f32 %v9920
  %vm9928 = vmor %vm9926, %vm9927
  %v9929 = vsel %vm9928, %v9920, %v9925
  %v9930 = vrsqrt.pop %v9655
  %v9931 = vmul.f32 %v9930, %v9655
  %v9932 = vmul.f32 %v9931, %v9930
  %v9933 = vmul.f32 0.5, %v9932
  %v9934 = vsub.f32 1.5, %v9933
  %v9935 = vmul.f32 %v9930, %v9934
  %vm9936 = vweird.f32 %v9655
  %vm9937 = vweird.f32 %v9930
  %vm9938 = vmor %vm9936, %vm9937
  %v9939 = vsel %vm9938, %v9930, %v9935
  %v9940 = vrsqrt.pop %v9656
  %v9941 = vmul.f32 %v9940, %v9656
  %v9942 = vmul.f32 %v9941, %v9940
  %v9943 = vmul.f32 0.5, %v9942
  %v9944 = vsub.f32 1.5, %v9943
  %v9945 = vmul.f32 %v9940, %v9944
  %vm9946 = vweird.f32 %v9656
  %vm9947 = vweird.f32 %v9940
  %vm9948 = vmor %vm9946, %vm9947
  %v9949 = vsel %vm9948, %v9940, %v9945
  %v9950 = vrsqrt.pop %v9657
  %v9951 = vmul.f32 %v9950, %v9657
  %v9952 = vmul.f32 %v9951, %v9950
  %v9953 = vmul.f32 0.5, %v9952
  %v9954 = vsub.f32 1.5, %v9953
  %v9955 = vmul.f32 %v9950, %v9954
  %vm9956 = vweird.f32 %v9657
  %vm9957 = vweird.f32 %v9950
  %vm9958 = vmor %vm9956, %vm9957
  %v9959 = vsel %vm9958, %v9950, %v9955
  %v9960 = vrsqrt.pop %v9658
  %v9961 = vmul.f32 %v9960, %v9658
  %v9962 = vmul.f32 %v9961, %v9960
  %v9963 = vmul.f32 0.5, %v9962
  %v9964 = vsub.f32 1.5, %v9963
  %v9965 = vmul.f32 %v9960, %v9964
  %vm9966 = vweird.f32 %v9658
  %vm9967 = vweird.f32 %v9960
  %vm9968 = vmor %vm9966, %vm9967
  %v9969 = vsel %vm9968, %v9960, %v9965
  %v9970 = vrsqrt.pop %v9659
  %v9971 = vmul.f32 %v9970, %v9659
  %v9972 = vmul.f32 %v9971, %v9970
  %v9973 = vmul.f32 0.5, %v9972
  %v9974 = vsub.f32 1.5, %v9973
  %v9975 = vmul.f32 %v9970, %v9974
  %vm9976 = vweird.f32 %v9659
  %vm9977 = vweird.f32 %v9970
  %vm9978 = vmor %vm9976, %vm9977
  %v9979 = vsel %vm9978, %v9970, %v9975
  %v9980 = vrsqrt.pop %v9660
  %v9981 = vmul.f32 %v9980, %v9660
  %v9982 = vmul.f32 %v9981, %v9980
  %v9983 = vmul.f32 0.5, %v9982
  %v9984 = vsub.f32 1.5, %v9983
  %v9985 = vmul.f32 %v9980, %v9984
  %vm9986 = vweird.f32 %v9660
  %vm9987 = vweird.f32 %v9980
  %vm9988 = vmor %vm9986, %vm9987
  %v9989 = vsel %vm9988, %v9980, %v9985
  %v9990 = vrsqrt.pop %v9661
  %v9991 = vmul.f32 %v9990, %v9661
  %v9992 = vmul.f32 %v9991, %v9990
  %v9993 = vmul.f32 0.5, %v9992
  %v9994 = vsub.f32 1.5, %v9993
  %v9995 = vmul.f32 %v9990, %v9994
  %vm9996 = vweird.f32 %v9661
  %vm9997 = vweird.f32 %v9990
  %vm9998 = vmor %vm9996, %vm9997
  %v9999 = vsel %vm9998, %v9990, %v9995
  %v10000 = vrsqrt.pop %v9662
  %v10001 = vmul.f32 %v10000, %v9662
  %v10002 = vmul.f32 %v10001, %v10000
  %v10003 = vmul.f32 0.5, %v10002
  %v10004 = vsub.f32 1.5, %v10003
  %v10005 = vmul.f32 %v10000, %v10004
  %vm10006 = vweird.f32 %v9662
  %vm10007 = vweird.f32 %v10000
  %vm10008 = vmor %vm10006, %vm10007
  %v10009 = vsel %vm10008, %v10000, %v10005
  %v10010 = vrsqrt.pop %v9663
  %v10011 = vmul.f32 %v10010, %v9663
  %v10012 = vmul.f32 %v10011, %v10010
  %v10013 = vmul.f32 0.5, %v10012
  %v10014 = vsub.f32 1.5, %v10013
  %v10015 = vmul.f32 %v10010, %v10014
  %vm10016 = vweird.f32 %v9663
  %vm10017 = vweird.f32 %v10010
  %vm10018 = vmor %vm10016, %vm10017
  %v10019 = vsel %vm10018, %v10010, %v10015
  %v10020 = vrsqrt.pop %v9664
  %v10021 = vmul.f32 %v10020, %v9664
  %v10022 = vmul.f32 %v10021, %v10020
  %v10023 = vmul.f32 0.5, %v10022
  %v10024 = vsub.f32 1.5, %v10023
  %v10025 = vmul.f32 %v10020, %v10024
  %vm10026 = vweird.f32 %v9664
  %vm10027 = vweird.f32 %v10020
  %vm10028 = vmor %vm10026, %vm10027
  %v10029 = vsel %vm10028, %v10020, %v10025
  %v10030 = vrsqrt.pop %v9665
  %v10031 = vmul.f32 %v10030, %v9665
  %v10032 = vmul.f32 %v10031, %v10030
  %v10033 = vmul.f32 0.5, %v10032
  %v10034 = vsub.f32 1.5, %v10033
  %v10035 = vmul.f32 %v10030, %v10034
  %vm10036 = vweird.f32 %v9665
  %vm10037 = vweird.f32 %v10030
  %vm10038 = vmor %vm10036, %vm10037
  %v10039 = vsel %vm10038, %v10030, %v10035
  %v10040 = vrsqrt.pop %v9666
  %v10041 = vmul.f32 %v10040, %v9666
  %v10042 = vmul.f32 %v10041, %v10040
  %v10043 = vmul.f32 0.5, %v10042
  %v10044 = vsub.f32 1.5, %v10043
  %v10045 = vmul.f32 %v10040, %v10044
  %vm10046 = vweird.f32 %v9666
  %vm10047 = vweird.f32 %v10040
  %vm10048 = vmor %vm10046, %vm10047
  %v10049 = vsel %vm10048, %v10040, %v10045
  %v10050 = vrsqrt.pop %v9667
  %v10051 = vmul.f32 %v10050, %v9667
  %v10052 = vmul.f32 %v10051, %v10050
  %v10053 = vmul.f32 0.5, %v10052
  %v10054 = vsub.f32 1.5, %v10053
  %v10055 = vmul.f32 %v10050, %v10054
  %vm10056 = vweird.f32 %v9667
  %vm10057 = vweird.f32 %v10050
  %vm10058 = vmor %vm10056, %vm10057
  %v10059 = vsel %vm10058, %v10050, %v10055
  %v10060 = vrsqrt.pop %v9668
  %v10061 = vmul.f32 %v10060, %v9668
  %v10062 = vmul.f32 %v10061, %v10060
  %v10063 = vmul.f32 0.5, %v10062
  %v10064 = vsub.f32 1.5, %v10063
  %v10065 = vmul.f32 %v10060, %v10064
  %vm10066 = vweird.f32 %v9668
  %vm10067 = vweird.f32 %v10060
  %vm10068 = vmor %vm10066, %vm10067
  %v10069 = vsel %vm10068, %v10060, %v10065
  %v10070 = vrsqrt.pop %v9669
  %v10071 = vmul.f32 %v10070, %v9669
  %v10072 = vmul.f32 %v10071, %v10070
  %v10073 = vmul.f32 0.5, %v10072
  %v10074 = vsub.f32 1.5, %v10073
  %v10075 = vmul.f32 %v10070, %v10074
  %vm10076 = vweird.f32 %v9669
  %vm10077 = vweird.f32 %v10070
  %vm10078 = vmor %vm10076, %vm10077
  %v10079 = vsel %vm10078, %v10070, %v10075
  %v10080 = vrsqrt.pop %v9670
  %v10081 = vmul.f32 %v10080, %v9670
  %v10082 = vmul.f32 %v10081, %v10080
  %v10083 = vmul.f32 0.5, %v10082
  %v10084 = vsub.f32 1.5, %v10083
  %v10085 = vmul.f32 %v10080, %v10084
  %vm10086 = vweird.f32 %v9670
  %vm10087 = vweird.f32 %v10080
  %vm10088 = vmor %vm10086, %vm10087
  %v10089 = vsel %vm10088, %v10080, %v10085
  %v10090 = vrsqrt.pop %v9671
  %v10091 = vmul.f32 %v10090, %v9671
  %v10092 = vmul.f32 %v10091, %v10090
  %v10093 = vmul.f32 0.5, %v10092
  %v10094 = vsub.f32 1.5, %v10093
  %v10095 = vmul.f32 %v10090, %v10094
  %vm10096 = vweird.f32 %v9671
  %vm10097 = vweird.f32 %v10090
  %vm10098 = vmor %vm10096, %vm10097
  %v10099 = vsel %vm10098, %v10090, %v10095
  %v10100 = vrsqrt.pop %v9672
  %v10101 = vmul.f32 %v10100, %v9672
  %v10102 = vmul.f32 %v10101, %v10100
  %v10103 = vmul.f32 0.5, %v10102
  %v10104 = vsub.f32 1.5, %v10103
  %v10105 = vmul.f32 %v10100, %v10104
  %vm10106 = vweird.f32 %v9672
  %vm10107 = vweird.f32 %v10100
  %vm10108 = vmor %vm10106, %vm10107
  %v10109 = vsel %vm10108, %v10100, %v10105
  %v10110 = vrsqrt.pop %v9673
  %v10111 = vmul.f32 %v10110, %v9673
  %v10112 = vmul.f32 %v10111, %v10110
  %v10113 = vmul.f32 0.5, %v10112
  %v10114 = vsub.f32 1.5, %v10113
  %v10115 = vmul.f32 %v10110, %v10114
  %vm10116 = vweird.f32 %v9673
  %vm10117 = vweird.f32 %v10110
  %vm10118 = vmor %vm10116, %vm10117
  %v10119 = vsel %vm10118, %v10110, %v10115
  %v10120 = vrsqrt.pop %v9674
  %v10121 = vmul.f32 %v10120, %v9674
  %v10122 = vmul.f32 %v10121, %v10120
  %v10123 = vmul.f32 0.5, %v10122
  %v10124 = vsub.f32 1.5, %v10123
  %v10125 = vmul.f32 %v10120, %v10124
  %vm10126 = vweird.f32 %v9674
  %vm10127 = vweird.f32 %v10120
  %vm10128 = vmor %vm10126, %vm10127
  %v10129 = vsel %vm10128, %v10120, %v10125
  %v10130 = vrsqrt.pop %v9675
  %v10131 = vmul.f32 %v10130, %v9675
  %v10132 = vmul.f32 %v10131, %v10130
  %v10133 = vmul.f32 0.5, %v10132
  %v10134 = vsub.f32 1.5, %v10133
  %v10135 = vmul.f32 %v10130, %v10134
  %vm10136 = vweird.f32 %v9675
  %vm10137 = vweird.f32 %v10130
  %vm10138 = vmor %vm10136, %vm10137
  %v10139 = vsel %vm10138, %v10130, %v10135
  %v10140 = vrsqrt.pop %v9676
  %v10141 = vmul.f32 %v10140, %v9676
  %v10142 = vmul.f32 %v10141, %v10140
  %v10143 = vmul.f32 0.5, %v10142
  %v10144 = vsub.f32 1.5, %v10143
  %v10145 = vmul.f32 %v10140, %v10144
  %vm10146 = vweird.f32 %v9676
  %vm10147 = vweird.f32 %v10140
  %vm10148 = vmor %vm10146, %vm10147
  %v10149 = vsel %vm10148, %v10140, %v10145
  %v10150 = vrsqrt.pop %v9677
  %v10151 = vmul.f32 %v10150, %v9677
  %v10152 = vmul.f32 %v10151, %v10150
  %v10153 = vmul.f32 0.5, %v10152
  %v10154 = vsub.f32 1.5, %v10153
  %v10155 = vmul.f32 %v10150, %v10154
  %vm10156 = vweird.f32 %v9677
  %vm10157 = vweird.f32 %v10150
  %vm10158 = vmor %vm10156, %vm10157
  %v10159 = vsel %vm10158, %v10150, %v10155
  %v10160 = vrsqrt.pop %v9678
  %v10161 = vmul.f32 %v10160, %v9678
  %v10162 = vmul.f32 %v10161, %v10160
  %v10163 = vmul.f32 0.5, %v10162
  %v10164 = vsub.f32 1.5, %v10163
  %v10165 = vmul.f32 %v10160, %v10164
  %vm10166 = vweird.f32 %v9678
  %vm10167 = vweird.f32 %v10160
  %vm10168 = vmor %vm10166, %vm10167
  %v10169 = vsel %vm10168, %v10160, %v10165
  %v10170 = vrsqrt.pop %v9679
  %v10171 = vmul.f32 %v10170, %v9679
  %v10172 = vmul.f32 %v10171, %v10170
  %v10173 = vmul.f32 0.5, %v10172
  %v10174 = vsub.f32 1.5, %v10173
  %v10175 = vmul.f32 %v10170, %v10174
  %vm10176 = vweird.f32 %v9679
  %vm10177 = vweird.f32 %v10170
  %vm10178 = vmor %vm10176, %vm10177
  %v10179 = vsel %vm10178, %v10170, %v10175
  %v10180 = vrsqrt.pop %v9680
  %v10181 = vmul.f32 %v10180, %v9680
  %v10182 = vmul.f32 %v10181, %v10180
  %v10183 = vmul.f32 0.5, %v10182
  %v10184 = vsub.f32 1.5, %v10183
  %v10185 = vmul.f32 %v10180, %v10184
  %vm10186 = vweird.f32 %v9680
  %vm10187 = vweird.f32 %v10180
  %vm10188 = vmor %vm10186, %vm10187
  %v10189 = vsel %vm10188, %v10180, %v10185
  %v10190 = vrsqrt.pop %v9681
  %v10191 = vmul.f32 %v10190, %v9681
  %v10192 = vmul.f32 %v10191, %v10190
  %v10193 = vmul.f32 0.5, %v10192
  %v10194 = vsub.f32 1.5, %v10193
  %v10195 = vmul.f32 %v10190, %v10194
  %vm10196 = vweird.f32 %v9681
  %vm10197 = vweird.f32 %v10190
  %vm10198 = vmor %vm10196, %vm10197
  %v10199 = vsel %vm10198, %v10190, %v10195
  %v10200 = vrsqrt.pop %v9682
  %v10201 = vmul.f32 %v10200, %v9682
  %v10202 = vmul.f32 %v10201, %v10200
  %v10203 = vmul.f32 0.5, %v10202
  %v10204 = vsub.f32 1.5, %v10203
  %v10205 = vmul.f32 %v10200, %v10204
  %vm10206 = vweird.f32 %v9682
  %vm10207 = vweird.f32 %v10200
  %vm10208 = vmor %vm10206, %vm10207
  %v10209 = vsel %vm10208, %v10200, %v10205
  %v10210 = vrsqrt.pop %v9683
  %v10211 = vmul.f32 %v10210, %v9683
  %v10212 = vmul.f32 %v10211, %v10210
  %v10213 = vmul.f32 0.5, %v10212
  %v10214 = vsub.f32 1.5, %v10213
  %v10215 = vmul.f32 %v10210, %v10214
  %vm10216 = vweird.f32 %v9683
  %vm10217 = vweird.f32 %v10210
  %vm10218 = vmor %vm10216, %vm10217
  %v10219 = vsel %vm10218, %v10210, %v10215
  %v10220 = vrsqrt.pop %v9684
  %v10221 = vmul.f32 %v10220, %v9684
  %v10222 = vmul.f32 %v10221, %v10220
  %v10223 = vmul.f32 0.5, %v10222
  %v10224 = vsub.f32 1.5, %v10223
  %v10225 = vmul.f32 %v10220, %v10224
  %vm10226 = vweird.f32 %v9684
  %vm10227 = vweird.f32 %v10220
  %vm10228 = vmor %vm10226, %vm10227
  %v10229 = vsel %vm10228, %v10220, %v10225
  %v10230 = vrsqrt.pop %v9685
  %v10231 = vmul.f32 %v10230, %v9685
  %v10232 = vmul.f32 %v10231, %v10230
  %v10233 = vmul.f32 0.5, %v10232
  %v10234 = vsub.f32 1.5, %v10233
  %v10235 = vmul.f32 %v10230, %v10234
  %vm10236 = vweird.f32 %v9685
  %vm10237 = vweird.f32 %v10230
  %vm10238 = vmor %vm10236, %vm10237
  %v10239 = vsel %vm10238, %v10230, %v10235
  %v10240 = vrsqrt.pop %v9686
  %v10241 = vmul.f32 %v10240, %v9686
  %v10242 = vmul.f32 %v10241, %v10240
  %v10243 = vmul.f32 0.5, %v10242
  %v10244 = vsub.f32 1.5, %v10243
  %v10245 = vmul.f32 %v10240, %v10244
  %vm10246 = vweird.f32 %v9686
  %vm10247 = vweird.f32 %v10240
  %vm10248 = vmor %vm10246, %vm10247
  %v10249 = vsel %vm10248, %v10240, %v10245
  %v10250 = vrsqrt.pop %v9687
  %v10251 = vmul.f32 %v10250, %v9687
  %v10252 = vmul.f32 %v10251, %v10250
  %v10253 = vmul.f32 0.5, %v10252
  %v10254 = vsub.f32 1.5, %v10253
  %v10255 = vmul.f32 %v10250, %v10254
  %vm10256 = vweird.f32 %v9687
  %vm10257 = vweird.f32 %v10250
  %vm10258 = vmor %vm10256, %vm10257
  %v10259 = vsel %vm10258, %v10250, %v10255
  %v10260 = vrsqrt.pop %v9688
  %v10261 = vmul.f32 %v10260, %v9688
  %v10262 = vmul.f32 %v10261, %v10260
  %v10263 = vmul.f32 0.5, %v10262
  %v10264 = vsub.f32 1.5, %v10263
  %v10265 = vmul.f32 %v10260, %v10264
  %vm10266 = vweird.f32 %v9688
  %vm10267 = vweird.f32 %v10260
  %vm10268 = vmor %vm10266, %vm10267
  %v10269 = vsel %vm10268, %v10260, %v10265
  %v10270 = vrsqrt.pop %v9689
  %v10271 = vmul.f32 %v10270, %v9689
  %v10272 = vmul.f32 %v10271, %v10270
  %v10273 = vmul.f32 0.5, %v10272
  %v10274 = vsub.f32 1.5, %v10273
  %v10275 = vmul.f32 %v10270, %v10274
  %vm10276 = vweird.f32 %v9689
  %vm10277 = vweird.f32 %v10270
  %vm10278 = vmor %vm10276, %vm10277
  %v10279 = vsel %vm10278, %v10270, %v10275
  %v10280 = vrsqrt.pop %v9690
  %v10281 = vmul.f32 %v10280, %v9690
  %v10282 = vmul.f32 %v10281, %v10280
  %v10283 = vmul.f32 0.5, %v10282
  %v10284 = vsub.f32 1.5, %v10283
  %v10285 = vmul.f32 %v10280, %v10284
  %vm10286 = vweird.f32 %v9690
  %vm10287 = vweird.f32 %v10280
  %vm10288 = vmor %vm10286, %vm10287
  %v10289 = vsel %vm10288, %v10280, %v10285
  %v10290 = vrsqrt.pop %v9691
  %v10291 = vmul.f32 %v10290, %v9691
  %v10292 = vmul.f32 %v10291, %v10290
  %v10293 = vmul.f32 0.5, %v10292
  %v10294 = vsub.f32 1.5, %v10293
  %v10295 = vmul.f32 %v10290, %v10294
  %vm10296 = vweird.f32 %v9691
  %vm10297 = vweird.f32 %v10290
  %vm10298 = vmor %vm10296, %vm10297
  %v10299 = vsel %vm10298, %v10290, %v10295
  %v10300 = vrsqrt.pop %v9692
  %v10301 = vmul.f32 %v10300, %v9692
  %v10302 = vmul.f32 %v10301, %v10300
  %v10303 = vmul.f32 0.5, %v10302
  %v10304 = vsub.f32 1.5, %v10303
  %v10305 = vmul.f32 %v10300, %v10304
  %vm10306 = vweird.f32 %v9692
  %vm10307 = vweird.f32 %v10300
  %vm10308 = vmor %vm10306, %vm10307
  %v10309 = vsel %vm10308, %v10300, %v10305
  %v10310 = vrsqrt.pop %v9693
  %v10311 = vmul.f32 %v10310, %v9693
  %v10312 = vmul.f32 %v10311, %v10310
  %v10313 = vmul.f32 0.5, %v10312
  %v10314 = vsub.f32 1.5, %v10313
  %v10315 = vmul.f32 %v10310, %v10314
  %vm10316 = vweird.f32 %v9693
  %vm10317 = vweird.f32 %v10310
  %vm10318 = vmor %vm10316, %vm10317
  %v10319 = vsel %vm10318, %v10310, %v10315
  %v10320 = vrsqrt.pop %v9694
  %v10321 = vmul.f32 %v10320, %v9694
  %v10322 = vmul.f32 %v10321, %v10320
  %v10323 = vmul.f32 0.5, %v10322
  %v10324 = vsub.f32 1.5, %v10323
  %v10325 = vmul.f32 %v10320, %v10324
  %vm10326 = vweird.f32 %v9694
  %vm10327 = vweird.f32 %v10320
  %vm10328 = vmor %vm10326, %vm10327
  %v10329 = vsel %vm10328, %v10320, %v10325
  %v10330 = vrsqrt.pop %v9695
  %v10331 = vmul.f32 %v10330, %v9695
  %v10332 = vmul.f32 %v10331, %v10330
  %v10333 = vmul.f32 0.5, %v10332
  %v10334 = vsub.f32 1.5, %v10333
  %v10335 = vmul.f32 %v10330, %v10334
  %vm10336 = vweird.f32 %v9695
  %vm10337 = vweird.f32 %v10330
  %vm10338 = vmor %vm10336, %vm10337
  %v10339 = vsel %vm10338, %v10330, %v10335
  %v10340 = vrsqrt.pop %v9696
  %v10341 = vmul.f32 %v10340, %v9696
  %v10342 = vmul.f32 %v10341, %v10340
  %v10343 = vmul.f32 0.5, %v10342
  %v10344 = vsub.f32 1.5, %v10343
  %v10345 = vmul.f32 %v10340, %v10344
  %vm10346 = vweird.f32 %v9696
  %vm10347 = vweird.f32 %v10340
  %vm10348 = vmor %vm10346, %vm10347
  %v10349 = vsel %vm10348, %v10340, %v10345
  %v10350 = vrsqrt.pop %v9697
  %v10351 = vmul.f32 %v10350, %v9697
  %v10352 = vmul.f32 %v10351, %v10350
  %v10353 = vmul.f32 0.5, %v10352
  %v10354 = vsub.f32 1.5, %v10353
  %v10355 = vmul.f32 %v10350, %v10354
  %vm10356 = vweird.f32 %v9697
  %vm10357 = vweird.f32 %v10350
  %vm10358 = vmor %vm10356, %vm10357
  %v10359 = vsel %vm10358, %v10350, %v10355
  %v10360 = vrsqrt.pop %v9698
  %v10361 = vmul.f32 %v10360, %v9698
  %v10362 = vmul.f32 %v10361, %v10360
  %v10363 = vmul.f32 0.5, %v10362
  %v10364 = vsub.f32 1.5, %v10363
  %v10365 = vmul.f32 %v10360, %v10364
  %vm10366 = vweird.f32 %v9698
  %vm10367 = vweird.f32 %v10360
  %vm10368 = vmor %vm10366, %vm10367
  %v10369 = vsel %vm10368, %v10360, %v10365
  %v10370 = vrsqrt.pop %v9699
  %v10371 = vmul.f32 %v10370, %v9699
  %v10372 = vmul.f32 %v10371, %v10370
  %v10373 = vmul.f32 0.5, %v10372
  %v10374 = vsub.f32 1.5, %v10373
  %v10375 = vmul.f32 %v10370, %v10374
  %vm10376 = vweird.f32 %v9699
  %vm10377 = vweird.f32 %v10370
  %vm10378 = vmor %vm10376, %vm10377
  %v10379 = vsel %vm10378, %v10370, %v10375
  %v10380 = vrsqrt.pop %v9700
  %v10381 = vmul.f32 %v10380, %v9700
  %v10382 = vmul.f32 %v10381, %v10380
  %v10383 = vmul.f32 0.5, %v10382
  %v10384 = vsub.f32 1.5, %v10383
  %v10385 = vmul.f32 %v10380, %v10384
  %vm10386 = vweird.f32 %v9700
  %vm10387 = vweird.f32 %v10380
  %vm10388 = vmor %vm10386, %vm10387
  %v10389 = vsel %vm10388, %v10380, %v10385
  %v10390 = vrsqrt.pop %v9701
  %v10391 = vmul.f32 %v10390, %v9701
  %v10392 = vmul.f32 %v10391, %v10390
  %v10393 = vmul.f32 0.5, %v10392
  %v10394 = vsub.f32 1.5, %v10393
  %v10395 = vmul.f32 %v10390, %v10394
  %vm10396 = vweird.f32 %v9701
  %vm10397 = vweird.f32 %v10390
  %vm10398 = vmor %vm10396, %vm10397
  %v10399 = vsel %vm10398, %v10390, %v10395
  %v10400 = vrsqrt.pop %v9702
  %v10401 = vmul.f32 %v10400, %v9702
  %v10402 = vmul.f32 %v10401, %v10400
  %v10403 = vmul.f32 0.5, %v10402
  %v10404 = vsub.f32 1.5, %v10403
  %v10405 = vmul.f32 %v10400, %v10404
  %vm10406 = vweird.f32 %v9702
  %vm10407 = vweird.f32 %v10400
  %vm10408 = vmor %vm10406, %vm10407
  %v10409 = vsel %vm10408, %v10400, %v10405
  %v10410 = vrsqrt.pop %v9703
  %v10411 = vmul.f32 %v10410, %v9703
  %v10412 = vmul.f32 %v10411, %v10410
  %v10413 = vmul.f32 0.5, %v10412
  %v10414 = vsub.f32 1.5, %v10413
  %v10415 = vmul.f32 %v10410, %v10414
  %vm10416 = vweird.f32 %v9703
  %vm10417 = vweird.f32 %v10410
  %vm10418 = vmor %vm10416, %vm10417
  %v10419 = vsel %vm10418, %v10410, %v10415
  %v10420 = vrsqrt.pop %v9704
  %v10421 = vmul.f32 %v10420, %v9704
  %v10422 = vmul.f32 %v10421, %v10420
  %v10423 = vmul.f32 0.5, %v10422
  %v10424 = vsub.f32 1.5, %v10423
  %v10425 = vmul.f32 %v10420, %v10424
  %vm10426 = vweird.f32 %v9704
  %vm10427 = vweird.f32 %v10420
  %vm10428 = vmor %vm10426, %vm10427
  %v10429 = vsel %vm10428, %v10420, %v10425
  %v10430 = vrsqrt.pop %v9705
  %v10431 = vmul.f32 %v10430, %v9705
  %v10432 = vmul.f32 %v10431, %v10430
  %v10433 = vmul.f32 0.5, %v10432
  %v10434 = vsub.f32 1.5, %v10433
  %v10435 = vmul.f32 %v10430, %v10434
  %vm10436 = vweird.f32 %v9705
  %vm10437 = vweird.f32 %v10430
  %vm10438 = vmor %vm10436, %vm10437
  %v10439 = vsel %vm10438, %v10430, %v10435
  %v10440 = vrsqrt.pop %v9706
  %v10441 = vmul.f32 %v10440, %v9706
  %v10442 = vmul.f32 %v10441, %v10440
  %v10443 = vmul.f32 0.5, %v10442
  %v10444 = vsub.f32 1.5, %v10443
  %v10445 = vmul.f32 %v10440, %v10444
  %vm10446 = vweird.f32 %v9706
  %vm10447 = vweird.f32 %v10440
  %vm10448 = vmor %vm10446, %vm10447
  %v10449 = vsel %vm10448, %v10440, %v10445
  %v10450 = vrsqrt.pop %v9707
  %v10451 = vmul.f32 %v10450, %v9707
  %v10452 = vmul.f32 %v10451, %v10450
  %v10453 = vmul.f32 0.5, %v10452
  %v10454 = vsub.f32 1.5, %v10453
  %v10455 = vmul.f32 %v10450, %v10454
  %vm10456 = vweird.f32 %v9707
  %vm10457 = vweird.f32 %v10450
  %vm10458 = vmor %vm10456, %vm10457
  %v10459 = vsel %vm10458, %v10450, %v10455
  %v10460 = vrsqrt.pop %v9708
  %v10461 = vmul.f32 %v10460, %v9708
  %v10462 = vmul.f32 %v10461, %v10460
  %v10463 = vmul.f32 0.5, %v10462
  %v10464 = vsub.f32 1.5, %v10463
  %v10465 = vmul.f32 %v10460, %v10464
  %vm10466 = vweird.f32 %v9708
  %vm10467 = vweird.f32 %v10460
  %vm10468 = vmor %vm10466, %vm10467
  %v10469 = vsel %vm10468, %v10460, %v10465
  %v10470 = vrsqrt.pop %v9709
  %v10471 = vmul.f32 %v10470, %v9709
  %v10472 = vmul.f32 %v10471, %v10470
  %v10473 = vmul.f32 0.5, %v10472
  %v10474 = vsub.f32 1.5, %v10473
  %v10475 = vmul.f32 %v10470, %v10474
  %vm10476 = vweird.f32 %v9709
  %vm10477 = vweird.f32 %v10470
  %vm10478 = vmor %vm10476, %vm10477
  %v10479 = vsel %vm10478, %v10470, %v10475
  %v10480 = vrsqrt.pop %v9710
  %v10481 = vmul.f32 %v10480, %v9710
  %v10482 = vmul.f32 %v10481, %v10480
  %v10483 = vmul.f32 0.5, %v10482
  %v10484 = vsub.f32 1.5, %v10483
  %v10485 = vmul.f32 %v10480, %v10484
  %vm10486 = vweird.f32 %v9710
  %vm10487 = vweird.f32 %v10480
  %vm10488 = vmor %vm10486, %vm10487
  %v10489 = vsel %vm10488, %v10480, %v10485
  %v10490 = vrsqrt.pop %v9711
  %v10491 = vmul.f32 %v10490, %v9711
  %v10492 = vmul.f32 %v10491, %v10490
  %v10493 = vmul.f32 0.5, %v10492
  %v10494 = vsub.f32 1.5, %v10493
  %v10495 = vmul.f32 %v10490, %v10494
  %vm10496 = vweird.f32 %v9711
  %vm10497 = vweird.f32 %v10490
  %vm10498 = vmor %vm10496, %vm10497
  %v10499 = vsel %vm10498, %v10490, %v10495
  %v10500 = vrsqrt.pop %v9712
  %v10501 = vmul.f32 %v10500, %v9712
  %v10502 = vmul.f32 %v10501, %v10500
  %v10503 = vmul.f32 0.5, %v10502
  %v10504 = vsub.f32 1.5, %v10503
  %v10505 = vmul.f32 %v10500, %v10504
  %vm10506 = vweird.f32 %v9712
  %vm10507 = vweird.f32 %v10500
  %vm10508 = vmor %vm10506, %vm10507
  %v10509 = vsel %vm10508, %v10500, %v10505
  %v10510 = vrsqrt.pop %v9713
  %v10511 = vmul.f32 %v10510, %v9713
  %v10512 = vmul.f32 %v10511, %v10510
  %v10513 = vmul.f32 0.5, %v10512
  %v10514 = vsub.f32 1.5, %v10513
  %v10515 = vmul.f32 %v10510, %v10514
  %vm10516 = vweird.f32 %v9713
  %vm10517 = vweird.f32 %v10510
  %vm10518 = vmor %vm10516, %vm10517
  %v10519 = vsel %vm10518, %v10510, %v10515
  %v10520 = vrsqrt.pop %v9714
  %v10521 = vmul.f32 %v10520, %v9714
  %v10522 = vmul.f32 %v10521, %v10520
  %v10523 = vmul.f32 0.5, %v10522
  %v10524 = vsub.f32 1.5, %v10523
  %v10525 = vmul.f32 %v10520, %v10524
  %vm10526 = vweird.f32 %v9714
  %vm10527 = vweird.f32 %v10520
  %vm10528 = vmor %vm10526, %vm10527
  %v10529 = vsel %vm10528, %v10520, %v10525
  %v10530 = vrsqrt.pop %v9715
  %v10531 = vmul.f32 %v10530, %v9715
  %v10532 = vmul.f32 %v10531, %v10530
  %v10533 = vmul.f32 0.5, %v10532
  %v10534 = vsub.f32 1.5, %v10533
  %v10535 = vmul.f32 %v10530, %v10534
  %vm10536 = vweird.f32 %v9715
  %vm10537 = vweird.f32 %v10530
  %vm10538 = vmor %vm10536, %vm10537
  %v10539 = vsel %vm10538, %v10530, %v10535
  %v10540 = vrsqrt.pop %v9716
  %v10541 = vmul.f32 %v10540, %v9716
  %v10542 = vmul.f32 %v10541, %v10540
  %v10543 = vmul.f32 0.5, %v10542
  %v10544 = vsub.f32 1.5, %v10543
  %v10545 = vmul.f32 %v10540, %v10544
  %vm10546 = vweird.f32 %v9716
  %vm10547 = vweird.f32 %v10540
  %vm10548 = vmor %vm10546, %vm10547
  %v10549 = vsel %vm10548, %v10540, %v10545
  %v10550 = vrsqrt.pop %v9717
  %v10551 = vmul.f32 %v10550, %v9717
  %v10552 = vmul.f32 %v10551, %v10550
  %v10553 = vmul.f32 0.5, %v10552
  %v10554 = vsub.f32 1.5, %v10553
  %v10555 = vmul.f32 %v10550, %v10554
  %vm10556 = vweird.f32 %v9717
  %vm10557 = vweird.f32 %v10550
  %vm10558 = vmor %vm10556, %vm10557
  %v10559 = vsel %vm10558, %v10550, %v10555
  %v10560 = vrsqrt.pop %v9718
  %v10561 = vmul.f32 %v10560, %v9718
  %v10562 = vmul.f32 %v10561, %v10560
  %v10563 = vmul.f32 0.5, %v10562
  %v10564 = vsub.f32 1.5, %v10563
  %v10565 = vmul.f32 %v10560, %v10564
  %vm10566 = vweird.f32 %v9718
  %vm10567 = vweird.f32 %v10560
  %vm10568 = vmor %vm10566, %vm10567
  %v10569 = vsel %vm10568, %v10560, %v10565
  %v10570 = vrsqrt.pop %v9719
  %v10571 = vmul.f32 %v10570, %v9719
  %v10572 = vmul.f32 %v10571, %v10570
  %v10573 = vmul.f32 0.5, %v10572
  %v10574 = vsub.f32 1.5, %v10573
  %v10575 = vmul.f32 %v10570, %v10574
  %vm10576 = vweird.f32 %v9719
  %vm10577 = vweird.f32 %v10570
  %vm10578 = vmor %vm10576, %vm10577
  %v10579 = vsel %vm10578, %v10570, %v10575
  %v10580 = vrsqrt.pop %v9720
  %v10581 = vmul.f32 %v10580, %v9720
  %v10582 = vmul.f32 %v10581, %v10580
  %v10583 = vmul.f32 0.5, %v10582
  %v10584 = vsub.f32 1.5, %v10583
  %v10585 = vmul.f32 %v10580, %v10584
  %vm10586 = vweird.f32 %v9720
  %vm10587 = vweird.f32 %v10580
  %vm10588 = vmor %vm10586, %vm10587
  %v10589 = vsel %vm10588, %v10580, %v10585
  %v10590 = vrsqrt.pop %v9721
  %v10591 = vmul.f32 %v10590, %v9721
  %v10592 = vmul.f32 %v10591, %v10590
  %v10593 = vmul.f32 0.5, %v10592
  %v10594 = vsub.f32 1.5, %v10593
  %v10595 = vmul.f32 %v10590, %v10594
  %vm10596 = vweird.f32 %v9721
  %vm10597 = vweird.f32 %v10590
  %vm10598 = vmor %vm10596, %vm10597
  %v10599 = vsel %vm10598, %v10590, %v10595
  %v10600 = vrsqrt.pop %v9722
  %v10601 = vmul.f32 %v10600, %v9722
  %v10602 = vmul.f32 %v10601, %v10600
  %v10603 = vmul.f32 0.5, %v10602
  %v10604 = vsub.f32 1.5, %v10603
  %v10605 = vmul.f32 %v10600, %v10604
  %vm10606 = vweird.f32 %v9722
  %vm10607 = vweird.f32 %v10600
  %vm10608 = vmor %vm10606, %vm10607
  %v10609 = vsel %vm10608, %v10600, %v10605
  %v10610 = vrsqrt.pop %v9723
  %v10611 = vmul.f32 %v10610, %v9723
  %v10612 = vmul.f32 %v10611, %v10610
  %v10613 = vmul.f32 0.5, %v10612
  %v10614 = vsub.f32 1.5, %v10613
  %v10615 = vmul.f32 %v10610, %v10614
  %vm10616 = vweird.f32 %v9723
  %vm10617 = vweird.f32 %v10610
  %vm10618 = vmor %vm10616, %vm10617
  %v10619 = vsel %vm10618, %v10610, %v10615
  %v10620 = vrsqrt.pop %v9724
  %v10621 = vmul.f32 %v10620, %v9724
  %v10622 = vmul.f32 %v10621, %v10620
  %v10623 = vmul.f32 0.5, %v10622
  %v10624 = vsub.f32 1.5, %v10623
  %v10625 = vmul.f32 %v10620, %v10624
  %vm10626 = vweird.f32 %v9724
  %vm10627 = vweird.f32 %v10620
  %vm10628 = vmor %vm10626, %vm10627
  %v10629 = vsel %vm10628, %v10620, %v10625
  %v10630 = vrsqrt.pop %v9725
  %v10631 = vmul.f32 %v10630, %v9725
  %v10632 = vmul.f32 %v10631, %v10630
  %v10633 = vmul.f32 0.5, %v10632
  %v10634 = vsub.f32 1.5, %v10633
  %v10635 = vmul.f32 %v10630, %v10634
  %vm10636 = vweird.f32 %v9725
  %vm10637 = vweird.f32 %v10630
  %vm10638 = vmor %vm10636, %vm10637
  %v10639 = vsel %vm10638, %v10630, %v10635
  %v10640 = vrsqrt.pop %v9726
  %v10641 = vmul.f32 %v10640, %v9726
  %v10642 = vmul.f32 %v10641, %v10640
  %v10643 = vmul.f32 0.5, %v10642
  %v10644 = vsub.f32 1.5, %v10643
  %v10645 = vmul.f32 %v10640, %v10644
  %vm10646 = vweird.f32 %v9726
  %vm10647 = vweird.f32 %v10640
  %vm10648 = vmor %vm10646, %vm10647
  %v10649 = vsel %vm10648, %v10640, %v10645
  %v10650 = vrsqrt.pop %v9727
  %v10651 = vmul.f32 %v10650, %v9727
  %v10652 = vmul.f32 %v10651, %v10650
  %v10653 = vmul.f32 0.5, %v10652
  %v10654 = vsub.f32 1.5, %v10653
  %v10655 = vmul.f32 %v10650, %v10654
  %vm10656 = vweird.f32 %v9727
  %vm10657 = vweird.f32 %v10650
  %vm10658 = vmor %vm10656, %vm10657
  %v10659 = vsel %vm10658, %v10650, %v10655
  %v10660 = vrsqrt.pop %v9728
  %v10661 = vmul.f32 %v10660, %v9728
  %v10662 = vmul.f32 %v10661, %v10660
  %v10663 = vmul.f32 0.5, %v10662
  %v10664 = vsub.f32 1.5, %v10663
  %v10665 = vmul.f32 %v10660, %v10664
  %vm10666 = vweird.f32 %v9728
  %vm10667 = vweird.f32 %v10660
  %vm10668 = vmor %vm10666, %vm10667
  %v10669 = vsel %vm10668, %v10660, %v10665
  %v10670 = vrsqrt.pop %v9729
  %v10671 = vmul.f32 %v10670, %v9729
  %v10672 = vmul.f32 %v10671, %v10670
  %v10673 = vmul.f32 0.5, %v10672
  %v10674 = vsub.f32 1.5, %v10673
  %v10675 = vmul.f32 %v10670, %v10674
  %vm10676 = vweird.f32 %v9729
  %vm10677 = vweird.f32 %v10670
  %vm10678 = vmor %vm10676, %vm10677
  %v10679 = vsel %vm10678, %v10670, %v10675
  %v10680 = vrsqrt.pop %v9730
  %v10681 = vmul.f32 %v10680, %v9730
  %v10682 = vmul.f32 %v10681, %v10680
  %v10683 = vmul.f32 0.5, %v10682
  %v10684 = vsub.f32 1.5, %v10683
  %v10685 = vmul.f32 %v10680, %v10684
  %vm10686 = vweird.f32 %v9730
  %vm10687 = vweird.f32 %v10680
  %vm10688 = vmor %vm10686, %vm10687
  %v10689 = vsel %vm10688, %v10680, %v10685
  %v10690 = vrsqrt.pop %v9731
  %v10691 = vmul.f32 %v10690, %v9731
  %v10692 = vmul.f32 %v10691, %v10690
  %v10693 = vmul.f32 0.5, %v10692
  %v10694 = vsub.f32 1.5, %v10693
  %v10695 = vmul.f32 %v10690, %v10694
  %vm10696 = vweird.f32 %v9731
  %vm10697 = vweird.f32 %v10690
  %vm10698 = vmor %vm10696, %vm10697
  %v10699 = vsel %vm10698, %v10690, %v10695
  %v10700 = vrsqrt.pop %v9732
  %v10701 = vmul.f32 %v10700, %v9732
  %v10702 = vmul.f32 %v10701, %v10700
  %v10703 = vmul.f32 0.5, %v10702
  %v10704 = vsub.f32 1.5, %v10703
  %v10705 = vmul.f32 %v10700, %v10704
  %vm10706 = vweird.f32 %v9732
  %vm10707 = vweird.f32 %v10700
  %vm10708 = vmor %vm10706, %vm10707
  %v10709 = vsel %vm10708, %v10700, %v10705
  %v10710 = vrsqrt.pop %v9733
  %v10711 = vmul.f32 %v10710, %v9733
  %v10712 = vmul.f32 %v10711, %v10710
  %v10713 = vmul.f32 0.5, %v10712
  %v10714 = vsub.f32 1.5, %v10713
  %v10715 = vmul.f32 %v10710, %v10714
  %vm10716 = vweird.f32 %v9733
  %vm10717 = vweird.f32 %v10710
  %vm10718 = vmor %vm10716, %vm10717
  %v10719 = vsel %vm10718, %v10710, %v10715
  %v10720 = vrsqrt.pop %v9734
  %v10721 = vmul.f32 %v10720, %v9734
  %v10722 = vmul.f32 %v10721, %v10720
  %v10723 = vmul.f32 0.5, %v10722
  %v10724 = vsub.f32 1.5, %v10723
  %v10725 = vmul.f32 %v10720, %v10724
  %vm10726 = vweird.f32 %v9734
  %vm10727 = vweird.f32 %v10720
  %vm10728 = vmor %vm10726, %vm10727
  %v10729 = vsel %vm10728, %v10720, %v10725
  %v10730 = vrsqrt.pop %v9735
  %v10731 = vmul.f32 %v10730, %v9735
  %v10732 = vmul.f32 %v10731, %v10730
  %v10733 = vmul.f32 0.5, %v10732
  %v10734 = vsub.f32 1.5, %v10733
  %v10735 = vmul.f32 %v10730, %v10734
  %vm10736 = vweird.f32 %v9735
  %vm10737 = vweird.f32 %v10730
  %vm10738 = vmor %vm10736, %vm10737
  %v10739 = vsel %vm10738, %v10730, %v10735
  %v10740 = vrsqrt.pop %v9736
  %v10741 = vmul.f32 %v10740, %v9736
  %v10742 = vmul.f32 %v10741, %v10740
  %v10743 = vmul.f32 0.5, %v10742
  %v10744 = vsub.f32 1.5, %v10743
  %v10745 = vmul.f32 %v10740, %v10744
  %vm10746 = vweird.f32 %v9736
  %vm10747 = vweird.f32 %v10740
  %vm10748 = vmor %vm10746, %vm10747
  %v10749 = vsel %vm10748, %v10740, %v10745
  %v10750 = vrsqrt.pop %v9737
  %v10751 = vmul.f32 %v10750, %v9737
  %v10752 = vmul.f32 %v10751, %v10750
  %v10753 = vmul.f32 0.5, %v10752
  %v10754 = vsub.f32 1.5, %v10753
  %v10755 = vmul.f32 %v10750, %v10754
  %vm10756 = vweird.f32 %v9737
  %vm10757 = vweird.f32 %v10750
  %vm10758 = vmor %vm10756, %vm10757
  %v10759 = vsel %vm10758, %v10750, %v10755
  %v10760 = vrsqrt.pop %v9738
  %v10761 = vmul.f32 %v10760, %v9738
  %v10762 = vmul.f32 %v10761, %v10760
  %v10763 = vmul.f32 0.5, %v10762
  %v10764 = vsub.f32 1.5, %v10763
  %v10765 = vmul.f32 %v10760, %v10764
  %vm10766 = vweird.f32 %v9738
  %vm10767 = vweird.f32 %v10760
  %vm10768 = vmor %vm10766, %vm10767
  %v10769 = vsel %vm10768, %v10760, %v10765
  %v10770 = vrsqrt.pop %v9739
  %v10771 = vmul.f32 %v10770, %v9739
  %v10772 = vmul.f32 %v10771, %v10770
  %v10773 = vmul.f32 0.5, %v10772
  %v10774 = vsub.f32 1.5, %v10773
  %v10775 = vmul.f32 %v10770, %v10774
  %vm10776 = vweird.f32 %v9739
  %vm10777 = vweird.f32 %v10770
  %vm10778 = vmor %vm10776, %vm10777
  %v10779 = vsel %vm10778, %v10770, %v10775
  %v10780 = vrsqrt.pop %v9740
  %v10781 = vmul.f32 %v10780, %v9740
  %v10782 = vmul.f32 %v10781, %v10780
  %v10783 = vmul.f32 0.5, %v10782
  %v10784 = vsub.f32 1.5, %v10783
  %v10785 = vmul.f32 %v10780, %v10784
  %vm10786 = vweird.f32 %v9740
  %vm10787 = vweird.f32 %v10780
  %vm10788 = vmor %vm10786, %vm10787
  %v10789 = vsel %vm10788, %v10780, %v10785
  %v10790 = vrsqrt.pop %v9741
  %v10791 = vmul.f32 %v10790, %v9741
  %v10792 = vmul.f32 %v10791, %v10790
  %v10793 = vmul.f32 0.5, %v10792
  %v10794 = vsub.f32 1.5, %v10793
  %v10795 = vmul.f32 %v10790, %v10794
  %vm10796 = vweird.f32 %v9741
  %vm10797 = vweird.f32 %v10790
  %vm10798 = vmor %vm10796, %vm10797
  %v10799 = vsel %vm10798, %v10790, %v10795
  %v10800 = vrsqrt.pop %v9742
  %v10801 = vmul.f32 %v10800, %v9742
  %v10802 = vmul.f32 %v10801, %v10800
  %v10803 = vmul.f32 0.5, %v10802
  %v10804 = vsub.f32 1.5, %v10803
  %v10805 = vmul.f32 %v10800, %v10804
  %vm10806 = vweird.f32 %v9742
  %vm10807 = vweird.f32 %v10800
  %vm10808 = vmor %vm10806, %vm10807
  %v10809 = vsel %vm10808, %v10800, %v10805
  %v10810 = vrsqrt.pop %v9743
  %v10811 = vmul.f32 %v10810, %v9743
  %v10812 = vmul.f32 %v10811, %v10810
  %v10813 = vmul.f32 0.5, %v10812
  %v10814 = vsub.f32 1.5, %v10813
  %v10815 = vmul.f32 %v10810, %v10814
  %vm10816 = vweird.f32 %v9743
  %vm10817 = vweird.f32 %v10810
  %vm10818 = vmor %vm10816, %vm10817
  %v10819 = vsel %vm10818, %v10810, %v10815
  %v10820 = vrsqrt.pop %v9744
  %v10821 = vmul.f32 %v10820, %v9744
  %v10822 = vmul.f32 %v10821, %v10820
  %v10823 = vmul.f32 0.5, %v10822
  %v10824 = vsub.f32 1.5, %v10823
  %v10825 = vmul.f32 %v10820, %v10824
  %vm10826 = vweird.f32 %v9744
  %vm10827 = vweird.f32 %v10820
  %vm10828 = vmor %vm10826, %vm10827
  %v10829 = vsel %vm10828, %v10820, %v10825
  %v10830 = vrsqrt.pop %v9745
  %v10831 = vmul.f32 %v10830, %v9745
  %v10832 = vmul.f32 %v10831, %v10830
  %v10833 = vmul.f32 0.5, %v10832
  %v10834 = vsub.f32 1.5, %v10833
  %v10835 = vmul.f32 %v10830, %v10834
  %vm10836 = vweird.f32 %v9745
  %vm10837 = vweird.f32 %v10830
  %vm10838 = vmor %vm10836, %vm10837
  %v10839 = vsel %vm10838, %v10830, %v10835
  %v10840 = vrsqrt.pop %v9746
  %v10841 = vmul.f32 %v10840, %v9746
  %v10842 = vmul.f32 %v10841, %v10840
  %v10843 = vmul.f32 0.5, %v10842
  %v10844 = vsub.f32 1.5, %v10843
  %v10845 = vmul.f32 %v10840, %v10844
  %vm10846 = vweird.f32 %v9746
  %vm10847 = vweird.f32 %v10840
  %vm10848 = vmor %vm10846, %vm10847
  %v10849 = vsel %vm10848, %v10840, %v10845
  %v10850 = vrsqrt.pop %v9747
  %v10851 = vmul.f32 %v10850, %v9747
  %v10852 = vmul.f32 %v10851, %v10850
  %v10853 = vmul.f32 0.5, %v10852
  %v10854 = vsub.f32 1.5, %v10853
  %v10855 = vmul.f32 %v10850, %v10854
  %vm10856 = vweird.f32 %v9747
  %vm10857 = vweird.f32 %v10850
  %vm10858 = vmor %vm10856, %vm10857
  %v10859 = vsel %vm10858, %v10850, %v10855
  %v10860 = vrsqrt.pop %v9748
  %v10861 = vmul.f32 %v10860, %v9748
  %v10862 = vmul.f32 %v10861, %v10860
  %v10863 = vmul.f32 0.5, %v10862
  %v10864 = vsub.f32 1.5, %v10863
  %v10865 = vmul.f32 %v10860, %v10864
  %vm10866 = vweird.f32 %v9748
  %vm10867 = vweird.f32 %v10860
  %vm10868 = vmor %vm10866, %vm10867
  %v10869 = vsel %vm10868, %v10860, %v10865
  %v10870 = vrsqrt.pop %v9749
  %v10871 = vmul.f32 %v10870, %v9749
  %v10872 = vmul.f32 %v10871, %v10870
  %v10873 = vmul.f32 0.5, %v10872
  %v10874 = vsub.f32 1.5, %v10873
  %v10875 = vmul.f32 %v10870, %v10874
  %vm10876 = vweird.f32 %v9749
  %vm10877 = vweird.f32 %v10870
  %vm10878 = vmor %vm10876, %vm10877
  %v10879 = vsel %vm10878, %v10870, %v10875
  %v10880 = vrsqrt.pop %v9750
  %v10881 = vmul.f32 %v10880, %v9750
  %v10882 = vmul.f32 %v10881, %v10880
  %v10883 = vmul.f32 0.5, %v10882
  %v10884 = vsub.f32 1.5, %v10883
  %v10885 = vmul.f32 %v10880, %v10884
  %vm10886 = vweird.f32 %v9750
  %vm10887 = vweird.f32 %v10880
  %vm10888 = vmor %vm10886, %vm10887
  %v10889 = vsel %vm10888, %v10880, %v10885
  %v10890 = vrsqrt.pop %v9751
  %v10891 = vmul.f32 %v10890, %v9751
  %v10892 = vmul.f32 %v10891, %v10890
  %v10893 = vmul.f32 0.5, %v10892
  %v10894 = vsub.f32 1.5, %v10893
  %v10895 = vmul.f32 %v10890, %v10894
  %vm10896 = vweird.f32 %v9751
  %vm10897 = vweird.f32 %v10890
  %vm10898 = vmor %vm10896, %vm10897
  %v10899 = vsel %vm10898, %v10890, %v10895
  %v10900 = vrsqrt.pop %v9752
  %v10901 = vmul.f32 %v10900, %v9752
  %v10902 = vmul.f32 %v10901, %v10900
  %v10903 = vmul.f32 0.5, %v10902
  %v10904 = vsub.f32 1.5, %v10903
  %v10905 = vmul.f32 %v10900, %v10904
  %vm10906 = vweird.f32 %v9752
  %vm10907 = vweird.f32 %v10900
  %vm10908 = vmor %vm10906, %vm10907
  %v10909 = vsel %vm10908, %v10900, %v10905
  %v10910 = vrsqrt.pop %v9753
  %v10911 = vmul.f32 %v10910, %v9753
  %v10912 = vmul.f32 %v10911, %v10910
  %v10913 = vmul.f32 0.5, %v10912
  %v10914 = vsub.f32 1.5, %v10913
  %v10915 = vmul.f32 %v10910, %v10914
  %vm10916 = vweird.f32 %v9753
  %vm10917 = vweird.f32 %v10910
  %vm10918 = vmor %vm10916, %vm10917
  %v10919 = vsel %vm10918, %v10910, %v10915
  %v10920 = vrsqrt.pop %v9754
  %v10921 = vmul.f32 %v10920, %v9754
  %v10922 = vmul.f32 %v10921, %v10920
  %v10923 = vmul.f32 0.5, %v10922
  %v10924 = vsub.f32 1.5, %v10923
  %v10925 = vmul.f32 %v10920, %v10924
  %vm10926 = vweird.f32 %v9754
  %vm10927 = vweird.f32 %v10920
  %vm10928 = vmor %vm10926, %vm10927
  %v10929 = vsel %vm10928, %v10920, %v10925
  %v10930 = vrsqrt.pop %v9755
  %v10931 = vmul.f32 %v10930, %v9755
  %v10932 = vmul.f32 %v10931, %v10930
  %v10933 = vmul.f32 0.5, %v10932
  %v10934 = vsub.f32 1.5, %v10933
  %v10935 = vmul.f32 %v10930, %v10934
  %vm10936 = vweird.f32 %v9755
  %vm10937 = vweird.f32 %v10930
  %vm10938 = vmor %vm10936, %vm10937
  %v10939 = vsel %vm10938, %v10930, %v10935
  %v10940 = vrsqrt.pop %v9756
  %v10941 = vmul.f32 %v10940, %v9756
  %v10942 = vmul.f32 %v10941, %v10940
  %v10943 = vmul.f32 0.5, %v10942
  %v10944 = vsub.f32 1.5, %v10943
  %v10945 = vmul.f32 %v10940, %v10944
  %vm10946 = vweird.f32 %v9756
  %vm10947 = vweird.f32 %v10940
  %vm10948 = vmor %vm10946, %vm10947
  %v10949 = vsel %vm10948, %v10940, %v10945
  %v10950 = vrsqrt.pop %v9757
  %v10951 = vmul.f32 %v10950, %v9757
  %v10952 = vmul.f32 %v10951, %v10950
  %v10953 = vmul.f32 0.5, %v10952
  %v10954 = vsub.f32 1.5, %v10953
  %v10955 = vmul.f32 %v10950, %v10954
  %vm10956 = vweird.f32 %v9757
  %vm10957 = vweird.f32 %v10950
  %vm10958 = vmor %vm10956, %vm10957
  %v10959 = vsel %vm10958, %v10950, %v10955
  %v10960 = vrsqrt.pop %v9758
  %v10961 = vmul.f32 %v10960, %v9758
  %v10962 = vmul.f32 %v10961, %v10960
  %v10963 = vmul.f32 0.5, %v10962
  %v10964 = vsub.f32 1.5, %v10963
  %v10965 = vmul.f32 %v10960, %v10964
  %vm10966 = vweird.f32 %v9758
  %vm10967 = vweird.f32 %v10960
  %vm10968 = vmor %vm10966, %vm10967
  %v10969 = vsel %vm10968, %v10960, %v10965
  %v10970 = vrsqrt.pop %v9759
  %v10971 = vmul.f32 %v10970, %v9759
  %v10972 = vmul.f32 %v10971, %v10970
  %v10973 = vmul.f32 0.5, %v10972
  %v10974 = vsub.f32 1.5, %v10973
  %v10975 = vmul.f32 %v10970, %v10974
  %vm10976 = vweird.f32 %v9759
  %vm10977 = vweird.f32 %v10970
  %vm10978 = vmor %vm10976, %vm10977
  %v10979 = vsel %vm10978, %v10970, %v10975
  %v10980 = vrsqrt.pop %v9760
  %v10981 = vmul.f32 %v10980, %v9760
  %v10982 = vmul.f32 %v10981, %v10980
  %v10983 = vmul.f32 0.5, %v10982
  %v10984 = vsub.f32 1.5, %v10983
  %v10985 = vmul.f32 %v10980, %v10984
  %vm10986 = vweird.f32 %v9760
  %vm10987 = vweird.f32 %v10980
  %vm10988 = vmor %vm10986, %vm10987
  %v10989 = vsel %vm10988, %v10980, %v10985
  %v10990 = vrsqrt.pop %v9761
  %v10991 = vmul.f32 %v10990, %v9761
  %v10992 = vmul.f32 %v10991, %v10990
  %v10993 = vmul.f32 0.5, %v10992
  %v10994 = vsub.f32 1.5, %v10993
  %v10995 = vmul.f32 %v10990, %v10994
  %vm10996 = vweird.f32 %v9761
  %vm10997 = vweird.f32 %v10990
  %vm10998 = vmor %vm10996, %vm10997
  %v10999 = vsel %vm10998, %v10990, %v10995
  %v11000 = vrsqrt.pop %v9762
  %v11001 = vmul.f32 %v11000, %v9762
  %v11002 = vmul.f32 %v11001, %v11000
  %v11003 = vmul.f32 0.5, %v11002
  %v11004 = vsub.f32 1.5, %v11003
  %v11005 = vmul.f32 %v11000, %v11004
  %vm11006 = vweird.f32 %v9762
  %vm11007 = vweird.f32 %v11000
  %vm11008 = vmor %vm11006, %vm11007
  %v11009 = vsel %vm11008, %v11000, %v11005
  %v11010 = vrsqrt.pop %v9763
  %v11011 = vmul.f32 %v11010, %v9763
  %v11012 = vmul.f32 %v11011, %v11010
  %v11013 = vmul.f32 0.5, %v11012
  %v11014 = vsub.f32 1.5, %v11013
  %v11015 = vmul.f32 %v11010, %v11014
  %vm11016 = vweird.f32 %v9763
  %vm11017 = vweird.f32 %v11010
  %vm11018 = vmor %vm11016, %vm11017
  %v11019 = vsel %vm11018, %v11010, %v11015
  %v11020 = vrsqrt.pop %v9764
  %v11021 = vmul.f32 %v11020, %v9764
  %v11022 = vmul.f32 %v11021, %v11020
  %v11023 = vmul.f32 0.5, %v11022
  %v11024 = vsub.f32 1.5, %v11023
  %v11025 = vmul.f32 %v11020, %v11024
  %vm11026 = vweird.f32 %v9764
  %vm11027 = vweird.f32 %v11020
  %vm11028 = vmor %vm11026, %vm11027
  %v11029 = vsel %vm11028, %v11020, %v11025
  %v11030 = vrsqrt.pop %v9765
  %v11031 = vmul.f32 %v11030, %v9765
  %v11032 = vmul.f32 %v11031, %v11030
  %v11033 = vmul.f32 0.5, %v11032
  %v11034 = vsub.f32 1.5, %v11033
  %v11035 = vmul.f32 %v11030, %v11034
  %vm11036 = vweird.f32 %v9765
  %vm11037 = vweird.f32 %v11030
  %vm11038 = vmor %vm11036, %vm11037
  %v11039 = vsel %vm11038, %v11030, %v11035
  %v11040 = vrsqrt.pop %v9766
  %v11041 = vmul.f32 %v11040, %v9766
  %v11042 = vmul.f32 %v11041, %v11040
  %v11043 = vmul.f32 0.5, %v11042
  %v11044 = vsub.f32 1.5, %v11043
  %v11045 = vmul.f32 %v11040, %v11044
  %vm11046 = vweird.f32 %v9766
  %vm11047 = vweird.f32 %v11040
  %vm11048 = vmor %vm11046, %vm11047
  %v11049 = vsel %vm11048, %v11040, %v11045
  %v11050 = vrsqrt.pop %v9767
  %v11051 = vmul.f32 %v11050, %v9767
  %v11052 = vmul.f32 %v11051, %v11050
  %v11053 = vmul.f32 0.5, %v11052
  %v11054 = vsub.f32 1.5, %v11053
  %v11055 = vmul.f32 %v11050, %v11054
  %vm11056 = vweird.f32 %v9767
  %vm11057 = vweird.f32 %v11050
  %vm11058 = vmor %vm11056, %vm11057
  %v11059 = vsel %vm11058, %v11050, %v11055
  %v11060 = vrsqrt.pop %v9768
  %v11061 = vmul.f32 %v11060, %v9768
  %v11062 = vmul.f32 %v11061, %v11060
  %v11063 = vmul.f32 0.5, %v11062
  %v11064 = vsub.f32 1.5, %v11063
  %v11065 = vmul.f32 %v11060, %v11064
  %vm11066 = vweird.f32 %v9768
  %vm11067 = vweird.f32 %v11060
  %vm11068 = vmor %vm11066, %vm11067
  %v11069 = vsel %vm11068, %v11060, %v11065
  %v11070 = vrsqrt.pop %v9769
  %v11071 = vmul.f32 %v11070, %v9769
  %v11072 = vmul.f32 %v11071, %v11070
  %v11073 = vmul.f32 0.5, %v11072
  %v11074 = vsub.f32 1.5, %v11073
  %v11075 = vmul.f32 %v11070, %v11074
  %vm11076 = vweird.f32 %v9769
  %vm11077 = vweird.f32 %v11070
  %vm11078 = vmor %vm11076, %vm11077
  %v11079 = vsel %vm11078, %v11070, %v11075
  %v11080 = vrsqrt.pop %v9770
  %v11081 = vmul.f32 %v11080, %v9770
  %v11082 = vmul.f32 %v11081, %v11080
  %v11083 = vmul.f32 0.5, %v11082
  %v11084 = vsub.f32 1.5, %v11083
  %v11085 = vmul.f32 %v11080, %v11084
  %vm11086 = vweird.f32 %v9770
  %vm11087 = vweird.f32 %v11080
  %vm11088 = vmor %vm11086, %vm11087
  %v11089 = vsel %vm11088, %v11080, %v11085
  %v11090 = vrsqrt.pop %v9771
  %v11091 = vmul.f32 %v11090, %v9771
  %v11092 = vmul.f32 %v11091, %v11090
  %v11093 = vmul.f32 0.5, %v11092
  %v11094 = vsub.f32 1.5, %v11093
  %v11095 = vmul.f32 %v11090, %v11094
  %vm11096 = vweird.f32 %v9771
  %vm11097 = vweird.f32 %v11090
  %vm11098 = vmor %vm11096, %vm11097
  %v11099 = vsel %vm11098, %v11090, %v11095
  %v11100 = vrsqrt.pop %v9772
  %v11101 = vmul.f32 %v11100, %v9772
  %v11102 = vmul.f32 %v11101, %v11100
  %v11103 = vmul.f32 0.5, %v11102
  %v11104 = vsub.f32 1.5, %v11103
  %v11105 = vmul.f32 %v11100, %v11104
  %vm11106 = vweird.f32 %v9772
  %vm11107 = vweird.f32 %v11100
  %vm11108 = vmor %vm11106, %vm11107
  %v11109 = vsel %vm11108, %v11100, %v11105
  %v11110 = vrsqrt.pop %v9773
  %v11111 = vmul.f32 %v11110, %v9773
  %v11112 = vmul.f32 %v11111, %v11110
  %v11113 = vmul.f32 0.5, %v11112
  %v11114 = vsub.f32 1.5, %v11113
  %v11115 = vmul.f32 %v11110, %v11114
  %vm11116 = vweird.f32 %v9773
  %vm11117 = vweird.f32 %v11110
  %vm11118 = vmor %vm11116, %vm11117
  %v11119 = vsel %vm11118, %v11110, %v11115
  %v11120 = vrsqrt.pop %v9774
  %v11121 = vmul.f32 %v11120, %v9774
  %v11122 = vmul.f32 %v11121, %v11120
  %v11123 = vmul.f32 0.5, %v11122
  %v11124 = vsub.f32 1.5, %v11123
  %v11125 = vmul.f32 %v11120, %v11124
  %vm11126 = vweird.f32 %v9774
  %vm11127 = vweird.f32 %v11120
  %vm11128 = vmor %vm11126, %vm11127
  %v11129 = vsel %vm11128, %v11120, %v11125
  %v11130 = vrsqrt.pop %v9775
  %v11131 = vmul.f32 %v11130, %v9775
  %v11132 = vmul.f32 %v11131, %v11130
  %v11133 = vmul.f32 0.5, %v11132
  %v11134 = vsub.f32 1.5, %v11133
  %v11135 = vmul.f32 %v11130, %v11134
  %vm11136 = vweird.f32 %v9775
  %vm11137 = vweird.f32 %v11130
  %vm11138 = vmor %vm11136, %vm11137
  %v11139 = vsel %vm11138, %v11130, %v11135
  %v11140 = vrsqrt.pop %v9776
  %v11141 = vmul.f32 %v11140, %v9776
  %v11142 = vmul.f32 %v11141, %v11140
  %v11143 = vmul.f32 0.5, %v11142
  %v11144 = vsub.f32 1.5, %v11143
  %v11145 = vmul.f32 %v11140, %v11144
  %vm11146 = vweird.f32 %v9776
  %vm11147 = vweird.f32 %v11140
  %vm11148 = vmor %vm11146, %vm11147
  %v11149 = vsel %vm11148, %v11140, %v11145
  %v11150 = vrsqrt.pop %v9777
  %v11151 = vmul.f32 %v11150, %v9777
  %v11152 = vmul.f32 %v11151, %v11150
  %v11153 = vmul.f32 0.5, %v11152
  %v11154 = vsub.f32 1.5, %v11153
  %v11155 = vmul.f32 %v11150, %v11154
  %vm11156 = vweird.f32 %v9777
  %vm11157 = vweird.f32 %v11150
  %vm11158 = vmor %vm11156, %vm11157
  %v11159 = vsel %vm11158, %v11150, %v11155
  %v11160 = vrsqrt.pop %v9778
  %v11161 = vmul.f32 %v11160, %v9778
  %v11162 = vmul.f32 %v11161, %v11160
  %v11163 = vmul.f32 0.5, %v11162
  %v11164 = vsub.f32 1.5, %v11163
  %v11165 = vmul.f32 %v11160, %v11164
  %vm11166 = vweird.f32 %v9778
  %vm11167 = vweird.f32 %v11160
  %vm11168 = vmor %vm11166, %vm11167
  %v11169 = vsel %vm11168, %v11160, %v11165
  %v11170 = vrsqrt.pop %v9779
  %v11171 = vmul.f32 %v11170, %v9779
  %v11172 = vmul.f32 %v11171, %v11170
  %v11173 = vmul.f32 0.5, %v11172
  %v11174 = vsub.f32 1.5, %v11173
  %v11175 = vmul.f32 %v11170, %v11174
  %vm11176 = vweird.f32 %v9779
  %vm11177 = vweird.f32 %v11170
  %vm11178 = vmor %vm11176, %vm11177
  %v11179 = vsel %vm11178, %v11170, %v11175
  %v11180 = vrsqrt.pop %v9780
  %v11181 = vmul.f32 %v11180, %v9780
  %v11182 = vmul.f32 %v11181, %v11180
  %v11183 = vmul.f32 0.5, %v11182
  %v11184 = vsub.f32 1.5, %v11183
  %v11185 = vmul.f32 %v11180, %v11184
  %vm11186 = vweird.f32 %v9780
  %vm11187 = vweird.f32 %v11180
  %vm11188 = vmor %vm11186, %vm11187
  %v11189 = vsel %vm11188, %v11180, %v11185
  %v11190 = vrsqrt.pop %v9781
  %v11191 = vmul.f32 %v11190, %v9781
  %v11192 = vmul.f32 %v11191, %v11190
  %v11193 = vmul.f32 0.5, %v11192
  %v11194 = vsub.f32 1.5, %v11193
  %v11195 = vmul.f32 %v11190, %v11194
  %vm11196 = vweird.f32 %v9781
  %vm11197 = vweird.f32 %v11190
  %vm11198 = vmor %vm11196, %vm11197
  %v11199 = vsel %vm11198, %v11190, %v11195
  %v11200 = vrsqrt.pop %v9782
  %v11201 = vmul.f32 %v11200, %v9782
  %v11202 = vmul.f32 %v11201, %v11200
  %v11203 = vmul.f32 0.5, %v11202
  %v11204 = vsub.f32 1.5, %v11203
  %v11205 = vmul.f32 %v11200, %v11204
  %vm11206 = vweird.f32 %v9782
  %vm11207 = vweird.f32 %v11200
  %vm11208 = vmor %vm11206, %vm11207
  %v11209 = vsel %vm11208, %v11200, %v11205
  %v11210 = vrsqrt.pop %v9783
  %v11211 = vmul.f32 %v11210, %v9783
  %v11212 = vmul.f32 %v11211, %v11210
  %v11213 = vmul.f32 0.5, %v11212
  %v11214 = vsub.f32 1.5, %v11213
  %v11215 = vmul.f32 %v11210, %v11214
  %vm11216 = vweird.f32 %v9783
  %vm11217 = vweird.f32 %v11210
  %vm11218 = vmor %vm11216, %vm11217
  %v11219 = vsel %vm11218, %v11210, %v11215
  %v11220 = vrsqrt.pop %v9784
  %v11221 = vmul.f32 %v11220, %v9784
  %v11222 = vmul.f32 %v11221, %v11220
  %v11223 = vmul.f32 0.5, %v11222
  %v11224 = vsub.f32 1.5, %v11223
  %v11225 = vmul.f32 %v11220, %v11224
  %vm11226 = vweird.f32 %v9784
  %vm11227 = vweird.f32 %v11220
  %vm11228 = vmor %vm11226, %vm11227
  %v11229 = vsel %vm11228, %v11220, %v11225
  %v11230 = vrsqrt.pop %v9785
  %v11231 = vmul.f32 %v11230, %v9785
  %v11232 = vmul.f32 %v11231, %v11230
  %v11233 = vmul.f32 0.5, %v11232
  %v11234 = vsub.f32 1.5, %v11233
  %v11235 = vmul.f32 %v11230, %v11234
  %vm11236 = vweird.f32 %v9785
  %vm11237 = vweird.f32 %v11230
  %vm11238 = vmor %vm11236, %vm11237
  %v11239 = vsel %vm11238, %v11230, %v11235
  %v11240 = vrsqrt.pop %v9786
  %v11241 = vmul.f32 %v11240, %v9786
  %v11242 = vmul.f32 %v11241, %v11240
  %v11243 = vmul.f32 0.5, %v11242
  %v11244 = vsub.f32 1.5, %v11243
  %v11245 = vmul.f32 %v11240, %v11244
  %vm11246 = vweird.f32 %v9786
  %vm11247 = vweird.f32 %v11240
  %vm11248 = vmor %vm11246, %vm11247
  %v11249 = vsel %vm11248, %v11240, %v11245
  %v11250 = vrsqrt.pop %v9787
  %v11251 = vmul.f32 %v11250, %v9787
  %v11252 = vmul.f32 %v11251, %v11250
  %v11253 = vmul.f32 0.5, %v11252
  %v11254 = vsub.f32 1.5, %v11253
  %v11255 = vmul.f32 %v11250, %v11254
  %vm11256 = vweird.f32 %v9787
  %vm11257 = vweird.f32 %v11250
  %vm11258 = vmor %vm11256, %vm11257
  %v11259 = vsel %vm11258, %v11250, %v11255
  %v11260 = vrsqrt.pop %v9788
  %v11261 = vmul.f32 %v11260, %v9788
  %v11262 = vmul.f32 %v11261, %v11260
  %v11263 = vmul.f32 0.5, %v11262
  %v11264 = vsub.f32 1.5, %v11263
  %v11265 = vmul.f32 %v11260, %v11264
  %vm11266 = vweird.f32 %v9788
  %vm11267 = vweird.f32 %v11260
  %vm11268 = vmor %vm11266, %vm11267
  %v11269 = vsel %vm11268, %v11260, %v11265
  %v11270 = vrsqrt.pop %v9789
  %v11271 = vmul.f32 %v11270, %v9789
  %v11272 = vmul.f32 %v11271, %v11270
  %v11273 = vmul.f32 0.5, %v11272
  %v11274 = vsub.f32 1.5, %v11273
  %v11275 = vmul.f32 %v11270, %v11274
  %vm11276 = vweird.f32 %v9789
  %vm11277 = vweird.f32 %v11270
  %vm11278 = vmor %vm11276, %vm11277
  %v11279 = vsel %vm11278, %v11270, %v11275
  %v11280 = vrsqrt.pop %v9790
  %v11281 = vmul.f32 %v11280, %v9790
  %v11282 = vmul.f32 %v11281, %v11280
  %v11283 = vmul.f32 0.5, %v11282
  %v11284 = vsub.f32 1.5, %v11283
  %v11285 = vmul.f32 %v11280, %v11284
  %vm11286 = vweird.f32 %v9790
  %vm11287 = vweird.f32 %v11280
  %vm11288 = vmor %vm11286, %vm11287
  %v11289 = vsel %vm11288, %v11280, %v11285
  %v11290 = vrsqrt.pop %v9791
  %v11291 = vmul.f32 %v11290, %v9791
  %v11292 = vmul.f32 %v11291, %v11290
  %v11293 = vmul.f32 0.5, %v11292
  %v11294 = vsub.f32 1.5, %v11293
  %v11295 = vmul.f32 %v11290, %v11294
  %vm11296 = vweird.f32 %v9791
  %vm11297 = vweird.f32 %v11290
  %vm11298 = vmor %vm11296, %vm11297
  %v11299 = vsel %vm11298, %v11290, %v11295
  %v11300 = vrsqrt.pop %v9792
  %v11301 = vmul.f32 %v11300, %v9792
  %v11302 = vmul.f32 %v11301, %v11300
  %v11303 = vmul.f32 0.5, %v11302
  %v11304 = vsub.f32 1.5, %v11303
  %v11305 = vmul.f32 %v11300, %v11304
  %vm11306 = vweird.f32 %v9792
  %vm11307 = vweird.f32 %v11300
  %vm11308 = vmor %vm11306, %vm11307
  %v11309 = vsel %vm11308, %v11300, %v11305
  %v11310 = vrsqrt.pop %v9793
  %v11311 = vmul.f32 %v11310, %v9793
  %v11312 = vmul.f32 %v11311, %v11310
  %v11313 = vmul.f32 0.5, %v11312
  %v11314 = vsub.f32 1.5, %v11313
  %v11315 = vmul.f32 %v11310, %v11314
  %vm11316 = vweird.f32 %v9793
  %vm11317 = vweird.f32 %v11310
  %vm11318 = vmor %vm11316, %vm11317
  %v11319 = vsel %vm11318, %v11310, %v11315
  %v11320 = vrsqrt.pop %v9794
  %v11321 = vmul.f32 %v11320, %v9794
  %v11322 = vmul.f32 %v11321, %v11320
  %v11323 = vmul.f32 0.5, %v11322
  %v11324 = vsub.f32 1.5, %v11323
  %v11325 = vmul.f32 %v11320, %v11324
  %vm11326 = vweird.f32 %v9794
  %vm11327 = vweird.f32 %v11320
  %vm11328 = vmor %vm11326, %vm11327
  %v11329 = vsel %vm11328, %v11320, %v11325
  %v11330 = vrsqrt.pop %v9795
  %v11331 = vmul.f32 %v11330, %v9795
  %v11332 = vmul.f32 %v11331, %v11330
  %v11333 = vmul.f32 0.5, %v11332
  %v11334 = vsub.f32 1.5, %v11333
  %v11335 = vmul.f32 %v11330, %v11334
  %vm11336 = vweird.f32 %v9795
  %vm11337 = vweird.f32 %v11330
  %vm11338 = vmor %vm11336, %vm11337
  %v11339 = vsel %vm11338, %v11330, %v11335
  %v11340 = vrsqrt.pop %v9796
  %v11341 = vmul.f32 %v11340, %v9796
  %v11342 = vmul.f32 %v11341, %v11340
  %v11343 = vmul.f32 0.5, %v11342
  %v11344 = vsub.f32 1.5, %v11343
  %v11345 = vmul.f32 %v11340, %v11344
  %vm11346 = vweird.f32 %v9796
  %vm11347 = vweird.f32 %v11340
  %vm11348 = vmor %vm11346, %vm11347
  %v11349 = vsel %vm11348, %v11340, %v11345
  %v11350 = vrsqrt.pop %v9797
  %v11351 = vmul.f32 %v11350, %v9797
  %v11352 = vmul.f32 %v11351, %v11350
  %v11353 = vmul.f32 0.5, %v11352
  %v11354 = vsub.f32 1.5, %v11353
  %v11355 = vmul.f32 %v11350, %v11354
  %vm11356 = vweird.f32 %v9797
  %vm11357 = vweird.f32 %v11350
  %vm11358 = vmor %vm11356, %vm11357
  %v11359 = vsel %vm11358, %v11350, %v11355
  %v11360 = vrsqrt.pop %v9798
  %v11361 = vmul.f32 %v11360, %v9798
  %v11362 = vmul.f32 %v11361, %v11360
  %v11363 = vmul.f32 0.5, %v11362
  %v11364 = vsub.f32 1.5, %v11363
  %v11365 = vmul.f32 %v11360, %v11364
  %vm11366 = vweird.f32 %v9798
  %vm11367 = vweird.f32 %v11360
  %vm11368 = vmor %vm11366, %vm11367
  %v11369 = vsel %vm11368, %v11360, %v11365
  %v11370 = vrsqrt.pop %v9799
  %v11371 = vmul.f32 %v11370, %v9799
  %v11372 = vmul.f32 %v11371, %v11370
  %v11373 = vmul.f32 0.5, %v11372
  %v11374 = vsub.f32 1.5, %v11373
  %v11375 = vmul.f32 %v11370, %v11374
  %vm11376 = vweird.f32 %v9799
  %vm11377 = vweird.f32 %v11370
  %vm11378 = vmor %vm11376, %vm11377
  %v11379 = vsel %vm11378, %v11370, %v11375
  %v11380 = vrsqrt.pop %v9800
  %v11381 = vmul.f32 %v11380, %v9800
  %v11382 = vmul.f32 %v11381, %v11380
  %v11383 = vmul.f32 0.5, %v11382
  %v11384 = vsub.f32 1.5, %v11383
  %v11385 = vmul.f32 %v11380, %v11384
  %vm11386 = vweird.f32 %v9800
  %vm11387 = vweird.f32 %v11380
  %vm11388 = vmor %vm11386, %vm11387
  %v11389 = vsel %vm11388, %v11380, %v11385
  %v11390 = vrsqrt.pop %v9801
  %v11391 = vmul.f32 %v11390, %v9801
  %v11392 = vmul.f32 %v11391, %v11390
  %v11393 = vmul.f32 0.5, %v11392
  %v11394 = vsub.f32 1.5, %v11393
  %v11395 = vmul.f32 %v11390, %v11394
  %vm11396 = vweird.f32 %v9801
  %vm11397 = vweird.f32 %v11390
  %vm11398 = vmor %vm11396, %vm11397
  %v11399 = vsel %vm11398, %v11390, %v11395
  %v11400 = vrsqrt.pop %v9802
  %v11401 = vmul.f32 %v11400, %v9802
  %v11402 = vmul.f32 %v11401, %v11400
  %v11403 = vmul.f32 0.5, %v11402
  %v11404 = vsub.f32 1.5, %v11403
  %v11405 = vmul.f32 %v11400, %v11404
  %vm11406 = vweird.f32 %v9802
  %vm11407 = vweird.f32 %v11400
  %vm11408 = vmor %vm11406, %vm11407
  %v11409 = vsel %vm11408, %v11400, %v11405
  %v11410 = vrsqrt.pop %v9803
  %v11411 = vmul.f32 %v11410, %v9803
  %v11412 = vmul.f32 %v11411, %v11410
  %v11413 = vmul.f32 0.5, %v11412
  %v11414 = vsub.f32 1.5, %v11413
  %v11415 = vmul.f32 %v11410, %v11414
  %vm11416 = vweird.f32 %v9803
  %vm11417 = vweird.f32 %v11410
  %vm11418 = vmor %vm11416, %vm11417
  %v11419 = vsel %vm11418, %v11410, %v11415
  %v11420 = vrsqrt.pop %v9804
  %v11421 = vmul.f32 %v11420, %v9804
  %v11422 = vmul.f32 %v11421, %v11420
  %v11423 = vmul.f32 0.5, %v11422
  %v11424 = vsub.f32 1.5, %v11423
  %v11425 = vmul.f32 %v11420, %v11424
  %vm11426 = vweird.f32 %v9804
  %vm11427 = vweird.f32 %v11420
  %vm11428 = vmor %vm11426, %vm11427
  %v11429 = vsel %vm11428, %v11420, %v11425
  %v11430 = vrsqrt.pop %v9805
  %v11431 = vmul.f32 %v11430, %v9805
  %v11432 = vmul.f32 %v11431, %v11430
  %v11433 = vmul.f32 0.5, %v11432
  %v11434 = vsub.f32 1.5, %v11433
  %v11435 = vmul.f32 %v11430, %v11434
  %vm11436 = vweird.f32 %v9805
  %vm11437 = vweird.f32 %v11430
  %vm11438 = vmor %vm11436, %vm11437
  %v11439 = vsel %vm11438, %v11430, %v11435
  %v11440 = vrsqrt.pop %v9806
  %v11441 = vmul.f32 %v11440, %v9806
  %v11442 = vmul.f32 %v11441, %v11440
  %v11443 = vmul.f32 0.5, %v11442
  %v11444 = vsub.f32 1.5, %v11443
  %v11445 = vmul.f32 %v11440, %v11444
  %vm11446 = vweird.f32 %v9806
  %vm11447 = vweird.f32 %v11440
  %vm11448 = vmor %vm11446, %vm11447
  %v11449 = vsel %vm11448, %v11440, %v11445
  %v11450 = vrsqrt.pop %v9807
  %v11451 = vmul.f32 %v11450, %v9807
  %v11452 = vmul.f32 %v11451, %v11450
  %v11453 = vmul.f32 0.5, %v11452
  %v11454 = vsub.f32 1.5, %v11453
  %v11455 = vmul.f32 %v11450, %v11454
  %vm11456 = vweird.f32 %v9807
  %vm11457 = vweird.f32 %v11450
  %vm11458 = vmor %vm11456, %vm11457
  %v11459 = vsel %vm11458, %v11450, %v11455
  %v11460 = vrsqrt.pop %v9808
  %v11461 = vmul.f32 %v11460, %v9808
  %v11462 = vmul.f32 %v11461, %v11460
  %v11463 = vmul.f32 0.5, %v11462
  %v11464 = vsub.f32 1.5, %v11463
  %v11465 = vmul.f32 %v11460, %v11464
  %vm11466 = vweird.f32 %v9808
  %vm11467 = vweird.f32 %v11460
  %vm11468 = vmor %vm11466, %vm11467
  %v11469 = vsel %vm11468, %v11460, %v11465
  %v11470 = vrsqrt.pop %v9809
  %v11471 = vmul.f32 %v11470, %v9809
  %v11472 = vmul.f32 %v11471, %v11470
  %v11473 = vmul.f32 0.5, %v11472
  %v11474 = vsub.f32 1.5, %v11473
  %v11475 = vmul.f32 %v11470, %v11474
  %vm11476 = vweird.f32 %v9809
  %vm11477 = vweird.f32 %v11470
  %vm11478 = vmor %vm11476, %vm11477
  %v11479 = vsel %vm11478, %v11470, %v11475
  %v11480 = vrsqrt.pop %v9810
  %v11481 = vmul.f32 %v11480, %v9810
  %v11482 = vmul.f32 %v11481, %v11480
  %v11483 = vmul.f32 0.5, %v11482
  %v11484 = vsub.f32 1.5, %v11483
  %v11485 = vmul.f32 %v11480, %v11484
  %vm11486 = vweird.f32 %v9810
  %vm11487 = vweird.f32 %v11480
  %vm11488 = vmor %vm11486, %vm11487
  %v11489 = vsel %vm11488, %v11480, %v11485
  %v11490 = vrsqrt.pop %v9811
  %v11491 = vmul.f32 %v11490, %v9811
  %v11492 = vmul.f32 %v11491, %v11490
  %v11493 = vmul.f32 0.5, %v11492
  %v11494 = vsub.f32 1.5, %v11493
  %v11495 = vmul.f32 %v11490, %v11494
  %vm11496 = vweird.f32 %v9811
  %vm11497 = vweird.f32 %v11490
  %vm11498 = vmor %vm11496, %vm11497
  %v11499 = vsel %vm11498, %v11490, %v11495
  %v11500 = vrsqrt.pop %v9812
  %v11501 = vmul.f32 %v11500, %v9812
  %v11502 = vmul.f32 %v11501, %v11500
  %v11503 = vmul.f32 0.5, %v11502
  %v11504 = vsub.f32 1.5, %v11503
  %v11505 = vmul.f32 %v11500, %v11504
  %vm11506 = vweird.f32 %v9812
  %vm11507 = vweird.f32 %v11500
  %vm11508 = vmor %vm11506, %vm11507
  %v11509 = vsel %vm11508, %v11500, %v11505
  %v11510 = vrsqrt.pop %v9813
  %v11511 = vmul.f32 %v11510, %v9813
  %v11512 = vmul.f32 %v11511, %v11510
  %v11513 = vmul.f32 0.5, %v11512
  %v11514 = vsub.f32 1.5, %v11513
  %v11515 = vmul.f32 %v11510, %v11514
  %vm11516 = vweird.f32 %v9813
  %vm11517 = vweird.f32 %v11510
  %vm11518 = vmor %vm11516, %vm11517
  %v11519 = vsel %vm11518, %v11510, %v11515
  %v11520 = vrsqrt.pop %v9814
  %v11521 = vmul.f32 %v11520, %v9814
  %v11522 = vmul.f32 %v11521, %v11520
  %v11523 = vmul.f32 0.5, %v11522
  %v11524 = vsub.f32 1.5, %v11523
  %v11525 = vmul.f32 %v11520, %v11524
  %vm11526 = vweird.f32 %v9814
  %vm11527 = vweird.f32 %v11520
  %vm11528 = vmor %vm11526, %vm11527
  %v11529 = vsel %vm11528, %v11520, %v11525
  %v11530 = vrsqrt.pop %v9815
  %v11531 = vmul.f32 %v11530, %v9815
  %v11532 = vmul.f32 %v11531, %v11530
  %v11533 = vmul.f32 0.5, %v11532
  %v11534 = vsub.f32 1.5, %v11533
  %v11535 = vmul.f32 %v11530, %v11534
  %vm11536 = vweird.f32 %v9815
  %vm11537 = vweird.f32 %v11530
  %vm11538 = vmor %vm11536, %vm11537
  %v11539 = vsel %vm11538, %v11530, %v11535
  %v11540 = vrsqrt.pop %v9816
  %v11541 = vmul.f32 %v11540, %v9816
  %v11542 = vmul.f32 %v11541, %v11540
  %v11543 = vmul.f32 0.5, %v11542
  %v11544 = vsub.f32 1.5, %v11543
  %v11545 = vmul.f32 %v11540, %v11544
  %vm11546 = vweird.f32 %v9816
  %vm11547 = vweird.f32 %v11540
  %vm11548 = vmor %vm11546, %vm11547
  %v11549 = vsel %vm11548, %v11540, %v11545
  %v11550 = vrsqrt.pop %v9817
  %v11551 = vmul.f32 %v11550, %v9817
  %v11552 = vmul.f32 %v11551, %v11550
  %v11553 = vmul.f32 0.5, %v11552
  %v11554 = vsub.f32 1.5, %v11553
  %v11555 = vmul.f32 %v11550, %v11554
  %vm11556 = vweird.f32 %v9817
  %vm11557 = vweird.f32 %v11550
  %vm11558 = vmor %vm11556, %vm11557
  %v11559 = vsel %vm11558, %v11550, %v11555
  %v11560 = vrsqrt.pop %v9818
  %v11561 = vmul.f32 %v11560, %v9818
  %v11562 = vmul.f32 %v11561, %v11560
  %v11563 = vmul.f32 0.5, %v11562
  %v11564 = vsub.f32 1.5, %v11563
  %v11565 = vmul.f32 %v11560, %v11564
  %vm11566 = vweird.f32 %v9818
  %vm11567 = vweird.f32 %v11560
  %vm11568 = vmor %vm11566, %vm11567
  %v11569 = vsel %vm11568, %v11560, %v11565
  %v11570 = vrsqrt.pop %v9819
  %v11571 = vmul.f32 %v11570, %v9819
  %v11572 = vmul.f32 %v11571, %v11570
  %v11573 = vmul.f32 0.5, %v11572
  %v11574 = vsub.f32 1.5, %v11573
  %v11575 = vmul.f32 %v11570, %v11574
  %vm11576 = vweird.f32 %v9819
  %vm11577 = vweird.f32 %v11570
  %vm11578 = vmor %vm11576, %vm11577
  %v11579 = vsel %vm11578, %v11570, %v11575
  %v11580 = vld [vmem:[%s7] sm:$0xff]
  %v11581 = vld [vmem:[%s7 + $0x8] sm:$0xff]
  %v11582 = vld [vmem:[%s7 + $0x10] sm:$0xff]
  %v11583 = vld [vmem:[%s7 + $0x18] sm:$0xff]
  %v11584 = vld [vmem:[%s7 + $0x20] sm:$0xff]
  %v11585 = vld [vmem:[%s7 + $0x28] sm:$0xff]
  %v11586 = vld [vmem:[%s7 + $0x30] sm:$0xff]
  %v11587 = vld [vmem:[%s7 + $0x38] sm:$0xff]
  %v11588 = vld [vmem:[%s7 + $0x40] sm:$0xff]
  %v11589 = vld [vmem:[%s7 + $0x48] sm:$0xff]
  %v11590 = vld [vmem:[%s7 + $0x50] sm:$0xff]
  %v11591 = vld [vmem:[%s7 + $0x58] sm:$0xff]
  %v11592 = vld [vmem:[%s7 + $0x60] sm:$0xff]
  %v11593 = vld [vmem:[%s7 + $0x68] sm:$0xff]
  %v11594 = vld [vmem:[%s7 + $0x70] sm:$0xff]
  %v11595 = vld [vmem:[%s7 + $0x78] sm:$0xff]
  %v11596 = vld [vmem:[%s7 + $0x80] sm:$0xff]
  %v11597 = vld [vmem:[%s7 + $0x88] sm:$0xff]
  %v11598 = vld [vmem:[%s7 + $0x90] sm:$0xff]
  %v11599 = vld [vmem:[%s7 + $0x98] sm:$0xff]
  %v11600 = vld [vmem:[%s7 + $0xa0] sm:$0xff]
  %v11601 = vld [vmem:[%s7 + $0xa8] sm:$0xff]
  %v11602 = vld [vmem:[%s7 + $0xb0] sm:$0xff]
  %v11603 = vld [vmem:[%s7 + $0xb8] sm:$0xff]
  %v11604 = vld [vmem:[%s7 + $0xc0] sm:$0xff]
  %v11605 = vld [vmem:[%s7 + $0xc8] sm:$0xff]
  %v11606 = vld [vmem:[%s7 + $0xd0] sm:$0xff]
  %v11607 = vld [vmem:[%s7 + $0xd8] sm:$0xff]
  %v11608 = vld [vmem:[%s7 + $0xe0] sm:$0xff]
  %v11609 = vld [vmem:[%s7 + $0xe8] sm:$0xff]
  %v11610 = vld [vmem:[%s7 + $0xf0] sm:$0xff]
  %v11611 = vld [vmem:[%s7 + $0xf8] sm:$0xff]
  %v11612 = vld [vmem:[%s7 + $0x100] sm:$0xff]
  %v11613 = vld [vmem:[%s7 + $0x108] sm:$0xff]
  %v11614 = vld [vmem:[%s7 + $0x110] sm:$0xff]
  %v11615 = vld [vmem:[%s7 + $0x118] sm:$0xff]
  %v11616 = vld [vmem:[%s7 + $0x120] sm:$0xff]
  %v11617 = vld [vmem:[%s7 + $0x128] sm:$0xff]
  %v11618 = vld [vmem:[%s7 + $0x130] sm:$0xff]
  %v11619 = vld [vmem:[%s7 + $0x138] sm:$0xff]
  %v11620 = vld [vmem:[%s7 + $0x140] sm:$0xff]
  %v11621 = vld [vmem:[%s7 + $0x148] sm:$0xff]
  %v11622 = vld [vmem:[%s7 + $0x150] sm:$0xff]
  %v11623 = vld [vmem:[%s7 + $0x158] sm:$0xff]
  %v11624 = vld [vmem:[%s7 + $0x160] sm:$0xff]
  %v11625 = vld [vmem:[%s7 + $0x168] sm:$0xff]
  %v11626 = vld [vmem:[%s7 + $0x170] sm:$0xff]
  %v11627 = vld [vmem:[%s7 + $0x178] sm:$0xff]
  %v11628 = vld [vmem:[%s7 + $0x180] sm:$0xff]
  %v11629 = vld [vmem:[%s7 + $0x188] sm:$0xff]
  %v11630 = vld [vmem:[%s7 + $0x190] sm:$0xff]
  %v11631 = vld [vmem:[%s7 + $0x198] sm:$0xff]
  %v11632 = vld [vmem:[%s7 + $0x1a0] sm:$0xff]
  %v11633 = vld [vmem:[%s7 + $0x1a8] sm:$0xff]
  %v11634 = vld [vmem:[%s7 + $0x1b0] sm:$0xff]
  %v11635 = vld [vmem:[%s7 + $0x1b8] sm:$0xff]
  %v11636 = vld [vmem:[%s7 + $0x1c0] sm:$0xff]
  %v11637 = vld [vmem:[%s7 + $0x1c8] sm:$0xff]
  %v11638 = vld [vmem:[%s7 + $0x1d0] sm:$0xff]
  %v11639 = vld [vmem:[%s7 + $0x1d8] sm:$0xff]
  %v11640 = vld [vmem:[%s7 + $0x1e0] sm:$0xff]
  %v11641 = vld [vmem:[%s7 + $0x1e8] sm:$0xff]
  %v11642 = vld [vmem:[%s7 + $0x1f0] sm:$0xff]
  %v11643 = vld [vmem:[%s7 + $0x1f8] sm:$0xff]
  %v11644 = vld [vmem:[%s7 + $0x200] sm:$0xff]
  %v11645 = vld [vmem:[%s7 + $0x208] sm:$0xff]
  %v11646 = vld [vmem:[%s7 + $0x210] sm:$0xff]
  %v11647 = vld [vmem:[%s7 + $0x218] sm:$0xff]
  %v11648 = vld [vmem:[%s7 + $0x220] sm:$0xff]
  %v11649 = vld [vmem:[%s7 + $0x228] sm:$0xff]
  %v11650 = vld [vmem:[%s7 + $0x230] sm:$0xff]
  %v11651 = vld [vmem:[%s7 + $0x238] sm:$0xff]
  %v11652 = vld [vmem:[%s7 + $0x240] sm:$0xff]
  %v11653 = vld [vmem:[%s7 + $0x248] sm:$0xff]
  %v11654 = vld [vmem:[%s7 + $0x250] sm:$0xff]
  %v11655 = vld [vmem:[%s7 + $0x258] sm:$0xff]
  %v11656 = vld [vmem:[%s7 + $0x260] sm:$0xff]
  %v11657 = vld [vmem:[%s7 + $0x268] sm:$0xff]
  %v11658 = vld [vmem:[%s7 + $0x270] sm:$0xff]
  %v11659 = vld [vmem:[%s7 + $0x278] sm:$0xff]
  %v11660 = vld [vmem:[%s7 + $0x280] sm:$0xff]
  %v11661 = vld [vmem:[%s7 + $0x288] sm:$0xff]
  %v11662 = vld [vmem:[%s7 + $0x290] sm:$0xff]
  %v11663 = vld [vmem:[%s7 + $0x298] sm:$0xff]
  %v11664 = vld [vmem:[%s7 + $0x2a0] sm:$0xff]
  %v11665 = vld [vmem:[%s7 + $0x2a8] sm:$0xff]
  %v11666 = vld [vmem:[%s7 + $0x2b0] sm:$0xff]
  %v11667 = vld [vmem:[%s7 + $0x2b8] sm:$0xff]
  %v11668 = vld [vmem:[%s7 + $0x2c0] sm:$0xff]
  %v11669 = vld [vmem:[%s7 + $0x2c8] sm:$0xff]
  %v11670 = vld [vmem:[%s7 + $0x2d0] sm:$0xff]
  %v11671 = vld [vmem:[%s7 + $0x2d8] sm:$0xff]
  %v11672 = vld [vmem:[%s7 + $0x2e0] sm:$0xff]
  %v11673 = vld [vmem:[%s7 + $0x2e8] sm:$0xff]
  %v11674 = vld [vmem:[%s7 + $0x2f0] sm:$0xff]
  %v11675 = vld [vmem:[%s7 + $0x2f8] sm:$0xff]
  %v11676 = vld [vmem:[%s7 + $0x300] sm:$0xff]
  %v11677 = vld [vmem:[%s7 + $0x308] sm:$0xff]
  %v11678 = vld [vmem:[%s7 + $0x310] sm:$0xff]
  %v11679 = vld [vmem:[%s7 + $0x318] sm:$0xff]
  %v11680 = vld [vmem:[%s7 + $0x320] sm:$0xff]
  %v11681 = vld [vmem:[%s7 + $0x328] sm:$0xff]
  %v11682 = vld [vmem:[%s7 + $0x330] sm:$0xff]
  %v11683 = vld [vmem:[%s7 + $0x338] sm:$0xff]
  %v11684 = vld [vmem:[%s7 + $0x340] sm:$0xff]
  %v11685 = vld [vmem:[%s7 + $0x348] sm:$0xff]
  %v11686 = vld [vmem:[%s7 + $0x350] sm:$0xff]
  %v11687 = vld [vmem:[%s7 + $0x358] sm:$0xff]
  %v11688 = vld [vmem:[%s7 + $0x360] sm:$0xff]
  %v11689 = vld [vmem:[%s7 + $0x368] sm:$0xff]
  %v11690 = vld [vmem:[%s7 + $0x370] sm:$0xff]
  %v11691 = vld [vmem:[%s7 + $0x378] sm:$0xff]
  %v11692 = vld [vmem:[%s7 + $0x380] sm:$0xff]
  %v11693 = vld [vmem:[%s7 + $0x388] sm:$0xff]
  %v11694 = vld [vmem:[%s7 + $0x390] sm:$0xff]
  %v11695 = vld [vmem:[%s7 + $0x398] sm:$0xff]
  %v11696 = vld [vmem:[%s7 + $0x3a0] sm:$0xff]
  %v11697 = vld [vmem:[%s7 + $0x3a8] sm:$0xff]
  %v11698 = vld [vmem:[%s7 + $0x3b0] sm:$0xff]
  %v11699 = vld [vmem:[%s7 + $0x3b8] sm:$0xff]
  %v11700 = vld [vmem:[%s7 + $0x3c0] sm:$0xff]
  %v11701 = vld [vmem:[%s7 + $0x3c8] sm:$0xff]
  %v11702 = vld [vmem:[%s7 + $0x3d0] sm:$0xff]
  %v11703 = vld [vmem:[%s7 + $0x3d8] sm:$0xff]
  %v11704 = vld [vmem:[%s7 + $0x3e0] sm:$0xff]
  %v11705 = vld [vmem:[%s7 + $0x3e8] sm:$0xff]
  %v11706 = vld [vmem:[%s7 + $0x3f0] sm:$0xff]
  %v11707 = vld [vmem:[%s7 + $0x3f8] sm:$0xff]
  %v11708 = vld [vmem:[%s7 + $0x400] sm:$0xff]
  %v11709 = vld [vmem:[%s7 + $0x408] sm:$0xff]
  %v11710 = vld [vmem:[%s7 + $0x410] sm:$0xff]
  %v11711 = vld [vmem:[%s7 + $0x418] sm:$0xff]
  %v11712 = vld [vmem:[%s7 + $0x420] sm:$0xff]
  %v11713 = vld [vmem:[%s7 + $0x428] sm:$0xff]
  %v11714 = vld [vmem:[%s7 + $0x430] sm:$0xff]
  %v11715 = vld [vmem:[%s7 + $0x438] sm:$0xff]
  %v11716 = vld [vmem:[%s7 + $0x440] sm:$0xff]
  %v11717 = vld [vmem:[%s7 + $0x448] sm:$0xff]
  %v11718 = vld [vmem:[%s7 + $0x450] sm:$0xff]
  %v11719 = vld [vmem:[%s7 + $0x458] sm:$0xff]
  %v11720 = vld [vmem:[%s7 + $0x460] sm:$0xff]
  %v11721 = vld [vmem:[%s7 + $0x468] sm:$0xff]
  %v11722 = vld [vmem:[%s7 + $0x470] sm:$0xff]
  %v11723 = vld [vmem:[%s7 + $0x478] sm:$0xff]
  %v11724 = vld [vmem:[%s7 + $0x480] sm:$0xff]
  %v11725 = vld [vmem:[%s7 + $0x488] sm:$0xff]
  %v11726 = vld [vmem:[%s7 + $0x490] sm:$0xff]
  %v11727 = vld [vmem:[%s7 + $0x498] sm:$0xff]
  %v11728 = vld [vmem:[%s7 + $0x4a0] sm:$0xff]
  %v11729 = vld [vmem:[%s7 + $0x4a8] sm:$0xff]
  %v11730 = vld [vmem:[%s7 + $0x4b0] sm:$0xff]
  %v11731 = vld [vmem:[%s7 + $0x4b8] sm:$0xff]
  %v11732 = vld [vmem:[%s7 + $0x4c0] sm:$0xff]
  %v11733 = vld [vmem:[%s7 + $0x4c8] sm:$0xff]
  %v11734 = vld [vmem:[%s7 + $0x4d0] sm:$0xff]
  %v11735 = vld [vmem:[%s7 + $0x4d8] sm:$0xff]
  %v11736 = vld [vmem:[%s7 + $0x4e0] sm:$0xff]
  %v11737 = vld [vmem:[%s7 + $0x4e8] sm:$0xff]
  %v11738 = vld [vmem:[%s7 + $0x4f0] sm:$0xff]
  %v11739 = vld [vmem:[%s7 + $0x4f8] sm:$0xff]
  %v11740 = vld [vmem:[%s7 + $0x500] sm:$0xff]
  %v11741 = vld [vmem:[%s7 + $0x508] sm:$0xff]
  %v11742 = vld [vmem:[%s7 + $0x510] sm:$0xff]
  %v11743 = vld [vmem:[%s7 + $0x518] sm:$0xff]
  %v11744 = vld [vmem:[%s7 + $0x520] sm:$0xff]
  %v11745 = vld [vmem:[%s7 + $0x528] sm:$0xff]
  %v11746 = vld [vmem:[%s7 + $0x530] sm:$0xff]
  %v11747 = vld [vmem:[%s7 + $0x538] sm:$0xff]
  %v11748 = vld [vmem:[%s7 + $0x540] sm:$0xff]
  %v11749 = vld [vmem:[%s7 + $0x548] sm:$0xff]
  %v11750 = vld [vmem:[%s7 + $0x550] sm:$0xff]
  %v11751 = vld [vmem:[%s7 + $0x558] sm:$0xff]
  %v11752 = vld [vmem:[%s7 + $0x560] sm:$0xff]
  %v11753 = vld [vmem:[%s7 + $0x568] sm:$0xff]
  %v11754 = vld [vmem:[%s7 + $0x570] sm:$0xff]
  %v11755 = vld [vmem:[%s7 + $0x578] sm:$0xff]
  %v11756 = vmul.f32 %v9829, %v11580
  %v11757 = vmul.f32 %v9839, %v11581
  %v11758 = vmul.f32 %v9849, %v11582
  %v11759 = vmul.f32 %v9859, %v11583
  %v11760 = vmul.f32 %v9869, %v11584
  %v11761 = vmul.f32 %v9879, %v11585
  %v11762 = vmul.f32 %v9889, %v11586
  %v11763 = vmul.f32 %v9899, %v11587
  %v11764 = vmul.f32 %v9909, %v11588
  %v11765 = vmul.f32 %v9919, %v11589
  %v11766 = vmul.f32 %v9929, %v11590
  %v11767 = vmul.f32 %v9939, %v11591
  %v11768 = vmul.f32 %v9949, %v11592
  %v11769 = vmul.f32 %v9959, %v11593
  %v11770 = vmul.f32 %v9969, %v11594
  %v11771 = vmul.f32 %v9979, %v11595
  %v11772 = vmul.f32 %v9989, %v11596
  %v11773 = vmul.f32 %v9999, %v11597
  %v11774 = vmul.f32 %v10009, %v11598
  %v11775 = vmul.f32 %v10019, %v11599
  %v11776 = vmul.f32 %v10029, %v11600
  %v11777 = vmul.f32 %v10039, %v11601
  %v11778 = vmul.f32 %v10049, %v11602
  %v11779 = vmul.f32 %v10059, %v11603
  %v11780 = vmul.f32 %v10069, %v11604
  %v11781 = vmul.f32 %v10079, %v11605
  %v11782 = vmul.f32 %v10089, %v11606
  %v11783 = vmul.f32 %v10099, %v11607
  %v11784 = vmul.f32 %v10109, %v11608
  %v11785 = vmul.f32 %v10119, %v11609
  %v11786 = vmul.f32 %v10129, %v11610
  %v11787 = vmul.f32 %v10139, %v11611
  %v11788 = vmul.f32 %v10149, %v11612
  %v11789 = vmul.f32 %v10159, %v11613
  %v11790 = vmul.f32 %v10169, %v11614
  %v11791 = vmul.f32 %v10179, %v11615
  %v11792 = vmul.f32 %v10189, %v11616
  %v11793 = vmul.f32 %v10199, %v11617
  %v11794 = vmul.f32 %v10209, %v11618
  %v11795 = vmul.f32 %v10219, %v11619
  %v11796 = vmul.f32 %v10229, %v11620
  %v11797 = vmul.f32 %v10239, %v11621
  %v11798 = vmul.f32 %v10249, %v11622
  %v11799 = vmul.f32 %v10259, %v11623
  %v11800 = vmul.f32 %v10269, %v11624
  %v11801 = vmul.f32 %v10279, %v11625
  %v11802 = vmul.f32 %v10289, %v11626
  %v11803 = vmul.f32 %v10299, %v11627
  %v11804 = vmul.f32 %v10309, %v11628
  %v11805 = vmul.f32 %v10319, %v11629
  %v11806 = vmul.f32 %v10329, %v11630
  %v11807 = vmul.f32 %v10339, %v11631
  %v11808 = vmul.f32 %v10349, %v11632
  %v11809 = vmul.f32 %v10359, %v11633
  %v11810 = vmul.f32 %v10369, %v11634
  %v11811 = vmul.f32 %v10379, %v11635
  %v11812 = vmul.f32 %v10389, %v11636
  %v11813 = vmul.f32 %v10399, %v11637
  %v11814 = vmul.f32 %v10409, %v11638
  %v11815 = vmul.f32 %v10419, %v11639
  %v11816 = vmul.f32 %v10429, %v11640
  %v11817 = vmul.f32 %v10439, %v11641
  %v11818 = vmul.f32 %v10449, %v11642
  %v11819 = vmul.f32 %v10459, %v11643
  %v11820 = vmul.f32 %v10469, %v11644
  %v11821 = vmul.f32 %v10479, %v11645
  %v11822 = vmul.f32 %v10489, %v11646
  %v11823 = vmul.f32 %v10499, %v11647
  %v11824 = vmul.f32 %v10509, %v11648
  %v11825 = vmul.f32 %v10519, %v11649
  %v11826 = vmul.f32 %v10529, %v11650
  %v11827 = vmul.f32 %v10539, %v11651
  %v11828 = vmul.f32 %v10549, %v11652
  %v11829 = vmul.f32 %v10559, %v11653
  %v11830 = vmul.f32 %v10569, %v11654
  %v11831 = vmul.f32 %v10579, %v11655
  %v11832 = vmul.f32 %v10589, %v11656
  %v11833 = vmul.f32 %v10599, %v11657
  %v11834 = vmul.f32 %v10609, %v11658
  %v11835 = vmul.f32 %v10619, %v11659
  %v11836 = vmul.f32 %v10629, %v11660
  %v11837 = vmul.f32 %v10639, %v11661
  %v11838 = vmul.f32 %v10649, %v11662
  %v11839 = vmul.f32 %v10659, %v11663
  %v11840 = vmul.f32 %v10669, %v11664
  %v11841 = vmul.f32 %v10679, %v11665
  %v11842 = vmul.f32 %v10689, %v11666
  %v11843 = vmul.f32 %v10699, %v11667
  %v11844 = vmul.f32 %v10709, %v11668
  %v11845 = vmul.f32 %v10719, %v11669
  %v11846 = vmul.f32 %v10729, %v11670
  %v11847 = vmul.f32 %v10739, %v11671
  %v11848 = vmul.f32 %v10749, %v11672
  %v11849 = vmul.f32 %v10759, %v11673
  %v11850 = vmul.f32 %v10769, %v11674
  %v11851 = vmul.f32 %v10779, %v11675
  %v11852 = vmul.f32 %v10789, %v11676
  %v11853 = vmul.f32 %v10799, %v11677
  %v11854 = vmul.f32 %v10809, %v11678
  %v11855 = vmul.f32 %v10819, %v11679
  %v11856 = vmul.f32 %v10829, %v11680
  %v11857 = vmul.f32 %v10839, %v11681
  %v11858 = vmul.f32 %v10849, %v11682
  %v11859 = vmul.f32 %v10859, %v11683
  %v11860 = vmul.f32 %v10869, %v11684
  %v11861 = vmul.f32 %v10879, %v11685
  %v11862 = vmul.f32 %v10889, %v11686
  %v11863 = vmul.f32 %v10899, %v11687
  %v11864 = vmul.f32 %v10909, %v11688
  %v11865 = vmul.f32 %v10919, %v11689
  %v11866 = vmul.f32 %v10929, %v11690
  %v11867 = vmul.f32 %v10939, %v11691
  %v11868 = vmul.f32 %v10949, %v11692
  %v11869 = vmul.f32 %v10959, %v11693
  %v11870 = vmul.f32 %v10969, %v11694
  %v11871 = vmul.f32 %v10979, %v11695
  %v11872 = vmul.f32 %v10989, %v11696
  %v11873 = vmul.f32 %v10999, %v11697
  %v11874 = vmul.f32 %v11009, %v11698
  %v11875 = vmul.f32 %v11019, %v11699
  %v11876 = vmul.f32 %v11029, %v11700
  %v11877 = vmul.f32 %v11039, %v11701
  %v11878 = vmul.f32 %v11049, %v11702
  %v11879 = vmul.f32 %v11059, %v11703
  %v11880 = vmul.f32 %v11069, %v11704
  %v11881 = vmul.f32 %v11079, %v11705
  %v11882 = vmul.f32 %v11089, %v11706
  %v11883 = vmul.f32 %v11099, %v11707
  %v11884 = vmul.f32 %v11109, %v11708
  %v11885 = vmul.f32 %v11119, %v11709
  %v11886 = vmul.f32 %v11129, %v11710
  %v11887 = vmul.f32 %v11139, %v11711
  %v11888 = vmul.f32 %v11149, %v11712
  %v11889 = vmul.f32 %v11159, %v11713
  %v11890 = vmul.f32 %v11169, %v11714
  %v11891 = vmul.f32 %v11179, %v11715
  %v11892 = vmul.f32 %v11189, %v11716
  %v11893 = vmul.f32 %v11199, %v11717
  %v11894 = vmul.f32 %v11209, %v11718
  %v11895 = vmul.f32 %v11219, %v11719
  %v11896 = vmul.f32 %v11229, %v11720
  %v11897 = vmul.f32 %v11239, %v11721
  %v11898 = vmul.f32 %v11249, %v11722
  %v11899 = vmul.f32 %v11259, %v11723
  %v11900 = vmul.f32 %v11269, %v11724
  %v11901 = vmul.f32 %v11279, %v11725
  %v11902 = vmul.f32 %v11289, %v11726
  %v11903 = vmul.f32 %v11299, %v11727
  %v11904 = vmul.f32 %v11309, %v11728
  %v11905 = vmul.f32 %v11319, %v11729
  %v11906 = vmul.f32 %v11329, %v11730
  %v11907 = vmul.f32 %v11339, %v11731
  %v11908 = vmul.f32 %v11349, %v11732
  %v11909 = vmul.f32 %v11359, %v11733
  %v11910 = vmul.f32 %v11369, %v11734
  %v11911 = vmul.f32 %v11379, %v11735
  %v11912 = vmul.f32 %v11389, %v11736
  %v11913 = vmul.f32 %v11399, %v11737
  %v11914 = vmul.f32 %v11409, %v11738
  %v11915 = vmul.f32 %v11419, %v11739
  %v11916 = vmul.f32 %v11429, %v11740
  %v11917 = vmul.f32 %v11439, %v11741
  %v11918 = vmul.f32 %v11449, %v11742
  %v11919 = vmul.f32 %v11459, %v11743
  %v11920 = vmul.f32 %v11469, %v11744
  %v11921 = vmul.f32 %v11479, %v11745
  %v11922 = vmul.f32 %v11489, %v11746
  %v11923 = vmul.f32 %v11499, %v11747
  %v11924 = vmul.f32 %v11509, %v11748
  %v11925 = vmul.f32 %v11519, %v11749
  %v11926 = vmul.f32 %v11529, %v11750
  %v11927 = vmul.f32 %v11539, %v11751
  %v11928 = vmul.f32 %v11549, %v11752
  %v11929 = vmul.f32 %v11559, %v11753
  %v11930 = vmul.f32 %v11569, %v11754
  %v11931 = vmul.f32 %v11579, %v11755
  %11933 = vset.pattern.permute.xlu0 0
  %11934 = vperm.xlu0 %11933, %v11756
  %v11935 = vpop.permute.xlu0 %11934
  %11938 = vset.pattern.permute.xlu0 0
  %11939 = vperm.xlu0 %11938, %v11757
  %v11940 = vpop.permute.xlu0 %11939
  %11943 = vset.pattern.permute.xlu0 0
  %11944 = vperm.xlu0 %11943, %v11758
  %v11945 = vpop.permute.xlu0 %11944
  %11948 = vset.pattern.permute.xlu0 0
  %11949 = vperm.xlu0 %11948, %v11759
  %v11950 = vpop.permute.xlu0 %11949
  %11953 = vset.pattern.permute.xlu0 0
  %11954 = vperm.xlu0 %11953, %v11760
  %v11955 = vpop.permute.xlu0 %11954
  %11958 = vset.pattern.permute.xlu0 0
  %11959 = vperm.xlu0 %11958, %v11761
  %v11960 = vpop.permute.xlu0 %11959
  %11963 = vset.pattern.permute.xlu0 0
  %11964 = vperm.xlu0 %11963, %v11762
  %v11965 = vpop.permute.xlu0 %11964
  %11968 = vset.pattern.permute.xlu0 0
  %11969 = vperm.xlu0 %11968, %v11763
  %v11970 = vpop.permute.xlu0 %11969
  %11973 = vset.pattern.permute.xlu0 0
  %11974 = vperm.xlu0 %11973, %v11764
  %v11975 = vpop.permute.xlu0 %11974
  %11978 = vset.pattern.permute.xlu0 0
  %11979 = vperm.xlu0 %11978, %v11765
  %v11980 = vpop.permute.xlu0 %11979
  %11983 = vset.pattern.permute.xlu0 0
  %11984 = vperm.xlu0 %11983, %v11766
  %v11985 = vpop.permute.xlu0 %11984
  %11988 = vset.pattern.permute.xlu0 0
  %11989 = vperm.xlu0 %11988, %v11767
  %v11990 = vpop.permute.xlu0 %11989
  %11993 = vset.pattern.permute.xlu0 0
  %11994 = vperm.xlu0 %11993, %v11768
  %v11995 = vpop.permute.xlu0 %11994
  %11998 = vset.pattern.permute.xlu0 0
  %11999 = vperm.xlu0 %11998, %v11769
  %v12000 = vpop.permute.xlu0 %11999
  %12003 = vset.pattern.permute.xlu0 0
  %12004 = vperm.xlu0 %12003, %v11770
  %v12005 = vpop.permute.xlu0 %12004
  %12008 = vset.pattern.permute.xlu0 0
  %12009 = vperm.xlu0 %12008, %v11771
  %v12010 = vpop.permute.xlu0 %12009
  %12013 = vset.pattern.permute.xlu0 0
  %12014 = vperm.xlu0 %12013, %v11772
  %v12015 = vpop.permute.xlu0 %12014
  %12018 = vset.pattern.permute.xlu0 0
  %12019 = vperm.xlu0 %12018, %v11773
  %v12020 = vpop.permute.xlu0 %12019
  %12023 = vset.pattern.permute.xlu0 0
  %12024 = vperm.xlu0 %12023, %v11774
  %v12025 = vpop.permute.xlu0 %12024
  %12028 = vset.pattern.permute.xlu0 0
  %12029 = vperm.xlu0 %12028, %v11775
  %v12030 = vpop.permute.xlu0 %12029
  %12033 = vset.pattern.permute.xlu0 0
  %12034 = vperm.xlu0 %12033, %v11776
  %v12035 = vpop.permute.xlu0 %12034
  %12038 = vset.pattern.permute.xlu0 0
  %12039 = vperm.xlu0 %12038, %v11777
  %v12040 = vpop.permute.xlu0 %12039
  %12043 = vset.pattern.permute.xlu0 0
  %12044 = vperm.xlu0 %12043, %v11778
  %v12045 = vpop.permute.xlu0 %12044
  %12048 = vset.pattern.permute.xlu0 0
  %12049 = vperm.xlu0 %12048, %v11779
  %v12050 = vpop.permute.xlu0 %12049
  %12053 = vset.pattern.permute.xlu0 0
  %12054 = vperm.xlu0 %12053, %v11780
  %v12055 = vpop.permute.xlu0 %12054
  %12058 = vset.pattern.permute.xlu0 0
  %12059 = vperm.xlu0 %12058, %v11781
  %v12060 = vpop.permute.xlu0 %12059
  %12063 = vset.pattern.permute.xlu0 0
  %12064 = vperm.xlu0 %12063, %v11782
  %v12065 = vpop.permute.xlu0 %12064
  %12068 = vset.pattern.permute.xlu0 0
  %12069 = vperm.xlu0 %12068, %v11783
  %v12070 = vpop.permute.xlu0 %12069
  %12073 = vset.pattern.permute.xlu0 0
  %12074 = vperm.xlu0 %12073, %v11784
  %v12075 = vpop.permute.xlu0 %12074
  %12078 = vset.pattern.permute.xlu0 0
  %12079 = vperm.xlu0 %12078, %v11785
  %v12080 = vpop.permute.xlu0 %12079
  %12083 = vset.pattern.permute.xlu0 0
  %12084 = vperm.xlu0 %12083, %v11786
  %v12085 = vpop.permute.xlu0 %12084
  %12088 = vset.pattern.permute.xlu0 0
  %12089 = vperm.xlu0 %12088, %v11787
  %v12090 = vpop.permute.xlu0 %12089
  %12093 = vset.pattern.permute.xlu0 0
  %12094 = vperm.xlu0 %12093, %v11788
  %v12095 = vpop.permute.xlu0 %12094
  %12098 = vset.pattern.permute.xlu0 0
  %12099 = vperm.xlu0 %12098, %v11789
  %v12100 = vpop.permute.xlu0 %12099
  %12103 = vset.pattern.permute.xlu0 0
  %12104 = vperm.xlu0 %12103, %v11790
  %v12105 = vpop.permute.xlu0 %12104
  %12108 = vset.pattern.permute.xlu0 0
  %12109 = vperm.xlu0 %12108, %v11791
  %v12110 = vpop.permute.xlu0 %12109
  %12113 = vset.pattern.permute.xlu0 0
  %12114 = vperm.xlu0 %12113, %v11792
  %v12115 = vpop.permute.xlu0 %12114
  %12118 = vset.pattern.permute.xlu0 0
  %12119 = vperm.xlu0 %12118, %v11793
  %v12120 = vpop.permute.xlu0 %12119
  %12123 = vset.pattern.permute.xlu0 0
  %12124 = vperm.xlu0 %12123, %v11794
  %v12125 = vpop.permute.xlu0 %12124
  %12128 = vset.pattern.permute.xlu0 0
  %12129 = vperm.xlu0 %12128, %v11795
  %v12130 = vpop.permute.xlu0 %12129
  %12133 = vset.pattern.permute.xlu0 0
  %12134 = vperm.xlu0 %12133, %v11796
  %v12135 = vpop.permute.xlu0 %12134
  %12138 = vset.pattern.permute.xlu0 0
  %12139 = vperm.xlu0 %12138, %v11797
  %v12140 = vpop.permute.xlu0 %12139
  %12143 = vset.pattern.permute.xlu0 0
  %12144 = vperm.xlu0 %12143, %v11798
  %v12145 = vpop.permute.xlu0 %12144
  %12148 = vset.pattern.permute.xlu0 0
  %12149 = vperm.xlu0 %12148, %v11799
  %v12150 = vpop.permute.xlu0 %12149
  %12153 = vset.pattern.permute.xlu0 0
  %12154 = vperm.xlu0 %12153, %v11800
  %v12155 = vpop.permute.xlu0 %12154
  %12158 = vset.pattern.permute.xlu0 0
  %12159 = vperm.xlu0 %12158, %v11801
  %v12160 = vpop.permute.xlu0 %12159
  %12163 = vset.pattern.permute.xlu0 0
  %12164 = vperm.xlu0 %12163, %v11802
  %v12165 = vpop.permute.xlu0 %12164
  %12168 = vset.pattern.permute.xlu0 0
  %12169 = vperm.xlu0 %12168, %v11803
  %v12170 = vpop.permute.xlu0 %12169
  %12173 = vset.pattern.permute.xlu0 0
  %12174 = vperm.xlu0 %12173, %v11804
  %v12175 = vpop.permute.xlu0 %12174
  %12178 = vset.pattern.permute.xlu0 0
  %12179 = vperm.xlu0 %12178, %v11805
  %v12180 = vpop.permute.xlu0 %12179
  %12183 = vset.pattern.permute.xlu0 0
  %12184 = vperm.xlu0 %12183, %v11806
  %v12185 = vpop.permute.xlu0 %12184
  %12188 = vset.pattern.permute.xlu0 0
  %12189 = vperm.xlu0 %12188, %v11807
  %v12190 = vpop.permute.xlu0 %12189
  %12193 = vset.pattern.permute.xlu0 0
  %12194 = vperm.xlu0 %12193, %v11808
  %v12195 = vpop.permute.xlu0 %12194
  %12198 = vset.pattern.permute.xlu0 0
  %12199 = vperm.xlu0 %12198, %v11809
  %v12200 = vpop.permute.xlu0 %12199
  %12203 = vset.pattern.permute.xlu0 0
  %12204 = vperm.xlu0 %12203, %v11810
  %v12205 = vpop.permute.xlu0 %12204
  %12208 = vset.pattern.permute.xlu0 0
  %12209 = vperm.xlu0 %12208, %v11811
  %v12210 = vpop.permute.xlu0 %12209
  %12213 = vset.pattern.permute.xlu0 0
  %12214 = vperm.xlu0 %12213, %v11812
  %v12215 = vpop.permute.xlu0 %12214
  %12218 = vset.pattern.permute.xlu0 0
  %12219 = vperm.xlu0 %12218, %v11813
  %v12220 = vpop.permute.xlu0 %12219
  %12223 = vset.pattern.permute.xlu0 0
  %12224 = vperm.xlu0 %12223, %v11814
  %v12225 = vpop.permute.xlu0 %12224
  %12228 = vset.pattern.permute.xlu0 0
  %12229 = vperm.xlu0 %12228, %v11815
  %v12230 = vpop.permute.xlu0 %12229
  %12233 = vset.pattern.permute.xlu0 0
  %12234 = vperm.xlu0 %12233, %v11816
  %v12235 = vpop.permute.xlu0 %12234
  %12238 = vset.pattern.permute.xlu0 0
  %12239 = vperm.xlu0 %12238, %v11817
  %v12240 = vpop.permute.xlu0 %12239
  %12243 = vset.pattern.permute.xlu0 0
  %12244 = vperm.xlu0 %12243, %v11818
  %v12245 = vpop.permute.xlu0 %12244
  %12248 = vset.pattern.permute.xlu0 0
  %12249 = vperm.xlu0 %12248, %v11819
  %v12250 = vpop.permute.xlu0 %12249
  %12253 = vset.pattern.permute.xlu0 0
  %12254 = vperm.xlu0 %12253, %v11820
  %v12255 = vpop.permute.xlu0 %12254
  %12258 = vset.pattern.permute.xlu0 0
  %12259 = vperm.xlu0 %12258, %v11821
  %v12260 = vpop.permute.xlu0 %12259
  %12263 = vset.pattern.permute.xlu0 0
  %12264 = vperm.xlu0 %12263, %v11822
  %v12265 = vpop.permute.xlu0 %12264
  %12268 = vset.pattern.permute.xlu0 0
  %12269 = vperm.xlu0 %12268, %v11823
  %v12270 = vpop.permute.xlu0 %12269
  %12273 = vset.pattern.permute.xlu0 0
  %12274 = vperm.xlu0 %12273, %v11824
  %v12275 = vpop.permute.xlu0 %12274
  %12278 = vset.pattern.permute.xlu0 0
  %12279 = vperm.xlu0 %12278, %v11825
  %v12280 = vpop.permute.xlu0 %12279
  %12283 = vset.pattern.permute.xlu0 0
  %12284 = vperm.xlu0 %12283, %v11826
  %v12285 = vpop.permute.xlu0 %12284
  %12288 = vset.pattern.permute.xlu0 0
  %12289 = vperm.xlu0 %12288, %v11827
  %v12290 = vpop.permute.xlu0 %12289
  %12293 = vset.pattern.permute.xlu0 0
  %12294 = vperm.xlu0 %12293, %v11828
  %v12295 = vpop.permute.xlu0 %12294
  %12298 = vset.pattern.permute.xlu0 0
  %12299 = vperm.xlu0 %12298, %v11829
  %v12300 = vpop.permute.xlu0 %12299
  %12303 = vset.pattern.permute.xlu0 0
  %12304 = vperm.xlu0 %12303, %v11830
  %v12305 = vpop.permute.xlu0 %12304
  %12308 = vset.pattern.permute.xlu0 0
  %12309 = vperm.xlu0 %12308, %v11831
  %v12310 = vpop.permute.xlu0 %12309
  %12313 = vset.pattern.permute.xlu0 0
  %12314 = vperm.xlu0 %12313, %v11832
  %v12315 = vpop.permute.xlu0 %12314
  %12318 = vset.pattern.permute.xlu0 0
  %12319 = vperm.xlu0 %12318, %v11833
  %v12320 = vpop.permute.xlu0 %12319
  %12323 = vset.pattern.permute.xlu0 0
  %12324 = vperm.xlu0 %12323, %v11834
  %v12325 = vpop.permute.xlu0 %12324
  %12328 = vset.pattern.permute.xlu0 0
  %12329 = vperm.xlu0 %12328, %v11835
  %v12330 = vpop.permute.xlu0 %12329
  %12333 = vset.pattern.permute.xlu0 0
  %12334 = vperm.xlu0 %12333, %v11836
  %v12335 = vpop.permute.xlu0 %12334
  %12338 = vset.pattern.permute.xlu0 0
  %12339 = vperm.xlu0 %12338, %v11837
  %v12340 = vpop.permute.xlu0 %12339
  %12343 = vset.pattern.permute.xlu0 0
  %12344 = vperm.xlu0 %12343, %v11838
  %v12345 = vpop.permute.xlu0 %12344
  %12348 = vset.pattern.permute.xlu0 0
  %12349 = vperm.xlu0 %12348, %v11839
  %v12350 = vpop.permute.xlu0 %12349
  %12353 = vset.pattern.permute.xlu0 0
  %12354 = vperm.xlu0 %12353, %v11840
  %v12355 = vpop.permute.xlu0 %12354
  %12358 = vset.pattern.permute.xlu0 0
  %12359 = vperm.xlu0 %12358, %v11841
  %v12360 = vpop.permute.xlu0 %12359
  %12363 = vset.pattern.permute.xlu0 0
  %12364 = vperm.xlu0 %12363, %v11842
  %v12365 = vpop.permute.xlu0 %12364
  %12368 = vset.pattern.permute.xlu0 0
  %12369 = vperm.xlu0 %12368, %v11843
  %v12370 = vpop.permute.xlu0 %12369
  %12373 = vset.pattern.permute.xlu0 0
  %12374 = vperm.xlu0 %12373, %v11844
  %v12375 = vpop.permute.xlu0 %12374
  %12378 = vset.pattern.permute.xlu0 0
  %12379 = vperm.xlu0 %12378, %v11845
  %v12380 = vpop.permute.xlu0 %12379
  %12383 = vset.pattern.permute.xlu0 0
  %12384 = vperm.xlu0 %12383, %v11846
  %v12385 = vpop.permute.xlu0 %12384
  %12388 = vset.pattern.permute.xlu0 0
  %12389 = vperm.xlu0 %12388, %v11847
  %v12390 = vpop.permute.xlu0 %12389
  %12393 = vset.pattern.permute.xlu0 0
  %12394 = vperm.xlu0 %12393, %v11848
  %v12395 = vpop.permute.xlu0 %12394
  %12398 = vset.pattern.permute.xlu0 0
  %12399 = vperm.xlu0 %12398, %v11849
  %v12400 = vpop.permute.xlu0 %12399
  %12403 = vset.pattern.permute.xlu0 0
  %12404 = vperm.xlu0 %12403, %v11850
  %v12405 = vpop.permute.xlu0 %12404
  %12408 = vset.pattern.permute.xlu0 0
  %12409 = vperm.xlu0 %12408, %v11851
  %v12410 = vpop.permute.xlu0 %12409
  %12413 = vset.pattern.permute.xlu0 0
  %12414 = vperm.xlu0 %12413, %v11852
  %v12415 = vpop.permute.xlu0 %12414
  %12418 = vset.pattern.permute.xlu0 0
  %12419 = vperm.xlu0 %12418, %v11853
  %v12420 = vpop.permute.xlu0 %12419
  %12423 = vset.pattern.permute.xlu0 0
  %12424 = vperm.xlu0 %12423, %v11854
  %v12425 = vpop.permute.xlu0 %12424
  %12428 = vset.pattern.permute.xlu0 0
  %12429 = vperm.xlu0 %12428, %v11855
  %v12430 = vpop.permute.xlu0 %12429
  %12433 = vset.pattern.permute.xlu0 0
  %12434 = vperm.xlu0 %12433, %v11856
  %v12435 = vpop.permute.xlu0 %12434
  %12438 = vset.pattern.permute.xlu0 0
  %12439 = vperm.xlu0 %12438, %v11857
  %v12440 = vpop.permute.xlu0 %12439
  %12443 = vset.pattern.permute.xlu0 0
  %12444 = vperm.xlu0 %12443, %v11858
  %v12445 = vpop.permute.xlu0 %12444
  %12448 = vset.pattern.permute.xlu0 0
  %12449 = vperm.xlu0 %12448, %v11859
  %v12450 = vpop.permute.xlu0 %12449
  %12453 = vset.pattern.permute.xlu0 0
  %12454 = vperm.xlu0 %12453, %v11860
  %v12455 = vpop.permute.xlu0 %12454
  %12458 = vset.pattern.permute.xlu0 0
  %12459 = vperm.xlu0 %12458, %v11861
  %v12460 = vpop.permute.xlu0 %12459
  %12463 = vset.pattern.permute.xlu0 0
  %12464 = vperm.xlu0 %12463, %v11862
  %v12465 = vpop.permute.xlu0 %12464
  %12468 = vset.pattern.permute.xlu0 0
  %12469 = vperm.xlu0 %12468, %v11863
  %v12470 = vpop.permute.xlu0 %12469
  %12473 = vset.pattern.permute.xlu0 0
  %12474 = vperm.xlu0 %12473, %v11864
  %v12475 = vpop.permute.xlu0 %12474
  %12478 = vset.pattern.permute.xlu0 0
  %12479 = vperm.xlu0 %12478, %v11865
  %v12480 = vpop.permute.xlu0 %12479
  %12483 = vset.pattern.permute.xlu0 0
  %12484 = vperm.xlu0 %12483, %v11866
  %v12485 = vpop.permute.xlu0 %12484
  %12488 = vset.pattern.permute.xlu0 0
  %12489 = vperm.xlu0 %12488, %v11867
  %v12490 = vpop.permute.xlu0 %12489
  %12493 = vset.pattern.permute.xlu0 0
  %12494 = vperm.xlu0 %12493, %v11868
  %v12495 = vpop.permute.xlu0 %12494
  %12498 = vset.pattern.permute.xlu0 0
  %12499 = vperm.xlu0 %12498, %v11869
  %v12500 = vpop.permute.xlu0 %12499
  %12503 = vset.pattern.permute.xlu0 0
  %12504 = vperm.xlu0 %12503, %v11870
  %v12505 = vpop.permute.xlu0 %12504
  %12508 = vset.pattern.permute.xlu0 0
  %12509 = vperm.xlu0 %12508, %v11871
  %v12510 = vpop.permute.xlu0 %12509
  %12513 = vset.pattern.permute.xlu0 0
  %12514 = vperm.xlu0 %12513, %v11872
  %v12515 = vpop.permute.xlu0 %12514
  %12518 = vset.pattern.permute.xlu0 0
  %12519 = vperm.xlu0 %12518, %v11873
  %v12520 = vpop.permute.xlu0 %12519
  %12523 = vset.pattern.permute.xlu0 0
  %12524 = vperm.xlu0 %12523, %v11874
  %v12525 = vpop.permute.xlu0 %12524
  %12528 = vset.pattern.permute.xlu0 0
  %12529 = vperm.xlu0 %12528, %v11875
  %v12530 = vpop.permute.xlu0 %12529
  %12533 = vset.pattern.permute.xlu0 0
  %12534 = vperm.xlu0 %12533, %v11876
  %v12535 = vpop.permute.xlu0 %12534
  %12538 = vset.pattern.permute.xlu0 0
  %12539 = vperm.xlu0 %12538, %v11877
  %v12540 = vpop.permute.xlu0 %12539
  %12543 = vset.pattern.permute.xlu0 0
  %12544 = vperm.xlu0 %12543, %v11878
  %v12545 = vpop.permute.xlu0 %12544
  %12548 = vset.pattern.permute.xlu0 0
  %12549 = vperm.xlu0 %12548, %v11879
  %v12550 = vpop.permute.xlu0 %12549
  %12553 = vset.pattern.permute.xlu0 0
  %12554 = vperm.xlu0 %12553, %v11880
  %v12555 = vpop.permute.xlu0 %12554
  %12558 = vset.pattern.permute.xlu0 0
  %12559 = vperm.xlu0 %12558, %v11881
  %v12560 = vpop.permute.xlu0 %12559
  %12563 = vset.pattern.permute.xlu0 0
  %12564 = vperm.xlu0 %12563, %v11882
  %v12565 = vpop.permute.xlu0 %12564
  %12568 = vset.pattern.permute.xlu0 0
  %12569 = vperm.xlu0 %12568, %v11883
  %v12570 = vpop.permute.xlu0 %12569
  %12573 = vset.pattern.permute.xlu0 0
  %12574 = vperm.xlu0 %12573, %v11884
  %v12575 = vpop.permute.xlu0 %12574
  %12578 = vset.pattern.permute.xlu0 0
  %12579 = vperm.xlu0 %12578, %v11885
  %v12580 = vpop.permute.xlu0 %12579
  %12583 = vset.pattern.permute.xlu0 0
  %12584 = vperm.xlu0 %12583, %v11886
  %v12585 = vpop.permute.xlu0 %12584
  %12588 = vset.pattern.permute.xlu0 0
  %12589 = vperm.xlu0 %12588, %v11887
  %v12590 = vpop.permute.xlu0 %12589
  %12593 = vset.pattern.permute.xlu0 0
  %12594 = vperm.xlu0 %12593, %v11888
  %v12595 = vpop.permute.xlu0 %12594
  %12598 = vset.pattern.permute.xlu0 0
  %12599 = vperm.xlu0 %12598, %v11889
  %v12600 = vpop.permute.xlu0 %12599
  %12603 = vset.pattern.permute.xlu0 0
  %12604 = vperm.xlu0 %12603, %v11890
  %v12605 = vpop.permute.xlu0 %12604
  %12608 = vset.pattern.permute.xlu0 0
  %12609 = vperm.xlu0 %12608, %v11891
  %v12610 = vpop.permute.xlu0 %12609
  %12613 = vset.pattern.permute.xlu0 0
  %12614 = vperm.xlu0 %12613, %v11892
  %v12615 = vpop.permute.xlu0 %12614
  %12618 = vset.pattern.permute.xlu0 0
  %12619 = vperm.xlu0 %12618, %v11893
  %v12620 = vpop.permute.xlu0 %12619
  %12623 = vset.pattern.permute.xlu0 0
  %12624 = vperm.xlu0 %12623, %v11894
  %v12625 = vpop.permute.xlu0 %12624
  %12628 = vset.pattern.permute.xlu0 0
  %12629 = vperm.xlu0 %12628, %v11895
  %v12630 = vpop.permute.xlu0 %12629
  %12633 = vset.pattern.permute.xlu0 0
  %12634 = vperm.xlu0 %12633, %v11896
  %v12635 = vpop.permute.xlu0 %12634
  %12638 = vset.pattern.permute.xlu0 0
  %12639 = vperm.xlu0 %12638, %v11897
  %v12640 = vpop.permute.xlu0 %12639
  %12643 = vset.pattern.permute.xlu0 0
  %12644 = vperm.xlu0 %12643, %v11898
  %v12645 = vpop.permute.xlu0 %12644
  %12648 = vset.pattern.permute.xlu0 0
  %12649 = vperm.xlu0 %12648, %v11899
  %v12650 = vpop.permute.xlu0 %12649
  %12653 = vset.pattern.permute.xlu0 0
  %12654 = vperm.xlu0 %12653, %v11900
  %v12655 = vpop.permute.xlu0 %12654
  %12658 = vset.pattern.permute.xlu0 0
  %12659 = vperm.xlu0 %12658, %v11901
  %v12660 = vpop.permute.xlu0 %12659
  %12663 = vset.pattern.permute.xlu0 0
  %12664 = vperm.xlu0 %12663, %v11902
  %v12665 = vpop.permute.xlu0 %12664
  %12668 = vset.pattern.permute.xlu0 0
  %12669 = vperm.xlu0 %12668, %v11903
  %v12670 = vpop.permute.xlu0 %12669
  %12673 = vset.pattern.permute.xlu0 0
  %12674 = vperm.xlu0 %12673, %v11904
  %v12675 = vpop.permute.xlu0 %12674
  %12678 = vset.pattern.permute.xlu0 0
  %12679 = vperm.xlu0 %12678, %v11905
  %v12680 = vpop.permute.xlu0 %12679
  %12683 = vset.pattern.permute.xlu0 0
  %12684 = vperm.xlu0 %12683, %v11906
  %v12685 = vpop.permute.xlu0 %12684
  %12688 = vset.pattern.permute.xlu0 0
  %12689 = vperm.xlu0 %12688, %v11907
  %v12690 = vpop.permute.xlu0 %12689
  %12693 = vset.pattern.permute.xlu0 0
  %12694 = vperm.xlu0 %12693, %v11908
  %v12695 = vpop.permute.xlu0 %12694
  %12698 = vset.pattern.permute.xlu0 0
  %12699 = vperm.xlu0 %12698, %v11909
  %v12700 = vpop.permute.xlu0 %12699
  %12703 = vset.pattern.permute.xlu0 0
  %12704 = vperm.xlu0 %12703, %v11910
  %v12705 = vpop.permute.xlu0 %12704
  %12708 = vset.pattern.permute.xlu0 0
  %12709 = vperm.xlu0 %12708, %v11911
  %v12710 = vpop.permute.xlu0 %12709
  %12713 = vset.pattern.permute.xlu0 0
  %12714 = vperm.xlu0 %12713, %v11912
  %v12715 = vpop.permute.xlu0 %12714
  %12718 = vset.pattern.permute.xlu0 0
  %12719 = vperm.xlu0 %12718, %v11913
  %v12720 = vpop.permute.xlu0 %12719
  %12723 = vset.pattern.permute.xlu0 0
  %12724 = vperm.xlu0 %12723, %v11914
  %v12725 = vpop.permute.xlu0 %12724
  %12728 = vset.pattern.permute.xlu0 0
  %12729 = vperm.xlu0 %12728, %v11915
  %v12730 = vpop.permute.xlu0 %12729
  %12733 = vset.pattern.permute.xlu0 0
  %12734 = vperm.xlu0 %12733, %v11916
  %v12735 = vpop.permute.xlu0 %12734
  %12738 = vset.pattern.permute.xlu0 0
  %12739 = vperm.xlu0 %12738, %v11917
  %v12740 = vpop.permute.xlu0 %12739
  %12743 = vset.pattern.permute.xlu0 0
  %12744 = vperm.xlu0 %12743, %v11918
  %v12745 = vpop.permute.xlu0 %12744
  %12748 = vset.pattern.permute.xlu0 0
  %12749 = vperm.xlu0 %12748, %v11919
  %v12750 = vpop.permute.xlu0 %12749
  %12753 = vset.pattern.permute.xlu0 0
  %12754 = vperm.xlu0 %12753, %v11920
  %v12755 = vpop.permute.xlu0 %12754
  %12758 = vset.pattern.permute.xlu0 0
  %12759 = vperm.xlu0 %12758, %v11921
  %v12760 = vpop.permute.xlu0 %12759
  %12763 = vset.pattern.permute.xlu0 0
  %12764 = vperm.xlu0 %12763, %v11922
  %v12765 = vpop.permute.xlu0 %12764
  %12768 = vset.pattern.permute.xlu0 0
  %12769 = vperm.xlu0 %12768, %v11923
  %v12770 = vpop.permute.xlu0 %12769
  %12773 = vset.pattern.permute.xlu0 0
  %12774 = vperm.xlu0 %12773, %v11924
  %v12775 = vpop.permute.xlu0 %12774
  %12778 = vset.pattern.permute.xlu0 0
  %12779 = vperm.xlu0 %12778, %v11925
  %v12780 = vpop.permute.xlu0 %12779
  %12783 = vset.pattern.permute.xlu0 0
  %12784 = vperm.xlu0 %12783, %v11926
  %v12785 = vpop.permute.xlu0 %12784
  %12788 = vset.pattern.permute.xlu0 0
  %12789 = vperm.xlu0 %12788, %v11927
  %v12790 = vpop.permute.xlu0 %12789
  %12793 = vset.pattern.permute.xlu0 0
  %12794 = vperm.xlu0 %12793, %v11928
  %v12795 = vpop.permute.xlu0 %12794
  %12798 = vset.pattern.permute.xlu0 0
  %12799 = vperm.xlu0 %12798, %v11929
  %v12800 = vpop.permute.xlu0 %12799
  %12803 = vset.pattern.permute.xlu0 0
  %12804 = vperm.xlu0 %12803, %v11930
  %v12805 = vpop.permute.xlu0 %12804
  %12808 = vset.pattern.permute.xlu0 0
  %12809 = vperm.xlu0 %12808, %v11931
  %v12810 = vpop.permute.xlu0 %12809
  %v12812 = vmul.f32 %v8588, %v11935
  %v12813 = vmul.f32 %v8589, %v11940
  %v12814 = vmul.f32 %v8590, %v11945
  %v12815 = vmul.f32 %v8591, %v11950
  %v12816 = vmul.f32 %v8592, %v11955
  %v12817 = vmul.f32 %v8593, %v11960
  %v12818 = vmul.f32 %v8594, %v11965
  %v12819 = vmul.f32 %v8595, %v11970
  %v12820 = vmul.f32 %v8596, %v11975
  %v12821 = vmul.f32 %v8597, %v11980
  %v12822 = vmul.f32 %v8598, %v11985
  %v12823 = vmul.f32 %v8599, %v11990
  %v12824 = vmul.f32 %v8600, %v11995
  %v12825 = vmul.f32 %v8601, %v12000
  %v12826 = vmul.f32 %v8602, %v12005
  %v12827 = vmul.f32 %v8603, %v12010
  %v12828 = vmul.f32 %v8604, %v12015
  %v12829 = vmul.f32 %v8605, %v12020
  %v12830 = vmul.f32 %v8606, %v12025
  %v12831 = vmul.f32 %v8607, %v12030
  %v12832 = vmul.f32 %v8608, %v12035
  %v12833 = vmul.f32 %v8609, %v12040
  %v12834 = vmul.f32 %v8610, %v12045
  %v12835 = vmul.f32 %v8611, %v12050
  %v12836 = vmul.f32 %v8612, %v12055
  %v12837 = vmul.f32 %v8613, %v12060
  %v12838 = vmul.f32 %v8614, %v12065
  %v12839 = vmul.f32 %v8615, %v12070
  %v12840 = vmul.f32 %v8616, %v12075
  %v12841 = vmul.f32 %v8617, %v12080
  %v12842 = vmul.f32 %v8618, %v12085
  %v12843 = vmul.f32 %v8619, %v12090
  %v12844 = vmul.f32 %v8620, %v12095
  %v12845 = vmul.f32 %v8621, %v12100
  %v12846 = vmul.f32 %v8622, %v12105
  %v12847 = vmul.f32 %v8623, %v12110
  %v12848 = vmul.f32 %v8624, %v12115
  %v12849 = vmul.f32 %v8625, %v12120
  %v12850 = vmul.f32 %v8626, %v12125
  %v12851 = vmul.f32 %v8627, %v12130
  %v12852 = vmul.f32 %v8628, %v12135
  %v12853 = vmul.f32 %v8629, %v12140
  %v12854 = vmul.f32 %v8630, %v12145
  %v12855 = vmul.f32 %v8631, %v12150
  %v12856 = vmul.f32 %v8632, %v12155
  %v12857 = vmul.f32 %v8633, %v12160
  %v12858 = vmul.f32 %v8634, %v12165
  %v12859 = vmul.f32 %v8635, %v12170
  %v12860 = vmul.f32 %v8636, %v12175
  %v12861 = vmul.f32 %v8637, %v12180
  %v12862 = vmul.f32 %v8638, %v12185
  %v12863 = vmul.f32 %v8639, %v12190
  %v12864 = vmul.f32 %v8640, %v12195
  %v12865 = vmul.f32 %v8641, %v12200
  %v12866 = vmul.f32 %v8642, %v12205
  %v12867 = vmul.f32 %v8643, %v12210
  %v12868 = vmul.f32 %v8644, %v12215
  %v12869 = vmul.f32 %v8645, %v12220
  %v12870 = vmul.f32 %v8646, %v12225
  %v12871 = vmul.f32 %v8647, %v12230
  %v12872 = vmul.f32 %v8648, %v12235
  %v12873 = vmul.f32 %v8649, %v12240
  %v12874 = vmul.f32 %v8650, %v12245
  %v12875 = vmul.f32 %v8651, %v12250
  %v12876 = vmul.f32 %v8652, %v12255
  %v12877 = vmul.f32 %v8653, %v12260
  %v12878 = vmul.f32 %v8654, %v12265
  %v12879 = vmul.f32 %v8655, %v12270
  %v12880 = vmul.f32 %v8656, %v12275
  %v12881 = vmul.f32 %v8657, %v12280
  %v12882 = vmul.f32 %v8658, %v12285
  %v12883 = vmul.f32 %v8659, %v12290
  %v12884 = vmul.f32 %v8660, %v12295
  %v12885 = vmul.f32 %v8661, %v12300
  %v12886 = vmul.f32 %v8662, %v12305
  %v12887 = vmul.f32 %v8663, %v12310
  %v12888 = vmul.f32 %v8664, %v12315
  %v12889 = vmul.f32 %v8665, %v12320
  %v12890 = vmul.f32 %v8666, %v12325
  %v12891 = vmul.f32 %v8667, %v12330
  %v12892 = vmul.f32 %v8668, %v12335
  %v12893 = vmul.f32 %v8669, %v12340
  %v12894 = vmul.f32 %v8670, %v12345
  %v12895 = vmul.f32 %v8671, %v12350
  %v12896 = vmul.f32 %v8672, %v12355
  %v12897 = vmul.f32 %v8673, %v12360
  %v12898 = vmul.f32 %v8674, %v12365
  %v12899 = vmul.f32 %v8675, %v12370
  %v12900 = vmul.f32 %v8676, %v12375
  %v12901 = vmul.f32 %v8677, %v12380
  %v12902 = vmul.f32 %v8678, %v12385
  %v12903 = vmul.f32 %v8679, %v12390
  %v12904 = vmul.f32 %v8680, %v12395
  %v12905 = vmul.f32 %v8681, %v12400
  %v12906 = vmul.f32 %v8682, %v12405
  %v12907 = vmul.f32 %v8683, %v12410
  %v12908 = vmul.f32 %v8684, %v12415
  %v12909 = vmul.f32 %v8685, %v12420
  %v12910 = vmul.f32 %v8686, %v12425
  %v12911 = vmul.f32 %v8687, %v12430
  %v12912 = vmul.f32 %v8688, %v12435
  %v12913 = vmul.f32 %v8689, %v12440
  %v12914 = vmul.f32 %v8690, %v12445
  %v12915 = vmul.f32 %v8691, %v12450
  %v12916 = vmul.f32 %v8692, %v12455
  %v12917 = vmul.f32 %v8693, %v12460
  %v12918 = vmul.f32 %v8694, %v12465
  %v12919 = vmul.f32 %v8695, %v12470
  %v12920 = vmul.f32 %v8696, %v12475
  %v12921 = vmul.f32 %v8697, %v12480
  %v12922 = vmul.f32 %v8698, %v12485
  %v12923 = vmul.f32 %v8699, %v12490
  %v12924 = vmul.f32 %v8700, %v12495
  %v12925 = vmul.f32 %v8701, %v12500
  %v12926 = vmul.f32 %v8702, %v12505
  %v12927 = vmul.f32 %v8703, %v12510
  %v12928 = vmul.f32 %v8704, %v12515
  %v12929 = vmul.f32 %v8705, %v12520
  %v12930 = vmul.f32 %v8706, %v12525
  %v12931 = vmul.f32 %v8707, %v12530
  %v12932 = vmul.f32 %v8708, %v12535
  %v12933 = vmul.f32 %v8709, %v12540
  %v12934 = vmul.f32 %v8710, %v12545
  %v12935 = vmul.f32 %v8711, %v12550
  %v12936 = vmul.f32 %v8712, %v12555
  %v12937 = vmul.f32 %v8713, %v12560
  %v12938 = vmul.f32 %v8714, %v12565
  %v12939 = vmul.f32 %v8715, %v12570
  %v12940 = vmul.f32 %v8716, %v12575
  %v12941 = vmul.f32 %v8717, %v12580
  %v12942 = vmul.f32 %v8718, %v12585
  %v12943 = vmul.f32 %v8719, %v12590
  %v12944 = vmul.f32 %v8720, %v12595
  %v12945 = vmul.f32 %v8721, %v12600
  %v12946 = vmul.f32 %v8722, %v12605
  %v12947 = vmul.f32 %v8723, %v12610
  %v12948 = vmul.f32 %v8724, %v12615
  %v12949 = vmul.f32 %v8725, %v12620
  %v12950 = vmul.f32 %v8726, %v12625
  %v12951 = vmul.f32 %v8727, %v12630
  %v12952 = vmul.f32 %v8728, %v12635
  %v12953 = vmul.f32 %v8729, %v12640
  %v12954 = vmul.f32 %v8730, %v12645
  %v12955 = vmul.f32 %v8731, %v12650
  %v12956 = vmul.f32 %v8732, %v12655
  %v12957 = vmul.f32 %v8733, %v12660
  %v12958 = vmul.f32 %v8734, %v12665
  %v12959 = vmul.f32 %v8735, %v12670
  %v12960 = vmul.f32 %v8736, %v12675
  %v12961 = vmul.f32 %v8737, %v12680
  %v12962 = vmul.f32 %v8738, %v12685
  %v12963 = vmul.f32 %v8739, %v12690
  %v12964 = vmul.f32 %v8740, %v12695
  %v12965 = vmul.f32 %v8741, %v12700
  %v12966 = vmul.f32 %v8742, %v12705
  %v12967 = vmul.f32 %v8743, %v12710
  %v12968 = vmul.f32 %v8744, %v12715
  %v12969 = vmul.f32 %v8745, %v12720
  %v12970 = vmul.f32 %v8746, %v12725
  %v12971 = vmul.f32 %v8747, %v12730
  %v12972 = vmul.f32 %v8748, %v12735
  %v12973 = vmul.f32 %v8749, %v12740
  %v12974 = vmul.f32 %v8750, %v12745
  %v12975 = vmul.f32 %v8751, %v12750
  %v12976 = vmul.f32 %v8752, %v12755
  %v12977 = vmul.f32 %v8753, %v12760
  %v12978 = vmul.f32 %v8754, %v12765
  %v12979 = vmul.f32 %v8755, %v12770
  %v12980 = vmul.f32 %v8756, %v12775
  %v12981 = vmul.f32 %v8757, %v12780
  %v12982 = vmul.f32 %v8758, %v12785
  %v12983 = vmul.f32 %v8759, %v12790
  %v12984 = vmul.f32 %v8760, %v12795
  %v12985 = vmul.f32 %v8761, %v12800
  %v12986 = vmul.f32 %v8762, %v12805
  %v12987 = vmul.f32 %v8763, %v12810
  %v12988 = vld [vmem:[%s8] sm:$0xff]
  %v12989 = vld [vmem:[%s8 + $0x8] sm:$0xff]
  %v12990 = vld [vmem:[%s8 + $0x10] sm:$0xff]
  %v12991 = vld [vmem:[%s8 + $0x18] sm:$0xff]
  %v12992 = vld [vmem:[%s8 + $0x20] sm:$0xff]
  %v12993 = vld [vmem:[%s8 + $0x28] sm:$0xff]
  %v12994 = vld [vmem:[%s8 + $0x30] sm:$0xff]
  %v12995 = vld [vmem:[%s8 + $0x38] sm:$0xff]
  %v12996 = vld [vmem:[%s8 + $0x40] sm:$0xff]
  %v12997 = vld [vmem:[%s8 + $0x48] sm:$0xff]
  %v12998 = vld [vmem:[%s8 + $0x50] sm:$0xff]
  %v12999 = vld [vmem:[%s8 + $0x58] sm:$0xff]
  %v13000 = vld [vmem:[%s8 + $0x60] sm:$0xff]
  %v13001 = vld [vmem:[%s8 + $0x68] sm:$0xff]
  %v13002 = vld [vmem:[%s8 + $0x70] sm:$0xff]
  %v13003 = vld [vmem:[%s8 + $0x78] sm:$0xff]
  %v13004 = vld [vmem:[%s8 + $0x80] sm:$0xff]
  %v13005 = vld [vmem:[%s8 + $0x88] sm:$0xff]
  %v13006 = vld [vmem:[%s8 + $0x90] sm:$0xff]
  %v13007 = vld [vmem:[%s8 + $0x98] sm:$0xff]
  %v13008 = vld [vmem:[%s8 + $0xa0] sm:$0xff]
  %v13009 = vld [vmem:[%s8 + $0xa8] sm:$0xff]
  %v13010 = vld [vmem:[%s8 + $0xb0] sm:$0xff]
  %v13011 = vld [vmem:[%s8 + $0xb8] sm:$0xff]
  %v13012 = vld [vmem:[%s8 + $0xc0] sm:$0xff]
  %v13013 = vld [vmem:[%s8 + $0xc8] sm:$0xff]
  %v13014 = vld [vmem:[%s8 + $0xd0] sm:$0xff]
  %v13015 = vld [vmem:[%s8 + $0xd8] sm:$0xff]
  %v13016 = vld [vmem:[%s8 + $0xe0] sm:$0xff]
  %v13017 = vld [vmem:[%s8 + $0xe8] sm:$0xff]
  %v13018 = vld [vmem:[%s8 + $0xf0] sm:$0xff]
  %v13019 = vld [vmem:[%s8 + $0xf8] sm:$0xff]
  %v13020 = vld [vmem:[%s8 + $0x100] sm:$0xff]
  %v13021 = vld [vmem:[%s8 + $0x108] sm:$0xff]
  %v13022 = vld [vmem:[%s8 + $0x110] sm:$0xff]
  %v13023 = vld [vmem:[%s8 + $0x118] sm:$0xff]
  %v13024 = vld [vmem:[%s8 + $0x120] sm:$0xff]
  %v13025 = vld [vmem:[%s8 + $0x128] sm:$0xff]
  %v13026 = vld [vmem:[%s8 + $0x130] sm:$0xff]
  %v13027 = vld [vmem:[%s8 + $0x138] sm:$0xff]
  %v13028 = vld [vmem:[%s8 + $0x140] sm:$0xff]
  %v13029 = vld [vmem:[%s8 + $0x148] sm:$0xff]
  %v13030 = vld [vmem:[%s8 + $0x150] sm:$0xff]
  %v13031 = vld [vmem:[%s8 + $0x158] sm:$0xff]
  %v13032 = vld [vmem:[%s8 + $0x160] sm:$0xff]
  %v13033 = vld [vmem:[%s8 + $0x168] sm:$0xff]
  %v13034 = vld [vmem:[%s8 + $0x170] sm:$0xff]
  %v13035 = vld [vmem:[%s8 + $0x178] sm:$0xff]
  %v13036 = vld [vmem:[%s8 + $0x180] sm:$0xff]
  %v13037 = vld [vmem:[%s8 + $0x188] sm:$0xff]
  %v13038 = vld [vmem:[%s8 + $0x190] sm:$0xff]
  %v13039 = vld [vmem:[%s8 + $0x198] sm:$0xff]
  %v13040 = vld [vmem:[%s8 + $0x1a0] sm:$0xff]
  %v13041 = vld [vmem:[%s8 + $0x1a8] sm:$0xff]
  %v13042 = vld [vmem:[%s8 + $0x1b0] sm:$0xff]
  %v13043 = vld [vmem:[%s8 + $0x1b8] sm:$0xff]
  %v13044 = vld [vmem:[%s8 + $0x1c0] sm:$0xff]
  %v13045 = vld [vmem:[%s8 + $0x1c8] sm:$0xff]
  %v13046 = vld [vmem:[%s8 + $0x1d0] sm:$0xff]
  %v13047 = vld [vmem:[%s8 + $0x1d8] sm:$0xff]
  %v13048 = vld [vmem:[%s8 + $0x1e0] sm:$0xff]
  %v13049 = vld [vmem:[%s8 + $0x1e8] sm:$0xff]
  %v13050 = vld [vmem:[%s8 + $0x1f0] sm:$0xff]
  %v13051 = vld [vmem:[%s8 + $0x1f8] sm:$0xff]
  %v13052 = vld [vmem:[%s8 + $0x200] sm:$0xff]
  %v13053 = vld [vmem:[%s8 + $0x208] sm:$0xff]
  %v13054 = vld [vmem:[%s8 + $0x210] sm:$0xff]
  %v13055 = vld [vmem:[%s8 + $0x218] sm:$0xff]
  %v13056 = vld [vmem:[%s8 + $0x220] sm:$0xff]
  %v13057 = vld [vmem:[%s8 + $0x228] sm:$0xff]
  %v13058 = vld [vmem:[%s8 + $0x230] sm:$0xff]
  %v13059 = vld [vmem:[%s8 + $0x238] sm:$0xff]
  %v13060 = vld [vmem:[%s8 + $0x240] sm:$0xff]
  %v13061 = vld [vmem:[%s8 + $0x248] sm:$0xff]
  %v13062 = vld [vmem:[%s8 + $0x250] sm:$0xff]
  %v13063 = vld [vmem:[%s8 + $0x258] sm:$0xff]
  %v13064 = vld [vmem:[%s8 + $0x260] sm:$0xff]
  %v13065 = vld [vmem:[%s8 + $0x268] sm:$0xff]
  %v13066 = vld [vmem:[%s8 + $0x270] sm:$0xff]
  %v13067 = vld [vmem:[%s8 + $0x278] sm:$0xff]
  %v13068 = vld [vmem:[%s8 + $0x280] sm:$0xff]
  %v13069 = vld [vmem:[%s8 + $0x288] sm:$0xff]
  %v13070 = vld [vmem:[%s8 + $0x290] sm:$0xff]
  %v13071 = vld [vmem:[%s8 + $0x298] sm:$0xff]
  %v13072 = vld [vmem:[%s8 + $0x2a0] sm:$0xff]
  %v13073 = vld [vmem:[%s8 + $0x2a8] sm:$0xff]
  %v13074 = vld [vmem:[%s8 + $0x2b0] sm:$0xff]
  %v13075 = vld [vmem:[%s8 + $0x2b8] sm:$0xff]
  %v13076 = vld [vmem:[%s8 + $0x2c0] sm:$0xff]
  %v13077 = vld [vmem:[%s8 + $0x2c8] sm:$0xff]
  %v13078 = vld [vmem:[%s8 + $0x2d0] sm:$0xff]
  %v13079 = vld [vmem:[%s8 + $0x2d8] sm:$0xff]
  %v13080 = vld [vmem:[%s8 + $0x2e0] sm:$0xff]
  %v13081 = vld [vmem:[%s8 + $0x2e8] sm:$0xff]
  %v13082 = vld [vmem:[%s8 + $0x2f0] sm:$0xff]
  %v13083 = vld [vmem:[%s8 + $0x2f8] sm:$0xff]
  %v13084 = vld [vmem:[%s8 + $0x300] sm:$0xff]
  %v13085 = vld [vmem:[%s8 + $0x308] sm:$0xff]
  %v13086 = vld [vmem:[%s8 + $0x310] sm:$0xff]
  %v13087 = vld [vmem:[%s8 + $0x318] sm:$0xff]
  %v13088 = vld [vmem:[%s8 + $0x320] sm:$0xff]
  %v13089 = vld [vmem:[%s8 + $0x328] sm:$0xff]
  %v13090 = vld [vmem:[%s8 + $0x330] sm:$0xff]
  %v13091 = vld [vmem:[%s8 + $0x338] sm:$0xff]
  %v13092 = vld [vmem:[%s8 + $0x340] sm:$0xff]
  %v13093 = vld [vmem:[%s8 + $0x348] sm:$0xff]
  %v13094 = vld [vmem:[%s8 + $0x350] sm:$0xff]
  %v13095 = vld [vmem:[%s8 + $0x358] sm:$0xff]
  %v13096 = vld [vmem:[%s8 + $0x360] sm:$0xff]
  %v13097 = vld [vmem:[%s8 + $0x368] sm:$0xff]
  %v13098 = vld [vmem:[%s8 + $0x370] sm:$0xff]
  %v13099 = vld [vmem:[%s8 + $0x378] sm:$0xff]
  %v13100 = vld [vmem:[%s8 + $0x380] sm:$0xff]
  %v13101 = vld [vmem:[%s8 + $0x388] sm:$0xff]
  %v13102 = vld [vmem:[%s8 + $0x390] sm:$0xff]
  %v13103 = vld [vmem:[%s8 + $0x398] sm:$0xff]
  %v13104 = vld [vmem:[%s8 + $0x3a0] sm:$0xff]
  %v13105 = vld [vmem:[%s8 + $0x3a8] sm:$0xff]
  %v13106 = vld [vmem:[%s8 + $0x3b0] sm:$0xff]
  %v13107 = vld [vmem:[%s8 + $0x3b8] sm:$0xff]
  %v13108 = vld [vmem:[%s8 + $0x3c0] sm:$0xff]
  %v13109 = vld [vmem:[%s8 + $0x3c8] sm:$0xff]
  %v13110 = vld [vmem:[%s8 + $0x3d0] sm:$0xff]
  %v13111 = vld [vmem:[%s8 + $0x3d8] sm:$0xff]
  %v13112 = vld [vmem:[%s8 + $0x3e0] sm:$0xff]
  %v13113 = vld [vmem:[%s8 + $0x3e8] sm:$0xff]
  %v13114 = vld [vmem:[%s8 + $0x3f0] sm:$0xff]
  %v13115 = vld [vmem:[%s8 + $0x3f8] sm:$0xff]
  %v13116 = vld [vmem:[%s8 + $0x400] sm:$0xff]
  %v13117 = vld [vmem:[%s8 + $0x408] sm:$0xff]
  %v13118 = vld [vmem:[%s8 + $0x410] sm:$0xff]
  %v13119 = vld [vmem:[%s8 + $0x418] sm:$0xff]
  %v13120 = vld [vmem:[%s8 + $0x420] sm:$0xff]
  %v13121 = vld [vmem:[%s8 + $0x428] sm:$0xff]
  %v13122 = vld [vmem:[%s8 + $0x430] sm:$0xff]
  %v13123 = vld [vmem:[%s8 + $0x438] sm:$0xff]
  %v13124 = vld [vmem:[%s8 + $0x440] sm:$0xff]
  %v13125 = vld [vmem:[%s8 + $0x448] sm:$0xff]
  %v13126 = vld [vmem:[%s8 + $0x450] sm:$0xff]
  %v13127 = vld [vmem:[%s8 + $0x458] sm:$0xff]
  %v13128 = vld [vmem:[%s8 + $0x460] sm:$0xff]
  %v13129 = vld [vmem:[%s8 + $0x468] sm:$0xff]
  %v13130 = vld [vmem:[%s8 + $0x470] sm:$0xff]
  %v13131 = vld [vmem:[%s8 + $0x478] sm:$0xff]
  %v13132 = vld [vmem:[%s8 + $0x480] sm:$0xff]
  %v13133 = vld [vmem:[%s8 + $0x488] sm:$0xff]
  %v13134 = vld [vmem:[%s8 + $0x490] sm:$0xff]
  %v13135 = vld [vmem:[%s8 + $0x498] sm:$0xff]
  %v13136 = vld [vmem:[%s8 + $0x4a0] sm:$0xff]
  %v13137 = vld [vmem:[%s8 + $0x4a8] sm:$0xff]
  %v13138 = vld [vmem:[%s8 + $0x4b0] sm:$0xff]
  %v13139 = vld [vmem:[%s8 + $0x4b8] sm:$0xff]
  %v13140 = vld [vmem:[%s8 + $0x4c0] sm:$0xff]
  %v13141 = vld [vmem:[%s8 + $0x4c8] sm:$0xff]
  %v13142 = vld [vmem:[%s8 + $0x4d0] sm:$0xff]
  %v13143 = vld [vmem:[%s8 + $0x4d8] sm:$0xff]
  %v13144 = vld [vmem:[%s8 + $0x4e0] sm:$0xff]
  %v13145 = vld [vmem:[%s8 + $0x4e8] sm:$0xff]
  %v13146 = vld [vmem:[%s8 + $0x4f0] sm:$0xff]
  %v13147 = vld [vmem:[%s8 + $0x4f8] sm:$0xff]
  %v13148 = vld [vmem:[%s8 + $0x500] sm:$0xff]
  %v13149 = vld [vmem:[%s8 + $0x508] sm:$0xff]
  %v13150 = vld [vmem:[%s8 + $0x510] sm:$0xff]
  %v13151 = vld [vmem:[%s8 + $0x518] sm:$0xff]
  %v13152 = vld [vmem:[%s8 + $0x520] sm:$0xff]
  %v13153 = vld [vmem:[%s8 + $0x528] sm:$0xff]
  %v13154 = vld [vmem:[%s8 + $0x530] sm:$0xff]
  %v13155 = vld [vmem:[%s8 + $0x538] sm:$0xff]
  %v13156 = vld [vmem:[%s8 + $0x540] sm:$0xff]
  %v13157 = vld [vmem:[%s8 + $0x548] sm:$0xff]
  %v13158 = vld [vmem:[%s8 + $0x550] sm:$0xff]
  %v13159 = vld [vmem:[%s8 + $0x558] sm:$0xff]
  %v13160 = vld [vmem:[%s8 + $0x560] sm:$0xff]
  %v13161 = vld [vmem:[%s8 + $0x568] sm:$0xff]
  %v13162 = vld [vmem:[%s8 + $0x570] sm:$0xff]
  %v13163 = vld [vmem:[%s8 + $0x578] sm:$0xff]
  %13165 = vset.pattern.permute.xlu0 0
  %13166 = vperm.xlu0 %13165, %v12988
  %v13167 = vpop.permute.xlu0 %13166
  %13170 = vset.pattern.permute.xlu0 0
  %13171 = vperm.xlu0 %13170, %v12989
  %v13172 = vpop.permute.xlu0 %13171
  %13175 = vset.pattern.permute.xlu0 0
  %13176 = vperm.xlu0 %13175, %v12990
  %v13177 = vpop.permute.xlu0 %13176
  %13180 = vset.pattern.permute.xlu0 0
  %13181 = vperm.xlu0 %13180, %v12991
  %v13182 = vpop.permute.xlu0 %13181
  %13185 = vset.pattern.permute.xlu0 0
  %13186 = vperm.xlu0 %13185, %v12992
  %v13187 = vpop.permute.xlu0 %13186
  %13190 = vset.pattern.permute.xlu0 0
  %13191 = vperm.xlu0 %13190, %v12993
  %v13192 = vpop.permute.xlu0 %13191
  %13195 = vset.pattern.permute.xlu0 0
  %13196 = vperm.xlu0 %13195, %v12994
  %v13197 = vpop.permute.xlu0 %13196
  %13200 = vset.pattern.permute.xlu0 0
  %13201 = vperm.xlu0 %13200, %v12995
  %v13202 = vpop.permute.xlu0 %13201
  %13205 = vset.pattern.permute.xlu0 0
  %13206 = vperm.xlu0 %13205, %v12996
  %v13207 = vpop.permute.xlu0 %13206
  %13210 = vset.pattern.permute.xlu0 0
  %13211 = vperm.xlu0 %13210, %v12997
  %v13212 = vpop.permute.xlu0 %13211
  %13215 = vset.pattern.permute.xlu0 0
  %13216 = vperm.xlu0 %13215, %v12998
  %v13217 = vpop.permute.xlu0 %13216
  %13220 = vset.pattern.permute.xlu0 0
  %13221 = vperm.xlu0 %13220, %v12999
  %v13222 = vpop.permute.xlu0 %13221
  %13225 = vset.pattern.permute.xlu0 0
  %13226 = vperm.xlu0 %13225, %v13000
  %v13227 = vpop.permute.xlu0 %13226
  %13230 = vset.pattern.permute.xlu0 0
  %13231 = vperm.xlu0 %13230, %v13001
  %v13232 = vpop.permute.xlu0 %13231
  %13235 = vset.pattern.permute.xlu0 0
  %13236 = vperm.xlu0 %13235, %v13002
  %v13237 = vpop.permute.xlu0 %13236
  %13240 = vset.pattern.permute.xlu0 0
  %13241 = vperm.xlu0 %13240, %v13003
  %v13242 = vpop.permute.xlu0 %13241
  %13245 = vset.pattern.permute.xlu0 0
  %13246 = vperm.xlu0 %13245, %v13004
  %v13247 = vpop.permute.xlu0 %13246
  %13250 = vset.pattern.permute.xlu0 0
  %13251 = vperm.xlu0 %13250, %v13005
  %v13252 = vpop.permute.xlu0 %13251
  %13255 = vset.pattern.permute.xlu0 0
  %13256 = vperm.xlu0 %13255, %v13006
  %v13257 = vpop.permute.xlu0 %13256
  %13260 = vset.pattern.permute.xlu0 0
  %13261 = vperm.xlu0 %13260, %v13007
  %v13262 = vpop.permute.xlu0 %13261
  %13265 = vset.pattern.permute.xlu0 0
  %13266 = vperm.xlu0 %13265, %v13008
  %v13267 = vpop.permute.xlu0 %13266
  %13270 = vset.pattern.permute.xlu0 0
  %13271 = vperm.xlu0 %13270, %v13009
  %v13272 = vpop.permute.xlu0 %13271
  %13275 = vset.pattern.permute.xlu0 0
  %13276 = vperm.xlu0 %13275, %v13010
  %v13277 = vpop.permute.xlu0 %13276
  %13280 = vset.pattern.permute.xlu0 0
  %13281 = vperm.xlu0 %13280, %v13011
  %v13282 = vpop.permute.xlu0 %13281
  %13285 = vset.pattern.permute.xlu0 0
  %13286 = vperm.xlu0 %13285, %v13012
  %v13287 = vpop.permute.xlu0 %13286
  %13290 = vset.pattern.permute.xlu0 0
  %13291 = vperm.xlu0 %13290, %v13013
  %v13292 = vpop.permute.xlu0 %13291
  %13295 = vset.pattern.permute.xlu0 0
  %13296 = vperm.xlu0 %13295, %v13014
  %v13297 = vpop.permute.xlu0 %13296
  %13300 = vset.pattern.permute.xlu0 0
  %13301 = vperm.xlu0 %13300, %v13015
  %v13302 = vpop.permute.xlu0 %13301
  %13305 = vset.pattern.permute.xlu0 0
  %13306 = vperm.xlu0 %13305, %v13016
  %v13307 = vpop.permute.xlu0 %13306
  %13310 = vset.pattern.permute.xlu0 0
  %13311 = vperm.xlu0 %13310, %v13017
  %v13312 = vpop.permute.xlu0 %13311
  %13315 = vset.pattern.permute.xlu0 0
  %13316 = vperm.xlu0 %13315, %v13018
  %v13317 = vpop.permute.xlu0 %13316
  %13320 = vset.pattern.permute.xlu0 0
  %13321 = vperm.xlu0 %13320, %v13019
  %v13322 = vpop.permute.xlu0 %13321
  %13325 = vset.pattern.permute.xlu0 0
  %13326 = vperm.xlu0 %13325, %v13020
  %v13327 = vpop.permute.xlu0 %13326
  %13330 = vset.pattern.permute.xlu0 0
  %13331 = vperm.xlu0 %13330, %v13021
  %v13332 = vpop.permute.xlu0 %13331
  %13335 = vset.pattern.permute.xlu0 0
  %13336 = vperm.xlu0 %13335, %v13022
  %v13337 = vpop.permute.xlu0 %13336
  %13340 = vset.pattern.permute.xlu0 0
  %13341 = vperm.xlu0 %13340, %v13023
  %v13342 = vpop.permute.xlu0 %13341
  %13345 = vset.pattern.permute.xlu0 0
  %13346 = vperm.xlu0 %13345, %v13024
  %v13347 = vpop.permute.xlu0 %13346
  %13350 = vset.pattern.permute.xlu0 0
  %13351 = vperm.xlu0 %13350, %v13025
  %v13352 = vpop.permute.xlu0 %13351
  %13355 = vset.pattern.permute.xlu0 0
  %13356 = vperm.xlu0 %13355, %v13026
  %v13357 = vpop.permute.xlu0 %13356
  %13360 = vset.pattern.permute.xlu0 0
  %13361 = vperm.xlu0 %13360, %v13027
  %v13362 = vpop.permute.xlu0 %13361
  %13365 = vset.pattern.permute.xlu0 0
  %13366 = vperm.xlu0 %13365, %v13028
  %v13367 = vpop.permute.xlu0 %13366
  %13370 = vset.pattern.permute.xlu0 0
  %13371 = vperm.xlu0 %13370, %v13029
  %v13372 = vpop.permute.xlu0 %13371
  %13375 = vset.pattern.permute.xlu0 0
  %13376 = vperm.xlu0 %13375, %v13030
  %v13377 = vpop.permute.xlu0 %13376
  %13380 = vset.pattern.permute.xlu0 0
  %13381 = vperm.xlu0 %13380, %v13031
  %v13382 = vpop.permute.xlu0 %13381
  %13385 = vset.pattern.permute.xlu0 0
  %13386 = vperm.xlu0 %13385, %v13032
  %v13387 = vpop.permute.xlu0 %13386
  %13390 = vset.pattern.permute.xlu0 0
  %13391 = vperm.xlu0 %13390, %v13033
  %v13392 = vpop.permute.xlu0 %13391
  %13395 = vset.pattern.permute.xlu0 0
  %13396 = vperm.xlu0 %13395, %v13034
  %v13397 = vpop.permute.xlu0 %13396
  %13400 = vset.pattern.permute.xlu0 0
  %13401 = vperm.xlu0 %13400, %v13035
  %v13402 = vpop.permute.xlu0 %13401
  %13405 = vset.pattern.permute.xlu0 0
  %13406 = vperm.xlu0 %13405, %v13036
  %v13407 = vpop.permute.xlu0 %13406
  %13410 = vset.pattern.permute.xlu0 0
  %13411 = vperm.xlu0 %13410, %v13037
  %v13412 = vpop.permute.xlu0 %13411
  %13415 = vset.pattern.permute.xlu0 0
  %13416 = vperm.xlu0 %13415, %v13038
  %v13417 = vpop.permute.xlu0 %13416
  %13420 = vset.pattern.permute.xlu0 0
  %13421 = vperm.xlu0 %13420, %v13039
  %v13422 = vpop.permute.xlu0 %13421
  %13425 = vset.pattern.permute.xlu0 0
  %13426 = vperm.xlu0 %13425, %v13040
  %v13427 = vpop.permute.xlu0 %13426
  %13430 = vset.pattern.permute.xlu0 0
  %13431 = vperm.xlu0 %13430, %v13041
  %v13432 = vpop.permute.xlu0 %13431
  %13435 = vset.pattern.permute.xlu0 0
  %13436 = vperm.xlu0 %13435, %v13042
  %v13437 = vpop.permute.xlu0 %13436
  %13440 = vset.pattern.permute.xlu0 0
  %13441 = vperm.xlu0 %13440, %v13043
  %v13442 = vpop.permute.xlu0 %13441
  %13445 = vset.pattern.permute.xlu0 0
  %13446 = vperm.xlu0 %13445, %v13044
  %v13447 = vpop.permute.xlu0 %13446
  %13450 = vset.pattern.permute.xlu0 0
  %13451 = vperm.xlu0 %13450, %v13045
  %v13452 = vpop.permute.xlu0 %13451
  %13455 = vset.pattern.permute.xlu0 0
  %13456 = vperm.xlu0 %13455, %v13046
  %v13457 = vpop.permute.xlu0 %13456
  %13460 = vset.pattern.permute.xlu0 0
  %13461 = vperm.xlu0 %13460, %v13047
  %v13462 = vpop.permute.xlu0 %13461
  %13465 = vset.pattern.permute.xlu0 0
  %13466 = vperm.xlu0 %13465, %v13048
  %v13467 = vpop.permute.xlu0 %13466
  %13470 = vset.pattern.permute.xlu0 0
  %13471 = vperm.xlu0 %13470, %v13049
  %v13472 = vpop.permute.xlu0 %13471
  %13475 = vset.pattern.permute.xlu0 0
  %13476 = vperm.xlu0 %13475, %v13050
  %v13477 = vpop.permute.xlu0 %13476
  %13480 = vset.pattern.permute.xlu0 0
  %13481 = vperm.xlu0 %13480, %v13051
  %v13482 = vpop.permute.xlu0 %13481
  %13485 = vset.pattern.permute.xlu0 0
  %13486 = vperm.xlu0 %13485, %v13052
  %v13487 = vpop.permute.xlu0 %13486
  %13490 = vset.pattern.permute.xlu0 0
  %13491 = vperm.xlu0 %13490, %v13053
  %v13492 = vpop.permute.xlu0 %13491
  %13495 = vset.pattern.permute.xlu0 0
  %13496 = vperm.xlu0 %13495, %v13054
  %v13497 = vpop.permute.xlu0 %13496
  %13500 = vset.pattern.permute.xlu0 0
  %13501 = vperm.xlu0 %13500, %v13055
  %v13502 = vpop.permute.xlu0 %13501
  %13505 = vset.pattern.permute.xlu0 0
  %13506 = vperm.xlu0 %13505, %v13056
  %v13507 = vpop.permute.xlu0 %13506
  %13510 = vset.pattern.permute.xlu0 0
  %13511 = vperm.xlu0 %13510, %v13057
  %v13512 = vpop.permute.xlu0 %13511
  %13515 = vset.pattern.permute.xlu0 0
  %13516 = vperm.xlu0 %13515, %v13058
  %v13517 = vpop.permute.xlu0 %13516
  %13520 = vset.pattern.permute.xlu0 0
  %13521 = vperm.xlu0 %13520, %v13059
  %v13522 = vpop.permute.xlu0 %13521
  %13525 = vset.pattern.permute.xlu0 0
  %13526 = vperm.xlu0 %13525, %v13060
  %v13527 = vpop.permute.xlu0 %13526
  %13530 = vset.pattern.permute.xlu0 0
  %13531 = vperm.xlu0 %13530, %v13061
  %v13532 = vpop.permute.xlu0 %13531
  %13535 = vset.pattern.permute.xlu0 0
  %13536 = vperm.xlu0 %13535, %v13062
  %v13537 = vpop.permute.xlu0 %13536
  %13540 = vset.pattern.permute.xlu0 0
  %13541 = vperm.xlu0 %13540, %v13063
  %v13542 = vpop.permute.xlu0 %13541
  %13545 = vset.pattern.permute.xlu0 0
  %13546 = vperm.xlu0 %13545, %v13064
  %v13547 = vpop.permute.xlu0 %13546
  %13550 = vset.pattern.permute.xlu0 0
  %13551 = vperm.xlu0 %13550, %v13065
  %v13552 = vpop.permute.xlu0 %13551
  %13555 = vset.pattern.permute.xlu0 0
  %13556 = vperm.xlu0 %13555, %v13066
  %v13557 = vpop.permute.xlu0 %13556
  %13560 = vset.pattern.permute.xlu0 0
  %13561 = vperm.xlu0 %13560, %v13067
  %v13562 = vpop.permute.xlu0 %13561
  %13565 = vset.pattern.permute.xlu0 0
  %13566 = vperm.xlu0 %13565, %v13068
  %v13567 = vpop.permute.xlu0 %13566
  %13570 = vset.pattern.permute.xlu0 0
  %13571 = vperm.xlu0 %13570, %v13069
  %v13572 = vpop.permute.xlu0 %13571
  %13575 = vset.pattern.permute.xlu0 0
  %13576 = vperm.xlu0 %13575, %v13070
  %v13577 = vpop.permute.xlu0 %13576
  %13580 = vset.pattern.permute.xlu0 0
  %13581 = vperm.xlu0 %13580, %v13071
  %v13582 = vpop.permute.xlu0 %13581
  %13585 = vset.pattern.permute.xlu0 0
  %13586 = vperm.xlu0 %13585, %v13072
  %v13587 = vpop.permute.xlu0 %13586
  %13590 = vset.pattern.permute.xlu0 0
  %13591 = vperm.xlu0 %13590, %v13073
  %v13592 = vpop.permute.xlu0 %13591
  %13595 = vset.pattern.permute.xlu0 0
  %13596 = vperm.xlu0 %13595, %v13074
  %v13597 = vpop.permute.xlu0 %13596
  %13600 = vset.pattern.permute.xlu0 0
  %13601 = vperm.xlu0 %13600, %v13075
  %v13602 = vpop.permute.xlu0 %13601
  %13605 = vset.pattern.permute.xlu0 0
  %13606 = vperm.xlu0 %13605, %v13076
  %v13607 = vpop.permute.xlu0 %13606
  %13610 = vset.pattern.permute.xlu0 0
  %13611 = vperm.xlu0 %13610, %v13077
  %v13612 = vpop.permute.xlu0 %13611
  %13615 = vset.pattern.permute.xlu0 0
  %13616 = vperm.xlu0 %13615, %v13078
  %v13617 = vpop.permute.xlu0 %13616
  %13620 = vset.pattern.permute.xlu0 0
  %13621 = vperm.xlu0 %13620, %v13079
  %v13622 = vpop.permute.xlu0 %13621
  %13625 = vset.pattern.permute.xlu0 0
  %13626 = vperm.xlu0 %13625, %v13080
  %v13627 = vpop.permute.xlu0 %13626
  %13630 = vset.pattern.permute.xlu0 0
  %13631 = vperm.xlu0 %13630, %v13081
  %v13632 = vpop.permute.xlu0 %13631
  %13635 = vset.pattern.permute.xlu0 0
  %13636 = vperm.xlu0 %13635, %v13082
  %v13637 = vpop.permute.xlu0 %13636
  %13640 = vset.pattern.permute.xlu0 0
  %13641 = vperm.xlu0 %13640, %v13083
  %v13642 = vpop.permute.xlu0 %13641
  %13645 = vset.pattern.permute.xlu0 0
  %13646 = vperm.xlu0 %13645, %v13084
  %v13647 = vpop.permute.xlu0 %13646
  %13650 = vset.pattern.permute.xlu0 0
  %13651 = vperm.xlu0 %13650, %v13085
  %v13652 = vpop.permute.xlu0 %13651
  %13655 = vset.pattern.permute.xlu0 0
  %13656 = vperm.xlu0 %13655, %v13086
  %v13657 = vpop.permute.xlu0 %13656
  %13660 = vset.pattern.permute.xlu0 0
  %13661 = vperm.xlu0 %13660, %v13087
  %v13662 = vpop.permute.xlu0 %13661
  %13665 = vset.pattern.permute.xlu0 0
  %13666 = vperm.xlu0 %13665, %v13088
  %v13667 = vpop.permute.xlu0 %13666
  %13670 = vset.pattern.permute.xlu0 0
  %13671 = vperm.xlu0 %13670, %v13089
  %v13672 = vpop.permute.xlu0 %13671
  %13675 = vset.pattern.permute.xlu0 0
  %13676 = vperm.xlu0 %13675, %v13090
  %v13677 = vpop.permute.xlu0 %13676
  %13680 = vset.pattern.permute.xlu0 0
  %13681 = vperm.xlu0 %13680, %v13091
  %v13682 = vpop.permute.xlu0 %13681
  %13685 = vset.pattern.permute.xlu0 0
  %13686 = vperm.xlu0 %13685, %v13092
  %v13687 = vpop.permute.xlu0 %13686
  %13690 = vset.pattern.permute.xlu0 0
  %13691 = vperm.xlu0 %13690, %v13093
  %v13692 = vpop.permute.xlu0 %13691
  %13695 = vset.pattern.permute.xlu0 0
  %13696 = vperm.xlu0 %13695, %v13094
  %v13697 = vpop.permute.xlu0 %13696
  %13700 = vset.pattern.permute.xlu0 0
  %13701 = vperm.xlu0 %13700, %v13095
  %v13702 = vpop.permute.xlu0 %13701
  %13705 = vset.pattern.permute.xlu0 0
  %13706 = vperm.xlu0 %13705, %v13096
  %v13707 = vpop.permute.xlu0 %13706
  %13710 = vset.pattern.permute.xlu0 0
  %13711 = vperm.xlu0 %13710, %v13097
  %v13712 = vpop.permute.xlu0 %13711
  %13715 = vset.pattern.permute.xlu0 0
  %13716 = vperm.xlu0 %13715, %v13098
  %v13717 = vpop.permute.xlu0 %13716
  %13720 = vset.pattern.permute.xlu0 0
  %13721 = vperm.xlu0 %13720, %v13099
  %v13722 = vpop.permute.xlu0 %13721
  %13725 = vset.pattern.permute.xlu0 0
  %13726 = vperm.xlu0 %13725, %v13100
  %v13727 = vpop.permute.xlu0 %13726
  %13730 = vset.pattern.permute.xlu0 0
  %13731 = vperm.xlu0 %13730, %v13101
  %v13732 = vpop.permute.xlu0 %13731
  %13735 = vset.pattern.permute.xlu0 0
  %13736 = vperm.xlu0 %13735, %v13102
  %v13737 = vpop.permute.xlu0 %13736
  %13740 = vset.pattern.permute.xlu0 0
  %13741 = vperm.xlu0 %13740, %v13103
  %v13742 = vpop.permute.xlu0 %13741
  %13745 = vset.pattern.permute.xlu0 0
  %13746 = vperm.xlu0 %13745, %v13104
  %v13747 = vpop.permute.xlu0 %13746
  %13750 = vset.pattern.permute.xlu0 0
  %13751 = vperm.xlu0 %13750, %v13105
  %v13752 = vpop.permute.xlu0 %13751
  %13755 = vset.pattern.permute.xlu0 0
  %13756 = vperm.xlu0 %13755, %v13106
  %v13757 = vpop.permute.xlu0 %13756
  %13760 = vset.pattern.permute.xlu0 0
  %13761 = vperm.xlu0 %13760, %v13107
  %v13762 = vpop.permute.xlu0 %13761
  %13765 = vset.pattern.permute.xlu0 0
  %13766 = vperm.xlu0 %13765, %v13108
  %v13767 = vpop.permute.xlu0 %13766
  %13770 = vset.pattern.permute.xlu0 0
  %13771 = vperm.xlu0 %13770, %v13109
  %v13772 = vpop.permute.xlu0 %13771
  %13775 = vset.pattern.permute.xlu0 0
  %13776 = vperm.xlu0 %13775, %v13110
  %v13777 = vpop.permute.xlu0 %13776
  %13780 = vset.pattern.permute.xlu0 0
  %13781 = vperm.xlu0 %13780, %v13111
  %v13782 = vpop.permute.xlu0 %13781
  %13785 = vset.pattern.permute.xlu0 0
  %13786 = vperm.xlu0 %13785, %v13112
  %v13787 = vpop.permute.xlu0 %13786
  %13790 = vset.pattern.permute.xlu0 0
  %13791 = vperm.xlu0 %13790, %v13113
  %v13792 = vpop.permute.xlu0 %13791
  %13795 = vset.pattern.permute.xlu0 0
  %13796 = vperm.xlu0 %13795, %v13114
  %v13797 = vpop.permute.xlu0 %13796
  %13800 = vset.pattern.permute.xlu0 0
  %13801 = vperm.xlu0 %13800, %v13115
  %v13802 = vpop.permute.xlu0 %13801
  %13805 = vset.pattern.permute.xlu0 0
  %13806 = vperm.xlu0 %13805, %v13116
  %v13807 = vpop.permute.xlu0 %13806
  %13810 = vset.pattern.permute.xlu0 0
  %13811 = vperm.xlu0 %13810, %v13117
  %v13812 = vpop.permute.xlu0 %13811
  %13815 = vset.pattern.permute.xlu0 0
  %13816 = vperm.xlu0 %13815, %v13118
  %v13817 = vpop.permute.xlu0 %13816
  %13820 = vset.pattern.permute.xlu0 0
  %13821 = vperm.xlu0 %13820, %v13119
  %v13822 = vpop.permute.xlu0 %13821
  %13825 = vset.pattern.permute.xlu0 0
  %13826 = vperm.xlu0 %13825, %v13120
  %v13827 = vpop.permute.xlu0 %13826
  %13830 = vset.pattern.permute.xlu0 0
  %13831 = vperm.xlu0 %13830, %v13121
  %v13832 = vpop.permute.xlu0 %13831
  %13835 = vset.pattern.permute.xlu0 0
  %13836 = vperm.xlu0 %13835, %v13122
  %v13837 = vpop.permute.xlu0 %13836
  %13840 = vset.pattern.permute.xlu0 0
  %13841 = vperm.xlu0 %13840, %v13123
  %v13842 = vpop.permute.xlu0 %13841
  %13845 = vset.pattern.permute.xlu0 0
  %13846 = vperm.xlu0 %13845, %v13124
  %v13847 = vpop.permute.xlu0 %13846
  %13850 = vset.pattern.permute.xlu0 0
  %13851 = vperm.xlu0 %13850, %v13125
  %v13852 = vpop.permute.xlu0 %13851
  %13855 = vset.pattern.permute.xlu0 0
  %13856 = vperm.xlu0 %13855, %v13126
  %v13857 = vpop.permute.xlu0 %13856
  %13860 = vset.pattern.permute.xlu0 0
  %13861 = vperm.xlu0 %13860, %v13127
  %v13862 = vpop.permute.xlu0 %13861
  %13865 = vset.pattern.permute.xlu0 0
  %13866 = vperm.xlu0 %13865, %v13128
  %v13867 = vpop.permute.xlu0 %13866
  %13870 = vset.pattern.permute.xlu0 0
  %13871 = vperm.xlu0 %13870, %v13129
  %v13872 = vpop.permute.xlu0 %13871
  %13875 = vset.pattern.permute.xlu0 0
  %13876 = vperm.xlu0 %13875, %v13130
  %v13877 = vpop.permute.xlu0 %13876
  %13880 = vset.pattern.permute.xlu0 0
  %13881 = vperm.xlu0 %13880, %v13131
  %v13882 = vpop.permute.xlu0 %13881
  %13885 = vset.pattern.permute.xlu0 0
  %13886 = vperm.xlu0 %13885, %v13132
  %v13887 = vpop.permute.xlu0 %13886
  %13890 = vset.pattern.permute.xlu0 0
  %13891 = vperm.xlu0 %13890, %v13133
  %v13892 = vpop.permute.xlu0 %13891
  %13895 = vset.pattern.permute.xlu0 0
  %13896 = vperm.xlu0 %13895, %v13134
  %v13897 = vpop.permute.xlu0 %13896
  %13900 = vset.pattern.permute.xlu0 0
  %13901 = vperm.xlu0 %13900, %v13135
  %v13902 = vpop.permute.xlu0 %13901
  %13905 = vset.pattern.permute.xlu0 0
  %13906 = vperm.xlu0 %13905, %v13136
  %v13907 = vpop.permute.xlu0 %13906
  %13910 = vset.pattern.permute.xlu0 0
  %13911 = vperm.xlu0 %13910, %v13137
  %v13912 = vpop.permute.xlu0 %13911
  %13915 = vset.pattern.permute.xlu0 0
  %13916 = vperm.xlu0 %13915, %v13138
  %v13917 = vpop.permute.xlu0 %13916
  %13920 = vset.pattern.permute.xlu0 0
  %13921 = vperm.xlu0 %13920, %v13139
  %v13922 = vpop.permute.xlu0 %13921
  %13925 = vset.pattern.permute.xlu0 0
  %13926 = vperm.xlu0 %13925, %v13140
  %v13927 = vpop.permute.xlu0 %13926
  %13930 = vset.pattern.permute.xlu0 0
  %13931 = vperm.xlu0 %13930, %v13141
  %v13932 = vpop.permute.xlu0 %13931
  %13935 = vset.pattern.permute.xlu0 0
  %13936 = vperm.xlu0 %13935, %v13142
  %v13937 = vpop.permute.xlu0 %13936
  %13940 = vset.pattern.permute.xlu0 0
  %13941 = vperm.xlu0 %13940, %v13143
  %v13942 = vpop.permute.xlu0 %13941
  %13945 = vset.pattern.permute.xlu0 0
  %13946 = vperm.xlu0 %13945, %v13144
  %v13947 = vpop.permute.xlu0 %13946
  %13950 = vset.pattern.permute.xlu0 0
  %13951 = vperm.xlu0 %13950, %v13145
  %v13952 = vpop.permute.xlu0 %13951
  %13955 = vset.pattern.permute.xlu0 0
  %13956 = vperm.xlu0 %13955, %v13146
  %v13957 = vpop.permute.xlu0 %13956
  %13960 = vset.pattern.permute.xlu0 0
  %13961 = vperm.xlu0 %13960, %v13147
  %v13962 = vpop.permute.xlu0 %13961
  %13965 = vset.pattern.permute.xlu0 0
  %13966 = vperm.xlu0 %13965, %v13148
  %v13967 = vpop.permute.xlu0 %13966
  %13970 = vset.pattern.permute.xlu0 0
  %13971 = vperm.xlu0 %13970, %v13149
  %v13972 = vpop.permute.xlu0 %13971
  %13975 = vset.pattern.permute.xlu0 0
  %13976 = vperm.xlu0 %13975, %v13150
  %v13977 = vpop.permute.xlu0 %13976
  %13980 = vset.pattern.permute.xlu0 0
  %13981 = vperm.xlu0 %13980, %v13151
  %v13982 = vpop.permute.xlu0 %13981
  %13985 = vset.pattern.permute.xlu0 0
  %13986 = vperm.xlu0 %13985, %v13152
  %v13987 = vpop.permute.xlu0 %13986
  %13990 = vset.pattern.permute.xlu0 0
  %13991 = vperm.xlu0 %13990, %v13153
  %v13992 = vpop.permute.xlu0 %13991
  %13995 = vset.pattern.permute.xlu0 0
  %13996 = vperm.xlu0 %13995, %v13154
  %v13997 = vpop.permute.xlu0 %13996
  %14000 = vset.pattern.permute.xlu0 0
  %14001 = vperm.xlu0 %14000, %v13155
  %v14002 = vpop.permute.xlu0 %14001
  %14005 = vset.pattern.permute.xlu0 0
  %14006 = vperm.xlu0 %14005, %v13156
  %v14007 = vpop.permute.xlu0 %14006
  %14010 = vset.pattern.permute.xlu0 0
  %14011 = vperm.xlu0 %14010, %v13157
  %v14012 = vpop.permute.xlu0 %14011
  %14015 = vset.pattern.permute.xlu0 0
  %14016 = vperm.xlu0 %14015, %v13158
  %v14017 = vpop.permute.xlu0 %14016
  %14020 = vset.pattern.permute.xlu0 0
  %14021 = vperm.xlu0 %14020, %v13159
  %v14022 = vpop.permute.xlu0 %14021
  %14025 = vset.pattern.permute.xlu0 0
  %14026 = vperm.xlu0 %14025, %v13160
  %v14027 = vpop.permute.xlu0 %14026
  %14030 = vset.pattern.permute.xlu0 0
  %14031 = vperm.xlu0 %14030, %v13161
  %v14032 = vpop.permute.xlu0 %14031
  %14035 = vset.pattern.permute.xlu0 0
  %14036 = vperm.xlu0 %14035, %v13162
  %v14037 = vpop.permute.xlu0 %14036
  %14040 = vset.pattern.permute.xlu0 0
  %14041 = vperm.xlu0 %14040, %v13163
  %v14042 = vpop.permute.xlu0 %14041
  %v14044 = vadd.f32 %v12812, %v13167
  %v14045 = vadd.f32 %v12813, %v13172
  %v14046 = vadd.f32 %v12814, %v13177
  %v14047 = vadd.f32 %v12815, %v13182
  %v14048 = vadd.f32 %v12816, %v13187
  %v14049 = vadd.f32 %v12817, %v13192
  %v14050 = vadd.f32 %v12818, %v13197
  %v14051 = vadd.f32 %v12819, %v13202
  %v14052 = vadd.f32 %v12820, %v13207
  %v14053 = vadd.f32 %v12821, %v13212
  %v14054 = vadd.f32 %v12822, %v13217
  %v14055 = vadd.f32 %v12823, %v13222
  %v14056 = vadd.f32 %v12824, %v13227
  %v14057 = vadd.f32 %v12825, %v13232
  %v14058 = vadd.f32 %v12826, %v13237
  %v14059 = vadd.f32 %v12827, %v13242
  %v14060 = vadd.f32 %v12828, %v13247
  %v14061 = vadd.f32 %v12829, %v13252
  %v14062 = vadd.f32 %v12830, %v13257
  %v14063 = vadd.f32 %v12831, %v13262
  %v14064 = vadd.f32 %v12832, %v13267
  %v14065 = vadd.f32 %v12833, %v13272
  %v14066 = vadd.f32 %v12834, %v13277
  %v14067 = vadd.f32 %v12835, %v13282
  %v14068 = vadd.f32 %v12836, %v13287
  %v14069 = vadd.f32 %v12837, %v13292
  %v14070 = vadd.f32 %v12838, %v13297
  %v14071 = vadd.f32 %v12839, %v13302
  %v14072 = vadd.f32 %v12840, %v13307
  %v14073 = vadd.f32 %v12841, %v13312
  %v14074 = vadd.f32 %v12842, %v13317
  %v14075 = vadd.f32 %v12843, %v13322
  %v14076 = vadd.f32 %v12844, %v13327
  %v14077 = vadd.f32 %v12845, %v13332
  %v14078 = vadd.f32 %v12846, %v13337
  %v14079 = vadd.f32 %v12847, %v13342
  %v14080 = vadd.f32 %v12848, %v13347
  %v14081 = vadd.f32 %v12849, %v13352
  %v14082 = vadd.f32 %v12850, %v13357
  %v14083 = vadd.f32 %v12851, %v13362
  %v14084 = vadd.f32 %v12852, %v13367
  %v14085 = vadd.f32 %v12853, %v13372
  %v14086 = vadd.f32 %v12854, %v13377
  %v14087 = vadd.f32 %v12855, %v13382
  %v14088 = vadd.f32 %v12856, %v13387
  %v14089 = vadd.f32 %v12857, %v13392
  %v14090 = vadd.f32 %v12858, %v13397
  %v14091 = vadd.f32 %v12859, %v13402
  %v14092 = vadd.f32 %v12860, %v13407
  %v14093 = vadd.f32 %v12861, %v13412
  %v14094 = vadd.f32 %v12862, %v13417
  %v14095 = vadd.f32 %v12863, %v13422
  %v14096 = vadd.f32 %v12864, %v13427
  %v14097 = vadd.f32 %v12865, %v13432
  %v14098 = vadd.f32 %v12866, %v13437
  %v14099 = vadd.f32 %v12867, %v13442
  %v14100 = vadd.f32 %v12868, %v13447
  %v14101 = vadd.f32 %v12869, %v13452
  %v14102 = vadd.f32 %v12870, %v13457
  %v14103 = vadd.f32 %v12871, %v13462
  %v14104 = vadd.f32 %v12872, %v13467
  %v14105 = vadd.f32 %v12873, %v13472
  %v14106 = vadd.f32 %v12874, %v13477
  %v14107 = vadd.f32 %v12875, %v13482
  %v14108 = vadd.f32 %v12876, %v13487
  %v14109 = vadd.f32 %v12877, %v13492
  %v14110 = vadd.f32 %v12878, %v13497
  %v14111 = vadd.f32 %v12879, %v13502
  %v14112 = vadd.f32 %v12880, %v13507
  %v14113 = vadd.f32 %v12881, %v13512
  %v14114 = vadd.f32 %v12882, %v13517
  %v14115 = vadd.f32 %v12883, %v13522
  %v14116 = vadd.f32 %v12884, %v13527
  %v14117 = vadd.f32 %v12885, %v13532
  %v14118 = vadd.f32 %v12886, %v13537
  %v14119 = vadd.f32 %v12887, %v13542
  %v14120 = vadd.f32 %v12888, %v13547
  %v14121 = vadd.f32 %v12889, %v13552
  %v14122 = vadd.f32 %v12890, %v13557
  %v14123 = vadd.f32 %v12891, %v13562
  %v14124 = vadd.f32 %v12892, %v13567
  %v14125 = vadd.f32 %v12893, %v13572
  %v14126 = vadd.f32 %v12894, %v13577
  %v14127 = vadd.f32 %v12895, %v13582
  %v14128 = vadd.f32 %v12896, %v13587
  %v14129 = vadd.f32 %v12897, %v13592
  %v14130 = vadd.f32 %v12898, %v13597
  %v14131 = vadd.f32 %v12899, %v13602
  %v14132 = vadd.f32 %v12900, %v13607
  %v14133 = vadd.f32 %v12901, %v13612
  %v14134 = vadd.f32 %v12902, %v13617
  %v14135 = vadd.f32 %v12903, %v13622
  %v14136 = vadd.f32 %v12904, %v13627
  %v14137 = vadd.f32 %v12905, %v13632
  %v14138 = vadd.f32 %v12906, %v13637
  %v14139 = vadd.f32 %v12907, %v13642
  %v14140 = vadd.f32 %v12908, %v13647
  %v14141 = vadd.f32 %v12909, %v13652
  %v14142 = vadd.f32 %v12910, %v13657
  %v14143 = vadd.f32 %v12911, %v13662
  %v14144 = vadd.f32 %v12912, %v13667
  %v14145 = vadd.f32 %v12913, %v13672
  %v14146 = vadd.f32 %v12914, %v13677
  %v14147 = vadd.f32 %v12915, %v13682
  %v14148 = vadd.f32 %v12916, %v13687
  %v14149 = vadd.f32 %v12917, %v13692
  %v14150 = vadd.f32 %v12918, %v13697
  %v14151 = vadd.f32 %v12919, %v13702
  %v14152 = vadd.f32 %v12920, %v13707
  %v14153 = vadd.f32 %v12921, %v13712
  %v14154 = vadd.f32 %v12922, %v13717
  %v14155 = vadd.f32 %v12923, %v13722
  %v14156 = vadd.f32 %v12924, %v13727
  %v14157 = vadd.f32 %v12925, %v13732
  %v14158 = vadd.f32 %v12926, %v13737
  %v14159 = vadd.f32 %v12927, %v13742
  %v14160 = vadd.f32 %v12928, %v13747
  %v14161 = vadd.f32 %v12929, %v13752
  %v14162 = vadd.f32 %v12930, %v13757
  %v14163 = vadd.f32 %v12931, %v13762
  %v14164 = vadd.f32 %v12932, %v13767
  %v14165 = vadd.f32 %v12933, %v13772
  %v14166 = vadd.f32 %v12934, %v13777
  %v14167 = vadd.f32 %v12935, %v13782
  %v14168 = vadd.f32 %v12936, %v13787
  %v14169 = vadd.f32 %v12937, %v13792
  %v14170 = vadd.f32 %v12938, %v13797
  %v14171 = vadd.f32 %v12939, %v13802
  %v14172 = vadd.f32 %v12940, %v13807
  %v14173 = vadd.f32 %v12941, %v13812
  %v14174 = vadd.f32 %v12942, %v13817
  %v14175 = vadd.f32 %v12943, %v13822
  %v14176 = vadd.f32 %v12944, %v13827
  %v14177 = vadd.f32 %v12945, %v13832
  %v14178 = vadd.f32 %v12946, %v13837
  %v14179 = vadd.f32 %v12947, %v13842
  %v14180 = vadd.f32 %v12948, %v13847
  %v14181 = vadd.f32 %v12949, %v13852
  %v14182 = vadd.f32 %v12950, %v13857
  %v14183 = vadd.f32 %v12951, %v13862
  %v14184 = vadd.f32 %v12952, %v13867
  %v14185 = vadd.f32 %v12953, %v13872
  %v14186 = vadd.f32 %v12954, %v13877
  %v14187 = vadd.f32 %v12955, %v13882
  %v14188 = vadd.f32 %v12956, %v13887
  %v14189 = vadd.f32 %v12957, %v13892
  %v14190 = vadd.f32 %v12958, %v13897
  %v14191 = vadd.f32 %v12959, %v13902
  %v14192 = vadd.f32 %v12960, %v13907
  %v14193 = vadd.f32 %v12961, %v13912
  %v14194 = vadd.f32 %v12962, %v13917
  %v14195 = vadd.f32 %v12963, %v13922
  %v14196 = vadd.f32 %v12964, %v13927
  %v14197 = vadd.f32 %v12965, %v13932
  %v14198 = vadd.f32 %v12966, %v13937
  %v14199 = vadd.f32 %v12967, %v13942
  %v14200 = vadd.f32 %v12968, %v13947
  %v14201 = vadd.f32 %v12969, %v13952
  %v14202 = vadd.f32 %v12970, %v13957
  %v14203 = vadd.f32 %v12971, %v13962
  %v14204 = vadd.f32 %v12972, %v13967
  %v14205 = vadd.f32 %v12973, %v13972
  %v14206 = vadd.f32 %v12974, %v13977
  %v14207 = vadd.f32 %v12975, %v13982
  %v14208 = vadd.f32 %v12976, %v13987
  %v14209 = vadd.f32 %v12977, %v13992
  %v14210 = vadd.f32 %v12978, %v13997
  %v14211 = vadd.f32 %v12979, %v14002
  %v14212 = vadd.f32 %v12980, %v14007
  %v14213 = vadd.f32 %v12981, %v14012
  %v14214 = vadd.f32 %v12982, %v14017
  %v14215 = vadd.f32 %v12983, %v14022
  %v14216 = vadd.f32 %v12984, %v14027
  %v14217 = vadd.f32 %v12985, %v14032
  %v14218 = vadd.f32 %v12986, %v14037
  %v14219 = vadd.f32 %v12987, %v14042
  %14220 = vst.msk [vmem:[%s9] sm:$0xff] %vm2906, %v14044
  %14221 = vst.msk [vmem:[%s9 + $0x8] sm:$0xff] %vm2906, %v14045
  %14222 = vst.msk [vmem:[%s9 + $0x10] sm:$0xff] %vm2906, %v14046
  %14223 = vst.msk [vmem:[%s9 + $0x18] sm:$0xff] %vm2906, %v14047
  %14224 = vst.msk [vmem:[%s9 + $0x20] sm:$0xff] %vm2906, %v14048
  %14225 = vst.msk [vmem:[%s9 + $0x28] sm:$0xff] %vm2906, %v14049
  %14226 = vst.msk [vmem:[%s9 + $0x30] sm:$0xff] %vm2906, %v14050
  %14227 = vst.msk [vmem:[%s9 + $0x38] sm:$0xff] %vm2906, %v14051
  %14228 = vst.msk [vmem:[%s9 + $0x40] sm:$0xff] %vm2906, %v14052
  %14229 = vst.msk [vmem:[%s9 + $0x48] sm:$0xff] %vm2906, %v14053
  %14230 = vst.msk [vmem:[%s9 + $0x50] sm:$0xff] %vm2906, %v14054
  %14231 = vst.msk [vmem:[%s9 + $0x58] sm:$0xff] %vm2906, %v14055
  %14232 = vst.msk [vmem:[%s9 + $0x60] sm:$0xff] %vm2906, %v14056
  %14233 = vst.msk [vmem:[%s9 + $0x68] sm:$0xff] %vm2906, %v14057
  %14234 = vst.msk [vmem:[%s9 + $0x70] sm:$0xff] %vm2906, %v14058
  %14235 = vst.msk [vmem:[%s9 + $0x78] sm:$0xff] %vm2906, %v14059
  %14236 = vst.msk [vmem:[%s9 + $0x80] sm:$0xff] %vm2906, %v14060
  %14237 = vst.msk [vmem:[%s9 + $0x88] sm:$0xff] %vm2906, %v14061
  %14238 = vst.msk [vmem:[%s9 + $0x90] sm:$0xff] %vm2906, %v14062
  %14239 = vst.msk [vmem:[%s9 + $0x98] sm:$0xff] %vm2906, %v14063
  %14240 = vst.msk [vmem:[%s9 + $0xa0] sm:$0xff] %vm2906, %v14064
  %14241 = vst.msk [vmem:[%s9 + $0xa8] sm:$0xff] %vm2906, %v14065
  %14242 = vst.msk [vmem:[%s9 + $0xb0] sm:$0xff] %vm2906, %v14066
  %14243 = vst.msk [vmem:[%s9 + $0xb8] sm:$0xff] %vm2906, %v14067
  %14244 = vst.msk [vmem:[%s9 + $0xc0] sm:$0xff] %vm2906, %v14068
  %14245 = vst.msk [vmem:[%s9 + $0xc8] sm:$0xff] %vm2906, %v14069
  %14246 = vst.msk [vmem:[%s9 + $0xd0] sm:$0xff] %vm2906, %v14070
  %14247 = vst.msk [vmem:[%s9 + $0xd8] sm:$0xff] %vm2906, %v14071
  %14248 = vst.msk [vmem:[%s9 + $0xe0] sm:$0xff] %vm2906, %v14072
  %14249 = vst.msk [vmem:[%s9 + $0xe8] sm:$0xff] %vm2906, %v14073
  %14250 = vst.msk [vmem:[%s9 + $0xf0] sm:$0xff] %vm2906, %v14074
  %14251 = vst.msk [vmem:[%s9 + $0xf8] sm:$0xff] %vm2906, %v14075
  %14252 = vst.msk [vmem:[%s9 + $0x100] sm:$0xff] %vm2906, %v14076
  %14253 = vst.msk [vmem:[%s9 + $0x108] sm:$0xff] %vm2906, %v14077
  %14254 = vst.msk [vmem:[%s9 + $0x110] sm:$0xff] %vm2906, %v14078
  %14255 = vst.msk [vmem:[%s9 + $0x118] sm:$0xff] %vm2906, %v14079
  %14256 = vst.msk [vmem:[%s9 + $0x120] sm:$0xff] %vm2906, %v14080
  %14257 = vst.msk [vmem:[%s9 + $0x128] sm:$0xff] %vm2906, %v14081
  %14258 = vst.msk [vmem:[%s9 + $0x130] sm:$0xff] %vm2906, %v14082
  %14259 = vst.msk [vmem:[%s9 + $0x138] sm:$0xff] %vm2906, %v14083
  %14260 = vst.msk [vmem:[%s9 + $0x140] sm:$0xff] %vm2906, %v14084
  %14261 = vst.msk [vmem:[%s9 + $0x148] sm:$0xff] %vm2906, %v14085
  %14262 = vst.msk [vmem:[%s9 + $0x150] sm:$0xff] %vm2906, %v14086
  %14263 = vst.msk [vmem:[%s9 + $0x158] sm:$0xff] %vm2906, %v14087
  %14264 = vst.msk [vmem:[%s9 + $0x160] sm:$0xff] %vm2906, %v14088
  %14265 = vst.msk [vmem:[%s9 + $0x168] sm:$0xff] %vm2906, %v14089
  %14266 = vst.msk [vmem:[%s9 + $0x170] sm:$0xff] %vm2906, %v14090
  %14267 = vst.msk [vmem:[%s9 + $0x178] sm:$0xff] %vm2906, %v14091
  %14268 = vst.msk [vmem:[%s9 + $0x180] sm:$0xff] %vm2906, %v14092
  %14269 = vst.msk [vmem:[%s9 + $0x188] sm:$0xff] %vm2906, %v14093
  %14270 = vst.msk [vmem:[%s9 + $0x190] sm:$0xff] %vm2906, %v14094
  %14271 = vst.msk [vmem:[%s9 + $0x198] sm:$0xff] %vm2906, %v14095
  %14272 = vst.msk [vmem:[%s9 + $0x1a0] sm:$0xff] %vm2906, %v14096
  %14273 = vst.msk [vmem:[%s9 + $0x1a8] sm:$0xff] %vm2906, %v14097
  %14274 = vst.msk [vmem:[%s9 + $0x1b0] sm:$0xff] %vm2906, %v14098
  %14275 = vst.msk [vmem:[%s9 + $0x1b8] sm:$0xff] %vm2906, %v14099
  %14276 = vst.msk [vmem:[%s9 + $0x1c0] sm:$0xff] %vm2906, %v14100
  %14277 = vst.msk [vmem:[%s9 + $0x1c8] sm:$0xff] %vm2906, %v14101
  %14278 = vst.msk [vmem:[%s9 + $0x1d0] sm:$0xff] %vm2906, %v14102
  %14279 = vst.msk [vmem:[%s9 + $0x1d8] sm:$0xff] %vm2906, %v14103
  %14280 = vst.msk [vmem:[%s9 + $0x1e0] sm:$0xff] %vm2906, %v14104
  %14281 = vst.msk [vmem:[%s9 + $0x1e8] sm:$0xff] %vm2906, %v14105
  %14282 = vst.msk [vmem:[%s9 + $0x1f0] sm:$0xff] %vm2906, %v14106
  %14283 = vst.msk [vmem:[%s9 + $0x1f8] sm:$0xff] %vm2906, %v14107
  %14284 = vst.msk [vmem:[%s9 + $0x200] sm:$0xff] %vm2906, %v14108
  %14285 = vst.msk [vmem:[%s9 + $0x208] sm:$0xff] %vm2906, %v14109
  %14286 = vst.msk [vmem:[%s9 + $0x210] sm:$0xff] %vm2906, %v14110
  %14287 = vst.msk [vmem:[%s9 + $0x218] sm:$0xff] %vm2906, %v14111
  %14288 = vst.msk [vmem:[%s9 + $0x220] sm:$0xff] %vm2906, %v14112
  %14289 = vst.msk [vmem:[%s9 + $0x228] sm:$0xff] %vm2906, %v14113
  %14290 = vst.msk [vmem:[%s9 + $0x230] sm:$0xff] %vm2906, %v14114
  %14291 = vst.msk [vmem:[%s9 + $0x238] sm:$0xff] %vm2906, %v14115
  %14292 = vst.msk [vmem:[%s9 + $0x240] sm:$0xff] %vm2906, %v14116
  %14293 = vst.msk [vmem:[%s9 + $0x248] sm:$0xff] %vm2906, %v14117
  %14294 = vst.msk [vmem:[%s9 + $0x250] sm:$0xff] %vm2906, %v14118
  %14295 = vst.msk [vmem:[%s9 + $0x258] sm:$0xff] %vm2906, %v14119
  %14296 = vst.msk [vmem:[%s9 + $0x260] sm:$0xff] %vm2906, %v14120
  %14297 = vst.msk [vmem:[%s9 + $0x268] sm:$0xff] %vm2906, %v14121
  %14298 = vst.msk [vmem:[%s9 + $0x270] sm:$0xff] %vm2906, %v14122
  %14299 = vst.msk [vmem:[%s9 + $0x278] sm:$0xff] %vm2906, %v14123
  %14300 = vst.msk [vmem:[%s9 + $0x280] sm:$0xff] %vm2906, %v14124
  %14301 = vst.msk [vmem:[%s9 + $0x288] sm:$0xff] %vm2906, %v14125
  %14302 = vst.msk [vmem:[%s9 + $0x290] sm:$0xff] %vm2906, %v14126
  %14303 = vst.msk [vmem:[%s9 + $0x298] sm:$0xff] %vm2906, %v14127
  %14304 = vst.msk [vmem:[%s9 + $0x2a0] sm:$0xff] %vm2906, %v14128
  %14305 = vst.msk [vmem:[%s9 + $0x2a8] sm:$0xff] %vm2906, %v14129
  %14306 = vst.msk [vmem:[%s9 + $0x2b0] sm:$0xff] %vm2906, %v14130
  %14307 = vst.msk [vmem:[%s9 + $0x2b8] sm:$0xff] %vm2906, %v14131
  %14308 = vst.msk [vmem:[%s9 + $0x2c0] sm:$0xff] %vm2906, %v14132
  %14309 = vst.msk [vmem:[%s9 + $0x2c8] sm:$0xff] %vm2906, %v14133
  %14310 = vst.msk [vmem:[%s9 + $0x2d0] sm:$0xff] %vm2906, %v14134
  %14311 = vst.msk [vmem:[%s9 + $0x2d8] sm:$0xff] %vm2906, %v14135
  %14312 = vst.msk [vmem:[%s9 + $0x2e0] sm:$0xff] %vm2906, %v14136
  %14313 = vst.msk [vmem:[%s9 + $0x2e8] sm:$0xff] %vm2906, %v14137
  %14314 = vst.msk [vmem:[%s9 + $0x2f0] sm:$0xff] %vm2906, %v14138
  %14315 = vst.msk [vmem:[%s9 + $0x2f8] sm:$0xff] %vm2906, %v14139
  %14316 = vst.msk [vmem:[%s9 + $0x300] sm:$0xff] %vm2906, %v14140
  %14317 = vst.msk [vmem:[%s9 + $0x308] sm:$0xff] %vm2906, %v14141
  %14318 = vst.msk [vmem:[%s9 + $0x310] sm:$0xff] %vm2906, %v14142
  %14319 = vst.msk [vmem:[%s9 + $0x318] sm:$0xff] %vm2906, %v14143
  %14320 = vst.msk [vmem:[%s9 + $0x320] sm:$0xff] %vm2906, %v14144
  %14321 = vst.msk [vmem:[%s9 + $0x328] sm:$0xff] %vm2906, %v14145
  %14322 = vst.msk [vmem:[%s9 + $0x330] sm:$0xff] %vm2906, %v14146
  %14323 = vst.msk [vmem:[%s9 + $0x338] sm:$0xff] %vm2906, %v14147
  %14324 = vst.msk [vmem:[%s9 + $0x340] sm:$0xff] %vm2906, %v14148
  %14325 = vst.msk [vmem:[%s9 + $0x348] sm:$0xff] %vm2906, %v14149
  %14326 = vst.msk [vmem:[%s9 + $0x350] sm:$0xff] %vm2906, %v14150
  %14327 = vst.msk [vmem:[%s9 + $0x358] sm:$0xff] %vm2906, %v14151
  %14328 = vst.msk [vmem:[%s9 + $0x360] sm:$0xff] %vm2906, %v14152
  %14329 = vst.msk [vmem:[%s9 + $0x368] sm:$0xff] %vm2906, %v14153
  %14330 = vst.msk [vmem:[%s9 + $0x370] sm:$0xff] %vm2906, %v14154
  %14331 = vst.msk [vmem:[%s9 + $0x378] sm:$0xff] %vm2906, %v14155
  %14332 = vst.msk [vmem:[%s9 + $0x380] sm:$0xff] %vm2906, %v14156
  %14333 = vst.msk [vmem:[%s9 + $0x388] sm:$0xff] %vm2906, %v14157
  %14334 = vst.msk [vmem:[%s9 + $0x390] sm:$0xff] %vm2906, %v14158
  %14335 = vst.msk [vmem:[%s9 + $0x398] sm:$0xff] %vm2906, %v14159
  %14336 = vst.msk [vmem:[%s9 + $0x3a0] sm:$0xff] %vm2906, %v14160
  %14337 = vst.msk [vmem:[%s9 + $0x3a8] sm:$0xff] %vm2906, %v14161
  %14338 = vst.msk [vmem:[%s9 + $0x3b0] sm:$0xff] %vm2906, %v14162
  %14339 = vst.msk [vmem:[%s9 + $0x3b8] sm:$0xff] %vm2906, %v14163
  %14340 = vst.msk [vmem:[%s9 + $0x3c0] sm:$0xff] %vm2906, %v14164
  %14341 = vst.msk [vmem:[%s9 + $0x3c8] sm:$0xff] %vm2906, %v14165
  %14342 = vst.msk [vmem:[%s9 + $0x3d0] sm:$0xff] %vm2906, %v14166
  %14343 = vst.msk [vmem:[%s9 + $0x3d8] sm:$0xff] %vm2906, %v14167
  %14344 = vst.msk [vmem:[%s9 + $0x3e0] sm:$0xff] %vm2906, %v14168
  %14345 = vst.msk [vmem:[%s9 + $0x3e8] sm:$0xff] %vm2906, %v14169
  %14346 = vst.msk [vmem:[%s9 + $0x3f0] sm:$0xff] %vm2906, %v14170
  %14347 = vst.msk [vmem:[%s9 + $0x3f8] sm:$0xff] %vm2906, %v14171
  %14348 = vst.msk [vmem:[%s9 + $0x400] sm:$0xff] %vm2906, %v14172
  %14349 = vst.msk [vmem:[%s9 + $0x408] sm:$0xff] %vm2906, %v14173
  %14350 = vst.msk [vmem:[%s9 + $0x410] sm:$0xff] %vm2906, %v14174
  %14351 = vst.msk [vmem:[%s9 + $0x418] sm:$0xff] %vm2906, %v14175
  %14352 = vst.msk [vmem:[%s9 + $0x420] sm:$0xff] %vm2906, %v14176
  %14353 = vst.msk [vmem:[%s9 + $0x428] sm:$0xff] %vm2906, %v14177
  %14354 = vst.msk [vmem:[%s9 + $0x430] sm:$0xff] %vm2906, %v14178
  %14355 = vst.msk [vmem:[%s9 + $0x438] sm:$0xff] %vm2906, %v14179
  %14356 = vst.msk [vmem:[%s9 + $0x440] sm:$0xff] %vm2906, %v14180
  %14357 = vst.msk [vmem:[%s9 + $0x448] sm:$0xff] %vm2906, %v14181
  %14358 = vst.msk [vmem:[%s9 + $0x450] sm:$0xff] %vm2906, %v14182
  %14359 = vst.msk [vmem:[%s9 + $0x458] sm:$0xff] %vm2906, %v14183
  %14360 = vst.msk [vmem:[%s9 + $0x460] sm:$0xff] %vm2906, %v14184
  %14361 = vst.msk [vmem:[%s9 + $0x468] sm:$0xff] %vm2906, %v14185
  %14362 = vst.msk [vmem:[%s9 + $0x470] sm:$0xff] %vm2906, %v14186
  %14363 = vst.msk [vmem:[%s9 + $0x478] sm:$0xff] %vm2906, %v14187
  %14364 = vst.msk [vmem:[%s9 + $0x480] sm:$0xff] %vm2906, %v14188
  %14365 = vst.msk [vmem:[%s9 + $0x488] sm:$0xff] %vm2906, %v14189
  %14366 = vst.msk [vmem:[%s9 + $0x490] sm:$0xff] %vm2906, %v14190
  %14367 = vst.msk [vmem:[%s9 + $0x498] sm:$0xff] %vm2906, %v14191
  %14368 = vst.msk [vmem:[%s9 + $0x4a0] sm:$0xff] %vm2906, %v14192
  %14369 = vst.msk [vmem:[%s9 + $0x4a8] sm:$0xff] %vm2906, %v14193
  %14370 = vst.msk [vmem:[%s9 + $0x4b0] sm:$0xff] %vm2906, %v14194
  %14371 = vst.msk [vmem:[%s9 + $0x4b8] sm:$0xff] %vm2906, %v14195
  %14372 = vst.msk [vmem:[%s9 + $0x4c0] sm:$0xff] %vm2906, %v14196
  %14373 = vst.msk [vmem:[%s9 + $0x4c8] sm:$0xff] %vm2906, %v14197
  %14374 = vst.msk [vmem:[%s9 + $0x4d0] sm:$0xff] %vm2906, %v14198
  %14375 = vst.msk [vmem:[%s9 + $0x4d8] sm:$0xff] %vm2906, %v14199
  %14376 = vst.msk [vmem:[%s9 + $0x4e0] sm:$0xff] %vm2906, %v14200
  %14377 = vst.msk [vmem:[%s9 + $0x4e8] sm:$0xff] %vm2906, %v14201
  %14378 = vst.msk [vmem:[%s9 + $0x4f0] sm:$0xff] %vm2906, %v14202
  %14379 = vst.msk [vmem:[%s9 + $0x4f8] sm:$0xff] %vm2906, %v14203
  %14380 = vst.msk [vmem:[%s9 + $0x500] sm:$0xff] %vm2906, %v14204
  %14381 = vst.msk [vmem:[%s9 + $0x508] sm:$0xff] %vm2906, %v14205
  %14382 = vst.msk [vmem:[%s9 + $0x510] sm:$0xff] %vm2906, %v14206
  %14383 = vst.msk [vmem:[%s9 + $0x518] sm:$0xff] %vm2906, %v14207
  %14384 = vst.msk [vmem:[%s9 + $0x520] sm:$0xff] %vm2906, %v14208
  %14385 = vst.msk [vmem:[%s9 + $0x528] sm:$0xff] %vm2906, %v14209
  %14386 = vst.msk [vmem:[%s9 + $0x530] sm:$0xff] %vm2906, %v14210
  %14387 = vst.msk [vmem:[%s9 + $0x538] sm:$0xff] %vm2906, %v14211
  %14388 = vst.msk [vmem:[%s9 + $0x540] sm:$0xff] %vm2906, %v14212
  %14389 = vst.msk [vmem:[%s9 + $0x548] sm:$0xff] %vm2906, %v14213
  %14390 = vst.msk [vmem:[%s9 + $0x550] sm:$0xff] %vm2906, %v14214
  %14391 = vst.msk [vmem:[%s9 + $0x558] sm:$0xff] %vm2906, %v14215
  %14392 = vst.msk [vmem:[%s9 + $0x560] sm:$0xff] %vm2906, %v14216
  %14393 = vst.msk [vmem:[%s9 + $0x568] sm:$0xff] %vm2906, %v14217
  %14394 = vst.msk [vmem:[%s9 + $0x570] sm:$0xff] %vm2906, %v14218
  %14395 = vst.msk [vmem:[%s9 + $0x578] sm:$0xff] %vm2906, %v14219
  // Predicated region
  $region38: #{module_forward.1} parent=0 // pred_check
    _
  $region39: #{module_forward.1} parent=0 // pred_check_branch
    %14397 = sbr.rel (0) target = $region41
  $region40: #{module_forward.1} parent=0 // pred_region
    _
  $region41: #{module_forward.1} parent=0 // pred_fallthru
    _
  // Predicated region
  $region42: #{module_forward.1} parent=0 // pred_check
    _
  $region43: #{module_forward.1} parent=0 // pred_check_branch
    %14399 = sbr.rel (0) target = $region45
  $region44: #{module_forward.1} parent=0 // pred_region
    _
  $region45: #{module_forward.1} parent=0 // pred_fallthru
    _

</llo_original>
